<compile_context>
chip_gen: v6e
topology: v6e:2x2x1
jax: 0.10.0
libtpu: 0.0.40
codegen_flags: <defaults>
</compile_context>

<pallas_src>
import functools

import jax
import jax.numpy as jnp
from jax.experimental import pallas as pl
from jax.experimental.pallas import tpu as pltpu


def _round_up(v, m):
    return ((v + m - 1) // m) * m


def _vmem_capacity_bytes():
    try:
        info = pltpu.get_tpu_info()
        cap = getattr(info, "vmem_capacity_bytes", None)
        if cap:
            return int(cap)
    except Exception:
        pass
    return 128 * 1024 * 1024  # v5e / v6e default


def _bf16_eup_available():
    """v6e / v7x EUP handles bf16 (2x transcendental throughput); v5e does not."""
    try:
        kind = jax.devices()[0].device_kind.lower()
    except Exception:
        return False
    return any(t in kind for t in ("v6", "v7", "tpu7", "7x"))


def pointer_net_kernel(x_ref, init_ref, mask_ref,
                       w1s_ref, w1x_ref, w2_ref,
                       wi_ref, wh_ref, bi_ref, bh_ref,
                       logits_ref, *, bf16_eup):
    Bt, Lp, DINp = x_ref.shape
    S = init_ref.shape[-1]
    Hp = w2_ref.shape[-1]

    x = x_ref[...]                                   # (Bt, Lp, DINp) f32
    x_bf = x.astype(jnp.bfloat16)                    # MXU operand copy
    h0 = init_ref[...]                               # (Bt, S) f32
    mask = mask_ref[...]                             # (Bt, Lp) f32

    w1s = w1s_ref[...]                               # (S, Hp)    bf16
    w1x = w1x_ref[...]                               # (DINp, Hp) bf16
    w2 = w2_ref[...]                                 # (1, Hp)    f32

    # Hoisted: mask bias used by both pointer calls (stays f32).
    neg_bias = -1e30 * (1.0 - mask)                  # (Bt, Lp)

    # x @ W1_x, batch collapsed into the MXU M dimension; bf16 operands,
    # f32 accumulation.  Shared by both pointer calls (state independent).
    xw = jnp.dot(x_bf.reshape(Bt * Lp, DINp), w1x,
                 preferred_element_type=jnp.float32).reshape(Bt, Lp, Hp)

    def attention_logits(state_f32):
        sw = jnp.dot(state_f32.astype(jnp.bfloat16), w1s,
                     preferred_element_type=jnp.float32)              # (Bt, Hp) f32
        pre = xw + sw[:, None, :]                                     # (Bt, Lp, Hp) f32
        if bf16_eup:
            # Packed bf16 EUP tanh (2x throughput on v6e/v7x); back to f32.
            h = jnp.tanh(pre.astype(jnp.bfloat16)).astype(jnp.float32)
        else:
            h = jnp.tanh(pre)
        # H-contraction on VPU (mul) + XLU (lane reduce): keeps the MXU free
        # (the N=1 matmul form cost M/8*ceil(K/128) pushes for 1 useful lane).
        att = jnp.sum(h * w2[:, None, :], axis=-1)                    # (Bt, Lp) f32
        return att + neg_bias

    # --- pointer #1 (needs the attention-weighted sum as the GRU input) ---
    logit1 = attention_logits(h0)
    logits_ref[0, :, :] = logit1

    m = jnp.max(logit1, axis=1, keepdims=True)
    e = jnp.exp(logit1 - m)                                           # (Bt, Lp) f32
    inv = pl.reciprocal(jnp.sum(e, axis=1, keepdims=True), approx=True)   # EUP slot
    p = e * inv                                                       # softmax over L
    # Attention-weighted sum on VPU + sublane reduce (avoids Bt M=1 MXU matmuls).
    out1 = jnp.sum(p[:, :, None] * x, axis=1)                         # (Bt, DINp) f32

    # --- fused GRUCell(out1, h0): two wide bf16 matmuls, (r, z, n) order ---
    gi = jnp.dot(out1.astype(jnp.bfloat16), wi_ref[...],
                 preferred_element_type=jnp.float32) + bi_ref[...]    # (Bt, 3S) f32
    gh = jnp.dot(h0.astype(jnp.bfloat16), wh_ref[...],
                 preferred_element_type=jnp.float32) + bh_ref[...]    # (Bt, 3S) f32
    r = jax.nn.sigmoid(gi[:, :S] + gh[:, :S])
    z = jax.nn.sigmoid(gi[:, S:2 * S] + gh[:, S:2 * S])
    n = jnp.tanh(gi[:, 2 * S:] + r * gh[:, 2 * S:])
    state = (1.0 - z) * n + z * h0                                    # (Bt, S) f32

    # --- pointer #2: logits only (attention-weighted sum is dead here) ---
    logits_ref[1, :, :] = attention_logits(state)


def pointer_net(x, init, mask, params, *, batch_tile=None):
    B, L, DIN = x.shape
    S = init.shape[-1]
    H = params['w1s'].shape[-1]

    # ---- lane-dense padding: L, DIN, H padded to multiples of 128 ----
    Lp = _round_up(L, 128)
    DINp = _round_up(DIN, 128)
    Hp = _round_up(H, 128)

    # ---- generation-aware batch tile + VMEM budget ----
    if batch_tile is None:
        batch_tile = 32            # big tiles amortize per-grid-step overhead
    batch_tile = max(8, min((batch_tile // 8) * 8, _round_up(B, 8)))

    def vmem_estimate(bt):
        f32b, bf16b = 4, 2
        blocks = (bt * Lp * DINp + bt * S + bt * Lp + 2 * bt * Lp) * f32b
        weights = ((S * Hp + DINp * Hp + DINp * 3 * S + S * 3 * S) * bf16b
                   + (Hp + 2 * 3 * S) * f32b)
        interm = ((2 * bt * Lp * Hp + 6 * bt * Lp) * f32b
                  + bt * Lp * DINp * bf16b
                  + bt * (DINp + 6 * S) * f32b)
        # double-buffered pipelined blocks + (conservatively) 2x weights
        return 2 * blocks + 2 * weights + interm

    vmem_cap = int(0.75 * _vmem_capacity_bytes())     # 96 MiB on 128-MiB parts, 48 MiB on v7x
    while batch_tile > 8 and vmem_estimate(batch_tile) > vmem_cap:
        batch_tile //= 2
    batch_tile = max(8, (batch_tile // 8) * 8)
    vmem_limit = int(min(vmem_cap,
                         max(32 * 1024 * 1024, 1.25 * vmem_estimate(batch_tile))))

    Bp = _round_up(B, batch_tile)
    # NOTE(v7x): for large B, Bp/batch_tile >= 2 (and even) lets the parallel
    # batch axis shard across both TensorCores; irrelevant at self-test sizes.

    # ---- pack / pad weights (MXU operands pre-cast to bf16) ----
    w1s_p = jnp.zeros((S, Hp), jnp.float32).at[:, :H].set(params['w1s']).astype(jnp.bfloat16)
    w1x_p = jnp.zeros((DINp, Hp), jnp.float32).at[:DIN, :H].set(params['w1x']).astype(jnp.bfloat16)
    w2_p = jnp.zeros((1, Hp), jnp.float32).at[:, :H].set(params['w2'])          # stays f32 (VPU path)

    w_i = jnp.concatenate([params['w_ir'], params['w_iz'], params['w_in']], axis=1)   # (DIN, 3S)
    w_h = jnp.concatenate([params['w_hr'], params['w_hz'], params['w_hn']], axis=1)   # (S, 3S)
    w_i_p = jnp.zeros((DINp, 3 * S), jnp.float32).at[:DIN, :].set(w_i).astype(jnp.bfloat16)
    w_h_p = w_h.astype(jnp.bfloat16)
    b_i = jnp.concatenate([params['b_ir'], params['b_iz'], params['b_in']], axis=1)   # (1, 3S) f32
    b_h = jnp.concatenate([params['b_hr'], params['b_hz'], params['b_hn']], axis=1)   # (1, 3S) f32

    # ---- pad activations (zero pad == masked out / zero contribution) ----
    x_p = jnp.zeros((Bp, Lp, DINp), jnp.float32).at[:B, :L, :DIN].set(x)
    mask_p = jnp.zeros((Bp, Lp), jnp.float32).at[:B, :L].set(mask)
    init_p = jnp.zeros((Bp, S), jnp.float32).at[:B, :].set(init)

    grid = (Bp // batch_tile,)

    def full_spec(shape):
        return pl.BlockSpec(shape, lambda i: (0,) * len(shape))

    in_specs = [
        pl.BlockSpec((batch_tile, Lp, DINp), lambda i: (i, 0, 0)),
        pl.BlockSpec((batch_tile, S), lambda i: (i, 0)),
        pl.BlockSpec((batch_tile, Lp), lambda i: (i, 0)),
        full_spec((S, Hp)),
        full_spec((DINp, Hp)),
        full_spec((1, Hp)),
        full_spec((DINp, 3 * S)),
        full_spec((S, 3 * S)),
        full_spec((1, 3 * S)),
        full_spec((1, 3 * S)),
    ]
    out_specs = pl.BlockSpec((2, batch_tile, Lp), lambda i: (0, i, 0))

    # Advisory cost estimate for the XLA scheduler (padded dims).
    matmul_flops = 2 * Bp * (Lp * DINp * Hp + 2 * S * Hp + DINp * 3 * S + S * 3 * S)
    vpu_flops = Bp * (4 * Lp * Hp + 2 * Lp * DINp)
    flops = int(matmul_flops + vpu_flops)
    transcendentals = int(Bp * (2 * Lp * Hp + Lp + 3 * S + 1))
    bytes_accessed = int(4 * (x_p.size + init_p.size + mask_p.size + w2_p.size
                              + b_i.size + b_h.size + 2 * Bp * Lp)
                         + 2 * (w1s_p.size + w1x_p.size + w_i_p.size + w_h_p.size))

    kernel = functools.partial(pointer_net_kernel, bf16_eup=_bf16_eup_available())

    logits = pl.pallas_call(
        kernel,
        out_shape=jax.ShapeDtypeStruct((2, Bp, Lp), jnp.float32),
        grid=grid,
        in_specs=in_specs,
        out_specs=out_specs,
        compiler_params=pltpu.CompilerParams(
            dimension_semantics=("parallel",),
            vmem_limit_bytes=vmem_limit),
        cost_estimate=pl.CostEstimate(flops=flops,
                                      transcendentals=transcendentals,
                                      bytes_accessed=bytes_accessed),
    )(x_p, init_p, mask_p, w1s_p, w1x_p, w2_p, w_i_p, w_h_p, b_i, b_h)

    return logits[0, :B, :L], logits[1, :B, :L]


def pointer_net_reference(x, init, mask, p):
    """Pure-JAX f32 reference (eval-mode PointerNet forward)."""
    def pointer(state):
        sw = state @ p['w1s']
        h = jnp.tanh(sw[:, None, :] + jnp.einsum('bld,dh->blh', x, p['w1x']))
        att = jnp.sum(h * p['w2'], axis=-1)
        logit = att - 1e30 * (1.0 - mask)
        prob = jax.nn.softmax(logit, axis=1)
        return jnp.sum(x * prob[:, :, None], axis=1), logit

    out1, l1 = pointer(init)
    r = jax.nn.sigmoid(out1 @ p['w_ir'] + p['b_ir'] + init @ p['w_hr'] + p['b_hr'])
    z = jax.nn.sigmoid(out1 @ p['w_iz'] + p['b_iz'] + init @ p['w_hz'] + p['b_hz'])
    n = jnp.tanh(out1 @ p['w_in'] + p['b_in'] + r * (init @ p['w_hn'] + p['b_hn']))
    state = (1.0 - z) * n + z * init
    _, l2 = pointer(state)
    return l1, l2


if __name__ == "__main__":
    B, L, DIN, S, H = 2, 8, 32, 32, 32   # batch, seq, input_size, state_size, hidden_size

    key = jax.random.PRNGKey(0)
    ks = jax.random.split(key, 20)

    def xavier(k, shape):
        bound = (6.0 / (shape[0] + shape[-1])) ** 0.5
        return jax.random.uniform(k, shape, jnp.float32, -bound, bound)

    # Weights stored pre-transposed for row-major (x @ W) matmuls inside the kernel.
    params = {
        'w1s': xavier(ks[0], (S, H)),       # Pointer net[0] columns acting on state
        'w1x': xavier(ks[1], (DIN, H)),     # Pointer net[0] columns acting on input
        'w2':  xavier(ks[2], (1, H)),       # Pointer net[2] weight (H -> 1)
        'w_ir': xavier(ks[3], (DIN, S)),    # GRUCell weight_ih (r, z, n), transposed
        'w_iz': xavier(ks[4], (DIN, S)),
        'w_in': xavier(ks[5], (DIN, S)),
        'w_hr': xavier(ks[6], (S, S)),      # GRUCell weight_hh (r, z, n), transposed
        'w_hz': xavier(ks[7], (S, S)),
        'w_hn': xavier(ks[8], (S, S)),
        'b_ir': 0.1 * jax.random.normal(ks[9], (1, S), jnp.float32),
        'b_iz': 0.1 * jax.random.normal(ks[10], (1, S), jnp.float32),
        'b_in': 0.1 * jax.random.normal(ks[11], (1, S), jnp.float32),
        'b_hr': 0.1 * jax.random.normal(ks[12], (1, S), jnp.float32),
        'b_hz': 0.1 * jax.random.normal(ks[13], (1, S), jnp.float32),
        'b_hn': 0.1 * jax.random.normal(ks[14], (1, S), jnp.float32),
    }

    x = jax.random.normal(ks[15], (B, L, DIN), jnp.float32)
    init_state = jax.random.normal(ks[16], (B, S), jnp.float32)
    # Valid lengths: batch 0 has all L positions valid, batch 1 has L-3.
    mask = (jnp.arange(L)[None, :] < jnp.array([[L], [L - 3]])).astype(jnp.float32)

    logit1, logit2 = jax.block_until_ready(pointer_net(x, init_state, mask, params))

    ref1, ref2 = pointer_net_reference(x, init_state, mask, params)
    # Tolerance reflects bf16 MXU operands (f32 accumulation) and the approx
    # EUP reciprocal in the pointer-#1 softmax; logits are O(1) for valid
    # positions, -1e30 (covered by rtol) for masked ones.
    assert jnp.allclose(logit1, ref1, atol=1e-1, rtol=5e-2), "logit1 mismatch"
    assert jnp.allclose(logit2, ref2, atol=1e-1, rtol=5e-2), "logit2 mismatch"

    print("KERNEL_OK")
</pallas_src>

<mosaic_0001>
module attributes {stable_mosaic.version = 11 : i64} {
  func.func @pointer_net_kernel(%arg0: i32, %arg1: memref<8x128x128xf32, #tpu.memory_space<vmem>>, %arg2: memref<8x32xf32, #tpu.memory_space<vmem>>, %arg3: memref<8x128xf32, #tpu.memory_space<vmem>>, %arg4: memref<32x128xbf16, #tpu.memory_space<vmem>>, %arg5: memref<128x128xbf16, #tpu.memory_space<vmem>>, %arg6: memref<1x128xf32, #tpu.memory_space<vmem>>, %arg7: memref<128x96xbf16, #tpu.memory_space<vmem>>, %arg8: memref<32x96xbf16, #tpu.memory_space<vmem>>, %arg9: memref<1x96xf32, #tpu.memory_space<vmem>>, %arg10: memref<1x96xf32, #tpu.memory_space<vmem>>, %arg11: memref<2x8x128xf32, #tpu.memory_space<vmem>>) attributes {dimension_semantics = [#tpu.dimension_semantics<parallel>], iteration_bounds = array<i64: 1>, scalar_prefetch = 0 : i64, scratch_operands = 0 : i64, tpu.core_type = #tpu.core_type<tc>, window_params = [{transform_indices = @transform_0, window_bounds = array<i64: 8, 128, 128>}, {transform_indices = @transform_1, window_bounds = array<i64: 8, 32>}, {transform_indices = @transform_2, window_bounds = array<i64: 8, 128>}, {pipeline_mode = #tpu.pipeline_mode<synchronous>, transform_indices = @transform_3, window_bounds = array<i64: 32, 128>}, {pipeline_mode = #tpu.pipeline_mode<synchronous>, transform_indices = @transform_4, window_bounds = array<i64: 128, 128>}, {pipeline_mode = #tpu.pipeline_mode<synchronous>, transform_indices = @transform_5, window_bounds = array<i64: 1, 128>}, {pipeline_mode = #tpu.pipeline_mode<synchronous>, transform_indices = @transform_6, window_bounds = array<i64: 128, 96>}, {pipeline_mode = #tpu.pipeline_mode<synchronous>, transform_indices = @transform_7, window_bounds = array<i64: 32, 96>}, {pipeline_mode = #tpu.pipeline_mode<synchronous>, transform_indices = @transform_8, window_bounds = array<i64: 1, 96>}, {pipeline_mode = #tpu.pipeline_mode<synchronous>, transform_indices = @transform_9, window_bounds = array<i64: 1, 96>}, {transform_indices = @transform_10, window_bounds = array<i64: 2, 8, 128>}]} {
    %c0 = arith.constant 0 : index
    %c0_0 = arith.constant 0 : index
    %c0_1 = arith.constant 0 : index
    %0 = vector.load %arg1[%c0, %c0_0, %c0_1] : memref<8x128x128xf32, #tpu.memory_space<vmem>>, vector<8x128x128xf32>
    %1 = arith.truncf %0 : vector<8x128x128xf32> to vector<8x128x128xbf16>
    %c0_2 = arith.constant 0 : index
    %c0_3 = arith.constant 0 : index
    %2 = vector.load %arg2[%c0_2, %c0_3] : memref<8x32xf32, #tpu.memory_space<vmem>>, vector<8x32xf32>
    %c0_4 = arith.constant 0 : index
    %c0_5 = arith.constant 0 : index
    %3 = vector.load %arg3[%c0_4, %c0_5] : memref<8x128xf32, #tpu.memory_space<vmem>>, vector<8x128xf32>
    %c0_6 = arith.constant 0 : index
    %c0_7 = arith.constant 0 : index
    %4 = vector.load %arg4[%c0_6, %c0_7] : memref<32x128xbf16, #tpu.memory_space<vmem>>, vector<32x128xbf16>
    %c0_8 = arith.constant 0 : index
    %c0_9 = arith.constant 0 : index
    %5 = vector.load %arg5[%c0_8, %c0_9] : memref<128x128xbf16, #tpu.memory_space<vmem>>, vector<128x128xbf16>
    %c0_10 = arith.constant 0 : index
    %c0_11 = arith.constant 0 : index
    %6 = vector.load %arg6[%c0_10, %c0_11] : memref<1x128xf32, #tpu.memory_space<vmem>>, vector<1x128xf32>
    %cst = arith.constant 1.000000e+00 : f32
    %7 = vector.broadcast %cst : f32 to vector<8x128xf32>
    %8 = arith.subf %7, %3 : vector<8x128xf32>
    %cst_12 = arith.constant -1.000000e+30 : f32
    %9 = vector.broadcast %cst_12 : f32 to vector<8x128xf32>
    %10 = arith.mulf %9, %8 : vector<8x128xf32>
    %11 = vector.shape_cast %1 : vector<8x128x128xbf16> to vector<1024x128xbf16>
    %cst_13 = arith.constant dense<0.000000e+00> : vector<1024x128xf32>
    %12 = tpu.matmul %11, %5, %cst_13 {dimension_numbers = #tpu.dot_dimension_numbers<[1], [0], [0], [1], [0, 0, 1, 1], [], []>} : vector<1024x128xbf16>, vector<128x128xbf16>, vector<1024x128xf32> -> vector<1024x128xf32>
    %13 = vector.shape_cast %12 : vector<1024x128xf32> to vector<8x128x128xf32>
    %14 = arith.truncf %2 : vector<8x32xf32> to vector<8x32xbf16>
    %cst_14 = arith.constant dense<0.000000e+00> : vector<8x128xf32>
    %15 = tpu.matmul %14, %4, %cst_14 {dimension_numbers = #tpu.dot_dimension_numbers<[1], [0], [0], [1], [0, 0, 1, 1], [], []>} : vector<8x32xbf16>, vector<32x128xbf16>, vector<8x128xf32> -> vector<8x128xf32>
    %16 = vector.shape_cast %15 : vector<8x128xf32> to vector<8x1x128xf32>
    %17 = vector.broadcast %16 : vector<8x1x128xf32> to vector<8x128x128xf32>
    %18 = arith.addf %13, %17 : vector<8x128x128xf32>
    %19 = math.tanh %18 : vector<8x128x128xf32>
    %20 = vector.shape_cast %6 : vector<1x128xf32> to vector<1x1x128xf32>
    %21 = vector.broadcast %20 : vector<1x1x128xf32> to vector<8x128x128xf32>
    %22 = arith.mulf %19, %21 : vector<8x128x128xf32>
    %cst_15 = arith.constant dense<0.000000e+00> : vector<8x128xf32>
    %23 = vector.multi_reduction <add>, %22, %cst_15 [2] : vector<8x128x128xf32> to vector<8x128xf32>
    %24 = arith.addf %23, %10 : vector<8x128xf32>
    %c0_16 = arith.constant 0 : index
    %c0_17 = arith.constant 0 : index
    %c0_18 = arith.constant 0 : index
    %25 = vector.load %arg11[%c0_16, %c0_17, %c0_18] : memref<2x8x128xf32, #tpu.memory_space<vmem>>, vector<1x8x128xf32>
    %26 = vector.shape_cast %25 : vector<1x8x128xf32> to vector<8x128xf32>
    %27 = vector.shape_cast %24 : vector<8x128xf32> to vector<1x8x128xf32>
    tpu.vector_store %arg11[%c0_16, %c0_17, %c0_18], %27 {strides = array<i32>} : memref<2x8x128xf32, #tpu.memory_space<vmem>>, vector<1x8x128xf32>,
    %cst_19 = arith.constant dense<0xFF800000> : vector<8xf32>
    %28 = vector.multi_reduction <maximumf>, %24, %cst_19 [1] : vector<8x128xf32> to vector<8xf32>
    %29 = vector.shape_cast %28 : vector<8xf32> to vector<8x1xf32>
    %30 = vector.broadcast %29 : vector<8x1xf32> to vector<8x128xf32>
    %31 = arith.subf %24, %30 : vector<8x128xf32>
    %32 = math.exp %31 : vector<8x128xf32>
    %cst_20 = arith.constant dense<0.000000e+00> : vector<8xf32>
    %33 = vector.multi_reduction <add>, %32, %cst_20 [1] : vector<8x128xf32> to vector<8xf32>
    %34 = vector.shape_cast %33 : vector<8xf32> to vector<8x1xf32>
    %35 = tpu.reciprocal %34 {approx = true} : vector<8x1xf32> -> vector<8x1xf32>
    %36 = vector.broadcast %35 : vector<8x1xf32> to vector<8x128xf32>
    %37 = arith.mulf %32, %36 : vector<8x128xf32>
    %38 = vector.shape_cast %37 : vector<8x128xf32> to vector<8x128x1xf32>
    %39 = vector.broadcast %38 : vector<8x128x1xf32> to vector<8x128x128xf32>
    %40 = arith.mulf %39, %0 : vector<8x128x128xf32>
    %cst_21 = arith.constant dense<0.000000e+00> : vector<8x128xf32>
    %41 = vector.multi_reduction <add>, %40, %cst_21 [1] : vector<8x128x128xf32> to vector<8x128xf32>
    %42 = arith.truncf %41 : vector<8x128xf32> to vector<8x128xbf16>
    %c0_22 = arith.constant 0 : index
    %c0_23 = arith.constant 0 : index
    %43 = vector.load %arg7[%c0_22, %c0_23] : memref<128x96xbf16, #tpu.memory_space<vmem>>, vector<128x96xbf16>
    %cst_24 = arith.constant dense<0.000000e+00> : vector<8x96xf32>
    %44 = tpu.matmul %42, %43, %cst_24 {dimension_numbers = #tpu.dot_dimension_numbers<[1], [0], [0], [1], [0, 0, 1, 1], [], []>} : vector<8x128xbf16>, vector<128x96xbf16>, vector<8x96xf32> -> vector<8x96xf32>
    %c0_25 = arith.constant 0 : index
    %c0_26 = arith.constant 0 : index
    %45 = vector.load %arg9[%c0_25, %c0_26] : memref<1x96xf32, #tpu.memory_space<vmem>>, vector<1x96xf32>
    %46 = vector.broadcast %45 : vector<1x96xf32> to vector<8x96xf32>
    %47 = arith.addf %44, %46 : vector<8x96xf32>
    %48 = arith.truncf %2 : vector<8x32xf32> to vector<8x32xbf16>
    %c0_27 = arith.constant 0 : index
    %c0_28 = arith.constant 0 : index
    %49 = vector.load %arg8[%c0_27, %c0_28] : memref<32x96xbf16, #tpu.memory_space<vmem>>, vector<32x96xbf16>
    %cst_29 = arith.constant dense<0.000000e+00> : vector<8x96xf32>
    %50 = tpu.matmul %48, %49, %cst_29 {dimension_numbers = #tpu.dot_dimension_numbers<[1], [0], [0], [1], [0, 0, 1, 1], [], []>} : vector<8x32xbf16>, vector<32x96xbf16>, vector<8x96xf32> -> vector<8x96xf32>
    %c0_30 = arith.constant 0 : index
    %c0_31 = arith.constant 0 : index
    %51 = vector.load %arg10[%c0_30, %c0_31] : memref<1x96xf32, #tpu.memory_space<vmem>>, vector<1x96xf32>
    %52 = vector.broadcast %51 : vector<1x96xf32> to vector<8x96xf32>
    %53 = arith.addf %50, %52 : vector<8x96xf32>
    %54 = vector.extract_strided_slice %47 {offsets = [0, 0], sizes = [8, 32], strides = [1, 1]} : vector<8x96xf32> to vector<8x32xf32>
    %55 = vector.extract_strided_slice %53 {offsets = [0, 0], sizes = [8, 32], strides = [1, 1]} : vector<8x96xf32> to vector<8x32xf32>
    %56 = arith.addf %54, %55 : vector<8x32xf32>
    %57 = arith.negf %56 : vector<8x32xf32>
    %58 = math.exp %57 : vector<8x32xf32>
    %cst_32 = arith.constant 1.000000e+00 : f32
    %59 = vector.broadcast %cst_32 : f32 to vector<8x32xf32>
    %60 = arith.addf %59, %58 : vector<8x32xf32>
    %61 = arith.divf %59, %60 : vector<8x32xf32>
    %62 = vector.extract_strided_slice %47 {offsets = [0, 32], sizes = [8, 32], strides = [1, 1]} : vector<8x96xf32> to vector<8x32xf32>
    %63 = vector.extract_strided_slice %53 {offsets = [0, 32], sizes = [8, 32], strides = [1, 1]} : vector<8x96xf32> to vector<8x32xf32>
    %64 = arith.addf %62, %63 : vector<8x32xf32>
    %65 = arith.negf %64 : vector<8x32xf32>
    %66 = math.exp %65 : vector<8x32xf32>
    %cst_33 = arith.constant 1.000000e+00 : f32
    %67 = vector.broadcast %cst_33 : f32 to vector<8x32xf32>
    %68 = arith.addf %67, %66 : vector<8x32xf32>
    %69 = arith.divf %67, %68 : vector<8x32xf32>
    %70 = vector.extract_strided_slice %47 {offsets = [0, 64], sizes = [8, 32], strides = [1, 1]} : vector<8x96xf32> to vector<8x32xf32>
    %71 = vector.extract_strided_slice %53 {offsets = [0, 64], sizes = [8, 32], strides = [1, 1]} : vector<8x96xf32> to vector<8x32xf32>
    %72 = arith.mulf %61, %71 : vector<8x32xf32>
    %73 = arith.addf %70, %72 : vector<8x32xf32>
    %74 = math.tanh %73 : vector<8x32xf32>
    %cst_34 = arith.constant 1.000000e+00 : f32
    %75 = vector.broadcast %cst_34 : f32 to vector<8x32xf32>
    %76 = arith.subf %75, %69 : vector<8x32xf32>
    %77 = arith.mulf %76, %74 : vector<8x32xf32>
    %78 = arith.mulf %69, %2 : vector<8x32xf32>
    %79 = arith.addf %77, %78 : vector<8x32xf32>
    %80 = arith.truncf %79 : vector<8x32xf32> to vector<8x32xbf16>
    %cst_35 = arith.constant dense<0.000000e+00> : vector<8x128xf32>
    %81 = tpu.matmul %80, %4, %cst_35 {dimension_numbers = #tpu.dot_dimension_numbers<[1], [0], [0], [1], [0, 0, 1, 1], [], []>} : vector<8x32xbf16>, vector<32x128xbf16>, vector<8x128xf32> -> vector<8x128xf32>
    %82 = vector.shape_cast %81 : vector<8x128xf32> to vector<8x1x128xf32>
    %83 = vector.broadcast %82 : vector<8x1x128xf32> to vector<8x128x128xf32>
    %84 = arith.addf %13, %83 : vector<8x128x128xf32>
    %85 = math.tanh %84 : vector<8x128x128xf32>
    %86 = vector.shape_cast %6 : vector<1x128xf32> to vector<1x1x128xf32>
    %87 = vector.broadcast %86 : vector<1x1x128xf32> to vector<8x128x128xf32>
    %88 = arith.mulf %85, %87 : vector<8x128x128xf32>
    %cst_36 = arith.constant dense<0.000000e+00> : vector<8x128xf32>
    %89 = vector.multi_reduction <add>, %88, %cst_36 [2] : vector<8x128x128xf32> to vector<8x128xf32>
    %90 = arith.addf %89, %10 : vector<8x128xf32>
    %c1 = arith.constant 1 : index
    %c0_37 = arith.constant 0 : index
    %c0_38 = arith.constant 0 : index
    %91 = vector.load %arg11[%c1, %c0_37, %c0_38] : memref<2x8x128xf32, #tpu.memory_space<vmem>>, vector<1x8x128xf32>
    %92 = vector.shape_cast %91 : vector<1x8x128xf32> to vector<8x128xf32>
    %93 = vector.shape_cast %90 : vector<8x128xf32> to vector<1x8x128xf32>
    tpu.vector_store %arg11[%c1, %c0_37, %c0_38], %93 {strides = array<i32>} : memref<2x8x128xf32, #tpu.memory_space<vmem>>, vector<1x8x128xf32>,
    return
  }
  func.func @transform_0(%arg0: i32) -> (i32, i32, i32) {
    %c0_i32 = arith.constant 0 : i32
    %c0_i32_0 = arith.constant 0 : i32
    %c0_i32_1 = arith.constant 0 : i32
    return %arg0, %c0_i32, %c0_i32_0 : i32, i32, i32
  }
  func.func @transform_1(%arg0: i32) -> (i32, i32) {
    %c0_i32 = arith.constant 0 : i32
    %c0_i32_0 = arith.constant 0 : i32
    return %arg0, %c0_i32 : i32, i32
  }
  func.func @transform_2(%arg0: i32) -> (i32, i32) {
    %c0_i32 = arith.constant 0 : i32
    %c0_i32_0 = arith.constant 0 : i32
    return %arg0, %c0_i32 : i32, i32
  }
  func.func @transform_3(%arg0: i32) -> (i32, i32) {
    %c0_i32 = arith.constant 0 : i32
    %c0_i32_0 = arith.constant 0 : i32
    %c0_i32_1 = arith.constant 0 : i32
    return %c0_i32, %c0_i32_0 : i32, i32
  }
  func.func @transform_4(%arg0: i32) -> (i32, i32) {
    %c0_i32 = arith.constant 0 : i32
    %c0_i32_0 = arith.constant 0 : i32
    %c0_i32_1 = arith.constant 0 : i32
    return %c0_i32, %c0_i32_0 : i32, i32
  }
  func.func @transform_5(%arg0: i32) -> (i32, i32) {
    %c0_i32 = arith.constant 0 : i32
    %c0_i32_0 = arith.constant 0 : i32
    %c0_i32_1 = arith.constant 0 : i32
    return %c0_i32, %c0_i32_0 : i32, i32
  }
  func.func @transform_6(%arg0: i32) -> (i32, i32) {
    %c0_i32 = arith.constant 0 : i32
    %c0_i32_0 = arith.constant 0 : i32
    %c0_i32_1 = arith.constant 0 : i32
    return %c0_i32, %c0_i32_0 : i32, i32
  }
  func.func @transform_7(%arg0: i32) -> (i32, i32) {
    %c0_i32 = arith.constant 0 : i32
    %c0_i32_0 = arith.constant 0 : i32
    %c0_i32_1 = arith.constant 0 : i32
    return %c0_i32, %c0_i32_0 : i32, i32
  }
  func.func @transform_8(%arg0: i32) -> (i32, i32) {
    %c0_i32 = arith.constant 0 : i32
    %c0_i32_0 = arith.constant 0 : i32
    %c0_i32_1 = arith.constant 0 : i32
    return %c0_i32, %c0_i32_0 : i32, i32
  }
  func.func @transform_9(%arg0: i32) -> (i32, i32) {
    %c0_i32 = arith.constant 0 : i32
    %c0_i32_0 = arith.constant 0 : i32
    %c0_i32_1 = arith.constant 0 : i32
    return %c0_i32, %c0_i32_0 : i32, i32
  }
  func.func @transform_10(%arg0: i32) -> (i32, i32, i32) {
    %c0_i32 = arith.constant 0 : i32
    %c0_i32_0 = arith.constant 0 : i32
    %c0_i32_1 = arith.constant 0 : i32
    return %c0_i32, %arg0, %c0_i32_0 : i32, i32, i32
  }
}

</mosaic_0001>

<llo_original>
// kernel: tpu_custom_call.1
$region0: #{tpu_custom_call.1}
  #allocation0 [shape = 'u32[]', space=smem, size = 0x4, offset = 0x4, fixed_abs, tag = 'smem constant byte address 0x4 - core index']
  #allocation1 [shape = 'u32[144,128]{1,0:T(1,128)}', space=vmem, size = 0x12000, scoped, tag = 'internal scratch']
  %s0 = inlined_call_operand.hbm [shape: f32[8,128,128], index: 0, kind: input, shape index: {}]
  %s1 = inlined_call_operand.vmem [shape: f32[8,32], index: 1, kind: input, shape index: {}]
  %s2 = inlined_call_operand.vmem [shape: f32[8,128], index: 2, kind: input, shape index: {}]
  %s3 = inlined_call_operand.vmem [shape: bf16[32,128], index: 3, kind: input, shape index: {}]
  %s4 = inlined_call_operand.vmem [shape: bf16[128,128], index: 4, kind: input, shape index: {}]
  %s5 = inlined_call_operand.vmem [shape: f32[1,128], index: 5, kind: input, shape index: {}]
  %s6 = inlined_call_operand.vmem [shape: bf16[128,96], index: 6, kind: input, shape index: {}]
  %s7 = inlined_call_operand.vmem [shape: bf16[32,96], index: 7, kind: input, shape index: {}]
  %s8 = inlined_call_operand.vmem [shape: f32[1,96], index: 8, kind: input, shape index: {}]
  %s9 = inlined_call_operand.vmem [shape: f32[1,96], index: 9, kind: input, shape index: {}]
  %s10 = inlined_call_operand.hbm [shape: f32[2,8,128], index: 10, kind: output, shape index: {}]
  %s11 = sld [smem:[#allocation0]]
  $region54: #{tpu_custom_call.1} parent=0
    _
  %s13 = ssub.s32 1, %s11
  %s14 = scalar_select 0, %s13, %s11
  $region1: #{tpu_custom_call.1} parent=0
    #allocation2 [shape = 'u8[524288]{0}', space=vmem, size = 0x80000, scoped, tag = 'input window, operand 0, single buffered']
    #allocation3 [shape = 's32[1]{0}', space=sflag, size = 0x4, scoped, tag = 'scoped memory for tpu_custom_call.1']
    #allocation4 [shape = 's32[1]{0}', space=sflag, size = 0x4, scoped, tag = 'scoped memory for tpu_custom_call.1']
    #allocation5 [shape = 'u8[8192]{0}', space=vmem, size = 0x2000, scoped, tag = 'output window, operand 0, single buffered']
    %15 = vsyncpa [#allocation3], 0
    %16 = vsyncpa [#allocation4], 0
    // Predicated region
    $region2: #{tpu_custom_call.1} parent=1 // pred_check
      _
    $region3: #{tpu_custom_call.1} parent=1 // pred_check_branch
      %18 = sbr.rel (0) target = $region5
    $region4: #{tpu_custom_call.1} parent=1 // pred_region
      %s20 = ssub.s32 16384, 16384
      %21 = vsyncadd [#allocation3], %s20
      %s22 = sshll.u32 [#allocation2], 4
      %s23 = int_to_ptr.vmem [resolvable:$true] %s22
      %28 = dma.hbm_to_vmem [thread:$0]  %s0, 16384, %s23, [#allocation3], 128, 128, 8
    $region5: #{tpu_custom_call.1} parent=1 // pred_fallthru
      _
    // Predicated region
    $region6: #{tpu_custom_call.1} parent=1 // pred_check
      _
    $region7: #{tpu_custom_call.1} parent=1 // pred_check_branch
      %30 = sbr.rel (0) target = $region9
    $region8: #{tpu_custom_call.1} parent=1 // pred_region
      _
    $region9: #{tpu_custom_call.1} parent=1 // pred_fallthru
      _
    // Predicated region
    $region10: #{tpu_custom_call.1} parent=1 // pred_check
      _
    $region11: #{tpu_custom_call.1} parent=1 // pred_check_branch
      %32 = sbr.rel (0) target = $region13
    $region12: #{tpu_custom_call.1} parent=1 // pred_region
      _
    $region13: #{tpu_custom_call.1} parent=1 // pred_fallthru
      _
    // Predicated region
    $region14: #{tpu_custom_call.1} parent=1 // pred_check
      _
    $region15: #{tpu_custom_call.1} parent=1 // pred_check_branch
      %34 = sbr.rel (0) target = $region17
    $region16: #{tpu_custom_call.1} parent=1 // pred_region
      _
    $region17: #{tpu_custom_call.1} parent=1 // pred_fallthru
      _
    // Predicated region
    $region18: #{tpu_custom_call.1} parent=1 // pred_check
      _
    $region19: #{tpu_custom_call.1} parent=1 // pred_check_branch
      %36 = sbr.rel (0) target = $region21
    $region20: #{tpu_custom_call.1} parent=1 // pred_region
      _
    $region21: #{tpu_custom_call.1} parent=1 // pred_fallthru
      _
    // Predicated region
    $region22: #{tpu_custom_call.1} parent=1 // pred_check
      _
    $region23: #{tpu_custom_call.1} parent=1 // pred_check_branch
      %38 = sbr.rel (0) target = $region25
    $region24: #{tpu_custom_call.1} parent=1 // pred_region
      _
    $region25: #{tpu_custom_call.1} parent=1 // pred_fallthru
      _
    // Predicated region
    $region26: #{tpu_custom_call.1} parent=1 // pred_check
      _
    $region27: #{tpu_custom_call.1} parent=1 // pred_check_branch
      %40 = sbr.rel (0) target = $region29
    $region28: #{tpu_custom_call.1} parent=1 // pred_region
      _
    $region29: #{tpu_custom_call.1} parent=1 // pred_fallthru
      _
    // Predicated region
    $region30: #{tpu_custom_call.1} parent=1 // pred_check
      _
    $region31: #{tpu_custom_call.1} parent=1 // pred_check_branch
      %42 = sbr.rel (0) target = $region33
    $region32: #{tpu_custom_call.1} parent=1 // pred_region
      _
    $region33: #{tpu_custom_call.1} parent=1 // pred_fallthru
      _
    // Predicated region
    $region34: #{tpu_custom_call.1} parent=1 // pred_check
      _
    $region35: #{tpu_custom_call.1} parent=1 // pred_check_branch
      %44 = sbr.rel (0) target = $region37
    $region36: #{tpu_custom_call.1} parent=1 // pred_region
      _
    $region37: #{tpu_custom_call.1} parent=1 // pred_fallthru
      _
    // Predicated region
    $region38: #{tpu_custom_call.1} parent=1 // pred_check
      _
    $region39: #{tpu_custom_call.1} parent=1 // pred_check_branch
      %46 = sbr.rel (0) target = $region41
    $region40: #{tpu_custom_call.1} parent=1 // pred_region
      _
    $region41: #{tpu_custom_call.1} parent=1 // pred_fallthru
      _
    // Predicated region
    $region42: #{tpu_custom_call.1} parent=1 // pred_check
      _
    $region43: #{tpu_custom_call.1} parent=1 // pred_check_branch
      %48 = sbr.rel (0) target = $region45
    $region44: #{tpu_custom_call.1} parent=1 // pred_region
      %49 = dma.done [#allocation3], 16384
    $region45: #{tpu_custom_call.1} parent=1 // pred_fallthru
      _
    %v51 = vld [vmem:[#allocation2] sm:$0xff]
    %v52 = vld [vmem:[#allocation2 + $0x8] sm:$0xff]
    %v53 = vld [vmem:[#allocation2 + $0x10] sm:$0xff]
    %v54 = vld [vmem:[#allocation2 + $0x18] sm:$0xff]
    %v55 = vld [vmem:[#allocation2 + $0x20] sm:$0xff]
    %v56 = vld [vmem:[#allocation2 + $0x28] sm:$0xff]
    %v57 = vld [vmem:[#allocation2 + $0x30] sm:$0xff]
    %v58 = vld [vmem:[#allocation2 + $0x38] sm:$0xff]
    %v59 = vld [vmem:[#allocation2 + $0x40] sm:$0xff]
    %v60 = vld [vmem:[#allocation2 + $0x48] sm:$0xff]
    %v61 = vld [vmem:[#allocation2 + $0x50] sm:$0xff]
    %v62 = vld [vmem:[#allocation2 + $0x58] sm:$0xff]
    %v63 = vld [vmem:[#allocation2 + $0x60] sm:$0xff]
    %v64 = vld [vmem:[#allocation2 + $0x68] sm:$0xff]
    %v65 = vld [vmem:[#allocation2 + $0x70] sm:$0xff]
    %v66 = vld [vmem:[#allocation2 + $0x78] sm:$0xff]
    %v67 = vld [vmem:[#allocation2 + $0x80] sm:$0xff]
    %v68 = vld [vmem:[#allocation2 + $0x88] sm:$0xff]
    %v69 = vld [vmem:[#allocation2 + $0x90] sm:$0xff]
    %v70 = vld [vmem:[#allocation2 + $0x98] sm:$0xff]
    %v71 = vld [vmem:[#allocation2 + $0xa0] sm:$0xff]
    %v72 = vld [vmem:[#allocation2 + $0xa8] sm:$0xff]
    %v73 = vld [vmem:[#allocation2 + $0xb0] sm:$0xff]
    %v74 = vld [vmem:[#allocation2 + $0xb8] sm:$0xff]
    %v75 = vld [vmem:[#allocation2 + $0xc0] sm:$0xff]
    %v76 = vld [vmem:[#allocation2 + $0xc8] sm:$0xff]
    %v77 = vld [vmem:[#allocation2 + $0xd0] sm:$0xff]
    %v78 = vld [vmem:[#allocation2 + $0xd8] sm:$0xff]
    %v79 = vld [vmem:[#allocation2 + $0xe0] sm:$0xff]
    %v80 = vld [vmem:[#allocation2 + $0xe8] sm:$0xff]
    %v81 = vld [vmem:[#allocation2 + $0xf0] sm:$0xff]
    %v82 = vld [vmem:[#allocation2 + $0xf8] sm:$0xff]
    %v83 = vld [vmem:[#allocation2 + $0x100] sm:$0xff]
    %v84 = vld [vmem:[#allocation2 + $0x108] sm:$0xff]
    %v85 = vld [vmem:[#allocation2 + $0x110] sm:$0xff]
    %v86 = vld [vmem:[#allocation2 + $0x118] sm:$0xff]
    %v87 = vld [vmem:[#allocation2 + $0x120] sm:$0xff]
    %v88 = vld [vmem:[#allocation2 + $0x128] sm:$0xff]
    %v89 = vld [vmem:[#allocation2 + $0x130] sm:$0xff]
    %v90 = vld [vmem:[#allocation2 + $0x138] sm:$0xff]
    %v91 = vld [vmem:[#allocation2 + $0x140] sm:$0xff]
    %v92 = vld [vmem:[#allocation2 + $0x148] sm:$0xff]
    %v93 = vld [vmem:[#allocation2 + $0x150] sm:$0xff]
    %v94 = vld [vmem:[#allocation2 + $0x158] sm:$0xff]
    %v95 = vld [vmem:[#allocation2 + $0x160] sm:$0xff]
    %v96 = vld [vmem:[#allocation2 + $0x168] sm:$0xff]
    %v97 = vld [vmem:[#allocation2 + $0x170] sm:$0xff]
    %v98 = vld [vmem:[#allocation2 + $0x178] sm:$0xff]
    %v99 = vld [vmem:[#allocation2 + $0x180] sm:$0xff]
    %v100 = vld [vmem:[#allocation2 + $0x188] sm:$0xff]
    %v101 = vld [vmem:[#allocation2 + $0x190] sm:$0xff]
    %v102 = vld [vmem:[#allocation2 + $0x198] sm:$0xff]
    %v103 = vld [vmem:[#allocation2 + $0x1a0] sm:$0xff]
    %v104 = vld [vmem:[#allocation2 + $0x1a8] sm:$0xff]
    %v105 = vld [vmem:[#allocation2 + $0x1b0] sm:$0xff]
    %v106 = vld [vmem:[#allocation2 + $0x1b8] sm:$0xff]
    %v107 = vld [vmem:[#allocation2 + $0x1c0] sm:$0xff]
    %v108 = vld [vmem:[#allocation2 + $0x1c8] sm:$0xff]
    %v109 = vld [vmem:[#allocation2 + $0x1d0] sm:$0xff]
    %v110 = vld [vmem:[#allocation2 + $0x1d8] sm:$0xff]
    %v111 = vld [vmem:[#allocation2 + $0x1e0] sm:$0xff]
    %v112 = vld [vmem:[#allocation2 + $0x1e8] sm:$0xff]
    %v113 = vld [vmem:[#allocation2 + $0x1f0] sm:$0xff]
    %v114 = vld [vmem:[#allocation2 + $0x1f8] sm:$0xff]
    %v115 = vld [vmem:[#allocation2 + $0x200] sm:$0xff]
    %v116 = vld [vmem:[#allocation2 + $0x208] sm:$0xff]
    %v117 = vld [vmem:[#allocation2 + $0x210] sm:$0xff]
    %v118 = vld [vmem:[#allocation2 + $0x218] sm:$0xff]
    %v119 = vld [vmem:[#allocation2 + $0x220] sm:$0xff]
    %v120 = vld [vmem:[#allocation2 + $0x228] sm:$0xff]
    %v121 = vld [vmem:[#allocation2 + $0x230] sm:$0xff]
    %v122 = vld [vmem:[#allocation2 + $0x238] sm:$0xff]
    %v123 = vld [vmem:[#allocation2 + $0x240] sm:$0xff]
    %v124 = vld [vmem:[#allocation2 + $0x248] sm:$0xff]
    %v125 = vld [vmem:[#allocation2 + $0x250] sm:$0xff]
    %v126 = vld [vmem:[#allocation2 + $0x258] sm:$0xff]
    %v127 = vld [vmem:[#allocation2 + $0x260] sm:$0xff]
    %v128 = vld [vmem:[#allocation2 + $0x268] sm:$0xff]
    %v129 = vld [vmem:[#allocation2 + $0x270] sm:$0xff]
    %v130 = vld [vmem:[#allocation2 + $0x278] sm:$0xff]
    %v131 = vld [vmem:[#allocation2 + $0x280] sm:$0xff]
    %v132 = vld [vmem:[#allocation2 + $0x288] sm:$0xff]
    %v133 = vld [vmem:[#allocation2 + $0x290] sm:$0xff]
    %v134 = vld [vmem:[#allocation2 + $0x298] sm:$0xff]
    %v135 = vld [vmem:[#allocation2 + $0x2a0] sm:$0xff]
    %v136 = vld [vmem:[#allocation2 + $0x2a8] sm:$0xff]
    %v137 = vld [vmem:[#allocation2 + $0x2b0] sm:$0xff]
    %v138 = vld [vmem:[#allocation2 + $0x2b8] sm:$0xff]
    %v139 = vld [vmem:[#allocation2 + $0x2c0] sm:$0xff]
    %v140 = vld [vmem:[#allocation2 + $0x2c8] sm:$0xff]
    %v141 = vld [vmem:[#allocation2 + $0x2d0] sm:$0xff]
    %v142 = vld [vmem:[#allocation2 + $0x2d8] sm:$0xff]
    %v143 = vld [vmem:[#allocation2 + $0x2e0] sm:$0xff]
    %v144 = vld [vmem:[#allocation2 + $0x2e8] sm:$0xff]
    %v145 = vld [vmem:[#allocation2 + $0x2f0] sm:$0xff]
    %v146 = vld [vmem:[#allocation2 + $0x2f8] sm:$0xff]
    %v147 = vld [vmem:[#allocation2 + $0x300] sm:$0xff]
    %v148 = vld [vmem:[#allocation2 + $0x308] sm:$0xff]
    %v149 = vld [vmem:[#allocation2 + $0x310] sm:$0xff]
    %v150 = vld [vmem:[#allocation2 + $0x318] sm:$0xff]
    %v151 = vld [vmem:[#allocation2 + $0x320] sm:$0xff]
    %v152 = vld [vmem:[#allocation2 + $0x328] sm:$0xff]
    %v153 = vld [vmem:[#allocation2 + $0x330] sm:$0xff]
    %v154 = vld [vmem:[#allocation2 + $0x338] sm:$0xff]
    %v155 = vld [vmem:[#allocation2 + $0x340] sm:$0xff]
    %v156 = vld [vmem:[#allocation2 + $0x348] sm:$0xff]
    %v157 = vld [vmem:[#allocation2 + $0x350] sm:$0xff]
    %v158 = vld [vmem:[#allocation2 + $0x358] sm:$0xff]
    %v159 = vld [vmem:[#allocation2 + $0x360] sm:$0xff]
    %v160 = vld [vmem:[#allocation2 + $0x368] sm:$0xff]
    %v161 = vld [vmem:[#allocation2 + $0x370] sm:$0xff]
    %v162 = vld [vmem:[#allocation2 + $0x378] sm:$0xff]
    %v163 = vld [vmem:[#allocation2 + $0x380] sm:$0xff]
    %v164 = vld [vmem:[#allocation2 + $0x388] sm:$0xff]
    %v165 = vld [vmem:[#allocation2 + $0x390] sm:$0xff]
    %v166 = vld [vmem:[#allocation2 + $0x398] sm:$0xff]
    %v167 = vld [vmem:[#allocation2 + $0x3a0] sm:$0xff]
    %v168 = vld [vmem:[#allocation2 + $0x3a8] sm:$0xff]
    %v169 = vld [vmem:[#allocation2 + $0x3b0] sm:$0xff]
    %v170 = vld [vmem:[#allocation2 + $0x3b8] sm:$0xff]
    %v171 = vld [vmem:[#allocation2 + $0x3c0] sm:$0xff]
    %v172 = vld [vmem:[#allocation2 + $0x3c8] sm:$0xff]
    %v173 = vld [vmem:[#allocation2 + $0x3d0] sm:$0xff]
    %v174 = vld [vmem:[#allocation2 + $0x3d8] sm:$0xff]
    %v175 = vld [vmem:[#allocation2 + $0x3e0] sm:$0xff]
    %v176 = vld [vmem:[#allocation2 + $0x3e8] sm:$0xff]
    %v177 = vld [vmem:[#allocation2 + $0x3f0] sm:$0xff]
    %v178 = vld [vmem:[#allocation2 + $0x3f8] sm:$0xff]
    %v179 = vpack.c.bf16 %v52, %v51
    %v180 = vpack.c.bf16 %v54, %v53
    %v181 = vpack.c.bf16 %v56, %v55
    %v182 = vpack.c.bf16 %v58, %v57
    %v183 = vpack.c.bf16 %v60, %v59
    %v184 = vpack.c.bf16 %v62, %v61
    %v185 = vpack.c.bf16 %v64, %v63
    %v186 = vpack.c.bf16 %v66, %v65
    %v187 = vpack.c.bf16 %v68, %v67
    %v188 = vpack.c.bf16 %v70, %v69
    %v189 = vpack.c.bf16 %v72, %v71
    %v190 = vpack.c.bf16 %v74, %v73
    %v191 = vpack.c.bf16 %v76, %v75
    %v192 = vpack.c.bf16 %v78, %v77
    %v193 = vpack.c.bf16 %v80, %v79
    %v194 = vpack.c.bf16 %v82, %v81
    %v195 = vpack.c.bf16 %v84, %v83
    %v196 = vpack.c.bf16 %v86, %v85
    %v197 = vpack.c.bf16 %v88, %v87
    %v198 = vpack.c.bf16 %v90, %v89
    %v199 = vpack.c.bf16 %v92, %v91
    %v200 = vpack.c.bf16 %v94, %v93
    %v201 = vpack.c.bf16 %v96, %v95
    %v202 = vpack.c.bf16 %v98, %v97
    %v203 = vpack.c.bf16 %v100, %v99
    %v204 = vpack.c.bf16 %v102, %v101
    %v205 = vpack.c.bf16 %v104, %v103
    %v206 = vpack.c.bf16 %v106, %v105
    %v207 = vpack.c.bf16 %v108, %v107
    %v208 = vpack.c.bf16 %v110, %v109
    %v209 = vpack.c.bf16 %v112, %v111
    %v210 = vpack.c.bf16 %v114, %v113
    %v211 = vpack.c.bf16 %v116, %v115
    %v212 = vpack.c.bf16 %v118, %v117
    %v213 = vpack.c.bf16 %v120, %v119
    %v214 = vpack.c.bf16 %v122, %v121
    %v215 = vpack.c.bf16 %v124, %v123
    %v216 = vpack.c.bf16 %v126, %v125
    %v217 = vpack.c.bf16 %v128, %v127
    %v218 = vpack.c.bf16 %v130, %v129
    %v219 = vpack.c.bf16 %v132, %v131
    %v220 = vpack.c.bf16 %v134, %v133
    %v221 = vpack.c.bf16 %v136, %v135
    %v222 = vpack.c.bf16 %v138, %v137
    %v223 = vpack.c.bf16 %v140, %v139
    %v224 = vpack.c.bf16 %v142, %v141
    %v225 = vpack.c.bf16 %v144, %v143
    %v226 = vpack.c.bf16 %v146, %v145
    %v227 = vpack.c.bf16 %v148, %v147
    %v228 = vpack.c.bf16 %v150, %v149
    %v229 = vpack.c.bf16 %v152, %v151
    %v230 = vpack.c.bf16 %v154, %v153
    %v231 = vpack.c.bf16 %v156, %v155
    %v232 = vpack.c.bf16 %v158, %v157
    %v233 = vpack.c.bf16 %v160, %v159
    %v234 = vpack.c.bf16 %v162, %v161
    %v235 = vpack.c.bf16 %v164, %v163
    %v236 = vpack.c.bf16 %v166, %v165
    %v237 = vpack.c.bf16 %v168, %v167
    %v238 = vpack.c.bf16 %v170, %v169
    %v239 = vpack.c.bf16 %v172, %v171
    %v240 = vpack.c.bf16 %v174, %v173
    %v241 = vpack.c.bf16 %v176, %v175
    %v242 = vpack.c.bf16 %v178, %v177
    %v243 = vld [vmem:[%s1] sm:$0xff]
    %v244 = vld [vmem:[%s2] sm:$0xff]
    %v245 = vld [vmem:[%s3] sm:$0xf]
    %v246 = vld [vmem:[%s3 + $0x4] sm:$0xf]
    %v247 = vld [vmem:[%s3 + $0x8] sm:$0xf]
    %v248 = vld [vmem:[%s3 + $0xc] sm:$0xf]
    %v249 = vld [vmem:[%s4] sm:$0xf]
    %v250 = vld [vmem:[%s4 + $0x4] sm:$0xf]
    %v251 = vld [vmem:[%s4 + $0x8] sm:$0xf]
    %v252 = vld [vmem:[%s4 + $0xc] sm:$0xf]
    %v253 = vld [vmem:[%s4 + $0x10] sm:$0xf]
    %v254 = vld [vmem:[%s4 + $0x14] sm:$0xf]
    %v255 = vld [vmem:[%s4 + $0x18] sm:$0xf]
    %v256 = vld [vmem:[%s4 + $0x1c] sm:$0xf]
    %v257 = vld [vmem:[%s4 + $0x20] sm:$0xf]
    %v258 = vld [vmem:[%s4 + $0x24] sm:$0xf]
    %v259 = vld [vmem:[%s4 + $0x28] sm:$0xf]
    %v260 = vld [vmem:[%s4 + $0x2c] sm:$0xf]
    %v261 = vld [vmem:[%s4 + $0x30] sm:$0xf]
    %v262 = vld [vmem:[%s4 + $0x34] sm:$0xf]
    %v263 = vld [vmem:[%s4 + $0x38] sm:$0xf]
    %v264 = vld [vmem:[%s4 + $0x3c] sm:$0xf]
    %v265 = vld [vmem:[%s5] sm:$0x1]
    %v266 = vsub.f32 1.0, %v244
    %v267 = vmul.f32 %v266, -1e+30
    %v284 = vunpack.c.l.b16 %v249
    %v285 = vunpack.c.l.b16 %v250
    %v286 = vunpack.c.l.b16 %v251
    %v287 = vunpack.c.l.b16 %v252
    %v288 = vunpack.c.l.b16 %v253
    %v289 = vunpack.c.l.b16 %v254
    %v290 = vunpack.c.l.b16 %v255
    %v291 = vunpack.c.l.b16 %v256
    %v292 = vunpack.c.l.b16 %v257
    %v293 = vunpack.c.l.b16 %v258
    %v294 = vunpack.c.l.b16 %v259
    %v295 = vunpack.c.l.b16 %v260
    %v296 = vunpack.c.l.b16 %v261
    %v297 = vunpack.c.l.b16 %v262
    %v298 = vunpack.c.l.b16 %v263
    %v299 = vunpack.c.l.b16 %v264
    %v300 = vpack.c.b16 %v285, %v284
    %v301 = vpack.c.b16 %v287, %v286
    %v302 = vpack.c.b16 %v289, %v288
    %v303 = vpack.c.b16 %v291, %v290
    %v304 = vpack.c.b16 %v293, %v292
    %v305 = vpack.c.b16 %v295, %v294
    %v306 = vpack.c.b16 %v297, %v296
    %v307 = vpack.c.b16 %v299, %v298
    %316 = vmatprep.subr.bf16.mxu0 0
    %317 = vmatpush1.bf16.msra.mxu0 %v307
    %318 = vmatprep.subr.bf16.mxu0 0
    %319 = vmatpush1.bf16.msra.mxu0 %v306
    %320 = vmatprep.subr.bf16.mxu0 0
    %321 = vmatpush1.bf16.msra.mxu0 %v305
    %322 = vmatprep.subr.bf16.mxu0 0
    %323 = vmatpush1.bf16.msra.mxu0 %v304
    %324 = vmatprep.subr.bf16.mxu0 0
    %325 = vmatpush1.bf16.msra.mxu0 %v303
    %326 = vmatprep.subr.bf16.mxu0 0
    %327 = vmatpush1.bf16.msra.mxu0 %v302
    %328 = vmatprep.subr.bf16.mxu0 0
    %329 = vmatpush1.bf16.msra.mxu0 %v301
    %330 = vmatprep.subr.bf16.mxu0 0
    %331 = vmatpush1.bf16.msra.mxu0 %v300
    %332 = vmatprep.subr.bf16.mxu0 0
    %333 = vmatpush2.bf16.msra.mxu0 0
    %334 = vmatprep.subr.bf16.mxu0 0
    %335 = vmatpush2.bf16.msra.mxu0 0
    %336 = vmatprep.subr.bf16.mxu0 0
    %337 = vmatpush2.bf16.msra.mxu0 0
    %338 = vmatprep.subr.bf16.mxu0 0
    %339 = vmatpush2.bf16.msra.mxu0 0
    %340 = vmatprep.subr.bf16.mxu0 0
    %341 = vmatpush2.bf16.msra.mxu0 0
    %342 = vmatprep.subr.bf16.mxu0 0
    %343 = vmatpush2.bf16.msra.mxu0 0
    %344 = vmatprep.subr.bf16.mxu0 0
    %345 = vmatpush2.bf16.msra.mxu0 0
    %346 = vmatprep.subr.bf16.mxu0 0
    %347 = vmatpush2.bf16.msra.mxu0 0
    %348 = vmatprep.mubr.bf16.mxu0 0
    %349 = vmatmul.mubr.bf16.gmra.mxu0 %v179
    %v350 = vpop.f32.mrf.mxu0
    %v351 = vadd.f32 0.0, %v350
    %v352 = vpop.f32.mrf.mxu0
    %v353 = vpop.f32.mrf.mxu0
    %v354 = vadd.f32 0.0, %v353
    %v355 = vpop.f32.mrf.mxu0
    %356 = vmatprep.mubr.bf16.mxu0 0
    %357 = vmatmul.mubr.bf16.gmra.mxu0 %v180
    %v358 = vpop.f32.mrf.mxu0
    %v359 = vadd.f32 0.0, %v358
    %v360 = vpop.f32.mrf.mxu0
    %v361 = vpop.f32.mrf.mxu0
    %v362 = vadd.f32 0.0, %v361
    %v363 = vpop.f32.mrf.mxu0
    %364 = vmatprep.mubr.bf16.mxu0 0
    %365 = vmatmul.mubr.bf16.gmra.mxu0 %v181
    %v366 = vpop.f32.mrf.mxu0
    %v367 = vadd.f32 0.0, %v366
    %v368 = vpop.f32.mrf.mxu0
    %v369 = vpop.f32.mrf.mxu0
    %v370 = vadd.f32 0.0, %v369
    %v371 = vpop.f32.mrf.mxu0
    %372 = vmatprep.mubr.bf16.mxu0 0
    %373 = vmatmul.mubr.bf16.gmra.mxu0 %v182
    %v374 = vpop.f32.mrf.mxu0
    %v375 = vadd.f32 0.0, %v374
    %v376 = vpop.f32.mrf.mxu0
    %v377 = vpop.f32.mrf.mxu0
    %v378 = vadd.f32 0.0, %v377
    %v379 = vpop.f32.mrf.mxu0
    %380 = vmatprep.mubr.bf16.mxu0 0
    %381 = vmatmul.mubr.bf16.gmra.mxu0 %v183
    %v382 = vpop.f32.mrf.mxu0
    %v383 = vadd.f32 0.0, %v382
    %v384 = vpop.f32.mrf.mxu0
    %v385 = vpop.f32.mrf.mxu0
    %v386 = vadd.f32 0.0, %v385
    %v387 = vpop.f32.mrf.mxu0
    %388 = vmatprep.mubr.bf16.mxu0 0
    %389 = vmatmul.mubr.bf16.gmra.mxu0 %v184
    %v390 = vpop.f32.mrf.mxu0
    %v391 = vadd.f32 0.0, %v390
    %v392 = vpop.f32.mrf.mxu0
    %v393 = vpop.f32.mrf.mxu0
    %v394 = vadd.f32 0.0, %v393
    %v395 = vpop.f32.mrf.mxu0
    %396 = vmatprep.mubr.bf16.mxu0 0
    %397 = vmatmul.mubr.bf16.gmra.mxu0 %v185
    %v398 = vpop.f32.mrf.mxu0
    %v399 = vadd.f32 0.0, %v398
    %v400 = vpop.f32.mrf.mxu0
    %v401 = vpop.f32.mrf.mxu0
    %v402 = vadd.f32 0.0, %v401
    %v403 = vpop.f32.mrf.mxu0
    %404 = vmatprep.mubr.bf16.mxu0 0
    %405 = vmatmul.mubr.bf16.gmra.mxu0 %v186
    %v406 = vpop.f32.mrf.mxu0
    %v407 = vadd.f32 0.0, %v406
    %v408 = vpop.f32.mrf.mxu0
    %v409 = vpop.f32.mrf.mxu0
    %v410 = vadd.f32 0.0, %v409
    %v411 = vpop.f32.mrf.mxu0
    %412 = vmatprep.mubr.bf16.mxu0 0
    %413 = vmatmul.mubr.bf16.gmra.mxu0 %v187
    %v414 = vpop.f32.mrf.mxu0
    %v415 = vadd.f32 0.0, %v414
    %v416 = vpop.f32.mrf.mxu0
    %v417 = vpop.f32.mrf.mxu0
    %v418 = vadd.f32 0.0, %v417
    %v419 = vpop.f32.mrf.mxu0
    %420 = vmatprep.mubr.bf16.mxu0 0
    %421 = vmatmul.mubr.bf16.gmra.mxu0 %v188
    %v422 = vpop.f32.mrf.mxu0
    %v423 = vadd.f32 0.0, %v422
    %v424 = vpop.f32.mrf.mxu0
    %v425 = vpop.f32.mrf.mxu0
    %v426 = vadd.f32 0.0, %v425
    %v427 = vpop.f32.mrf.mxu0
    %428 = vmatprep.mubr.bf16.mxu0 0
    %429 = vmatmul.mubr.bf16.gmra.mxu0 %v189
    %v430 = vpop.f32.mrf.mxu0
    %v431 = vadd.f32 0.0, %v430
    %v432 = vpop.f32.mrf.mxu0
    %v433 = vpop.f32.mrf.mxu0
    %v434 = vadd.f32 0.0, %v433
    %v435 = vpop.f32.mrf.mxu0
    %436 = vmatprep.mubr.bf16.mxu0 0
    %437 = vmatmul.mubr.bf16.gmra.mxu0 %v190
    %v438 = vpop.f32.mrf.mxu0
    %v439 = vadd.f32 0.0, %v438
    %v440 = vpop.f32.mrf.mxu0
    %v441 = vpop.f32.mrf.mxu0
    %v442 = vadd.f32 0.0, %v441
    %v443 = vpop.f32.mrf.mxu0
    %444 = vmatprep.mubr.bf16.mxu0 0
    %445 = vmatmul.mubr.bf16.gmra.mxu0 %v191
    %v446 = vpop.f32.mrf.mxu0
    %v447 = vadd.f32 0.0, %v446
    %v448 = vpop.f32.mrf.mxu0
    %v449 = vpop.f32.mrf.mxu0
    %v450 = vadd.f32 0.0, %v449
    %v451 = vpop.f32.mrf.mxu0
    %452 = vmatprep.mubr.bf16.mxu0 0
    %453 = vmatmul.mubr.bf16.gmra.mxu0 %v192
    %v454 = vpop.f32.mrf.mxu0
    %v455 = vadd.f32 0.0, %v454
    %v456 = vpop.f32.mrf.mxu0
    %v457 = vpop.f32.mrf.mxu0
    %v458 = vadd.f32 0.0, %v457
    %v459 = vpop.f32.mrf.mxu0
    %460 = vmatprep.mubr.bf16.mxu0 0
    %461 = vmatmul.mubr.bf16.gmra.mxu0 %v193
    %v462 = vpop.f32.mrf.mxu0
    %v463 = vadd.f32 0.0, %v462
    %v464 = vpop.f32.mrf.mxu0
    %v465 = vpop.f32.mrf.mxu0
    %v466 = vadd.f32 0.0, %v465
    %v467 = vpop.f32.mrf.mxu0
    %468 = vmatprep.mubr.bf16.mxu0 0
    %469 = vmatmul.mubr.bf16.gmra.mxu0 %v194
    %v470 = vpop.f32.mrf.mxu0
    %v471 = vadd.f32 0.0, %v470
    %v472 = vpop.f32.mrf.mxu0
    %v473 = vpop.f32.mrf.mxu0
    %v474 = vadd.f32 0.0, %v473
    %v475 = vpop.f32.mrf.mxu0
    %476 = vmatprep.mubr.bf16.mxu0 0
    %477 = vmatmul.mubr.bf16.gmra.mxu0 %v195
    %v478 = vpop.f32.mrf.mxu0
    %v479 = vadd.f32 0.0, %v478
    %v480 = vpop.f32.mrf.mxu0
    %v481 = vpop.f32.mrf.mxu0
    %v482 = vadd.f32 0.0, %v481
    %v483 = vpop.f32.mrf.mxu0
    %484 = vmatprep.mubr.bf16.mxu0 0
    %485 = vmatmul.mubr.bf16.gmra.mxu0 %v196
    %v486 = vpop.f32.mrf.mxu0
    %v487 = vadd.f32 0.0, %v486
    %v488 = vpop.f32.mrf.mxu0
    %v489 = vpop.f32.mrf.mxu0
    %v490 = vadd.f32 0.0, %v489
    %v491 = vpop.f32.mrf.mxu0
    %492 = vmatprep.mubr.bf16.mxu0 0
    %493 = vmatmul.mubr.bf16.gmra.mxu0 %v197
    %v494 = vpop.f32.mrf.mxu0
    %v495 = vadd.f32 0.0, %v494
    %v496 = vpop.f32.mrf.mxu0
    %v497 = vpop.f32.mrf.mxu0
    %v498 = vadd.f32 0.0, %v497
    %v499 = vpop.f32.mrf.mxu0
    %500 = vmatprep.mubr.bf16.mxu0 0
    %501 = vmatmul.mubr.bf16.gmra.mxu0 %v198
    %v502 = vpop.f32.mrf.mxu0
    %v503 = vadd.f32 0.0, %v502
    %v504 = vpop.f32.mrf.mxu0
    %v505 = vpop.f32.mrf.mxu0
    %v506 = vadd.f32 0.0, %v505
    %v507 = vpop.f32.mrf.mxu0
    %508 = vmatprep.mubr.bf16.mxu0 0
    %509 = vmatmul.mubr.bf16.gmra.mxu0 %v199
    %v510 = vpop.f32.mrf.mxu0
    %v511 = vadd.f32 0.0, %v510
    %v512 = vpop.f32.mrf.mxu0
    %v513 = vpop.f32.mrf.mxu0
    %v514 = vadd.f32 0.0, %v513
    %v515 = vpop.f32.mrf.mxu0
    %516 = vmatprep.mubr.bf16.mxu0 0
    %517 = vmatmul.mubr.bf16.gmra.mxu0 %v200
    %v518 = vpop.f32.mrf.mxu0
    %v519 = vadd.f32 0.0, %v518
    %v520 = vpop.f32.mrf.mxu0
    %v521 = vpop.f32.mrf.mxu0
    %v522 = vadd.f32 0.0, %v521
    %v523 = vpop.f32.mrf.mxu0
    %524 = vmatprep.mubr.bf16.mxu0 0
    %525 = vmatmul.mubr.bf16.gmra.mxu0 %v201
    %v526 = vpop.f32.mrf.mxu0
    %v527 = vadd.f32 0.0, %v526
    %v528 = vpop.f32.mrf.mxu0
    %v529 = vpop.f32.mrf.mxu0
    %v530 = vadd.f32 0.0, %v529
    %v531 = vpop.f32.mrf.mxu0
    %532 = vmatprep.mubr.bf16.mxu0 0
    %533 = vmatmul.mubr.bf16.gmra.mxu0 %v202
    %v534 = vpop.f32.mrf.mxu0
    %v535 = vadd.f32 0.0, %v534
    %v536 = vpop.f32.mrf.mxu0
    %v537 = vpop.f32.mrf.mxu0
    %v538 = vadd.f32 0.0, %v537
    %v539 = vpop.f32.mrf.mxu0
    %540 = vmatprep.mubr.bf16.mxu0 0
    %541 = vmatmul.mubr.bf16.gmra.mxu0 %v203
    %v542 = vpop.f32.mrf.mxu0
    %v543 = vadd.f32 0.0, %v542
    %v544 = vpop.f32.mrf.mxu0
    %v545 = vpop.f32.mrf.mxu0
    %v546 = vadd.f32 0.0, %v545
    %v547 = vpop.f32.mrf.mxu0
    %548 = vmatprep.mubr.bf16.mxu0 0
    %549 = vmatmul.mubr.bf16.gmra.mxu0 %v204
    %v550 = vpop.f32.mrf.mxu0
    %v551 = vadd.f32 0.0, %v550
    %v552 = vpop.f32.mrf.mxu0
    %v553 = vpop.f32.mrf.mxu0
    %v554 = vadd.f32 0.0, %v553
    %v555 = vpop.f32.mrf.mxu0
    %556 = vmatprep.mubr.bf16.mxu0 0
    %557 = vmatmul.mubr.bf16.gmra.mxu0 %v205
    %v558 = vpop.f32.mrf.mxu0
    %v559 = vadd.f32 0.0, %v558
    %v560 = vpop.f32.mrf.mxu0
    %v561 = vpop.f32.mrf.mxu0
    %v562 = vadd.f32 0.0, %v561
    %v563 = vpop.f32.mrf.mxu0
    %564 = vmatprep.mubr.bf16.mxu0 0
    %565 = vmatmul.mubr.bf16.gmra.mxu0 %v206
    %v566 = vpop.f32.mrf.mxu0
    %v567 = vadd.f32 0.0, %v566
    %v568 = vpop.f32.mrf.mxu0
    %v569 = vpop.f32.mrf.mxu0
    %v570 = vadd.f32 0.0, %v569
    %v571 = vpop.f32.mrf.mxu0
    %572 = vmatprep.mubr.bf16.mxu0 0
    %573 = vmatmul.mubr.bf16.gmra.mxu0 %v207
    %v574 = vpop.f32.mrf.mxu0
    %v575 = vadd.f32 0.0, %v574
    %v576 = vpop.f32.mrf.mxu0
    %v577 = vpop.f32.mrf.mxu0
    %v578 = vadd.f32 0.0, %v577
    %v579 = vpop.f32.mrf.mxu0
    %580 = vmatprep.mubr.bf16.mxu0 0
    %581 = vmatmul.mubr.bf16.gmra.mxu0 %v208
    %v582 = vpop.f32.mrf.mxu0
    %v583 = vadd.f32 0.0, %v582
    %v584 = vpop.f32.mrf.mxu0
    %v585 = vpop.f32.mrf.mxu0
    %v586 = vadd.f32 0.0, %v585
    %v587 = vpop.f32.mrf.mxu0
    %588 = vmatprep.mubr.bf16.mxu0 0
    %589 = vmatmul.mubr.bf16.gmra.mxu0 %v209
    %v590 = vpop.f32.mrf.mxu0
    %v591 = vadd.f32 0.0, %v590
    %v592 = vpop.f32.mrf.mxu0
    %v593 = vpop.f32.mrf.mxu0
    %v594 = vadd.f32 0.0, %v593
    %v595 = vpop.f32.mrf.mxu0
    %596 = vmatprep.mubr.bf16.mxu0 0
    %597 = vmatmul.mubr.bf16.gmra.mxu0 %v210
    %v598 = vpop.f32.mrf.mxu0
    %v599 = vadd.f32 0.0, %v598
    %v600 = vpop.f32.mrf.mxu0
    %v601 = vpop.f32.mrf.mxu0
    %v602 = vadd.f32 0.0, %v601
    %v603 = vpop.f32.mrf.mxu0
    %604 = vmatprep.mubr.bf16.mxu0 0
    %605 = vmatmul.mubr.bf16.gmra.mxu0 %v211
    %v606 = vpop.f32.mrf.mxu0
    %v607 = vadd.f32 0.0, %v606
    %v608 = vpop.f32.mrf.mxu0
    %v609 = vpop.f32.mrf.mxu0
    %v610 = vadd.f32 0.0, %v609
    %v611 = vpop.f32.mrf.mxu0
    %612 = vmatprep.mubr.bf16.mxu0 0
    %613 = vmatmul.mubr.bf16.gmra.mxu0 %v212
    %v614 = vpop.f32.mrf.mxu0
    %v615 = vadd.f32 0.0, %v614
    %v616 = vpop.f32.mrf.mxu0
    %v617 = vpop.f32.mrf.mxu0
    %v618 = vadd.f32 0.0, %v617
    %v619 = vpop.f32.mrf.mxu0
    %620 = vmatprep.mubr.bf16.mxu0 0
    %621 = vmatmul.mubr.bf16.gmra.mxu0 %v213
    %v622 = vpop.f32.mrf.mxu0
    %v623 = vadd.f32 0.0, %v622
    %v624 = vpop.f32.mrf.mxu0
    %v625 = vpop.f32.mrf.mxu0
    %v626 = vadd.f32 0.0, %v625
    %v627 = vpop.f32.mrf.mxu0
    %628 = vmatprep.mubr.bf16.mxu0 0
    %629 = vmatmul.mubr.bf16.gmra.mxu0 %v214
    %v630 = vpop.f32.mrf.mxu0
    %v631 = vadd.f32 0.0, %v630
    %v632 = vpop.f32.mrf.mxu0
    %v633 = vpop.f32.mrf.mxu0
    %v634 = vadd.f32 0.0, %v633
    %v635 = vpop.f32.mrf.mxu0
    %636 = vmatprep.mubr.bf16.mxu0 0
    %637 = vmatmul.mubr.bf16.gmra.mxu0 %v215
    %v638 = vpop.f32.mrf.mxu0
    %v639 = vadd.f32 0.0, %v638
    %v640 = vpop.f32.mrf.mxu0
    %v641 = vpop.f32.mrf.mxu0
    %v642 = vadd.f32 0.0, %v641
    %v643 = vpop.f32.mrf.mxu0
    %644 = vmatprep.mubr.bf16.mxu0 0
    %645 = vmatmul.mubr.bf16.gmra.mxu0 %v216
    %v646 = vpop.f32.mrf.mxu0
    %v647 = vadd.f32 0.0, %v646
    %v648 = vpop.f32.mrf.mxu0
    %v649 = vpop.f32.mrf.mxu0
    %v650 = vadd.f32 0.0, %v649
    %v651 = vpop.f32.mrf.mxu0
    %652 = vmatprep.mubr.bf16.mxu0 0
    %653 = vmatmul.mubr.bf16.gmra.mxu0 %v217
    %v654 = vpop.f32.mrf.mxu0
    %v655 = vadd.f32 0.0, %v654
    %v656 = vpop.f32.mrf.mxu0
    %v657 = vpop.f32.mrf.mxu0
    %v658 = vadd.f32 0.0, %v657
    %v659 = vpop.f32.mrf.mxu0
    %660 = vmatprep.mubr.bf16.mxu0 0
    %661 = vmatmul.mubr.bf16.gmra.mxu0 %v218
    %v662 = vpop.f32.mrf.mxu0
    %v663 = vadd.f32 0.0, %v662
    %v664 = vpop.f32.mrf.mxu0
    %v665 = vpop.f32.mrf.mxu0
    %v666 = vadd.f32 0.0, %v665
    %v667 = vpop.f32.mrf.mxu0
    %668 = vmatprep.mubr.bf16.mxu0 0
    %669 = vmatmul.mubr.bf16.gmra.mxu0 %v219
    %v670 = vpop.f32.mrf.mxu0
    %v671 = vadd.f32 0.0, %v670
    %v672 = vpop.f32.mrf.mxu0
    %v673 = vpop.f32.mrf.mxu0
    %v674 = vadd.f32 0.0, %v673
    %v675 = vpop.f32.mrf.mxu0
    %676 = vmatprep.mubr.bf16.mxu0 0
    %677 = vmatmul.mubr.bf16.gmra.mxu0 %v220
    %v678 = vpop.f32.mrf.mxu0
    %v679 = vadd.f32 0.0, %v678
    %v680 = vpop.f32.mrf.mxu0
    %v681 = vpop.f32.mrf.mxu0
    %v682 = vadd.f32 0.0, %v681
    %v683 = vpop.f32.mrf.mxu0
    %684 = vmatprep.mubr.bf16.mxu0 0
    %685 = vmatmul.mubr.bf16.gmra.mxu0 %v221
    %v686 = vpop.f32.mrf.mxu0
    %v687 = vadd.f32 0.0, %v686
    %v688 = vpop.f32.mrf.mxu0
    %v689 = vpop.f32.mrf.mxu0
    %v690 = vadd.f32 0.0, %v689
    %v691 = vpop.f32.mrf.mxu0
    %692 = vmatprep.mubr.bf16.mxu0 0
    %693 = vmatmul.mubr.bf16.gmra.mxu0 %v222
    %v694 = vpop.f32.mrf.mxu0
    %v695 = vadd.f32 0.0, %v694
    %v696 = vpop.f32.mrf.mxu0
    %v697 = vpop.f32.mrf.mxu0
    %v698 = vadd.f32 0.0, %v697
    %v699 = vpop.f32.mrf.mxu0
    %700 = vmatprep.mubr.bf16.mxu0 0
    %701 = vmatmul.mubr.bf16.gmra.mxu0 %v223
    %v702 = vpop.f32.mrf.mxu0
    %v703 = vadd.f32 0.0, %v702
    %v704 = vpop.f32.mrf.mxu0
    %v705 = vpop.f32.mrf.mxu0
    %v706 = vadd.f32 0.0, %v705
    %v707 = vpop.f32.mrf.mxu0
    %708 = vmatprep.mubr.bf16.mxu0 0
    %709 = vmatmul.mubr.bf16.gmra.mxu0 %v224
    %v710 = vpop.f32.mrf.mxu0
    %v711 = vadd.f32 0.0, %v710
    %v712 = vpop.f32.mrf.mxu0
    %v713 = vpop.f32.mrf.mxu0
    %v714 = vadd.f32 0.0, %v713
    %v715 = vpop.f32.mrf.mxu0
    %716 = vmatprep.mubr.bf16.mxu0 0
    %717 = vmatmul.mubr.bf16.gmra.mxu0 %v225
    %v718 = vpop.f32.mrf.mxu0
    %v719 = vadd.f32 0.0, %v718
    %v720 = vpop.f32.mrf.mxu0
    %v721 = vpop.f32.mrf.mxu0
    %v722 = vadd.f32 0.0, %v721
    %v723 = vpop.f32.mrf.mxu0
    %724 = vmatprep.mubr.bf16.mxu0 0
    %725 = vmatmul.mubr.bf16.gmra.mxu0 %v226
    %v726 = vpop.f32.mrf.mxu0
    %v727 = vadd.f32 0.0, %v726
    %v728 = vpop.f32.mrf.mxu0
    %v729 = vpop.f32.mrf.mxu0
    %v730 = vadd.f32 0.0, %v729
    %v731 = vpop.f32.mrf.mxu0
    %732 = vmatprep.mubr.bf16.mxu0 0
    %733 = vmatmul.mubr.bf16.gmra.mxu0 %v227
    %v734 = vpop.f32.mrf.mxu0
    %v735 = vadd.f32 0.0, %v734
    %v736 = vpop.f32.mrf.mxu0
    %v737 = vpop.f32.mrf.mxu0
    %v738 = vadd.f32 0.0, %v737
    %v739 = vpop.f32.mrf.mxu0
    %740 = vmatprep.mubr.bf16.mxu0 0
    %741 = vmatmul.mubr.bf16.gmra.mxu0 %v228
    %v742 = vpop.f32.mrf.mxu0
    %v743 = vadd.f32 0.0, %v742
    %v744 = vpop.f32.mrf.mxu0
    %v745 = vpop.f32.mrf.mxu0
    %v746 = vadd.f32 0.0, %v745
    %v747 = vpop.f32.mrf.mxu0
    %748 = vmatprep.mubr.bf16.mxu0 0
    %749 = vmatmul.mubr.bf16.gmra.mxu0 %v229
    %v750 = vpop.f32.mrf.mxu0
    %v751 = vadd.f32 0.0, %v750
    %v752 = vpop.f32.mrf.mxu0
    %v753 = vpop.f32.mrf.mxu0
    %v754 = vadd.f32 0.0, %v753
    %v755 = vpop.f32.mrf.mxu0
    %756 = vmatprep.mubr.bf16.mxu0 0
    %757 = vmatmul.mubr.bf16.gmra.mxu0 %v230
    %v758 = vpop.f32.mrf.mxu0
    %v759 = vadd.f32 0.0, %v758
    %v760 = vpop.f32.mrf.mxu0
    %v761 = vpop.f32.mrf.mxu0
    %v762 = vadd.f32 0.0, %v761
    %v763 = vpop.f32.mrf.mxu0
    %764 = vmatprep.mubr.bf16.mxu0 0
    %765 = vmatmul.mubr.bf16.gmra.mxu0 %v231
    %v766 = vpop.f32.mrf.mxu0
    %v767 = vadd.f32 0.0, %v766
    %v768 = vpop.f32.mrf.mxu0
    %v769 = vpop.f32.mrf.mxu0
    %v770 = vadd.f32 0.0, %v769
    %v771 = vpop.f32.mrf.mxu0
    %772 = vmatprep.mubr.bf16.mxu0 0
    %773 = vmatmul.mubr.bf16.gmra.mxu0 %v232
    %v774 = vpop.f32.mrf.mxu0
    %v775 = vadd.f32 0.0, %v774
    %v776 = vpop.f32.mrf.mxu0
    %v777 = vpop.f32.mrf.mxu0
    %v778 = vadd.f32 0.0, %v777
    %v779 = vpop.f32.mrf.mxu0
    %780 = vmatprep.mubr.bf16.mxu0 0
    %781 = vmatmul.mubr.bf16.gmra.mxu0 %v233
    %v782 = vpop.f32.mrf.mxu0
    %v783 = vadd.f32 0.0, %v782
    %v784 = vpop.f32.mrf.mxu0
    %v785 = vpop.f32.mrf.mxu0
    %v786 = vadd.f32 0.0, %v785
    %v787 = vpop.f32.mrf.mxu0
    %788 = vmatprep.mubr.bf16.mxu0 0
    %789 = vmatmul.mubr.bf16.gmra.mxu0 %v234
    %v790 = vpop.f32.mrf.mxu0
    %v791 = vadd.f32 0.0, %v790
    %v792 = vpop.f32.mrf.mxu0
    %v793 = vpop.f32.mrf.mxu0
    %v794 = vadd.f32 0.0, %v793
    %v795 = vpop.f32.mrf.mxu0
    %796 = vmatprep.mubr.bf16.mxu0 0
    %797 = vmatmul.mubr.bf16.gmra.mxu0 %v235
    %v798 = vpop.f32.mrf.mxu0
    %v799 = vadd.f32 0.0, %v798
    %v800 = vpop.f32.mrf.mxu0
    %v801 = vpop.f32.mrf.mxu0
    %v802 = vadd.f32 0.0, %v801
    %v803 = vpop.f32.mrf.mxu0
    %804 = vmatprep.mubr.bf16.mxu0 0
    %805 = vmatmul.mubr.bf16.gmra.mxu0 %v236
    %v806 = vpop.f32.mrf.mxu0
    %v807 = vadd.f32 0.0, %v806
    %v808 = vpop.f32.mrf.mxu0
    %v809 = vpop.f32.mrf.mxu0
    %v810 = vadd.f32 0.0, %v809
    %v811 = vpop.f32.mrf.mxu0
    %812 = vmatprep.mubr.bf16.mxu0 0
    %813 = vmatmul.mubr.bf16.gmra.mxu0 %v237
    %v814 = vpop.f32.mrf.mxu0
    %v815 = vadd.f32 0.0, %v814
    %v816 = vpop.f32.mrf.mxu0
    %v817 = vpop.f32.mrf.mxu0
    %v818 = vadd.f32 0.0, %v817
    %v819 = vpop.f32.mrf.mxu0
    %820 = vmatprep.mubr.bf16.mxu0 0
    %821 = vmatmul.mubr.bf16.gmra.mxu0 %v238
    %v822 = vpop.f32.mrf.mxu0
    %v823 = vadd.f32 0.0, %v822
    %v824 = vpop.f32.mrf.mxu0
    %v825 = vpop.f32.mrf.mxu0
    %v826 = vadd.f32 0.0, %v825
    %v827 = vpop.f32.mrf.mxu0
    %828 = vmatprep.mubr.bf16.mxu0 0
    %829 = vmatmul.mubr.bf16.gmra.mxu0 %v239
    %v830 = vpop.f32.mrf.mxu0
    %v831 = vadd.f32 0.0, %v830
    %v832 = vpop.f32.mrf.mxu0
    %v833 = vpop.f32.mrf.mxu0
    %v834 = vadd.f32 0.0, %v833
    %v835 = vpop.f32.mrf.mxu0
    %836 = vmatprep.mubr.bf16.mxu0 0
    %837 = vmatmul.mubr.bf16.gmra.mxu0 %v240
    %v838 = vpop.f32.mrf.mxu0
    %v839 = vadd.f32 0.0, %v838
    %v840 = vpop.f32.mrf.mxu0
    %v841 = vpop.f32.mrf.mxu0
    %v842 = vadd.f32 0.0, %v841
    %v843 = vpop.f32.mrf.mxu0
    %844 = vmatprep.mubr.bf16.mxu0 0
    %845 = vmatmul.mubr.bf16.gmra.mxu0 %v241
    %v846 = vpop.f32.mrf.mxu0
    %v847 = vadd.f32 0.0, %v846
    %v848 = vpop.f32.mrf.mxu0
    %v849 = vpop.f32.mrf.mxu0
    %v850 = vadd.f32 0.0, %v849
    %v851 = vpop.f32.mrf.mxu0
    %852 = vmatprep.mubr.bf16.mxu0 0
    %853 = vmatmul.mubr.bf16.gmra.mxu0 %v242
    %v854 = vpop.f32.mrf.mxu0
    %v855 = vadd.f32 0.0, %v854
    %v856 = vpop.f32.mrf.mxu0
    %v857 = vpop.f32.mrf.mxu0
    %v858 = vadd.f32 0.0, %v857
    %v859 = vpop.f32.mrf.mxu0
    %860 = vdwg.mxu0
    %v861 = vpack.c.bf16 %v243, %v243
    %v866 = vunpack.c.l.b16 %v245
    %v867 = vunpack.c.l.b16 %v246
    %v868 = vunpack.c.l.b16 %v247
    %v869 = vunpack.c.l.b16 %v248
    %v870 = vpack.c.b16 %v867, %v866
    %v871 = vpack.c.b16 %v869, %v868
    %vm874 = vcmask 261120
    %v876 = vsel %vm874, %v861, 0
    %878 = vmatprep.subr.bf16.mxu0 0
    %879 = vmatpush1.bf16.msra.mxu0 0
    %880 = vmatprep.subr.bf16.mxu0 0
    %881 = vmatpush1.bf16.msra.mxu0 0
    %882 = vmatprep.subr.bf16.mxu0 0
    %883 = vmatpush1.bf16.msra.mxu0 0
    %884 = vmatprep.subr.bf16.mxu0 0
    %885 = vmatpush1.bf16.msra.mxu0 0
    %886 = vmatprep.subr.bf16.mxu0 0
    %887 = vmatpush1.bf16.msra.mxu0 0
    %888 = vmatprep.subr.bf16.mxu0 0
    %889 = vmatpush1.bf16.msra.mxu0 0
    %890 = vmatprep.subr.bf16.mxu0 0
    %891 = vmatpush1.bf16.msra.mxu0 %v871
    %892 = vmatprep.subr.bf16.mxu0 0
    %893 = vmatpush1.bf16.msra.mxu0 %v870
    %894 = vmatprep.subr.bf16.mxu0 0
    %895 = vmatpush2.bf16.msra.mxu0 0
    %896 = vmatprep.subr.bf16.mxu0 0
    %897 = vmatpush2.bf16.msra.mxu0 0
    %898 = vmatprep.subr.bf16.mxu0 0
    %899 = vmatpush2.bf16.msra.mxu0 0
    %900 = vmatprep.subr.bf16.mxu0 0
    %901 = vmatpush2.bf16.msra.mxu0 0
    %902 = vmatprep.subr.bf16.mxu0 0
    %903 = vmatpush2.bf16.msra.mxu0 0
    %904 = vmatprep.subr.bf16.mxu0 0
    %905 = vmatpush2.bf16.msra.mxu0 0
    %906 = vmatprep.subr.bf16.mxu0 0
    %907 = vmatpush2.bf16.msra.mxu0 0
    %908 = vmatprep.subr.bf16.mxu0 0
    %909 = vmatpush2.bf16.msra.mxu0 0
    %910 = vmatprep.mubr.bf16.mxu0 0
    %911 = vmatmul.mubr.bf16.gmra.mxu0 %v876
    %v912 = vpop.f32.mrf.mxu0
    %v913 = vadd.f32 0.0, %v912
    %v914 = vpop.f32.mrf.mxu0
    %v915 = vpop.f32.mrf.mxu0
    %v916 = vpop.f32.mrf.mxu0
    %917 = vdwg.mxu0
    %v919 = vcombine.high %v913, %v913
    %v921 = vunpack.c.l.s4 1966171168
    %v922 = vunpack.c.0.s8 %v921
    %v923 = vlaneseq
    %v924 = vshrl.u32 %v923, 7
    %v925 = vsub.s32 %v922, %v924
    %v926 = vrot.slane %v913, %v925
    %v928 = vunpack.c.l.s4 1966171168
    %v929 = vunpack.c.0.s8 %v928
    %v930 = vlaneseq
    %v931 = vshrl.u32 %v930, 7
    %v932 = vsub.s32 %v929, %v931
    %v933 = vrot.slane %v919, %v932
    %v934 = vcombine.high %v926, %v926
    %v935 = vcombine.high %v933, %v933
    %v937 = vunpack.c.l.s4 1966171168
    %v938 = vunpack.c.0.s8 %v937
    %v939 = vlaneseq
    %v940 = vshrl.u32 %v939, 7
    %v941 = vsub.s32 %v938, %v940
    %v942 = vrot.slane %v926, %v941
    %v944 = vunpack.c.l.s4 1966171168
    %v945 = vunpack.c.0.s8 %v944
    %v946 = vlaneseq
    %v947 = vshrl.u32 %v946, 7
    %v948 = vsub.s32 %v945, %v947
    %v949 = vrot.slane %v933, %v948
    %v951 = vunpack.c.l.s4 1966171168
    %v952 = vunpack.c.0.s8 %v951
    %v953 = vlaneseq
    %v954 = vshrl.u32 %v953, 7
    %v955 = vsub.s32 %v952, %v954
    %v956 = vrot.slane %v934, %v955
    %v958 = vunpack.c.l.s4 1966171168
    %v959 = vunpack.c.0.s8 %v958
    %v960 = vlaneseq
    %v961 = vshrl.u32 %v960, 7
    %v962 = vsub.s32 %v959, %v961
    %v963 = vrot.slane %v935, %v962
    %v964 = vcombine.high %v942, %v942
    %v965 = vcombine.high %v949, %v949
    %v966 = vcombine.high %v956, %v956
    %v967 = vcombine.high %v963, %v963
    %v968 = vlaneseq
    %v969 = vshrl.u32 %v968, 7
    %v970 = vsub.s32 0, %v969
    %v971 = vrot.slane %v942, %v970
    %v972 = vlaneseq
    %v973 = vshrl.u32 %v972, 7
    %v974 = vsub.s32 0, %v973
    %v975 = vrot.slane %v956, %v974
    %v976 = vlaneseq
    %v977 = vshrl.u32 %v976, 7
    %v978 = vsub.s32 0, %v977
    %v979 = vrot.slane %v964, %v978
    %v980 = vlaneseq
    %v981 = vshrl.u32 %v980, 7
    %v982 = vsub.s32 0, %v981
    %v983 = vrot.slane %v966, %v982
    %v984 = vlaneseq
    %v985 = vshrl.u32 %v984, 7
    %v986 = vsub.s32 0, %v985
    %v987 = vrot.slane %v949, %v986
    %v988 = vlaneseq
    %v989 = vshrl.u32 %v988, 7
    %v990 = vsub.s32 0, %v989
    %v991 = vrot.slane %v963, %v990
    %v992 = vlaneseq
    %v993 = vshrl.u32 %v992, 7
    %v994 = vsub.s32 0, %v993
    %v995 = vrot.slane %v965, %v994
    %v996 = vlaneseq
    %v997 = vshrl.u32 %v996, 7
    %v998 = vsub.s32 0, %v997
    %v999 = vrot.slane %v967, %v998
    %v1008 = vadd.f32 %v351, %v971
    %v1009 = vadd.f32 %v354, %v971
    %v1010 = vadd.f32 %v359, %v971
    %v1011 = vadd.f32 %v362, %v971
    %v1012 = vadd.f32 %v367, %v971
    %v1013 = vadd.f32 %v370, %v971
    %v1014 = vadd.f32 %v375, %v971
    %v1015 = vadd.f32 %v378, %v971
    %v1016 = vadd.f32 %v383, %v971
    %v1017 = vadd.f32 %v386, %v971
    %v1018 = vadd.f32 %v391, %v971
    %v1019 = vadd.f32 %v394, %v971
    %v1020 = vadd.f32 %v399, %v971
    %v1021 = vadd.f32 %v402, %v971
    %v1022 = vadd.f32 %v407, %v971
    %v1023 = vadd.f32 %v410, %v971
    %v1024 = vadd.f32 %v415, %v975
    %v1025 = vadd.f32 %v418, %v975
    %v1026 = vadd.f32 %v423, %v975
    %v1027 = vadd.f32 %v426, %v975
    %v1028 = vadd.f32 %v431, %v975
    %v1029 = vadd.f32 %v434, %v975
    %v1030 = vadd.f32 %v439, %v975
    %v1031 = vadd.f32 %v442, %v975
    %v1032 = vadd.f32 %v447, %v975
    %v1033 = vadd.f32 %v450, %v975
    %v1034 = vadd.f32 %v455, %v975
    %v1035 = vadd.f32 %v458, %v975
    %v1036 = vadd.f32 %v463, %v975
    %v1037 = vadd.f32 %v466, %v975
    %v1038 = vadd.f32 %v471, %v975
    %v1039 = vadd.f32 %v474, %v975
    %v1040 = vadd.f32 %v479, %v979
    %v1041 = vadd.f32 %v482, %v979
    %v1042 = vadd.f32 %v487, %v979
    %v1043 = vadd.f32 %v490, %v979
    %v1044 = vadd.f32 %v495, %v979
    %v1045 = vadd.f32 %v498, %v979
    %v1046 = vadd.f32 %v503, %v979
    %v1047 = vadd.f32 %v506, %v979
    %v1048 = vadd.f32 %v511, %v979
    %v1049 = vadd.f32 %v514, %v979
    %v1050 = vadd.f32 %v519, %v979
    %v1051 = vadd.f32 %v522, %v979
    %v1052 = vadd.f32 %v527, %v979
    %v1053 = vadd.f32 %v530, %v979
    %v1054 = vadd.f32 %v535, %v979
    %v1055 = vadd.f32 %v538, %v979
    %v1056 = vadd.f32 %v543, %v983
    %v1057 = vadd.f32 %v546, %v983
    %v1058 = vadd.f32 %v551, %v983
    %v1059 = vadd.f32 %v554, %v983
    %v1060 = vadd.f32 %v559, %v983
    %v1061 = vadd.f32 %v562, %v983
    %v1062 = vadd.f32 %v567, %v983
    %v1063 = vadd.f32 %v570, %v983
    %v1064 = vadd.f32 %v575, %v983
    %v1065 = vadd.f32 %v578, %v983
    %v1066 = vadd.f32 %v583, %v983
    %v1067 = vadd.f32 %v586, %v983
    %v1068 = vadd.f32 %v591, %v983
    %v1069 = vadd.f32 %v594, %v983
    %v1070 = vadd.f32 %v599, %v983
    %v1071 = vadd.f32 %v602, %v983
    %v1072 = vadd.f32 %v607, %v987
    %v1073 = vadd.f32 %v610, %v987
    %v1074 = vadd.f32 %v615, %v987
    %v1075 = vadd.f32 %v618, %v987
    %v1076 = vadd.f32 %v623, %v987
    %v1077 = vadd.f32 %v626, %v987
    %v1078 = vadd.f32 %v631, %v987
    %v1079 = vadd.f32 %v634, %v987
    %v1080 = vadd.f32 %v639, %v987
    %v1081 = vadd.f32 %v642, %v987
    %v1082 = vadd.f32 %v647, %v987
    %v1083 = vadd.f32 %v650, %v987
    %v1084 = vadd.f32 %v655, %v987
    %v1085 = vadd.f32 %v658, %v987
    %v1086 = vadd.f32 %v663, %v987
    %v1087 = vadd.f32 %v666, %v987
    %v1088 = vadd.f32 %v671, %v991
    %v1089 = vadd.f32 %v674, %v991
    %v1090 = vadd.f32 %v679, %v991
    %v1091 = vadd.f32 %v682, %v991
    %v1092 = vadd.f32 %v687, %v991
    %v1093 = vadd.f32 %v690, %v991
    %v1094 = vadd.f32 %v695, %v991
    %v1095 = vadd.f32 %v698, %v991
    %v1096 = vadd.f32 %v703, %v991
    %v1097 = vadd.f32 %v706, %v991
    %v1098 = vadd.f32 %v711, %v991
    %v1099 = vadd.f32 %v714, %v991
    %v1100 = vadd.f32 %v719, %v991
    %v1101 = vadd.f32 %v722, %v991
    %v1102 = vadd.f32 %v727, %v991
    %v1103 = vadd.f32 %v730, %v991
    %v1104 = vadd.f32 %v735, %v995
    %v1105 = vadd.f32 %v738, %v995
    %v1106 = vadd.f32 %v743, %v995
    %v1107 = vadd.f32 %v746, %v995
    %v1108 = vadd.f32 %v751, %v995
    %v1109 = vadd.f32 %v754, %v995
    %v1110 = vadd.f32 %v759, %v995
    %v1111 = vadd.f32 %v762, %v995
    %v1112 = vadd.f32 %v767, %v995
    %v1113 = vadd.f32 %v770, %v995
    %v1114 = vadd.f32 %v775, %v995
    %v1115 = vadd.f32 %v778, %v995
    %v1116 = vadd.f32 %v783, %v995
    %v1117 = vadd.f32 %v786, %v995
    %v1118 = vadd.f32 %v791, %v995
    %v1119 = vadd.f32 %v794, %v995
    %v1120 = vadd.f32 %v799, %v999
    %v1121 = vadd.f32 %v802, %v999
    %v1122 = vadd.f32 %v807, %v999
    %v1123 = vadd.f32 %v810, %v999
    %v1124 = vadd.f32 %v815, %v999
    %v1125 = vadd.f32 %v818, %v999
    %v1126 = vadd.f32 %v823, %v999
    %v1127 = vadd.f32 %v826, %v999
    %v1128 = vadd.f32 %v831, %v999
    %v1129 = vadd.f32 %v834, %v999
    %v1130 = vadd.f32 %v839, %v999
    %v1131 = vadd.f32 %v842, %v999
    %v1132 = vadd.f32 %v847, %v999
    %v1133 = vadd.f32 %v850, %v999
    %v1134 = vadd.f32 %v855, %v999
    %v1135 = vadd.f32 %v858, %v999
    %v1136 = vtanh.pop %v1008
    %v1137 = vtanh.pop %v1009
    %v1138 = vtanh.pop %v1010
    %v1139 = vtanh.pop %v1011
    %v1140 = vtanh.pop %v1012
    %v1141 = vtanh.pop %v1013
    %v1142 = vtanh.pop %v1014
    %v1143 = vtanh.pop %v1015
    %v1144 = vtanh.pop %v1016
    %v1145 = vtanh.pop %v1017
    %v1146 = vtanh.pop %v1018
    %v1147 = vtanh.pop %v1019
    %v1148 = vtanh.pop %v1020
    %v1149 = vtanh.pop %v1021
    %v1150 = vtanh.pop %v1022
    %v1151 = vtanh.pop %v1023
    %v1152 = vtanh.pop %v1024
    %v1153 = vtanh.pop %v1025
    %v1154 = vtanh.pop %v1026
    %v1155 = vtanh.pop %v1027
    %v1156 = vtanh.pop %v1028
    %v1157 = vtanh.pop %v1029
    %v1158 = vtanh.pop %v1030
    %v1159 = vtanh.pop %v1031
    %v1160 = vtanh.pop %v1032
    %v1161 = vtanh.pop %v1033
    %v1162 = vtanh.pop %v1034
    %v1163 = vtanh.pop %v1035
    %v1164 = vtanh.pop %v1036
    %v1165 = vtanh.pop %v1037
    %v1166 = vtanh.pop %v1038
    %v1167 = vtanh.pop %v1039
    %v1168 = vtanh.pop %v1040
    %v1169 = vtanh.pop %v1041
    %v1170 = vtanh.pop %v1042
    %v1171 = vtanh.pop %v1043
    %v1172 = vtanh.pop %v1044
    %v1173 = vtanh.pop %v1045
    %v1174 = vtanh.pop %v1046
    %v1175 = vtanh.pop %v1047
    %v1176 = vtanh.pop %v1048
    %v1177 = vtanh.pop %v1049
    %v1178 = vtanh.pop %v1050
    %v1179 = vtanh.pop %v1051
    %v1180 = vtanh.pop %v1052
    %v1181 = vtanh.pop %v1053
    %v1182 = vtanh.pop %v1054
    %v1183 = vtanh.pop %v1055
    %v1184 = vtanh.pop %v1056
    %v1185 = vtanh.pop %v1057
    %v1186 = vtanh.pop %v1058
    %v1187 = vtanh.pop %v1059
    %v1188 = vtanh.pop %v1060
    %v1189 = vtanh.pop %v1061
    %v1190 = vtanh.pop %v1062
    %v1191 = vtanh.pop %v1063
    %v1192 = vtanh.pop %v1064
    %v1193 = vtanh.pop %v1065
    %v1194 = vtanh.pop %v1066
    %v1195 = vtanh.pop %v1067
    %v1196 = vtanh.pop %v1068
    %v1197 = vtanh.pop %v1069
    %v1198 = vtanh.pop %v1070
    %v1199 = vtanh.pop %v1071
    %v1200 = vtanh.pop %v1072
    %v1201 = vtanh.pop %v1073
    %v1202 = vtanh.pop %v1074
    %v1203 = vtanh.pop %v1075
    %v1204 = vtanh.pop %v1076
    %v1205 = vtanh.pop %v1077
    %v1206 = vtanh.pop %v1078
    %v1207 = vtanh.pop %v1079
    %v1208 = vtanh.pop %v1080
    %v1209 = vtanh.pop %v1081
    %v1210 = vtanh.pop %v1082
    %v1211 = vtanh.pop %v1083
    %v1212 = vtanh.pop %v1084
    %v1213 = vtanh.pop %v1085
    %v1214 = vtanh.pop %v1086
    %v1215 = vtanh.pop %v1087
    %v1216 = vtanh.pop %v1088
    %v1217 = vtanh.pop %v1089
    %v1218 = vtanh.pop %v1090
    %v1219 = vtanh.pop %v1091
    %v1220 = vtanh.pop %v1092
    %v1221 = vtanh.pop %v1093
    %v1222 = vtanh.pop %v1094
    %v1223 = vtanh.pop %v1095
    %v1224 = vtanh.pop %v1096
    %v1225 = vtanh.pop %v1097
    %v1226 = vtanh.pop %v1098
    %v1227 = vtanh.pop %v1099
    %v1228 = vtanh.pop %v1100
    %v1229 = vtanh.pop %v1101
    %v1230 = vtanh.pop %v1102
    %v1231 = vtanh.pop %v1103
    %v1232 = vtanh.pop %v1104
    %v1233 = vtanh.pop %v1105
    %v1234 = vtanh.pop %v1106
    %v1235 = vtanh.pop %v1107
    %v1236 = vtanh.pop %v1108
    %v1237 = vtanh.pop %v1109
    %v1238 = vtanh.pop %v1110
    %v1239 = vtanh.pop %v1111
    %v1240 = vtanh.pop %v1112
    %v1241 = vtanh.pop %v1113
    %v1242 = vtanh.pop %v1114
    %v1243 = vtanh.pop %v1115
    %v1244 = vtanh.pop %v1116
    %v1245 = vtanh.pop %v1117
    %v1246 = vtanh.pop %v1118
    %v1247 = vtanh.pop %v1119
    %v1248 = vtanh.pop %v1120
    %v1249 = vtanh.pop %v1121
    %v1250 = vtanh.pop %v1122
    %v1251 = vtanh.pop %v1123
    %v1252 = vtanh.pop %v1124
    %v1253 = vtanh.pop %v1125
    %v1254 = vtanh.pop %v1126
    %v1255 = vtanh.pop %v1127
    %v1256 = vtanh.pop %v1128
    %v1257 = vtanh.pop %v1129
    %v1258 = vtanh.pop %v1130
    %v1259 = vtanh.pop %v1131
    %v1260 = vtanh.pop %v1132
    %v1261 = vtanh.pop %v1133
    %v1262 = vtanh.pop %v1134
    %v1263 = vtanh.pop %v1135
    %v1265 = vlaneseq
    %v1266 = vshrl.u32 %v1265, 7
    %v1267 = vsub.s32 0, %v1266
    %v1268 = vrot.slane %v265, %v1267
    %v1270 = vmul.f32 %v1136, %v1268
    %v1271 = vmul.f32 %v1137, %v1268
    %v1272 = vmul.f32 %v1138, %v1268
    %v1273 = vmul.f32 %v1139, %v1268
    %v1274 = vmul.f32 %v1140, %v1268
    %v1275 = vmul.f32 %v1141, %v1268
    %v1276 = vmul.f32 %v1142, %v1268
    %v1277 = vmul.f32 %v1143, %v1268
    %v1278 = vmul.f32 %v1144, %v1268
    %v1279 = vmul.f32 %v1145, %v1268
    %v1280 = vmul.f32 %v1146, %v1268
    %v1281 = vmul.f32 %v1147, %v1268
    %v1282 = vmul.f32 %v1148, %v1268
    %v1283 = vmul.f32 %v1149, %v1268
    %v1284 = vmul.f32 %v1150, %v1268
    %v1285 = vmul.f32 %v1151, %v1268
    %v1286 = vmul.f32 %v1152, %v1268
    %v1287 = vmul.f32 %v1153, %v1268
    %v1288 = vmul.f32 %v1154, %v1268
    %v1289 = vmul.f32 %v1155, %v1268
    %v1290 = vmul.f32 %v1156, %v1268
    %v1291 = vmul.f32 %v1157, %v1268
    %v1292 = vmul.f32 %v1158, %v1268
    %v1293 = vmul.f32 %v1159, %v1268
    %v1294 = vmul.f32 %v1160, %v1268
    %v1295 = vmul.f32 %v1161, %v1268
    %v1296 = vmul.f32 %v1162, %v1268
    %v1297 = vmul.f32 %v1163, %v1268
    %v1298 = vmul.f32 %v1164, %v1268
    %v1299 = vmul.f32 %v1165, %v1268
    %v1300 = vmul.f32 %v1166, %v1268
    %v1301 = vmul.f32 %v1167, %v1268
    %v1302 = vmul.f32 %v1168, %v1268
    %v1303 = vmul.f32 %v1169, %v1268
    %v1304 = vmul.f32 %v1170, %v1268
    %v1305 = vmul.f32 %v1171, %v1268
    %v1306 = vmul.f32 %v1172, %v1268
    %v1307 = vmul.f32 %v1173, %v1268
    %v1308 = vmul.f32 %v1174, %v1268
    %v1309 = vmul.f32 %v1175, %v1268
    %v1310 = vmul.f32 %v1176, %v1268
    %v1311 = vmul.f32 %v1177, %v1268
    %v1312 = vmul.f32 %v1178, %v1268
    %v1313 = vmul.f32 %v1179, %v1268
    %v1314 = vmul.f32 %v1180, %v1268
    %v1315 = vmul.f32 %v1181, %v1268
    %v1316 = vmul.f32 %v1182, %v1268
    %v1317 = vmul.f32 %v1183, %v1268
    %v1318 = vmul.f32 %v1184, %v1268
    %v1319 = vmul.f32 %v1185, %v1268
    %v1320 = vmul.f32 %v1186, %v1268
    %v1321 = vmul.f32 %v1187, %v1268
    %v1322 = vmul.f32 %v1188, %v1268
    %v1323 = vmul.f32 %v1189, %v1268
    %v1324 = vmul.f32 %v1190, %v1268
    %v1325 = vmul.f32 %v1191, %v1268
    %v1326 = vmul.f32 %v1192, %v1268
    %v1327 = vmul.f32 %v1193, %v1268
    %v1328 = vmul.f32 %v1194, %v1268
    %v1329 = vmul.f32 %v1195, %v1268
    %v1330 = vmul.f32 %v1196, %v1268
    %v1331 = vmul.f32 %v1197, %v1268
    %v1332 = vmul.f32 %v1198, %v1268
    %v1333 = vmul.f32 %v1199, %v1268
    %v1334 = vmul.f32 %v1200, %v1268
    %v1335 = vmul.f32 %v1201, %v1268
    %v1336 = vmul.f32 %v1202, %v1268
    %v1337 = vmul.f32 %v1203, %v1268
    %v1338 = vmul.f32 %v1204, %v1268
    %v1339 = vmul.f32 %v1205, %v1268
    %v1340 = vmul.f32 %v1206, %v1268
    %v1341 = vmul.f32 %v1207, %v1268
    %v1342 = vmul.f32 %v1208, %v1268
    %v1343 = vmul.f32 %v1209, %v1268
    %v1344 = vmul.f32 %v1210, %v1268
    %v1345 = vmul.f32 %v1211, %v1268
    %v1346 = vmul.f32 %v1212, %v1268
    %v1347 = vmul.f32 %v1213, %v1268
    %v1348 = vmul.f32 %v1214, %v1268
    %v1349 = vmul.f32 %v1215, %v1268
    %v1350 = vmul.f32 %v1216, %v1268
    %v1351 = vmul.f32 %v1217, %v1268
    %v1352 = vmul.f32 %v1218, %v1268
    %v1353 = vmul.f32 %v1219, %v1268
    %v1354 = vmul.f32 %v1220, %v1268
    %v1355 = vmul.f32 %v1221, %v1268
    %v1356 = vmul.f32 %v1222, %v1268
    %v1357 = vmul.f32 %v1223, %v1268
    %v1358 = vmul.f32 %v1224, %v1268
    %v1359 = vmul.f32 %v1225, %v1268
    %v1360 = vmul.f32 %v1226, %v1268
    %v1361 = vmul.f32 %v1227, %v1268
    %v1362 = vmul.f32 %v1228, %v1268
    %v1363 = vmul.f32 %v1229, %v1268
    %v1364 = vmul.f32 %v1230, %v1268
    %v1365 = vmul.f32 %v1231, %v1268
    %v1366 = vmul.f32 %v1232, %v1268
    %v1367 = vmul.f32 %v1233, %v1268
    %v1368 = vmul.f32 %v1234, %v1268
    %v1369 = vmul.f32 %v1235, %v1268
    %v1370 = vmul.f32 %v1236, %v1268
    %v1371 = vmul.f32 %v1237, %v1268
    %v1372 = vmul.f32 %v1238, %v1268
    %v1373 = vmul.f32 %v1239, %v1268
    %v1374 = vmul.f32 %v1240, %v1268
    %v1375 = vmul.f32 %v1241, %v1268
    %v1376 = vmul.f32 %v1242, %v1268
    %v1377 = vmul.f32 %v1243, %v1268
    %v1378 = vmul.f32 %v1244, %v1268
    %v1379 = vmul.f32 %v1245, %v1268
    %v1380 = vmul.f32 %v1246, %v1268
    %v1381 = vmul.f32 %v1247, %v1268
    %v1382 = vmul.f32 %v1248, %v1268
    %v1383 = vmul.f32 %v1249, %v1268
    %v1384 = vmul.f32 %v1250, %v1268
    %v1385 = vmul.f32 %v1251, %v1268
    %v1386 = vmul.f32 %v1252, %v1268
    %v1387 = vmul.f32 %v1253, %v1268
    %v1388 = vmul.f32 %v1254, %v1268
    %v1389 = vmul.f32 %v1255, %v1268
    %v1390 = vmul.f32 %v1256, %v1268
    %v1391 = vmul.f32 %v1257, %v1268
    %v1392 = vmul.f32 %v1258, %v1268
    %v1393 = vmul.f32 %v1259, %v1268
    %v1394 = vmul.f32 %v1260, %v1268
    %v1395 = vmul.f32 %v1261, %v1268
    %v1396 = vmul.f32 %v1262, %v1268
    %v1397 = vmul.f32 %v1263, %v1268
    %1398 = vadd.xlane.f32.xlu0 %v1270
    %v1399 = vpop.xlane.xlu0 %1398
    %1400 = vadd.xlane.f32.xlu0 %v1271
    %v1401 = vpop.xlane.xlu0 %1400
    %1402 = vadd.xlane.f32.xlu0 %v1272
    %v1403 = vpop.xlane.xlu0 %1402
    %1404 = vadd.xlane.f32.xlu0 %v1273
    %v1405 = vpop.xlane.xlu0 %1404
    %1406 = vadd.xlane.f32.xlu0 %v1274
    %v1407 = vpop.xlane.xlu0 %1406
    %1408 = vadd.xlane.f32.xlu0 %v1275
    %v1409 = vpop.xlane.xlu0 %1408
    %1410 = vadd.xlane.f32.xlu0 %v1276
    %v1411 = vpop.xlane.xlu0 %1410
    %1412 = vadd.xlane.f32.xlu0 %v1277
    %v1413 = vpop.xlane.xlu0 %1412
    %1414 = vadd.xlane.f32.xlu0 %v1278
    %v1415 = vpop.xlane.xlu0 %1414
    %1416 = vadd.xlane.f32.xlu0 %v1279
    %v1417 = vpop.xlane.xlu0 %1416
    %1418 = vadd.xlane.f32.xlu0 %v1280
    %v1419 = vpop.xlane.xlu0 %1418
    %1420 = vadd.xlane.f32.xlu0 %v1281
    %v1421 = vpop.xlane.xlu0 %1420
    %1422 = vadd.xlane.f32.xlu0 %v1282
    %v1423 = vpop.xlane.xlu0 %1422
    %1424 = vadd.xlane.f32.xlu0 %v1283
    %v1425 = vpop.xlane.xlu0 %1424
    %1426 = vadd.xlane.f32.xlu0 %v1284
    %v1427 = vpop.xlane.xlu0 %1426
    %1428 = vadd.xlane.f32.xlu0 %v1285
    %v1429 = vpop.xlane.xlu0 %1428
    %1430 = vadd.xlane.f32.xlu0 %v1286
    %v1431 = vpop.xlane.xlu0 %1430
    %1432 = vadd.xlane.f32.xlu0 %v1287
    %v1433 = vpop.xlane.xlu0 %1432
    %1434 = vadd.xlane.f32.xlu0 %v1288
    %v1435 = vpop.xlane.xlu0 %1434
    %1436 = vadd.xlane.f32.xlu0 %v1289
    %v1437 = vpop.xlane.xlu0 %1436
    %1438 = vadd.xlane.f32.xlu0 %v1290
    %v1439 = vpop.xlane.xlu0 %1438
    %1440 = vadd.xlane.f32.xlu0 %v1291
    %v1441 = vpop.xlane.xlu0 %1440
    %1442 = vadd.xlane.f32.xlu0 %v1292
    %v1443 = vpop.xlane.xlu0 %1442
    %1444 = vadd.xlane.f32.xlu0 %v1293
    %v1445 = vpop.xlane.xlu0 %1444
    %1446 = vadd.xlane.f32.xlu0 %v1294
    %v1447 = vpop.xlane.xlu0 %1446
    %1448 = vadd.xlane.f32.xlu0 %v1295
    %v1449 = vpop.xlane.xlu0 %1448
    %1450 = vadd.xlane.f32.xlu0 %v1296
    %v1451 = vpop.xlane.xlu0 %1450
    %1452 = vadd.xlane.f32.xlu0 %v1297
    %v1453 = vpop.xlane.xlu0 %1452
    %1454 = vadd.xlane.f32.xlu0 %v1298
    %v1455 = vpop.xlane.xlu0 %1454
    %1456 = vadd.xlane.f32.xlu0 %v1299
    %v1457 = vpop.xlane.xlu0 %1456
    %1458 = vadd.xlane.f32.xlu0 %v1300
    %v1459 = vpop.xlane.xlu0 %1458
    %1460 = vadd.xlane.f32.xlu0 %v1301
    %v1461 = vpop.xlane.xlu0 %1460
    %1462 = vadd.xlane.f32.xlu0 %v1302
    %v1463 = vpop.xlane.xlu0 %1462
    %1464 = vadd.xlane.f32.xlu0 %v1303
    %v1465 = vpop.xlane.xlu0 %1464
    %1466 = vadd.xlane.f32.xlu0 %v1304
    %v1467 = vpop.xlane.xlu0 %1466
    %1468 = vadd.xlane.f32.xlu0 %v1305
    %v1469 = vpop.xlane.xlu0 %1468
    %1470 = vadd.xlane.f32.xlu0 %v1306
    %v1471 = vpop.xlane.xlu0 %1470
    %1472 = vadd.xlane.f32.xlu0 %v1307
    %v1473 = vpop.xlane.xlu0 %1472
    %1474 = vadd.xlane.f32.xlu0 %v1308
    %v1475 = vpop.xlane.xlu0 %1474
    %1476 = vadd.xlane.f32.xlu0 %v1309
    %v1477 = vpop.xlane.xlu0 %1476
    %1478 = vadd.xlane.f32.xlu0 %v1310
    %v1479 = vpop.xlane.xlu0 %1478
    %1480 = vadd.xlane.f32.xlu0 %v1311
    %v1481 = vpop.xlane.xlu0 %1480
    %1482 = vadd.xlane.f32.xlu0 %v1312
    %v1483 = vpop.xlane.xlu0 %1482
    %1484 = vadd.xlane.f32.xlu0 %v1313
    %v1485 = vpop.xlane.xlu0 %1484
    %1486 = vadd.xlane.f32.xlu0 %v1314
    %v1487 = vpop.xlane.xlu0 %1486
    %1488 = vadd.xlane.f32.xlu0 %v1315
    %v1489 = vpop.xlane.xlu0 %1488
    %1490 = vadd.xlane.f32.xlu0 %v1316
    %v1491 = vpop.xlane.xlu0 %1490
    %1492 = vadd.xlane.f32.xlu0 %v1317
    %v1493 = vpop.xlane.xlu0 %1492
    %1494 = vadd.xlane.f32.xlu0 %v1318
    %v1495 = vpop.xlane.xlu0 %1494
    %1496 = vadd.xlane.f32.xlu0 %v1319
    %v1497 = vpop.xlane.xlu0 %1496
    %1498 = vadd.xlane.f32.xlu0 %v1320
    %v1499 = vpop.xlane.xlu0 %1498
    %1500 = vadd.xlane.f32.xlu0 %v1321
    %v1501 = vpop.xlane.xlu0 %1500
    %1502 = vadd.xlane.f32.xlu0 %v1322
    %v1503 = vpop.xlane.xlu0 %1502
    %1504 = vadd.xlane.f32.xlu0 %v1323
    %v1505 = vpop.xlane.xlu0 %1504
    %1506 = vadd.xlane.f32.xlu0 %v1324
    %v1507 = vpop.xlane.xlu0 %1506
    %1508 = vadd.xlane.f32.xlu0 %v1325
    %v1509 = vpop.xlane.xlu0 %1508
    %1510 = vadd.xlane.f32.xlu0 %v1326
    %v1511 = vpop.xlane.xlu0 %1510
    %1512 = vadd.xlane.f32.xlu0 %v1327
    %v1513 = vpop.xlane.xlu0 %1512
    %1514 = vadd.xlane.f32.xlu0 %v1328
    %v1515 = vpop.xlane.xlu0 %1514
    %1516 = vadd.xlane.f32.xlu0 %v1329
    %v1517 = vpop.xlane.xlu0 %1516
    %1518 = vadd.xlane.f32.xlu0 %v1330
    %v1519 = vpop.xlane.xlu0 %1518
    %1520 = vadd.xlane.f32.xlu0 %v1331
    %v1521 = vpop.xlane.xlu0 %1520
    %1522 = vadd.xlane.f32.xlu0 %v1332
    %v1523 = vpop.xlane.xlu0 %1522
    %1524 = vadd.xlane.f32.xlu0 %v1333
    %v1525 = vpop.xlane.xlu0 %1524
    %1526 = vadd.xlane.f32.xlu0 %v1334
    %v1527 = vpop.xlane.xlu0 %1526
    %1528 = vadd.xlane.f32.xlu0 %v1335
    %v1529 = vpop.xlane.xlu0 %1528
    %1530 = vadd.xlane.f32.xlu0 %v1336
    %v1531 = vpop.xlane.xlu0 %1530
    %1532 = vadd.xlane.f32.xlu0 %v1337
    %v1533 = vpop.xlane.xlu0 %1532
    %1534 = vadd.xlane.f32.xlu0 %v1338
    %v1535 = vpop.xlane.xlu0 %1534
    %1536 = vadd.xlane.f32.xlu0 %v1339
    %v1537 = vpop.xlane.xlu0 %1536
    %1538 = vadd.xlane.f32.xlu0 %v1340
    %v1539 = vpop.xlane.xlu0 %1538
    %1540 = vadd.xlane.f32.xlu0 %v1341
    %v1541 = vpop.xlane.xlu0 %1540
    %1542 = vadd.xlane.f32.xlu0 %v1342
    %v1543 = vpop.xlane.xlu0 %1542
    %1544 = vadd.xlane.f32.xlu0 %v1343
    %v1545 = vpop.xlane.xlu0 %1544
    %1546 = vadd.xlane.f32.xlu0 %v1344
    %v1547 = vpop.xlane.xlu0 %1546
    %1548 = vadd.xlane.f32.xlu0 %v1345
    %v1549 = vpop.xlane.xlu0 %1548
    %1550 = vadd.xlane.f32.xlu0 %v1346
    %v1551 = vpop.xlane.xlu0 %1550
    %1552 = vadd.xlane.f32.xlu0 %v1347
    %v1553 = vpop.xlane.xlu0 %1552
    %1554 = vadd.xlane.f32.xlu0 %v1348
    %v1555 = vpop.xlane.xlu0 %1554
    %1556 = vadd.xlane.f32.xlu0 %v1349
    %v1557 = vpop.xlane.xlu0 %1556
    %1558 = vadd.xlane.f32.xlu0 %v1350
    %v1559 = vpop.xlane.xlu0 %1558
    %1560 = vadd.xlane.f32.xlu0 %v1351
    %v1561 = vpop.xlane.xlu0 %1560
    %1562 = vadd.xlane.f32.xlu0 %v1352
    %v1563 = vpop.xlane.xlu0 %1562
    %1564 = vadd.xlane.f32.xlu0 %v1353
    %v1565 = vpop.xlane.xlu0 %1564
    %1566 = vadd.xlane.f32.xlu0 %v1354
    %v1567 = vpop.xlane.xlu0 %1566
    %1568 = vadd.xlane.f32.xlu0 %v1355
    %v1569 = vpop.xlane.xlu0 %1568
    %1570 = vadd.xlane.f32.xlu0 %v1356
    %v1571 = vpop.xlane.xlu0 %1570
    %1572 = vadd.xlane.f32.xlu0 %v1357
    %v1573 = vpop.xlane.xlu0 %1572
    %1574 = vadd.xlane.f32.xlu0 %v1358
    %v1575 = vpop.xlane.xlu0 %1574
    %1576 = vadd.xlane.f32.xlu0 %v1359
    %v1577 = vpop.xlane.xlu0 %1576
    %1578 = vadd.xlane.f32.xlu0 %v1360
    %v1579 = vpop.xlane.xlu0 %1578
    %1580 = vadd.xlane.f32.xlu0 %v1361
    %v1581 = vpop.xlane.xlu0 %1580
    %1582 = vadd.xlane.f32.xlu0 %v1362
    %v1583 = vpop.xlane.xlu0 %1582
    %1584 = vadd.xlane.f32.xlu0 %v1363
    %v1585 = vpop.xlane.xlu0 %1584
    %1586 = vadd.xlane.f32.xlu0 %v1364
    %v1587 = vpop.xlane.xlu0 %1586
    %1588 = vadd.xlane.f32.xlu0 %v1365
    %v1589 = vpop.xlane.xlu0 %1588
    %1590 = vadd.xlane.f32.xlu0 %v1366
    %v1591 = vpop.xlane.xlu0 %1590
    %1592 = vadd.xlane.f32.xlu0 %v1367
    %v1593 = vpop.xlane.xlu0 %1592
    %1594 = vadd.xlane.f32.xlu0 %v1368
    %v1595 = vpop.xlane.xlu0 %1594
    %1596 = vadd.xlane.f32.xlu0 %v1369
    %v1597 = vpop.xlane.xlu0 %1596
    %1598 = vadd.xlane.f32.xlu0 %v1370
    %v1599 = vpop.xlane.xlu0 %1598
    %1600 = vadd.xlane.f32.xlu0 %v1371
    %v1601 = vpop.xlane.xlu0 %1600
    %1602 = vadd.xlane.f32.xlu0 %v1372
    %v1603 = vpop.xlane.xlu0 %1602
    %1604 = vadd.xlane.f32.xlu0 %v1373
    %v1605 = vpop.xlane.xlu0 %1604
    %1606 = vadd.xlane.f32.xlu0 %v1374
    %v1607 = vpop.xlane.xlu0 %1606
    %1608 = vadd.xlane.f32.xlu0 %v1375
    %v1609 = vpop.xlane.xlu0 %1608
    %1610 = vadd.xlane.f32.xlu0 %v1376
    %v1611 = vpop.xlane.xlu0 %1610
    %1612 = vadd.xlane.f32.xlu0 %v1377
    %v1613 = vpop.xlane.xlu0 %1612
    %1614 = vadd.xlane.f32.xlu0 %v1378
    %v1615 = vpop.xlane.xlu0 %1614
    %1616 = vadd.xlane.f32.xlu0 %v1379
    %v1617 = vpop.xlane.xlu0 %1616
    %1618 = vadd.xlane.f32.xlu0 %v1380
    %v1619 = vpop.xlane.xlu0 %1618
    %1620 = vadd.xlane.f32.xlu0 %v1381
    %v1621 = vpop.xlane.xlu0 %1620
    %1622 = vadd.xlane.f32.xlu0 %v1382
    %v1623 = vpop.xlane.xlu0 %1622
    %1624 = vadd.xlane.f32.xlu0 %v1383
    %v1625 = vpop.xlane.xlu0 %1624
    %1626 = vadd.xlane.f32.xlu0 %v1384
    %v1627 = vpop.xlane.xlu0 %1626
    %1628 = vadd.xlane.f32.xlu0 %v1385
    %v1629 = vpop.xlane.xlu0 %1628
    %1630 = vadd.xlane.f32.xlu0 %v1386
    %v1631 = vpop.xlane.xlu0 %1630
    %1632 = vadd.xlane.f32.xlu0 %v1387
    %v1633 = vpop.xlane.xlu0 %1632
    %1634 = vadd.xlane.f32.xlu0 %v1388
    %v1635 = vpop.xlane.xlu0 %1634
    %1636 = vadd.xlane.f32.xlu0 %v1389
    %v1637 = vpop.xlane.xlu0 %1636
    %1638 = vadd.xlane.f32.xlu0 %v1390
    %v1639 = vpop.xlane.xlu0 %1638
    %1640 = vadd.xlane.f32.xlu0 %v1391
    %v1641 = vpop.xlane.xlu0 %1640
    %1642 = vadd.xlane.f32.xlu0 %v1392
    %v1643 = vpop.xlane.xlu0 %1642
    %1644 = vadd.xlane.f32.xlu0 %v1393
    %v1645 = vpop.xlane.xlu0 %1644
    %1646 = vadd.xlane.f32.xlu0 %v1394
    %v1647 = vpop.xlane.xlu0 %1646
    %1648 = vadd.xlane.f32.xlu0 %v1395
    %v1649 = vpop.xlane.xlu0 %1648
    %1650 = vadd.xlane.f32.xlu0 %v1396
    %v1651 = vpop.xlane.xlu0 %1650
    %1652 = vadd.xlane.f32.xlu0 %v1397
    %v1653 = vpop.xlane.xlu0 %1652
    %v1655 = vlaneseq
    %v1656 = vshrl.u32 %v1655, 7
    %v1657 = vsub.s32 0, %v1656
    %v1658 = vrot.slane %v267, %v1657
    %1660 = vbcast.lane.b32.xlu0 %v1658, 256
    %v1661 = vpop.permute.xlu0 %1660
    %s1663 = sor.u32 256, 8
    %1664 = vbcast.lane.b32.xlu0 %v1658, %s1663
    %v1665 = vpop.permute.xlu0 %1664
    %s1667 = sor.u32 256, 16
    %1668 = vbcast.lane.b32.xlu0 %v1658, %s1667
    %v1669 = vpop.permute.xlu0 %1668
    %s1671 = sor.u32 256, 24
    %1672 = vbcast.lane.b32.xlu0 %v1658, %s1671
    %v1673 = vpop.permute.xlu0 %1672
    %s1675 = sor.u32 256, 32
    %1676 = vbcast.lane.b32.xlu0 %v1658, %s1675
    %v1677 = vpop.permute.xlu0 %1676
    %s1679 = sor.u32 256, 40
    %1680 = vbcast.lane.b32.xlu0 %v1658, %s1679
    %v1681 = vpop.permute.xlu0 %1680
    %s1683 = sor.u32 256, 48
    %1684 = vbcast.lane.b32.xlu0 %v1658, %s1683
    %v1685 = vpop.permute.xlu0 %1684
    %s1687 = sor.u32 256, 56
    %1688 = vbcast.lane.b32.xlu0 %v1658, %s1687
    %v1689 = vpop.permute.xlu0 %1688
    %s1691 = sor.u32 256, 64
    %1692 = vbcast.lane.b32.xlu0 %v1658, %s1691
    %v1693 = vpop.permute.xlu0 %1692
    %s1695 = sor.u32 256, 72
    %1696 = vbcast.lane.b32.xlu0 %v1658, %s1695
    %v1697 = vpop.permute.xlu0 %1696
    %s1699 = sor.u32 256, 80
    %1700 = vbcast.lane.b32.xlu0 %v1658, %s1699
    %v1701 = vpop.permute.xlu0 %1700
    %s1703 = sor.u32 256, 88
    %1704 = vbcast.lane.b32.xlu0 %v1658, %s1703
    %v1705 = vpop.permute.xlu0 %1704
    %s1707 = sor.u32 256, 96
    %1708 = vbcast.lane.b32.xlu0 %v1658, %s1707
    %v1709 = vpop.permute.xlu0 %1708
    %s1711 = sor.u32 256, 104
    %1712 = vbcast.lane.b32.xlu0 %v1658, %s1711
    %v1713 = vpop.permute.xlu0 %1712
    %s1715 = sor.u32 256, 112
    %1716 = vbcast.lane.b32.xlu0 %v1658, %s1715
    %v1717 = vpop.permute.xlu0 %1716
    %s1719 = sor.u32 256, 120
    %1720 = vbcast.lane.b32.xlu0 %v1658, %s1719
    %v1721 = vpop.permute.xlu0 %1720
    %v1722 = vlaneseq
    %v1723 = vshrl.u32 %v1722, 7
    %v1724 = vsub.s32 1, %v1723
    %v1725 = vrot.slane %v267, %v1724
    %1727 = vbcast.lane.b32.xlu0 %v1725, 256
    %v1728 = vpop.permute.xlu0 %1727
    %s1730 = sor.u32 256, 8
    %1731 = vbcast.lane.b32.xlu0 %v1725, %s1730
    %v1732 = vpop.permute.xlu0 %1731
    %s1734 = sor.u32 256, 16
    %1735 = vbcast.lane.b32.xlu0 %v1725, %s1734
    %v1736 = vpop.permute.xlu0 %1735
    %s1738 = sor.u32 256, 24
    %1739 = vbcast.lane.b32.xlu0 %v1725, %s1738
    %v1740 = vpop.permute.xlu0 %1739
    %s1742 = sor.u32 256, 32
    %1743 = vbcast.lane.b32.xlu0 %v1725, %s1742
    %v1744 = vpop.permute.xlu0 %1743
    %s1746 = sor.u32 256, 40
    %1747 = vbcast.lane.b32.xlu0 %v1725, %s1746
    %v1748 = vpop.permute.xlu0 %1747
    %s1750 = sor.u32 256, 48
    %1751 = vbcast.lane.b32.xlu0 %v1725, %s1750
    %v1752 = vpop.permute.xlu0 %1751
    %s1754 = sor.u32 256, 56
    %1755 = vbcast.lane.b32.xlu0 %v1725, %s1754
    %v1756 = vpop.permute.xlu0 %1755
    %s1758 = sor.u32 256, 64
    %1759 = vbcast.lane.b32.xlu0 %v1725, %s1758
    %v1760 = vpop.permute.xlu0 %1759
    %s1762 = sor.u32 256, 72
    %1763 = vbcast.lane.b32.xlu0 %v1725, %s1762
    %v1764 = vpop.permute.xlu0 %1763
    %s1766 = sor.u32 256, 80
    %1767 = vbcast.lane.b32.xlu0 %v1725, %s1766
    %v1768 = vpop.permute.xlu0 %1767
    %s1770 = sor.u32 256, 88
    %1771 = vbcast.lane.b32.xlu0 %v1725, %s1770
    %v1772 = vpop.permute.xlu0 %1771
    %s1774 = sor.u32 256, 96
    %1775 = vbcast.lane.b32.xlu0 %v1725, %s1774
    %v1776 = vpop.permute.xlu0 %1775
    %s1778 = sor.u32 256, 104
    %1779 = vbcast.lane.b32.xlu0 %v1725, %s1778
    %v1780 = vpop.permute.xlu0 %1779
    %s1782 = sor.u32 256, 112
    %1783 = vbcast.lane.b32.xlu0 %v1725, %s1782
    %v1784 = vpop.permute.xlu0 %1783
    %s1786 = sor.u32 256, 120
    %1787 = vbcast.lane.b32.xlu0 %v1725, %s1786
    %v1788 = vpop.permute.xlu0 %1787
    %v1789 = vlaneseq
    %v1790 = vshrl.u32 %v1789, 7
    %v1791 = vsub.s32 2, %v1790
    %v1792 = vrot.slane %v267, %v1791
    %1794 = vbcast.lane.b32.xlu0 %v1792, 256
    %v1795 = vpop.permute.xlu0 %1794
    %s1797 = sor.u32 256, 8
    %1798 = vbcast.lane.b32.xlu0 %v1792, %s1797
    %v1799 = vpop.permute.xlu0 %1798
    %s1801 = sor.u32 256, 16
    %1802 = vbcast.lane.b32.xlu0 %v1792, %s1801
    %v1803 = vpop.permute.xlu0 %1802
    %s1805 = sor.u32 256, 24
    %1806 = vbcast.lane.b32.xlu0 %v1792, %s1805
    %v1807 = vpop.permute.xlu0 %1806
    %s1809 = sor.u32 256, 32
    %1810 = vbcast.lane.b32.xlu0 %v1792, %s1809
    %v1811 = vpop.permute.xlu0 %1810
    %s1813 = sor.u32 256, 40
    %1814 = vbcast.lane.b32.xlu0 %v1792, %s1813
    %v1815 = vpop.permute.xlu0 %1814
    %s1817 = sor.u32 256, 48
    %1818 = vbcast.lane.b32.xlu0 %v1792, %s1817
    %v1819 = vpop.permute.xlu0 %1818
    %s1821 = sor.u32 256, 56
    %1822 = vbcast.lane.b32.xlu0 %v1792, %s1821
    %v1823 = vpop.permute.xlu0 %1822
    %s1825 = sor.u32 256, 64
    %1826 = vbcast.lane.b32.xlu0 %v1792, %s1825
    %v1827 = vpop.permute.xlu0 %1826
    %s1829 = sor.u32 256, 72
    %1830 = vbcast.lane.b32.xlu0 %v1792, %s1829
    %v1831 = vpop.permute.xlu0 %1830
    %s1833 = sor.u32 256, 80
    %1834 = vbcast.lane.b32.xlu0 %v1792, %s1833
    %v1835 = vpop.permute.xlu0 %1834
    %s1837 = sor.u32 256, 88
    %1838 = vbcast.lane.b32.xlu0 %v1792, %s1837
    %v1839 = vpop.permute.xlu0 %1838
    %s1841 = sor.u32 256, 96
    %1842 = vbcast.lane.b32.xlu0 %v1792, %s1841
    %v1843 = vpop.permute.xlu0 %1842
    %s1845 = sor.u32 256, 104
    %1846 = vbcast.lane.b32.xlu0 %v1792, %s1845
    %v1847 = vpop.permute.xlu0 %1846
    %s1849 = sor.u32 256, 112
    %1850 = vbcast.lane.b32.xlu0 %v1792, %s1849
    %v1851 = vpop.permute.xlu0 %1850
    %s1853 = sor.u32 256, 120
    %1854 = vbcast.lane.b32.xlu0 %v1792, %s1853
    %v1855 = vpop.permute.xlu0 %1854
    %v1856 = vlaneseq
    %v1857 = vshrl.u32 %v1856, 7
    %v1858 = vsub.s32 3, %v1857
    %v1859 = vrot.slane %v267, %v1858
    %1861 = vbcast.lane.b32.xlu0 %v1859, 256
    %v1862 = vpop.permute.xlu0 %1861
    %s1864 = sor.u32 256, 8
    %1865 = vbcast.lane.b32.xlu0 %v1859, %s1864
    %v1866 = vpop.permute.xlu0 %1865
    %s1868 = sor.u32 256, 16
    %1869 = vbcast.lane.b32.xlu0 %v1859, %s1868
    %v1870 = vpop.permute.xlu0 %1869
    %s1872 = sor.u32 256, 24
    %1873 = vbcast.lane.b32.xlu0 %v1859, %s1872
    %v1874 = vpop.permute.xlu0 %1873
    %s1876 = sor.u32 256, 32
    %1877 = vbcast.lane.b32.xlu0 %v1859, %s1876
    %v1878 = vpop.permute.xlu0 %1877
    %s1880 = sor.u32 256, 40
    %1881 = vbcast.lane.b32.xlu0 %v1859, %s1880
    %v1882 = vpop.permute.xlu0 %1881
    %s1884 = sor.u32 256, 48
    %1885 = vbcast.lane.b32.xlu0 %v1859, %s1884
    %v1886 = vpop.permute.xlu0 %1885
    %s1888 = sor.u32 256, 56
    %1889 = vbcast.lane.b32.xlu0 %v1859, %s1888
    %v1890 = vpop.permute.xlu0 %1889
    %s1892 = sor.u32 256, 64
    %1893 = vbcast.lane.b32.xlu0 %v1859, %s1892
    %v1894 = vpop.permute.xlu0 %1893
    %s1896 = sor.u32 256, 72
    %1897 = vbcast.lane.b32.xlu0 %v1859, %s1896
    %v1898 = vpop.permute.xlu0 %1897
    %s1900 = sor.u32 256, 80
    %1901 = vbcast.lane.b32.xlu0 %v1859, %s1900
    %v1902 = vpop.permute.xlu0 %1901
    %s1904 = sor.u32 256, 88
    %1905 = vbcast.lane.b32.xlu0 %v1859, %s1904
    %v1906 = vpop.permute.xlu0 %1905
    %s1908 = sor.u32 256, 96
    %1909 = vbcast.lane.b32.xlu0 %v1859, %s1908
    %v1910 = vpop.permute.xlu0 %1909
    %s1912 = sor.u32 256, 104
    %1913 = vbcast.lane.b32.xlu0 %v1859, %s1912
    %v1914 = vpop.permute.xlu0 %1913
    %s1916 = sor.u32 256, 112
    %1917 = vbcast.lane.b32.xlu0 %v1859, %s1916
    %v1918 = vpop.permute.xlu0 %1917
    %s1920 = sor.u32 256, 120
    %1921 = vbcast.lane.b32.xlu0 %v1859, %s1920
    %v1922 = vpop.permute.xlu0 %1921
    %v1923 = vlaneseq
    %v1924 = vshrl.u32 %v1923, 7
    %v1925 = vsub.s32 4, %v1924
    %v1926 = vrot.slane %v267, %v1925
    %1928 = vbcast.lane.b32.xlu0 %v1926, 256
    %v1929 = vpop.permute.xlu0 %1928
    %s1931 = sor.u32 256, 8
    %1932 = vbcast.lane.b32.xlu0 %v1926, %s1931
    %v1933 = vpop.permute.xlu0 %1932
    %s1935 = sor.u32 256, 16
    %1936 = vbcast.lane.b32.xlu0 %v1926, %s1935
    %v1937 = vpop.permute.xlu0 %1936
    %s1939 = sor.u32 256, 24
    %1940 = vbcast.lane.b32.xlu0 %v1926, %s1939
    %v1941 = vpop.permute.xlu0 %1940
    %s1943 = sor.u32 256, 32
    %1944 = vbcast.lane.b32.xlu0 %v1926, %s1943
    %v1945 = vpop.permute.xlu0 %1944
    %s1947 = sor.u32 256, 40
    %1948 = vbcast.lane.b32.xlu0 %v1926, %s1947
    %v1949 = vpop.permute.xlu0 %1948
    %s1951 = sor.u32 256, 48
    %1952 = vbcast.lane.b32.xlu0 %v1926, %s1951
    %v1953 = vpop.permute.xlu0 %1952
    %s1955 = sor.u32 256, 56
    %1956 = vbcast.lane.b32.xlu0 %v1926, %s1955
    %v1957 = vpop.permute.xlu0 %1956
    %s1959 = sor.u32 256, 64
    %1960 = vbcast.lane.b32.xlu0 %v1926, %s1959
    %v1961 = vpop.permute.xlu0 %1960
    %s1963 = sor.u32 256, 72
    %1964 = vbcast.lane.b32.xlu0 %v1926, %s1963
    %v1965 = vpop.permute.xlu0 %1964
    %s1967 = sor.u32 256, 80
    %1968 = vbcast.lane.b32.xlu0 %v1926, %s1967
    %v1969 = vpop.permute.xlu0 %1968
    %s1971 = sor.u32 256, 88
    %1972 = vbcast.lane.b32.xlu0 %v1926, %s1971
    %v1973 = vpop.permute.xlu0 %1972
    %s1975 = sor.u32 256, 96
    %1976 = vbcast.lane.b32.xlu0 %v1926, %s1975
    %v1977 = vpop.permute.xlu0 %1976
    %s1979 = sor.u32 256, 104
    %1980 = vbcast.lane.b32.xlu0 %v1926, %s1979
    %v1981 = vpop.permute.xlu0 %1980
    %s1983 = sor.u32 256, 112
    %1984 = vbcast.lane.b32.xlu0 %v1926, %s1983
    %v1985 = vpop.permute.xlu0 %1984
    %s1987 = sor.u32 256, 120
    %1988 = vbcast.lane.b32.xlu0 %v1926, %s1987
    %v1989 = vpop.permute.xlu0 %1988
    %v1990 = vlaneseq
    %v1991 = vshrl.u32 %v1990, 7
    %v1992 = vsub.s32 5, %v1991
    %v1993 = vrot.slane %v267, %v1992
    %1995 = vbcast.lane.b32.xlu0 %v1993, 256
    %v1996 = vpop.permute.xlu0 %1995
    %s1998 = sor.u32 256, 8
    %1999 = vbcast.lane.b32.xlu0 %v1993, %s1998
    %v2000 = vpop.permute.xlu0 %1999
    %s2002 = sor.u32 256, 16
    %2003 = vbcast.lane.b32.xlu0 %v1993, %s2002
    %v2004 = vpop.permute.xlu0 %2003
    %s2006 = sor.u32 256, 24
    %2007 = vbcast.lane.b32.xlu0 %v1993, %s2006
    %v2008 = vpop.permute.xlu0 %2007
    %s2010 = sor.u32 256, 32
    %2011 = vbcast.lane.b32.xlu0 %v1993, %s2010
    %v2012 = vpop.permute.xlu0 %2011
    %s2014 = sor.u32 256, 40
    %2015 = vbcast.lane.b32.xlu0 %v1993, %s2014
    %v2016 = vpop.permute.xlu0 %2015
    %s2018 = sor.u32 256, 48
    %2019 = vbcast.lane.b32.xlu0 %v1993, %s2018
    %v2020 = vpop.permute.xlu0 %2019
    %s2022 = sor.u32 256, 56
    %2023 = vbcast.lane.b32.xlu0 %v1993, %s2022
    %v2024 = vpop.permute.xlu0 %2023
    %s2026 = sor.u32 256, 64
    %2027 = vbcast.lane.b32.xlu0 %v1993, %s2026
    %v2028 = vpop.permute.xlu0 %2027
    %s2030 = sor.u32 256, 72
    %2031 = vbcast.lane.b32.xlu0 %v1993, %s2030
    %v2032 = vpop.permute.xlu0 %2031
    %s2034 = sor.u32 256, 80
    %2035 = vbcast.lane.b32.xlu0 %v1993, %s2034
    %v2036 = vpop.permute.xlu0 %2035
    %s2038 = sor.u32 256, 88
    %2039 = vbcast.lane.b32.xlu0 %v1993, %s2038
    %v2040 = vpop.permute.xlu0 %2039
    %s2042 = sor.u32 256, 96
    %2043 = vbcast.lane.b32.xlu0 %v1993, %s2042
    %v2044 = vpop.permute.xlu0 %2043
    %s2046 = sor.u32 256, 104
    %2047 = vbcast.lane.b32.xlu0 %v1993, %s2046
    %v2048 = vpop.permute.xlu0 %2047
    %s2050 = sor.u32 256, 112
    %2051 = vbcast.lane.b32.xlu0 %v1993, %s2050
    %v2052 = vpop.permute.xlu0 %2051
    %s2054 = sor.u32 256, 120
    %2055 = vbcast.lane.b32.xlu0 %v1993, %s2054
    %v2056 = vpop.permute.xlu0 %2055
    %v2057 = vlaneseq
    %v2058 = vshrl.u32 %v2057, 7
    %v2059 = vsub.s32 6, %v2058
    %v2060 = vrot.slane %v267, %v2059
    %2062 = vbcast.lane.b32.xlu0 %v2060, 256
    %v2063 = vpop.permute.xlu0 %2062
    %s2065 = sor.u32 256, 8
    %2066 = vbcast.lane.b32.xlu0 %v2060, %s2065
    %v2067 = vpop.permute.xlu0 %2066
    %s2069 = sor.u32 256, 16
    %2070 = vbcast.lane.b32.xlu0 %v2060, %s2069
    %v2071 = vpop.permute.xlu0 %2070
    %s2073 = sor.u32 256, 24
    %2074 = vbcast.lane.b32.xlu0 %v2060, %s2073
    %v2075 = vpop.permute.xlu0 %2074
    %s2077 = sor.u32 256, 32
    %2078 = vbcast.lane.b32.xlu0 %v2060, %s2077
    %v2079 = vpop.permute.xlu0 %2078
    %s2081 = sor.u32 256, 40
    %2082 = vbcast.lane.b32.xlu0 %v2060, %s2081
    %v2083 = vpop.permute.xlu0 %2082
    %s2085 = sor.u32 256, 48
    %2086 = vbcast.lane.b32.xlu0 %v2060, %s2085
    %v2087 = vpop.permute.xlu0 %2086
    %s2089 = sor.u32 256, 56
    %2090 = vbcast.lane.b32.xlu0 %v2060, %s2089
    %v2091 = vpop.permute.xlu0 %2090
    %s2093 = sor.u32 256, 64
    %2094 = vbcast.lane.b32.xlu0 %v2060, %s2093
    %v2095 = vpop.permute.xlu0 %2094
    %s2097 = sor.u32 256, 72
    %2098 = vbcast.lane.b32.xlu0 %v2060, %s2097
    %v2099 = vpop.permute.xlu0 %2098
    %s2101 = sor.u32 256, 80
    %2102 = vbcast.lane.b32.xlu0 %v2060, %s2101
    %v2103 = vpop.permute.xlu0 %2102
    %s2105 = sor.u32 256, 88
    %2106 = vbcast.lane.b32.xlu0 %v2060, %s2105
    %v2107 = vpop.permute.xlu0 %2106
    %s2109 = sor.u32 256, 96
    %2110 = vbcast.lane.b32.xlu0 %v2060, %s2109
    %v2111 = vpop.permute.xlu0 %2110
    %s2113 = sor.u32 256, 104
    %2114 = vbcast.lane.b32.xlu0 %v2060, %s2113
    %v2115 = vpop.permute.xlu0 %2114
    %s2117 = sor.u32 256, 112
    %2118 = vbcast.lane.b32.xlu0 %v2060, %s2117
    %v2119 = vpop.permute.xlu0 %2118
    %s2121 = sor.u32 256, 120
    %2122 = vbcast.lane.b32.xlu0 %v2060, %s2121
    %v2123 = vpop.permute.xlu0 %2122
    %v2124 = vlaneseq
    %v2125 = vshrl.u32 %v2124, 7
    %v2126 = vsub.s32 7, %v2125
    %v2127 = vrot.slane %v267, %v2126
    %2129 = vbcast.lane.b32.xlu0 %v2127, 256
    %v2130 = vpop.permute.xlu0 %2129
    %s2132 = sor.u32 256, 8
    %2133 = vbcast.lane.b32.xlu0 %v2127, %s2132
    %v2134 = vpop.permute.xlu0 %2133
    %s2136 = sor.u32 256, 16
    %2137 = vbcast.lane.b32.xlu0 %v2127, %s2136
    %v2138 = vpop.permute.xlu0 %2137
    %s2140 = sor.u32 256, 24
    %2141 = vbcast.lane.b32.xlu0 %v2127, %s2140
    %v2142 = vpop.permute.xlu0 %2141
    %s2144 = sor.u32 256, 32
    %2145 = vbcast.lane.b32.xlu0 %v2127, %s2144
    %v2146 = vpop.permute.xlu0 %2145
    %s2148 = sor.u32 256, 40
    %2149 = vbcast.lane.b32.xlu0 %v2127, %s2148
    %v2150 = vpop.permute.xlu0 %2149
    %s2152 = sor.u32 256, 48
    %2153 = vbcast.lane.b32.xlu0 %v2127, %s2152
    %v2154 = vpop.permute.xlu0 %2153
    %s2156 = sor.u32 256, 56
    %2157 = vbcast.lane.b32.xlu0 %v2127, %s2156
    %v2158 = vpop.permute.xlu0 %2157
    %s2160 = sor.u32 256, 64
    %2161 = vbcast.lane.b32.xlu0 %v2127, %s2160
    %v2162 = vpop.permute.xlu0 %2161
    %s2164 = sor.u32 256, 72
    %2165 = vbcast.lane.b32.xlu0 %v2127, %s2164
    %v2166 = vpop.permute.xlu0 %2165
    %s2168 = sor.u32 256, 80
    %2169 = vbcast.lane.b32.xlu0 %v2127, %s2168
    %v2170 = vpop.permute.xlu0 %2169
    %s2172 = sor.u32 256, 88
    %2173 = vbcast.lane.b32.xlu0 %v2127, %s2172
    %v2174 = vpop.permute.xlu0 %2173
    %s2176 = sor.u32 256, 96
    %2177 = vbcast.lane.b32.xlu0 %v2127, %s2176
    %v2178 = vpop.permute.xlu0 %2177
    %s2180 = sor.u32 256, 104
    %2181 = vbcast.lane.b32.xlu0 %v2127, %s2180
    %v2182 = vpop.permute.xlu0 %2181
    %s2184 = sor.u32 256, 112
    %2185 = vbcast.lane.b32.xlu0 %v2127, %s2184
    %v2186 = vpop.permute.xlu0 %2185
    %s2188 = sor.u32 256, 120
    %2189 = vbcast.lane.b32.xlu0 %v2127, %s2188
    %v2190 = vpop.permute.xlu0 %2189
    %v2319 = vadd.f32 %v1399, %v1661
    %v2320 = vadd.f32 %v1401, %v1665
    %v2321 = vadd.f32 %v1403, %v1669
    %v2322 = vadd.f32 %v1405, %v1673
    %v2323 = vadd.f32 %v1407, %v1677
    %v2324 = vadd.f32 %v1409, %v1681
    %v2325 = vadd.f32 %v1411, %v1685
    %v2326 = vadd.f32 %v1413, %v1689
    %v2327 = vadd.f32 %v1415, %v1693
    %v2328 = vadd.f32 %v1417, %v1697
    %v2329 = vadd.f32 %v1419, %v1701
    %v2330 = vadd.f32 %v1421, %v1705
    %v2331 = vadd.f32 %v1423, %v1709
    %v2332 = vadd.f32 %v1425, %v1713
    %v2333 = vadd.f32 %v1427, %v1717
    %v2334 = vadd.f32 %v1429, %v1721
    %v2335 = vadd.f32 %v1431, %v1728
    %v2336 = vadd.f32 %v1433, %v1732
    %v2337 = vadd.f32 %v1435, %v1736
    %v2338 = vadd.f32 %v1437, %v1740
    %v2339 = vadd.f32 %v1439, %v1744
    %v2340 = vadd.f32 %v1441, %v1748
    %v2341 = vadd.f32 %v1443, %v1752
    %v2342 = vadd.f32 %v1445, %v1756
    %v2343 = vadd.f32 %v1447, %v1760
    %v2344 = vadd.f32 %v1449, %v1764
    %v2345 = vadd.f32 %v1451, %v1768
    %v2346 = vadd.f32 %v1453, %v1772
    %v2347 = vadd.f32 %v1455, %v1776
    %v2348 = vadd.f32 %v1457, %v1780
    %v2349 = vadd.f32 %v1459, %v1784
    %v2350 = vadd.f32 %v1461, %v1788
    %v2351 = vadd.f32 %v1463, %v1795
    %v2352 = vadd.f32 %v1465, %v1799
    %v2353 = vadd.f32 %v1467, %v1803
    %v2354 = vadd.f32 %v1469, %v1807
    %v2355 = vadd.f32 %v1471, %v1811
    %v2356 = vadd.f32 %v1473, %v1815
    %v2357 = vadd.f32 %v1475, %v1819
    %v2358 = vadd.f32 %v1477, %v1823
    %v2359 = vadd.f32 %v1479, %v1827
    %v2360 = vadd.f32 %v1481, %v1831
    %v2361 = vadd.f32 %v1483, %v1835
    %v2362 = vadd.f32 %v1485, %v1839
    %v2363 = vadd.f32 %v1487, %v1843
    %v2364 = vadd.f32 %v1489, %v1847
    %v2365 = vadd.f32 %v1491, %v1851
    %v2366 = vadd.f32 %v1493, %v1855
    %v2367 = vadd.f32 %v1495, %v1862
    %v2368 = vadd.f32 %v1497, %v1866
    %v2369 = vadd.f32 %v1499, %v1870
    %v2370 = vadd.f32 %v1501, %v1874
    %v2371 = vadd.f32 %v1503, %v1878
    %v2372 = vadd.f32 %v1505, %v1882
    %v2373 = vadd.f32 %v1507, %v1886
    %v2374 = vadd.f32 %v1509, %v1890
    %v2375 = vadd.f32 %v1511, %v1894
    %v2376 = vadd.f32 %v1513, %v1898
    %v2377 = vadd.f32 %v1515, %v1902
    %v2378 = vadd.f32 %v1517, %v1906
    %v2379 = vadd.f32 %v1519, %v1910
    %v2380 = vadd.f32 %v1521, %v1914
    %v2381 = vadd.f32 %v1523, %v1918
    %v2382 = vadd.f32 %v1525, %v1922
    %v2383 = vadd.f32 %v1527, %v1929
    %v2384 = vadd.f32 %v1529, %v1933
    %v2385 = vadd.f32 %v1531, %v1937
    %v2386 = vadd.f32 %v1533, %v1941
    %v2387 = vadd.f32 %v1535, %v1945
    %v2388 = vadd.f32 %v1537, %v1949
    %v2389 = vadd.f32 %v1539, %v1953
    %v2390 = vadd.f32 %v1541, %v1957
    %v2391 = vadd.f32 %v1543, %v1961
    %v2392 = vadd.f32 %v1545, %v1965
    %v2393 = vadd.f32 %v1547, %v1969
    %v2394 = vadd.f32 %v1549, %v1973
    %v2395 = vadd.f32 %v1551, %v1977
    %v2396 = vadd.f32 %v1553, %v1981
    %v2397 = vadd.f32 %v1555, %v1985
    %v2398 = vadd.f32 %v1557, %v1989
    %v2399 = vadd.f32 %v1559, %v1996
    %v2400 = vadd.f32 %v1561, %v2000
    %v2401 = vadd.f32 %v1563, %v2004
    %v2402 = vadd.f32 %v1565, %v2008
    %v2403 = vadd.f32 %v1567, %v2012
    %v2404 = vadd.f32 %v1569, %v2016
    %v2405 = vadd.f32 %v1571, %v2020
    %v2406 = vadd.f32 %v1573, %v2024
    %v2407 = vadd.f32 %v1575, %v2028
    %v2408 = vadd.f32 %v1577, %v2032
    %v2409 = vadd.f32 %v1579, %v2036
    %v2410 = vadd.f32 %v1581, %v2040
    %v2411 = vadd.f32 %v1583, %v2044
    %v2412 = vadd.f32 %v1585, %v2048
    %v2413 = vadd.f32 %v1587, %v2052
    %v2414 = vadd.f32 %v1589, %v2056
    %v2415 = vadd.f32 %v1591, %v2063
    %v2416 = vadd.f32 %v1593, %v2067
    %v2417 = vadd.f32 %v1595, %v2071
    %v2418 = vadd.f32 %v1597, %v2075
    %v2419 = vadd.f32 %v1599, %v2079
    %v2420 = vadd.f32 %v1601, %v2083
    %v2421 = vadd.f32 %v1603, %v2087
    %v2422 = vadd.f32 %v1605, %v2091
    %v2423 = vadd.f32 %v1607, %v2095
    %v2424 = vadd.f32 %v1609, %v2099
    %v2425 = vadd.f32 %v1611, %v2103
    %v2426 = vadd.f32 %v1613, %v2107
    %v2427 = vadd.f32 %v1615, %v2111
    %v2428 = vadd.f32 %v1617, %v2115
    %v2429 = vadd.f32 %v1619, %v2119
    %v2430 = vadd.f32 %v1621, %v2123
    %v2431 = vadd.f32 %v1623, %v2130
    %v2432 = vadd.f32 %v1625, %v2134
    %v2433 = vadd.f32 %v1627, %v2138
    %v2434 = vadd.f32 %v1629, %v2142
    %v2435 = vadd.f32 %v1631, %v2146
    %v2436 = vadd.f32 %v1633, %v2150
    %v2437 = vadd.f32 %v1635, %v2154
    %v2438 = vadd.f32 %v1637, %v2158
    %v2439 = vadd.f32 %v1639, %v2162
    %v2440 = vadd.f32 %v1641, %v2166
    %v2441 = vadd.f32 %v1643, %v2170
    %v2442 = vadd.f32 %v1645, %v2174
    %v2443 = vadd.f32 %v1647, %v2178
    %v2444 = vadd.f32 %v1649, %v2182
    %v2445 = vadd.f32 %v1651, %v2186
    %v2446 = vadd.f32 %v1653, %v2190
    %2575 = vset.pattern.permute.xlu0 0
    %2576 = vperm.xlu0 %2575, %v2319
    %v2577 = vpop.permute.xlu0 %2576
    %2578 = vset.pattern.permute.xlu0 0
    %2579 = vperm.xlu0 %2578, %v2320
    %v2580 = vpop.permute.xlu0 %2579
    %2581 = vset.pattern.permute.xlu0 0
    %2582 = vperm.xlu0 %2581, %v2321
    %v2583 = vpop.permute.xlu0 %2582
    %2584 = vset.pattern.permute.xlu0 0
    %2585 = vperm.xlu0 %2584, %v2322
    %v2586 = vpop.permute.xlu0 %2585
    %2587 = vset.pattern.permute.xlu0 0
    %2588 = vperm.xlu0 %2587, %v2323
    %v2589 = vpop.permute.xlu0 %2588
    %2590 = vset.pattern.permute.xlu0 0
    %2591 = vperm.xlu0 %2590, %v2324
    %v2592 = vpop.permute.xlu0 %2591
    %2593 = vset.pattern.permute.xlu0 0
    %2594 = vperm.xlu0 %2593, %v2325
    %v2595 = vpop.permute.xlu0 %2594
    %2596 = vset.pattern.permute.xlu0 0
    %2597 = vperm.xlu0 %2596, %v2326
    %v2598 = vpop.permute.xlu0 %2597
    %2599 = vset.pattern.permute.xlu0 0
    %2600 = vperm.xlu0 %2599, %v2327
    %v2601 = vpop.permute.xlu0 %2600
    %2602 = vset.pattern.permute.xlu0 0
    %2603 = vperm.xlu0 %2602, %v2328
    %v2604 = vpop.permute.xlu0 %2603
    %2605 = vset.pattern.permute.xlu0 0
    %2606 = vperm.xlu0 %2605, %v2329
    %v2607 = vpop.permute.xlu0 %2606
    %2608 = vset.pattern.permute.xlu0 0
    %2609 = vperm.xlu0 %2608, %v2330
    %v2610 = vpop.permute.xlu0 %2609
    %2611 = vset.pattern.permute.xlu0 0
    %2612 = vperm.xlu0 %2611, %v2331
    %v2613 = vpop.permute.xlu0 %2612
    %2614 = vset.pattern.permute.xlu0 0
    %2615 = vperm.xlu0 %2614, %v2332
    %v2616 = vpop.permute.xlu0 %2615
    %2617 = vset.pattern.permute.xlu0 0
    %2618 = vperm.xlu0 %2617, %v2333
    %v2619 = vpop.permute.xlu0 %2618
    %2620 = vset.pattern.permute.xlu0 0
    %2621 = vperm.xlu0 %2620, %v2334
    %v2622 = vpop.permute.xlu0 %2621
    %2623 = vset.pattern.permute.xlu0 0
    %2624 = vperm.xlu0 %2623, %v2335
    %v2625 = vpop.permute.xlu0 %2624
    %2626 = vset.pattern.permute.xlu0 0
    %2627 = vperm.xlu0 %2626, %v2336
    %v2628 = vpop.permute.xlu0 %2627
    %2629 = vset.pattern.permute.xlu0 0
    %2630 = vperm.xlu0 %2629, %v2337
    %v2631 = vpop.permute.xlu0 %2630
    %2632 = vset.pattern.permute.xlu0 0
    %2633 = vperm.xlu0 %2632, %v2338
    %v2634 = vpop.permute.xlu0 %2633
    %2635 = vset.pattern.permute.xlu0 0
    %2636 = vperm.xlu0 %2635, %v2339
    %v2637 = vpop.permute.xlu0 %2636
    %2638 = vset.pattern.permute.xlu0 0
    %2639 = vperm.xlu0 %2638, %v2340
    %v2640 = vpop.permute.xlu0 %2639
    %2641 = vset.pattern.permute.xlu0 0
    %2642 = vperm.xlu0 %2641, %v2341
    %v2643 = vpop.permute.xlu0 %2642
    %2644 = vset.pattern.permute.xlu0 0
    %2645 = vperm.xlu0 %2644, %v2342
    %v2646 = vpop.permute.xlu0 %2645
    %2647 = vset.pattern.permute.xlu0 0
    %2648 = vperm.xlu0 %2647, %v2343
    %v2649 = vpop.permute.xlu0 %2648
    %2650 = vset.pattern.permute.xlu0 0
    %2651 = vperm.xlu0 %2650, %v2344
    %v2652 = vpop.permute.xlu0 %2651
    %2653 = vset.pattern.permute.xlu0 0
    %2654 = vperm.xlu0 %2653, %v2345
    %v2655 = vpop.permute.xlu0 %2654
    %2656 = vset.pattern.permute.xlu0 0
    %2657 = vperm.xlu0 %2656, %v2346
    %v2658 = vpop.permute.xlu0 %2657
    %2659 = vset.pattern.permute.xlu0 0
    %2660 = vperm.xlu0 %2659, %v2347
    %v2661 = vpop.permute.xlu0 %2660
    %2662 = vset.pattern.permute.xlu0 0
    %2663 = vperm.xlu0 %2662, %v2348
    %v2664 = vpop.permute.xlu0 %2663
    %2665 = vset.pattern.permute.xlu0 0
    %2666 = vperm.xlu0 %2665, %v2349
    %v2667 = vpop.permute.xlu0 %2666
    %2668 = vset.pattern.permute.xlu0 0
    %2669 = vperm.xlu0 %2668, %v2350
    %v2670 = vpop.permute.xlu0 %2669
    %2671 = vset.pattern.permute.xlu0 0
    %2672 = vperm.xlu0 %2671, %v2351
    %v2673 = vpop.permute.xlu0 %2672
    %2674 = vset.pattern.permute.xlu0 0
    %2675 = vperm.xlu0 %2674, %v2352
    %v2676 = vpop.permute.xlu0 %2675
    %2677 = vset.pattern.permute.xlu0 0
    %2678 = vperm.xlu0 %2677, %v2353
    %v2679 = vpop.permute.xlu0 %2678
    %2680 = vset.pattern.permute.xlu0 0
    %2681 = vperm.xlu0 %2680, %v2354
    %v2682 = vpop.permute.xlu0 %2681
    %2683 = vset.pattern.permute.xlu0 0
    %2684 = vperm.xlu0 %2683, %v2355
    %v2685 = vpop.permute.xlu0 %2684
    %2686 = vset.pattern.permute.xlu0 0
    %2687 = vperm.xlu0 %2686, %v2356
    %v2688 = vpop.permute.xlu0 %2687
    %2689 = vset.pattern.permute.xlu0 0
    %2690 = vperm.xlu0 %2689, %v2357
    %v2691 = vpop.permute.xlu0 %2690
    %2692 = vset.pattern.permute.xlu0 0
    %2693 = vperm.xlu0 %2692, %v2358
    %v2694 = vpop.permute.xlu0 %2693
    %2695 = vset.pattern.permute.xlu0 0
    %2696 = vperm.xlu0 %2695, %v2359
    %v2697 = vpop.permute.xlu0 %2696
    %2698 = vset.pattern.permute.xlu0 0
    %2699 = vperm.xlu0 %2698, %v2360
    %v2700 = vpop.permute.xlu0 %2699
    %2701 = vset.pattern.permute.xlu0 0
    %2702 = vperm.xlu0 %2701, %v2361
    %v2703 = vpop.permute.xlu0 %2702
    %2704 = vset.pattern.permute.xlu0 0
    %2705 = vperm.xlu0 %2704, %v2362
    %v2706 = vpop.permute.xlu0 %2705
    %2707 = vset.pattern.permute.xlu0 0
    %2708 = vperm.xlu0 %2707, %v2363
    %v2709 = vpop.permute.xlu0 %2708
    %2710 = vset.pattern.permute.xlu0 0
    %2711 = vperm.xlu0 %2710, %v2364
    %v2712 = vpop.permute.xlu0 %2711
    %2713 = vset.pattern.permute.xlu0 0
    %2714 = vperm.xlu0 %2713, %v2365
    %v2715 = vpop.permute.xlu0 %2714
    %2716 = vset.pattern.permute.xlu0 0
    %2717 = vperm.xlu0 %2716, %v2366
    %v2718 = vpop.permute.xlu0 %2717
    %2719 = vset.pattern.permute.xlu0 0
    %2720 = vperm.xlu0 %2719, %v2367
    %v2721 = vpop.permute.xlu0 %2720
    %2722 = vset.pattern.permute.xlu0 0
    %2723 = vperm.xlu0 %2722, %v2368
    %v2724 = vpop.permute.xlu0 %2723
    %2725 = vset.pattern.permute.xlu0 0
    %2726 = vperm.xlu0 %2725, %v2369
    %v2727 = vpop.permute.xlu0 %2726
    %2728 = vset.pattern.permute.xlu0 0
    %2729 = vperm.xlu0 %2728, %v2370
    %v2730 = vpop.permute.xlu0 %2729
    %2731 = vset.pattern.permute.xlu0 0
    %2732 = vperm.xlu0 %2731, %v2371
    %v2733 = vpop.permute.xlu0 %2732
    %2734 = vset.pattern.permute.xlu0 0
    %2735 = vperm.xlu0 %2734, %v2372
    %v2736 = vpop.permute.xlu0 %2735
    %2737 = vset.pattern.permute.xlu0 0
    %2738 = vperm.xlu0 %2737, %v2373
    %v2739 = vpop.permute.xlu0 %2738
    %2740 = vset.pattern.permute.xlu0 0
    %2741 = vperm.xlu0 %2740, %v2374
    %v2742 = vpop.permute.xlu0 %2741
    %2743 = vset.pattern.permute.xlu0 0
    %2744 = vperm.xlu0 %2743, %v2375
    %v2745 = vpop.permute.xlu0 %2744
    %2746 = vset.pattern.permute.xlu0 0
    %2747 = vperm.xlu0 %2746, %v2376
    %v2748 = vpop.permute.xlu0 %2747
    %2749 = vset.pattern.permute.xlu0 0
    %2750 = vperm.xlu0 %2749, %v2377
    %v2751 = vpop.permute.xlu0 %2750
    %2752 = vset.pattern.permute.xlu0 0
    %2753 = vperm.xlu0 %2752, %v2378
    %v2754 = vpop.permute.xlu0 %2753
    %2755 = vset.pattern.permute.xlu0 0
    %2756 = vperm.xlu0 %2755, %v2379
    %v2757 = vpop.permute.xlu0 %2756
    %2758 = vset.pattern.permute.xlu0 0
    %2759 = vperm.xlu0 %2758, %v2380
    %v2760 = vpop.permute.xlu0 %2759
    %2761 = vset.pattern.permute.xlu0 0
    %2762 = vperm.xlu0 %2761, %v2381
    %v2763 = vpop.permute.xlu0 %2762
    %2764 = vset.pattern.permute.xlu0 0
    %2765 = vperm.xlu0 %2764, %v2382
    %v2766 = vpop.permute.xlu0 %2765
    %2767 = vset.pattern.permute.xlu0 0
    %2768 = vperm.xlu0 %2767, %v2383
    %v2769 = vpop.permute.xlu0 %2768
    %2770 = vset.pattern.permute.xlu0 0
    %2771 = vperm.xlu0 %2770, %v2384
    %v2772 = vpop.permute.xlu0 %2771
    %2773 = vset.pattern.permute.xlu0 0
    %2774 = vperm.xlu0 %2773, %v2385
    %v2775 = vpop.permute.xlu0 %2774
    %2776 = vset.pattern.permute.xlu0 0
    %2777 = vperm.xlu0 %2776, %v2386
    %v2778 = vpop.permute.xlu0 %2777
    %2779 = vset.pattern.permute.xlu0 0
    %2780 = vperm.xlu0 %2779, %v2387
    %v2781 = vpop.permute.xlu0 %2780
    %2782 = vset.pattern.permute.xlu0 0
    %2783 = vperm.xlu0 %2782, %v2388
    %v2784 = vpop.permute.xlu0 %2783
    %2785 = vset.pattern.permute.xlu0 0
    %2786 = vperm.xlu0 %2785, %v2389
    %v2787 = vpop.permute.xlu0 %2786
    %2788 = vset.pattern.permute.xlu0 0
    %2789 = vperm.xlu0 %2788, %v2390
    %v2790 = vpop.permute.xlu0 %2789
    %2791 = vset.pattern.permute.xlu0 0
    %2792 = vperm.xlu0 %2791, %v2391
    %v2793 = vpop.permute.xlu0 %2792
    %2794 = vset.pattern.permute.xlu0 0
    %2795 = vperm.xlu0 %2794, %v2392
    %v2796 = vpop.permute.xlu0 %2795
    %2797 = vset.pattern.permute.xlu0 0
    %2798 = vperm.xlu0 %2797, %v2393
    %v2799 = vpop.permute.xlu0 %2798
    %2800 = vset.pattern.permute.xlu0 0
    %2801 = vperm.xlu0 %2800, %v2394
    %v2802 = vpop.permute.xlu0 %2801
    %2803 = vset.pattern.permute.xlu0 0
    %2804 = vperm.xlu0 %2803, %v2395
    %v2805 = vpop.permute.xlu0 %2804
    %2806 = vset.pattern.permute.xlu0 0
    %2807 = vperm.xlu0 %2806, %v2396
    %v2808 = vpop.permute.xlu0 %2807
    %2809 = vset.pattern.permute.xlu0 0
    %2810 = vperm.xlu0 %2809, %v2397
    %v2811 = vpop.permute.xlu0 %2810
    %2812 = vset.pattern.permute.xlu0 0
    %2813 = vperm.xlu0 %2812, %v2398
    %v2814 = vpop.permute.xlu0 %2813
    %2815 = vset.pattern.permute.xlu0 0
    %2816 = vperm.xlu0 %2815, %v2399
    %v2817 = vpop.permute.xlu0 %2816
    %2818 = vset.pattern.permute.xlu0 0
    %2819 = vperm.xlu0 %2818, %v2400
    %v2820 = vpop.permute.xlu0 %2819
    %2821 = vset.pattern.permute.xlu0 0
    %2822 = vperm.xlu0 %2821, %v2401
    %v2823 = vpop.permute.xlu0 %2822
    %2824 = vset.pattern.permute.xlu0 0
    %2825 = vperm.xlu0 %2824, %v2402
    %v2826 = vpop.permute.xlu0 %2825
    %2827 = vset.pattern.permute.xlu0 0
    %2828 = vperm.xlu0 %2827, %v2403
    %v2829 = vpop.permute.xlu0 %2828
    %2830 = vset.pattern.permute.xlu0 0
    %2831 = vperm.xlu0 %2830, %v2404
    %v2832 = vpop.permute.xlu0 %2831
    %2833 = vset.pattern.permute.xlu0 0
    %2834 = vperm.xlu0 %2833, %v2405
    %v2835 = vpop.permute.xlu0 %2834
    %2836 = vset.pattern.permute.xlu0 0
    %2837 = vperm.xlu0 %2836, %v2406
    %v2838 = vpop.permute.xlu0 %2837
    %2839 = vset.pattern.permute.xlu0 0
    %2840 = vperm.xlu0 %2839, %v2407
    %v2841 = vpop.permute.xlu0 %2840
    %2842 = vset.pattern.permute.xlu0 0
    %2843 = vperm.xlu0 %2842, %v2408
    %v2844 = vpop.permute.xlu0 %2843
    %2845 = vset.pattern.permute.xlu0 0
    %2846 = vperm.xlu0 %2845, %v2409
    %v2847 = vpop.permute.xlu0 %2846
    %2848 = vset.pattern.permute.xlu0 0
    %2849 = vperm.xlu0 %2848, %v2410
    %v2850 = vpop.permute.xlu0 %2849
    %2851 = vset.pattern.permute.xlu0 0
    %2852 = vperm.xlu0 %2851, %v2411
    %v2853 = vpop.permute.xlu0 %2852
    %2854 = vset.pattern.permute.xlu0 0
    %2855 = vperm.xlu0 %2854, %v2412
    %v2856 = vpop.permute.xlu0 %2855
    %2857 = vset.pattern.permute.xlu0 0
    %2858 = vperm.xlu0 %2857, %v2413
    %v2859 = vpop.permute.xlu0 %2858
    %2860 = vset.pattern.permute.xlu0 0
    %2861 = vperm.xlu0 %2860, %v2414
    %v2862 = vpop.permute.xlu0 %2861
    %2863 = vset.pattern.permute.xlu0 0
    %2864 = vperm.xlu0 %2863, %v2415
    %v2865 = vpop.permute.xlu0 %2864
    %2866 = vset.pattern.permute.xlu0 0
    %2867 = vperm.xlu0 %2866, %v2416
    %v2868 = vpop.permute.xlu0 %2867
    %2869 = vset.pattern.permute.xlu0 0
    %2870 = vperm.xlu0 %2869, %v2417
    %v2871 = vpop.permute.xlu0 %2870
    %2872 = vset.pattern.permute.xlu0 0
    %2873 = vperm.xlu0 %2872, %v2418
    %v2874 = vpop.permute.xlu0 %2873
    %2875 = vset.pattern.permute.xlu0 0
    %2876 = vperm.xlu0 %2875, %v2419
    %v2877 = vpop.permute.xlu0 %2876
    %2878 = vset.pattern.permute.xlu0 0
    %2879 = vperm.xlu0 %2878, %v2420
    %v2880 = vpop.permute.xlu0 %2879
    %2881 = vset.pattern.permute.xlu0 0
    %2882 = vperm.xlu0 %2881, %v2421
    %v2883 = vpop.permute.xlu0 %2882
    %2884 = vset.pattern.permute.xlu0 0
    %2885 = vperm.xlu0 %2884, %v2422
    %v2886 = vpop.permute.xlu0 %2885
    %2887 = vset.pattern.permute.xlu0 0
    %2888 = vperm.xlu0 %2887, %v2423
    %v2889 = vpop.permute.xlu0 %2888
    %2890 = vset.pattern.permute.xlu0 0
    %2891 = vperm.xlu0 %2890, %v2424
    %v2892 = vpop.permute.xlu0 %2891
    %2893 = vset.pattern.permute.xlu0 0
    %2894 = vperm.xlu0 %2893, %v2425
    %v2895 = vpop.permute.xlu0 %2894
    %2896 = vset.pattern.permute.xlu0 0
    %2897 = vperm.xlu0 %2896, %v2426
    %v2898 = vpop.permute.xlu0 %2897
    %2899 = vset.pattern.permute.xlu0 0
    %2900 = vperm.xlu0 %2899, %v2427
    %v2901 = vpop.permute.xlu0 %2900
    %2902 = vset.pattern.permute.xlu0 0
    %2903 = vperm.xlu0 %2902, %v2428
    %v2904 = vpop.permute.xlu0 %2903
    %2905 = vset.pattern.permute.xlu0 0
    %2906 = vperm.xlu0 %2905, %v2429
    %v2907 = vpop.permute.xlu0 %2906
    %2908 = vset.pattern.permute.xlu0 0
    %2909 = vperm.xlu0 %2908, %v2430
    %v2910 = vpop.permute.xlu0 %2909
    %2911 = vset.pattern.permute.xlu0 0
    %2912 = vperm.xlu0 %2911, %v2431
    %v2913 = vpop.permute.xlu0 %2912
    %2914 = vset.pattern.permute.xlu0 0
    %2915 = vperm.xlu0 %2914, %v2432
    %v2916 = vpop.permute.xlu0 %2915
    %2917 = vset.pattern.permute.xlu0 0
    %2918 = vperm.xlu0 %2917, %v2433
    %v2919 = vpop.permute.xlu0 %2918
    %2920 = vset.pattern.permute.xlu0 0
    %2921 = vperm.xlu0 %2920, %v2434
    %v2922 = vpop.permute.xlu0 %2921
    %2923 = vset.pattern.permute.xlu0 0
    %2924 = vperm.xlu0 %2923, %v2435
    %v2925 = vpop.permute.xlu0 %2924
    %2926 = vset.pattern.permute.xlu0 0
    %2927 = vperm.xlu0 %2926, %v2436
    %v2928 = vpop.permute.xlu0 %2927
    %2929 = vset.pattern.permute.xlu0 0
    %2930 = vperm.xlu0 %2929, %v2437
    %v2931 = vpop.permute.xlu0 %2930
    %2932 = vset.pattern.permute.xlu0 0
    %2933 = vperm.xlu0 %2932, %v2438
    %v2934 = vpop.permute.xlu0 %2933
    %2935 = vset.pattern.permute.xlu0 0
    %2936 = vperm.xlu0 %2935, %v2439
    %v2937 = vpop.permute.xlu0 %2936
    %2938 = vset.pattern.permute.xlu0 0
    %2939 = vperm.xlu0 %2938, %v2440
    %v2940 = vpop.permute.xlu0 %2939
    %2941 = vset.pattern.permute.xlu0 0
    %2942 = vperm.xlu0 %2941, %v2441
    %v2943 = vpop.permute.xlu0 %2942
    %2944 = vset.pattern.permute.xlu0 0
    %2945 = vperm.xlu0 %2944, %v2442
    %v2946 = vpop.permute.xlu0 %2945
    %2947 = vset.pattern.permute.xlu0 0
    %2948 = vperm.xlu0 %2947, %v2443
    %v2949 = vpop.permute.xlu0 %2948
    %2950 = vset.pattern.permute.xlu0 0
    %2951 = vperm.xlu0 %2950, %v2444
    %v2952 = vpop.permute.xlu0 %2951
    %2953 = vset.pattern.permute.xlu0 0
    %2954 = vperm.xlu0 %2953, %v2445
    %v2955 = vpop.permute.xlu0 %2954
    %2956 = vset.pattern.permute.xlu0 0
    %2957 = vperm.xlu0 %2956, %v2446
    %v2958 = vpop.permute.xlu0 %2957
    %v2959 = vlaneseq
    %v2960 = vand.u32 %v2959, 127
    %v2961 = vlaneseq
    %v2962 = vshrl.u32 %v2961, 7
    %v2963 = vsub.s32 %v2960, %v2962
    %v2964 = vrot.slane %v2577, %v2963
    %v2965 = vadd.s32 %v2960, 4294967288
    %v2966 = vlaneseq
    %v2967 = vshrl.u32 %v2966, 7
    %v2968 = vsub.s32 %v2965, %v2967
    %v2969 = vrot.slane %v2580, %v2968
    %vm2970 = vcmask 130112
    %v2971 = vsel %vm2970, %v2969, %v2964
    %v2972 = vadd.s32 %v2960, 4294967280
    %v2973 = vlaneseq
    %v2974 = vshrl.u32 %v2973, 7
    %v2975 = vsub.s32 %v2972, %v2974
    %v2976 = vrot.slane %v2583, %v2975
    %vm2977 = vcmask 195712
    %v2978 = vsel %vm2977, %v2976, %v2971
    %v2979 = vadd.s32 %v2960, 4294967272
    %v2980 = vlaneseq
    %v2981 = vshrl.u32 %v2980, 7
    %v2982 = vsub.s32 %v2979, %v2981
    %v2983 = vrot.slane %v2586, %v2982
    %vm2984 = vcmask 261312
    %v2985 = vsel %vm2984, %v2983, %v2978
    %v2986 = vadd.s32 %v2960, 4294967264
    %v2987 = vlaneseq
    %v2988 = vshrl.u32 %v2987, 7
    %v2989 = vsub.s32 %v2986, %v2988
    %v2990 = vrot.slane %v2589, %v2989
    %vm2991 = vcmask 326912
    %v2992 = vsel %vm2991, %v2990, %v2985
    %v2993 = vadd.s32 %v2960, 4294967256
    %v2994 = vlaneseq
    %v2995 = vshrl.u32 %v2994, 7
    %v2996 = vsub.s32 %v2993, %v2995
    %v2997 = vrot.slane %v2592, %v2996
    %vm2998 = vcmask 392512
    %v2999 = vsel %vm2998, %v2997, %v2992
    %v3000 = vadd.s32 %v2960, 4294967248
    %v3001 = vlaneseq
    %v3002 = vshrl.u32 %v3001, 7
    %v3003 = vsub.s32 %v3000, %v3002
    %v3004 = vrot.slane %v2595, %v3003
    %vm3005 = vcmask 458112
    %v3006 = vsel %vm3005, %v3004, %v2999
    %v3007 = vadd.s32 %v2960, 4294967240
    %v3008 = vlaneseq
    %v3009 = vshrl.u32 %v3008, 7
    %v3010 = vsub.s32 %v3007, %v3009
    %v3011 = vrot.slane %v2598, %v3010
    %vm3012 = vcmask 523712
    %v3013 = vsel %vm3012, %v3011, %v3006
    %v3014 = vadd.s32 %v2960, 4294967232
    %v3015 = vlaneseq
    %v3016 = vshrl.u32 %v3015, 7
    %v3017 = vsub.s32 %v3014, %v3016
    %v3018 = vrot.slane %v2601, %v3017
    %vm3019 = vcmask 589312
    %v3020 = vsel %vm3019, %v3018, %v3013
    %v3021 = vadd.s32 %v2960, 4294967224
    %v3022 = vlaneseq
    %v3023 = vshrl.u32 %v3022, 7
    %v3024 = vsub.s32 %v3021, %v3023
    %v3025 = vrot.slane %v2604, %v3024
    %vm3026 = vcmask 654912
    %v3027 = vsel %vm3026, %v3025, %v3020
    %v3028 = vadd.s32 %v2960, 4294967216
    %v3029 = vlaneseq
    %v3030 = vshrl.u32 %v3029, 7
    %v3031 = vsub.s32 %v3028, %v3030
    %v3032 = vrot.slane %v2607, %v3031
    %vm3033 = vcmask 720512
    %v3034 = vsel %vm3033, %v3032, %v3027
    %v3035 = vadd.s32 %v2960, 4294967208
    %v3036 = vlaneseq
    %v3037 = vshrl.u32 %v3036, 7
    %v3038 = vsub.s32 %v3035, %v3037
    %v3039 = vrot.slane %v2610, %v3038
    %vm3040 = vcmask 786112
    %v3041 = vsel %vm3040, %v3039, %v3034
    %v3042 = vadd.s32 %v2960, 4294967200
    %v3043 = vlaneseq
    %v3044 = vshrl.u32 %v3043, 7
    %v3045 = vsub.s32 %v3042, %v3044
    %v3046 = vrot.slane %v2613, %v3045
    %vm3047 = vcmask 851712
    %v3048 = vsel %vm3047, %v3046, %v3041
    %v3049 = vadd.s32 %v2960, 4294967192
    %v3050 = vlaneseq
    %v3051 = vshrl.u32 %v3050, 7
    %v3052 = vsub.s32 %v3049, %v3051
    %v3053 = vrot.slane %v2616, %v3052
    %vm3054 = vcmask 917312
    %v3055 = vsel %vm3054, %v3053, %v3048
    %v3056 = vadd.s32 %v2960, 4294967184
    %v3057 = vlaneseq
    %v3058 = vshrl.u32 %v3057, 7
    %v3059 = vsub.s32 %v3056, %v3058
    %v3060 = vrot.slane %v2619, %v3059
    %vm3061 = vcmask 982912
    %v3062 = vsel %vm3061, %v3060, %v3055
    %v3063 = vadd.s32 %v2960, 4294967176
    %v3064 = vlaneseq
    %v3065 = vshrl.u32 %v3064, 7
    %v3066 = vsub.s32 %v3063, %v3065
    %v3067 = vrot.slane %v2622, %v3066
    %vm3068 = vcmask 1048512
    %v3069 = vsel %vm3068, %v3067, %v3062
    %v3070 = vlaneseq
    %v3071 = vshrl.u32 %v3070, 7
    %v3072 = vsub.s32 %v2960, %v3071
    %v3073 = vrot.slane %v2625, %v3072
    %v3074 = vlaneseq
    %v3075 = vshrl.u32 %v3074, 7
    %v3076 = vsub.s32 %v2965, %v3075
    %v3077 = vrot.slane %v2628, %v3076
    %v3078 = vsel %vm2970, %v3077, %v3073
    %v3079 = vlaneseq
    %v3080 = vshrl.u32 %v3079, 7
    %v3081 = vsub.s32 %v2972, %v3080
    %v3082 = vrot.slane %v2631, %v3081
    %v3083 = vsel %vm2977, %v3082, %v3078
    %v3084 = vlaneseq
    %v3085 = vshrl.u32 %v3084, 7
    %v3086 = vsub.s32 %v2979, %v3085
    %v3087 = vrot.slane %v2634, %v3086
    %v3088 = vsel %vm2984, %v3087, %v3083
    %v3089 = vlaneseq
    %v3090 = vshrl.u32 %v3089, 7
    %v3091 = vsub.s32 %v2986, %v3090
    %v3092 = vrot.slane %v2637, %v3091
    %v3093 = vsel %vm2991, %v3092, %v3088
    %v3094 = vlaneseq
    %v3095 = vshrl.u32 %v3094, 7
    %v3096 = vsub.s32 %v2993, %v3095
    %v3097 = vrot.slane %v2640, %v3096
    %v3098 = vsel %vm2998, %v3097, %v3093
    %v3099 = vlaneseq
    %v3100 = vshrl.u32 %v3099, 7
    %v3101 = vsub.s32 %v3000, %v3100
    %v3102 = vrot.slane %v2643, %v3101
    %v3103 = vsel %vm3005, %v3102, %v3098
    %v3104 = vlaneseq
    %v3105 = vshrl.u32 %v3104, 7
    %v3106 = vsub.s32 %v3007, %v3105
    %v3107 = vrot.slane %v2646, %v3106
    %v3108 = vsel %vm3012, %v3107, %v3103
    %v3109 = vlaneseq
    %v3110 = vshrl.u32 %v3109, 7
    %v3111 = vsub.s32 %v3014, %v3110
    %v3112 = vrot.slane %v2649, %v3111
    %v3113 = vsel %vm3019, %v3112, %v3108
    %v3114 = vlaneseq
    %v3115 = vshrl.u32 %v3114, 7
    %v3116 = vsub.s32 %v3021, %v3115
    %v3117 = vrot.slane %v2652, %v3116
    %v3118 = vsel %vm3026, %v3117, %v3113
    %v3119 = vlaneseq
    %v3120 = vshrl.u32 %v3119, 7
    %v3121 = vsub.s32 %v3028, %v3120
    %v3122 = vrot.slane %v2655, %v3121
    %v3123 = vsel %vm3033, %v3122, %v3118
    %v3124 = vlaneseq
    %v3125 = vshrl.u32 %v3124, 7
    %v3126 = vsub.s32 %v3035, %v3125
    %v3127 = vrot.slane %v2658, %v3126
    %v3128 = vsel %vm3040, %v3127, %v3123
    %v3129 = vlaneseq
    %v3130 = vshrl.u32 %v3129, 7
    %v3131 = vsub.s32 %v3042, %v3130
    %v3132 = vrot.slane %v2661, %v3131
    %v3133 = vsel %vm3047, %v3132, %v3128
    %v3134 = vlaneseq
    %v3135 = vshrl.u32 %v3134, 7
    %v3136 = vsub.s32 %v3049, %v3135
    %v3137 = vrot.slane %v2664, %v3136
    %v3138 = vsel %vm3054, %v3137, %v3133
    %v3139 = vlaneseq
    %v3140 = vshrl.u32 %v3139, 7
    %v3141 = vsub.s32 %v3056, %v3140
    %v3142 = vrot.slane %v2667, %v3141
    %v3143 = vsel %vm3061, %v3142, %v3138
    %v3144 = vlaneseq
    %v3145 = vshrl.u32 %v3144, 7
    %v3146 = vsub.s32 %v3063, %v3145
    %v3147 = vrot.slane %v2670, %v3146
    %v3148 = vsel %vm3068, %v3147, %v3143
    %v3149 = vlaneseq
    %v3150 = vshrl.u32 %v3149, 7
    %v3151 = vsub.s32 %v2960, %v3150
    %v3152 = vrot.slane %v2673, %v3151
    %v3153 = vlaneseq
    %v3154 = vshrl.u32 %v3153, 7
    %v3155 = vsub.s32 %v2965, %v3154
    %v3156 = vrot.slane %v2676, %v3155
    %v3157 = vsel %vm2970, %v3156, %v3152
    %v3158 = vlaneseq
    %v3159 = vshrl.u32 %v3158, 7
    %v3160 = vsub.s32 %v2972, %v3159
    %v3161 = vrot.slane %v2679, %v3160
    %v3162 = vsel %vm2977, %v3161, %v3157
    %v3163 = vlaneseq
    %v3164 = vshrl.u32 %v3163, 7
    %v3165 = vsub.s32 %v2979, %v3164
    %v3166 = vrot.slane %v2682, %v3165
    %v3167 = vsel %vm2984, %v3166, %v3162
    %v3168 = vlaneseq
    %v3169 = vshrl.u32 %v3168, 7
    %v3170 = vsub.s32 %v2986, %v3169
    %v3171 = vrot.slane %v2685, %v3170
    %v3172 = vsel %vm2991, %v3171, %v3167
    %v3173 = vlaneseq
    %v3174 = vshrl.u32 %v3173, 7
    %v3175 = vsub.s32 %v2993, %v3174
    %v3176 = vrot.slane %v2688, %v3175
    %v3177 = vsel %vm2998, %v3176, %v3172
    %v3178 = vlaneseq
    %v3179 = vshrl.u32 %v3178, 7
    %v3180 = vsub.s32 %v3000, %v3179
    %v3181 = vrot.slane %v2691, %v3180
    %v3182 = vsel %vm3005, %v3181, %v3177
    %v3183 = vlaneseq
    %v3184 = vshrl.u32 %v3183, 7
    %v3185 = vsub.s32 %v3007, %v3184
    %v3186 = vrot.slane %v2694, %v3185
    %v3187 = vsel %vm3012, %v3186, %v3182
    %v3188 = vlaneseq
    %v3189 = vshrl.u32 %v3188, 7
    %v3190 = vsub.s32 %v3014, %v3189
    %v3191 = vrot.slane %v2697, %v3190
    %v3192 = vsel %vm3019, %v3191, %v3187
    %v3193 = vlaneseq
    %v3194 = vshrl.u32 %v3193, 7
    %v3195 = vsub.s32 %v3021, %v3194
    %v3196 = vrot.slane %v2700, %v3195
    %v3197 = vsel %vm3026, %v3196, %v3192
    %v3198 = vlaneseq
    %v3199 = vshrl.u32 %v3198, 7
    %v3200 = vsub.s32 %v3028, %v3199
    %v3201 = vrot.slane %v2703, %v3200
    %v3202 = vsel %vm3033, %v3201, %v3197
    %v3203 = vlaneseq
    %v3204 = vshrl.u32 %v3203, 7
    %v3205 = vsub.s32 %v3035, %v3204
    %v3206 = vrot.slane %v2706, %v3205
    %v3207 = vsel %vm3040, %v3206, %v3202
    %v3208 = vlaneseq
    %v3209 = vshrl.u32 %v3208, 7
    %v3210 = vsub.s32 %v3042, %v3209
    %v3211 = vrot.slane %v2709, %v3210
    %v3212 = vsel %vm3047, %v3211, %v3207
    %v3213 = vlaneseq
    %v3214 = vshrl.u32 %v3213, 7
    %v3215 = vsub.s32 %v3049, %v3214
    %v3216 = vrot.slane %v2712, %v3215
    %v3217 = vsel %vm3054, %v3216, %v3212
    %v3218 = vlaneseq
    %v3219 = vshrl.u32 %v3218, 7
    %v3220 = vsub.s32 %v3056, %v3219
    %v3221 = vrot.slane %v2715, %v3220
    %v3222 = vsel %vm3061, %v3221, %v3217
    %v3223 = vlaneseq
    %v3224 = vshrl.u32 %v3223, 7
    %v3225 = vsub.s32 %v3063, %v3224
    %v3226 = vrot.slane %v2718, %v3225
    %v3227 = vsel %vm3068, %v3226, %v3222
    %v3228 = vlaneseq
    %v3229 = vshrl.u32 %v3228, 7
    %v3230 = vsub.s32 %v2960, %v3229
    %v3231 = vrot.slane %v2721, %v3230
    %v3232 = vlaneseq
    %v3233 = vshrl.u32 %v3232, 7
    %v3234 = vsub.s32 %v2965, %v3233
    %v3235 = vrot.slane %v2724, %v3234
    %v3236 = vsel %vm2970, %v3235, %v3231
    %v3237 = vlaneseq
    %v3238 = vshrl.u32 %v3237, 7
    %v3239 = vsub.s32 %v2972, %v3238
    %v3240 = vrot.slane %v2727, %v3239
    %v3241 = vsel %vm2977, %v3240, %v3236
    %v3242 = vlaneseq
    %v3243 = vshrl.u32 %v3242, 7
    %v3244 = vsub.s32 %v2979, %v3243
    %v3245 = vrot.slane %v2730, %v3244
    %v3246 = vsel %vm2984, %v3245, %v3241
    %v3247 = vlaneseq
    %v3248 = vshrl.u32 %v3247, 7
    %v3249 = vsub.s32 %v2986, %v3248
    %v3250 = vrot.slane %v2733, %v3249
    %v3251 = vsel %vm2991, %v3250, %v3246
    %v3252 = vlaneseq
    %v3253 = vshrl.u32 %v3252, 7
    %v3254 = vsub.s32 %v2993, %v3253
    %v3255 = vrot.slane %v2736, %v3254
    %v3256 = vsel %vm2998, %v3255, %v3251
    %v3257 = vlaneseq
    %v3258 = vshrl.u32 %v3257, 7
    %v3259 = vsub.s32 %v3000, %v3258
    %v3260 = vrot.slane %v2739, %v3259
    %v3261 = vsel %vm3005, %v3260, %v3256
    %v3262 = vlaneseq
    %v3263 = vshrl.u32 %v3262, 7
    %v3264 = vsub.s32 %v3007, %v3263
    %v3265 = vrot.slane %v2742, %v3264
    %v3266 = vsel %vm3012, %v3265, %v3261
    %v3267 = vlaneseq
    %v3268 = vshrl.u32 %v3267, 7
    %v3269 = vsub.s32 %v3014, %v3268
    %v3270 = vrot.slane %v2745, %v3269
    %v3271 = vsel %vm3019, %v3270, %v3266
    %v3272 = vlaneseq
    %v3273 = vshrl.u32 %v3272, 7
    %v3274 = vsub.s32 %v3021, %v3273
    %v3275 = vrot.slane %v2748, %v3274
    %v3276 = vsel %vm3026, %v3275, %v3271
    %v3277 = vlaneseq
    %v3278 = vshrl.u32 %v3277, 7
    %v3279 = vsub.s32 %v3028, %v3278
    %v3280 = vrot.slane %v2751, %v3279
    %v3281 = vsel %vm3033, %v3280, %v3276
    %v3282 = vlaneseq
    %v3283 = vshrl.u32 %v3282, 7
    %v3284 = vsub.s32 %v3035, %v3283
    %v3285 = vrot.slane %v2754, %v3284
    %v3286 = vsel %vm3040, %v3285, %v3281
    %v3287 = vlaneseq
    %v3288 = vshrl.u32 %v3287, 7
    %v3289 = vsub.s32 %v3042, %v3288
    %v3290 = vrot.slane %v2757, %v3289
    %v3291 = vsel %vm3047, %v3290, %v3286
    %v3292 = vlaneseq
    %v3293 = vshrl.u32 %v3292, 7
    %v3294 = vsub.s32 %v3049, %v3293
    %v3295 = vrot.slane %v2760, %v3294
    %v3296 = vsel %vm3054, %v3295, %v3291
    %v3297 = vlaneseq
    %v3298 = vshrl.u32 %v3297, 7
    %v3299 = vsub.s32 %v3056, %v3298
    %v3300 = vrot.slane %v2763, %v3299
    %v3301 = vsel %vm3061, %v3300, %v3296
    %v3302 = vlaneseq
    %v3303 = vshrl.u32 %v3302, 7
    %v3304 = vsub.s32 %v3063, %v3303
    %v3305 = vrot.slane %v2766, %v3304
    %v3306 = vsel %vm3068, %v3305, %v3301
    %v3307 = vlaneseq
    %v3308 = vshrl.u32 %v3307, 7
    %v3309 = vsub.s32 %v2960, %v3308
    %v3310 = vrot.slane %v2769, %v3309
    %v3311 = vlaneseq
    %v3312 = vshrl.u32 %v3311, 7
    %v3313 = vsub.s32 %v2965, %v3312
    %v3314 = vrot.slane %v2772, %v3313
    %v3315 = vsel %vm2970, %v3314, %v3310
    %v3316 = vlaneseq
    %v3317 = vshrl.u32 %v3316, 7
    %v3318 = vsub.s32 %v2972, %v3317
    %v3319 = vrot.slane %v2775, %v3318
    %v3320 = vsel %vm2977, %v3319, %v3315
    %v3321 = vlaneseq
    %v3322 = vshrl.u32 %v3321, 7
    %v3323 = vsub.s32 %v2979, %v3322
    %v3324 = vrot.slane %v2778, %v3323
    %v3325 = vsel %vm2984, %v3324, %v3320
    %v3326 = vlaneseq
    %v3327 = vshrl.u32 %v3326, 7
    %v3328 = vsub.s32 %v2986, %v3327
    %v3329 = vrot.slane %v2781, %v3328
    %v3330 = vsel %vm2991, %v3329, %v3325
    %v3331 = vlaneseq
    %v3332 = vshrl.u32 %v3331, 7
    %v3333 = vsub.s32 %v2993, %v3332
    %v3334 = vrot.slane %v2784, %v3333
    %v3335 = vsel %vm2998, %v3334, %v3330
    %v3336 = vlaneseq
    %v3337 = vshrl.u32 %v3336, 7
    %v3338 = vsub.s32 %v3000, %v3337
    %v3339 = vrot.slane %v2787, %v3338
    %v3340 = vsel %vm3005, %v3339, %v3335
    %v3341 = vlaneseq
    %v3342 = vshrl.u32 %v3341, 7
    %v3343 = vsub.s32 %v3007, %v3342
    %v3344 = vrot.slane %v2790, %v3343
    %v3345 = vsel %vm3012, %v3344, %v3340
    %v3346 = vlaneseq
    %v3347 = vshrl.u32 %v3346, 7
    %v3348 = vsub.s32 %v3014, %v3347
    %v3349 = vrot.slane %v2793, %v3348
    %v3350 = vsel %vm3019, %v3349, %v3345
    %v3351 = vlaneseq
    %v3352 = vshrl.u32 %v3351, 7
    %v3353 = vsub.s32 %v3021, %v3352
    %v3354 = vrot.slane %v2796, %v3353
    %v3355 = vsel %vm3026, %v3354, %v3350
    %v3356 = vlaneseq
    %v3357 = vshrl.u32 %v3356, 7
    %v3358 = vsub.s32 %v3028, %v3357
    %v3359 = vrot.slane %v2799, %v3358
    %v3360 = vsel %vm3033, %v3359, %v3355
    %v3361 = vlaneseq
    %v3362 = vshrl.u32 %v3361, 7
    %v3363 = vsub.s32 %v3035, %v3362
    %v3364 = vrot.slane %v2802, %v3363
    %v3365 = vsel %vm3040, %v3364, %v3360
    %v3366 = vlaneseq
    %v3367 = vshrl.u32 %v3366, 7
    %v3368 = vsub.s32 %v3042, %v3367
    %v3369 = vrot.slane %v2805, %v3368
    %v3370 = vsel %vm3047, %v3369, %v3365
    %v3371 = vlaneseq
    %v3372 = vshrl.u32 %v3371, 7
    %v3373 = vsub.s32 %v3049, %v3372
    %v3374 = vrot.slane %v2808, %v3373
    %v3375 = vsel %vm3054, %v3374, %v3370
    %v3376 = vlaneseq
    %v3377 = vshrl.u32 %v3376, 7
    %v3378 = vsub.s32 %v3056, %v3377
    %v3379 = vrot.slane %v2811, %v3378
    %v3380 = vsel %vm3061, %v3379, %v3375
    %v3381 = vlaneseq
    %v3382 = vshrl.u32 %v3381, 7
    %v3383 = vsub.s32 %v3063, %v3382
    %v3384 = vrot.slane %v2814, %v3383
    %v3385 = vsel %vm3068, %v3384, %v3380
    %v3386 = vlaneseq
    %v3387 = vshrl.u32 %v3386, 7
    %v3388 = vsub.s32 %v2960, %v3387
    %v3389 = vrot.slane %v2817, %v3388
    %v3390 = vlaneseq
    %v3391 = vshrl.u32 %v3390, 7
    %v3392 = vsub.s32 %v2965, %v3391
    %v3393 = vrot.slane %v2820, %v3392
    %v3394 = vsel %vm2970, %v3393, %v3389
    %v3395 = vlaneseq
    %v3396 = vshrl.u32 %v3395, 7
    %v3397 = vsub.s32 %v2972, %v3396
    %v3398 = vrot.slane %v2823, %v3397
    %v3399 = vsel %vm2977, %v3398, %v3394
    %v3400 = vlaneseq
    %v3401 = vshrl.u32 %v3400, 7
    %v3402 = vsub.s32 %v2979, %v3401
    %v3403 = vrot.slane %v2826, %v3402
    %v3404 = vsel %vm2984, %v3403, %v3399
    %v3405 = vlaneseq
    %v3406 = vshrl.u32 %v3405, 7
    %v3407 = vsub.s32 %v2986, %v3406
    %v3408 = vrot.slane %v2829, %v3407
    %v3409 = vsel %vm2991, %v3408, %v3404
    %v3410 = vlaneseq
    %v3411 = vshrl.u32 %v3410, 7
    %v3412 = vsub.s32 %v2993, %v3411
    %v3413 = vrot.slane %v2832, %v3412
    %v3414 = vsel %vm2998, %v3413, %v3409
    %v3415 = vlaneseq
    %v3416 = vshrl.u32 %v3415, 7
    %v3417 = vsub.s32 %v3000, %v3416
    %v3418 = vrot.slane %v2835, %v3417
    %v3419 = vsel %vm3005, %v3418, %v3414
    %v3420 = vlaneseq
    %v3421 = vshrl.u32 %v3420, 7
    %v3422 = vsub.s32 %v3007, %v3421
    %v3423 = vrot.slane %v2838, %v3422
    %v3424 = vsel %vm3012, %v3423, %v3419
    %v3425 = vlaneseq
    %v3426 = vshrl.u32 %v3425, 7
    %v3427 = vsub.s32 %v3014, %v3426
    %v3428 = vrot.slane %v2841, %v3427
    %v3429 = vsel %vm3019, %v3428, %v3424
    %v3430 = vlaneseq
    %v3431 = vshrl.u32 %v3430, 7
    %v3432 = vsub.s32 %v3021, %v3431
    %v3433 = vrot.slane %v2844, %v3432
    %v3434 = vsel %vm3026, %v3433, %v3429
    %v3435 = vlaneseq
    %v3436 = vshrl.u32 %v3435, 7
    %v3437 = vsub.s32 %v3028, %v3436
    %v3438 = vrot.slane %v2847, %v3437
    %v3439 = vsel %vm3033, %v3438, %v3434
    %v3440 = vlaneseq
    %v3441 = vshrl.u32 %v3440, 7
    %v3442 = vsub.s32 %v3035, %v3441
    %v3443 = vrot.slane %v2850, %v3442
    %v3444 = vsel %vm3040, %v3443, %v3439
    %v3445 = vlaneseq
    %v3446 = vshrl.u32 %v3445, 7
    %v3447 = vsub.s32 %v3042, %v3446
    %v3448 = vrot.slane %v2853, %v3447
    %v3449 = vsel %vm3047, %v3448, %v3444
    %v3450 = vlaneseq
    %v3451 = vshrl.u32 %v3450, 7
    %v3452 = vsub.s32 %v3049, %v3451
    %v3453 = vrot.slane %v2856, %v3452
    %v3454 = vsel %vm3054, %v3453, %v3449
    %v3455 = vlaneseq
    %v3456 = vshrl.u32 %v3455, 7
    %v3457 = vsub.s32 %v3056, %v3456
    %v3458 = vrot.slane %v2859, %v3457
    %v3459 = vsel %vm3061, %v3458, %v3454
    %v3460 = vlaneseq
    %v3461 = vshrl.u32 %v3460, 7
    %v3462 = vsub.s32 %v3063, %v3461
    %v3463 = vrot.slane %v2862, %v3462
    %v3464 = vsel %vm3068, %v3463, %v3459
    %v3465 = vlaneseq
    %v3466 = vshrl.u32 %v3465, 7
    %v3467 = vsub.s32 %v2960, %v3466
    %v3468 = vrot.slane %v2865, %v3467
    %v3469 = vlaneseq
    %v3470 = vshrl.u32 %v3469, 7
    %v3471 = vsub.s32 %v2965, %v3470
    %v3472 = vrot.slane %v2868, %v3471
    %v3473 = vsel %vm2970, %v3472, %v3468
    %v3474 = vlaneseq
    %v3475 = vshrl.u32 %v3474, 7
    %v3476 = vsub.s32 %v2972, %v3475
    %v3477 = vrot.slane %v2871, %v3476
    %v3478 = vsel %vm2977, %v3477, %v3473
    %v3479 = vlaneseq
    %v3480 = vshrl.u32 %v3479, 7
    %v3481 = vsub.s32 %v2979, %v3480
    %v3482 = vrot.slane %v2874, %v3481
    %v3483 = vsel %vm2984, %v3482, %v3478
    %v3484 = vlaneseq
    %v3485 = vshrl.u32 %v3484, 7
    %v3486 = vsub.s32 %v2986, %v3485
    %v3487 = vrot.slane %v2877, %v3486
    %v3488 = vsel %vm2991, %v3487, %v3483
    %v3489 = vlaneseq
    %v3490 = vshrl.u32 %v3489, 7
    %v3491 = vsub.s32 %v2993, %v3490
    %v3492 = vrot.slane %v2880, %v3491
    %v3493 = vsel %vm2998, %v3492, %v3488
    %v3494 = vlaneseq
    %v3495 = vshrl.u32 %v3494, 7
    %v3496 = vsub.s32 %v3000, %v3495
    %v3497 = vrot.slane %v2883, %v3496
    %v3498 = vsel %vm3005, %v3497, %v3493
    %v3499 = vlaneseq
    %v3500 = vshrl.u32 %v3499, 7
    %v3501 = vsub.s32 %v3007, %v3500
    %v3502 = vrot.slane %v2886, %v3501
    %v3503 = vsel %vm3012, %v3502, %v3498
    %v3504 = vlaneseq
    %v3505 = vshrl.u32 %v3504, 7
    %v3506 = vsub.s32 %v3014, %v3505
    %v3507 = vrot.slane %v2889, %v3506
    %v3508 = vsel %vm3019, %v3507, %v3503
    %v3509 = vlaneseq
    %v3510 = vshrl.u32 %v3509, 7
    %v3511 = vsub.s32 %v3021, %v3510
    %v3512 = vrot.slane %v2892, %v3511
    %v3513 = vsel %vm3026, %v3512, %v3508
    %v3514 = vlaneseq
    %v3515 = vshrl.u32 %v3514, 7
    %v3516 = vsub.s32 %v3028, %v3515
    %v3517 = vrot.slane %v2895, %v3516
    %v3518 = vsel %vm3033, %v3517, %v3513
    %v3519 = vlaneseq
    %v3520 = vshrl.u32 %v3519, 7
    %v3521 = vsub.s32 %v3035, %v3520
    %v3522 = vrot.slane %v2898, %v3521
    %v3523 = vsel %vm3040, %v3522, %v3518
    %v3524 = vlaneseq
    %v3525 = vshrl.u32 %v3524, 7
    %v3526 = vsub.s32 %v3042, %v3525
    %v3527 = vrot.slane %v2901, %v3526
    %v3528 = vsel %vm3047, %v3527, %v3523
    %v3529 = vlaneseq
    %v3530 = vshrl.u32 %v3529, 7
    %v3531 = vsub.s32 %v3049, %v3530
    %v3532 = vrot.slane %v2904, %v3531
    %v3533 = vsel %vm3054, %v3532, %v3528
    %v3534 = vlaneseq
    %v3535 = vshrl.u32 %v3534, 7
    %v3536 = vsub.s32 %v3056, %v3535
    %v3537 = vrot.slane %v2907, %v3536
    %v3538 = vsel %vm3061, %v3537, %v3533
    %v3539 = vlaneseq
    %v3540 = vshrl.u32 %v3539, 7
    %v3541 = vsub.s32 %v3063, %v3540
    %v3542 = vrot.slane %v2910, %v3541
    %v3543 = vsel %vm3068, %v3542, %v3538
    %v3544 = vlaneseq
    %v3545 = vshrl.u32 %v3544, 7
    %v3546 = vsub.s32 %v2960, %v3545
    %v3547 = vrot.slane %v2913, %v3546
    %v3548 = vlaneseq
    %v3549 = vshrl.u32 %v3548, 7
    %v3550 = vsub.s32 %v2965, %v3549
    %v3551 = vrot.slane %v2916, %v3550
    %v3552 = vsel %vm2970, %v3551, %v3547
    %v3553 = vlaneseq
    %v3554 = vshrl.u32 %v3553, 7
    %v3555 = vsub.s32 %v2972, %v3554
    %v3556 = vrot.slane %v2919, %v3555
    %v3557 = vsel %vm2977, %v3556, %v3552
    %v3558 = vlaneseq
    %v3559 = vshrl.u32 %v3558, 7
    %v3560 = vsub.s32 %v2979, %v3559
    %v3561 = vrot.slane %v2922, %v3560
    %v3562 = vsel %vm2984, %v3561, %v3557
    %v3563 = vlaneseq
    %v3564 = vshrl.u32 %v3563, 7
    %v3565 = vsub.s32 %v2986, %v3564
    %v3566 = vrot.slane %v2925, %v3565
    %v3567 = vsel %vm2991, %v3566, %v3562
    %v3568 = vlaneseq
    %v3569 = vshrl.u32 %v3568, 7
    %v3570 = vsub.s32 %v2993, %v3569
    %v3571 = vrot.slane %v2928, %v3570
    %v3572 = vsel %vm2998, %v3571, %v3567
    %v3573 = vlaneseq
    %v3574 = vshrl.u32 %v3573, 7
    %v3575 = vsub.s32 %v3000, %v3574
    %v3576 = vrot.slane %v2931, %v3575
    %v3577 = vsel %vm3005, %v3576, %v3572
    %v3578 = vlaneseq
    %v3579 = vshrl.u32 %v3578, 7
    %v3580 = vsub.s32 %v3007, %v3579
    %v3581 = vrot.slane %v2934, %v3580
    %v3582 = vsel %vm3012, %v3581, %v3577
    %v3583 = vlaneseq
    %v3584 = vshrl.u32 %v3583, 7
    %v3585 = vsub.s32 %v3014, %v3584
    %v3586 = vrot.slane %v2937, %v3585
    %v3587 = vsel %vm3019, %v3586, %v3582
    %v3588 = vlaneseq
    %v3589 = vshrl.u32 %v3588, 7
    %v3590 = vsub.s32 %v3021, %v3589
    %v3591 = vrot.slane %v2940, %v3590
    %v3592 = vsel %vm3026, %v3591, %v3587
    %v3593 = vlaneseq
    %v3594 = vshrl.u32 %v3593, 7
    %v3595 = vsub.s32 %v3028, %v3594
    %v3596 = vrot.slane %v2943, %v3595
    %v3597 = vsel %vm3033, %v3596, %v3592
    %v3598 = vlaneseq
    %v3599 = vshrl.u32 %v3598, 7
    %v3600 = vsub.s32 %v3035, %v3599
    %v3601 = vrot.slane %v2946, %v3600
    %v3602 = vsel %vm3040, %v3601, %v3597
    %v3603 = vlaneseq
    %v3604 = vshrl.u32 %v3603, 7
    %v3605 = vsub.s32 %v3042, %v3604
    %v3606 = vrot.slane %v2949, %v3605
    %v3607 = vsel %vm3047, %v3606, %v3602
    %v3608 = vlaneseq
    %v3609 = vshrl.u32 %v3608, 7
    %v3610 = vsub.s32 %v3049, %v3609
    %v3611 = vrot.slane %v2952, %v3610
    %v3612 = vsel %vm3054, %v3611, %v3607
    %v3613 = vlaneseq
    %v3614 = vshrl.u32 %v3613, 7
    %v3615 = vsub.s32 %v3056, %v3614
    %v3616 = vrot.slane %v2955, %v3615
    %v3617 = vsel %vm3061, %v3616, %v3612
    %v3618 = vlaneseq
    %v3619 = vshrl.u32 %v3618, 7
    %v3620 = vsub.s32 %v3063, %v3619
    %v3621 = vrot.slane %v2958, %v3620
    %v3622 = vsel %vm3068, %v3621, %v3617
    %vm3623 = vcmask 1041409
    %v3624 = vsel %vm3623, %v3148, %v3069
    %vm3625 = vcmask 1042434
    %v3626 = vsel %vm3625, %v3227, %v3624
    %vm3627 = vcmask 1043459
    %v3628 = vsel %vm3627, %v3306, %v3626
    %vm3629 = vcmask 1044484
    %v3630 = vsel %vm3629, %v3385, %v3628
    %vm3631 = vcmask 1045509
    %v3632 = vsel %vm3631, %v3464, %v3630
    %vm3633 = vcmask 1046534
    %v3634 = vsel %vm3633, %v3543, %v3632
    %vm3635 = vcmask 1047559
    %v3636 = vsel %vm3635, %v3622, %v3634
    %3638 = vst [vmem:[#allocation5] sm:$0xff] %v3636
    %3639 = vmax.xlane.f32.xlu0 %v3636
    %v3640 = vpop.xlane.xlu0 %3639
    %v3642 = vlaneseq
    %v3643 = vshrl.u32 %v3642, 7
    %v3644 = vsub.s32 0, %v3643
    %v3645 = vrot.slane %v3640, %v3644
    %v3646 = vlaneseq
    %v3647 = vshrl.u32 %v3646, 7
    %v3648 = vsub.s32 1, %v3647
    %v3649 = vrot.slane %v3640, %v3648
    %v3650 = vlaneseq
    %v3651 = vshrl.u32 %v3650, 7
    %v3652 = vsub.s32 2, %v3651
    %v3653 = vrot.slane %v3640, %v3652
    %v3654 = vlaneseq
    %v3655 = vshrl.u32 %v3654, 7
    %v3656 = vsub.s32 3, %v3655
    %v3657 = vrot.slane %v3640, %v3656
    %v3658 = vlaneseq
    %v3659 = vshrl.u32 %v3658, 7
    %v3660 = vsub.s32 4, %v3659
    %v3661 = vrot.slane %v3640, %v3660
    %v3662 = vlaneseq
    %v3663 = vshrl.u32 %v3662, 7
    %v3664 = vsub.s32 5, %v3663
    %v3665 = vrot.slane %v3640, %v3664
    %v3666 = vlaneseq
    %v3667 = vshrl.u32 %v3666, 7
    %v3668 = vsub.s32 6, %v3667
    %v3669 = vrot.slane %v3640, %v3668
    %v3670 = vlaneseq
    %v3671 = vshrl.u32 %v3670, 7
    %v3672 = vsub.s32 7, %v3671
    %v3673 = vrot.slane %v3640, %v3672
    %v3682 = vsub.f32 %v2319, %v3645
    %v3683 = vsub.f32 %v2320, %v3645
    %v3684 = vsub.f32 %v2321, %v3645
    %v3685 = vsub.f32 %v2322, %v3645
    %v3686 = vsub.f32 %v2323, %v3645
    %v3687 = vsub.f32 %v2324, %v3645
    %v3688 = vsub.f32 %v2325, %v3645
    %v3689 = vsub.f32 %v2326, %v3645
    %v3690 = vsub.f32 %v2327, %v3645
    %v3691 = vsub.f32 %v2328, %v3645
    %v3692 = vsub.f32 %v2329, %v3645
    %v3693 = vsub.f32 %v2330, %v3645
    %v3694 = vsub.f32 %v2331, %v3645
    %v3695 = vsub.f32 %v2332, %v3645
    %v3696 = vsub.f32 %v2333, %v3645
    %v3697 = vsub.f32 %v2334, %v3645
    %v3698 = vsub.f32 %v2335, %v3649
    %v3699 = vsub.f32 %v2336, %v3649
    %v3700 = vsub.f32 %v2337, %v3649
    %v3701 = vsub.f32 %v2338, %v3649
    %v3702 = vsub.f32 %v2339, %v3649
    %v3703 = vsub.f32 %v2340, %v3649
    %v3704 = vsub.f32 %v2341, %v3649
    %v3705 = vsub.f32 %v2342, %v3649
    %v3706 = vsub.f32 %v2343, %v3649
    %v3707 = vsub.f32 %v2344, %v3649
    %v3708 = vsub.f32 %v2345, %v3649
    %v3709 = vsub.f32 %v2346, %v3649
    %v3710 = vsub.f32 %v2347, %v3649
    %v3711 = vsub.f32 %v2348, %v3649
    %v3712 = vsub.f32 %v2349, %v3649
    %v3713 = vsub.f32 %v2350, %v3649
    %v3714 = vsub.f32 %v2351, %v3653
    %v3715 = vsub.f32 %v2352, %v3653
    %v3716 = vsub.f32 %v2353, %v3653
    %v3717 = vsub.f32 %v2354, %v3653
    %v3718 = vsub.f32 %v2355, %v3653
    %v3719 = vsub.f32 %v2356, %v3653
    %v3720 = vsub.f32 %v2357, %v3653
    %v3721 = vsub.f32 %v2358, %v3653
    %v3722 = vsub.f32 %v2359, %v3653
    %v3723 = vsub.f32 %v2360, %v3653
    %v3724 = vsub.f32 %v2361, %v3653
    %v3725 = vsub.f32 %v2362, %v3653
    %v3726 = vsub.f32 %v2363, %v3653
    %v3727 = vsub.f32 %v2364, %v3653
    %v3728 = vsub.f32 %v2365, %v3653
    %v3729 = vsub.f32 %v2366, %v3653
    %v3730 = vsub.f32 %v2367, %v3657
    %v3731 = vsub.f32 %v2368, %v3657
    %v3732 = vsub.f32 %v2369, %v3657
    %v3733 = vsub.f32 %v2370, %v3657
    %v3734 = vsub.f32 %v2371, %v3657
    %v3735 = vsub.f32 %v2372, %v3657
    %v3736 = vsub.f32 %v2373, %v3657
    %v3737 = vsub.f32 %v2374, %v3657
    %v3738 = vsub.f32 %v2375, %v3657
    %v3739 = vsub.f32 %v2376, %v3657
    %v3740 = vsub.f32 %v2377, %v3657
    %v3741 = vsub.f32 %v2378, %v3657
    %v3742 = vsub.f32 %v2379, %v3657
    %v3743 = vsub.f32 %v2380, %v3657
    %v3744 = vsub.f32 %v2381, %v3657
    %v3745 = vsub.f32 %v2382, %v3657
    %v3746 = vsub.f32 %v2383, %v3661
    %v3747 = vsub.f32 %v2384, %v3661
    %v3748 = vsub.f32 %v2385, %v3661
    %v3749 = vsub.f32 %v2386, %v3661
    %v3750 = vsub.f32 %v2387, %v3661
    %v3751 = vsub.f32 %v2388, %v3661
    %v3752 = vsub.f32 %v2389, %v3661
    %v3753 = vsub.f32 %v2390, %v3661
    %v3754 = vsub.f32 %v2391, %v3661
    %v3755 = vsub.f32 %v2392, %v3661
    %v3756 = vsub.f32 %v2393, %v3661
    %v3757 = vsub.f32 %v2394, %v3661
    %v3758 = vsub.f32 %v2395, %v3661
    %v3759 = vsub.f32 %v2396, %v3661
    %v3760 = vsub.f32 %v2397, %v3661
    %v3761 = vsub.f32 %v2398, %v3661
    %v3762 = vsub.f32 %v2399, %v3665
    %v3763 = vsub.f32 %v2400, %v3665
    %v3764 = vsub.f32 %v2401, %v3665
    %v3765 = vsub.f32 %v2402, %v3665
    %v3766 = vsub.f32 %v2403, %v3665
    %v3767 = vsub.f32 %v2404, %v3665
    %v3768 = vsub.f32 %v2405, %v3665
    %v3769 = vsub.f32 %v2406, %v3665
    %v3770 = vsub.f32 %v2407, %v3665
    %v3771 = vsub.f32 %v2408, %v3665
    %v3772 = vsub.f32 %v2409, %v3665
    %v3773 = vsub.f32 %v2410, %v3665
    %v3774 = vsub.f32 %v2411, %v3665
    %v3775 = vsub.f32 %v2412, %v3665
    %v3776 = vsub.f32 %v2413, %v3665
    %v3777 = vsub.f32 %v2414, %v3665
    %v3778 = vsub.f32 %v2415, %v3669
    %v3779 = vsub.f32 %v2416, %v3669
    %v3780 = vsub.f32 %v2417, %v3669
    %v3781 = vsub.f32 %v2418, %v3669
    %v3782 = vsub.f32 %v2419, %v3669
    %v3783 = vsub.f32 %v2420, %v3669
    %v3784 = vsub.f32 %v2421, %v3669
    %v3785 = vsub.f32 %v2422, %v3669
    %v3786 = vsub.f32 %v2423, %v3669
    %v3787 = vsub.f32 %v2424, %v3669
    %v3788 = vsub.f32 %v2425, %v3669
    %v3789 = vsub.f32 %v2426, %v3669
    %v3790 = vsub.f32 %v2427, %v3669
    %v3791 = vsub.f32 %v2428, %v3669
    %v3792 = vsub.f32 %v2429, %v3669
    %v3793 = vsub.f32 %v2430, %v3669
    %v3794 = vsub.f32 %v2431, %v3673
    %v3795 = vsub.f32 %v2432, %v3673
    %v3796 = vsub.f32 %v2433, %v3673
    %v3797 = vsub.f32 %v2434, %v3673
    %v3798 = vsub.f32 %v2435, %v3673
    %v3799 = vsub.f32 %v2436, %v3673
    %v3800 = vsub.f32 %v2437, %v3673
    %v3801 = vsub.f32 %v2438, %v3673
    %v3802 = vsub.f32 %v2439, %v3673
    %v3803 = vsub.f32 %v2440, %v3673
    %v3804 = vsub.f32 %v2441, %v3673
    %v3805 = vsub.f32 %v2442, %v3673
    %v3806 = vsub.f32 %v2443, %v3673
    %v3807 = vsub.f32 %v2444, %v3673
    %v3808 = vsub.f32 %v2445, %v3673
    %v3809 = vsub.f32 %v2446, %v3673
    %v3810 = vmul.f32 %v3682, 1.442695
    %v3811 = vpow.pop %v3810
    %v3812 = vmul.f32 %v3683, 1.442695
    %v3813 = vpow.pop %v3812
    %v3814 = vmul.f32 %v3684, 1.442695
    %v3815 = vpow.pop %v3814
    %v3816 = vmul.f32 %v3685, 1.442695
    %v3817 = vpow.pop %v3816
    %v3818 = vmul.f32 %v3686, 1.442695
    %v3819 = vpow.pop %v3818
    %v3820 = vmul.f32 %v3687, 1.442695
    %v3821 = vpow.pop %v3820
    %v3822 = vmul.f32 %v3688, 1.442695
    %v3823 = vpow.pop %v3822
    %v3824 = vmul.f32 %v3689, 1.442695
    %v3825 = vpow.pop %v3824
    %v3826 = vmul.f32 %v3690, 1.442695
    %v3827 = vpow.pop %v3826
    %v3828 = vmul.f32 %v3691, 1.442695
    %v3829 = vpow.pop %v3828
    %v3830 = vmul.f32 %v3692, 1.442695
    %v3831 = vpow.pop %v3830
    %v3832 = vmul.f32 %v3693, 1.442695
    %v3833 = vpow.pop %v3832
    %v3834 = vmul.f32 %v3694, 1.442695
    %v3835 = vpow.pop %v3834
    %v3836 = vmul.f32 %v3695, 1.442695
    %v3837 = vpow.pop %v3836
    %v3838 = vmul.f32 %v3696, 1.442695
    %v3839 = vpow.pop %v3838
    %v3840 = vmul.f32 %v3697, 1.442695
    %v3841 = vpow.pop %v3840
    %v3842 = vmul.f32 %v3698, 1.442695
    %v3843 = vpow.pop %v3842
    %v3844 = vmul.f32 %v3699, 1.442695
    %v3845 = vpow.pop %v3844
    %v3846 = vmul.f32 %v3700, 1.442695
    %v3847 = vpow.pop %v3846
    %v3848 = vmul.f32 %v3701, 1.442695
    %v3849 = vpow.pop %v3848
    %v3850 = vmul.f32 %v3702, 1.442695
    %v3851 = vpow.pop %v3850
    %v3852 = vmul.f32 %v3703, 1.442695
    %v3853 = vpow.pop %v3852
    %v3854 = vmul.f32 %v3704, 1.442695
    %v3855 = vpow.pop %v3854
    %v3856 = vmul.f32 %v3705, 1.442695
    %v3857 = vpow.pop %v3856
    %v3858 = vmul.f32 %v3706, 1.442695
    %v3859 = vpow.pop %v3858
    %v3860 = vmul.f32 %v3707, 1.442695
    %v3861 = vpow.pop %v3860
    %v3862 = vmul.f32 %v3708, 1.442695
    %v3863 = vpow.pop %v3862
    %v3864 = vmul.f32 %v3709, 1.442695
    %v3865 = vpow.pop %v3864
    %v3866 = vmul.f32 %v3710, 1.442695
    %v3867 = vpow.pop %v3866
    %v3868 = vmul.f32 %v3711, 1.442695
    %v3869 = vpow.pop %v3868
    %v3870 = vmul.f32 %v3712, 1.442695
    %v3871 = vpow.pop %v3870
    %v3872 = vmul.f32 %v3713, 1.442695
    %v3873 = vpow.pop %v3872
    %v3874 = vmul.f32 %v3714, 1.442695
    %v3875 = vpow.pop %v3874
    %v3876 = vmul.f32 %v3715, 1.442695
    %v3877 = vpow.pop %v3876
    %v3878 = vmul.f32 %v3716, 1.442695
    %v3879 = vpow.pop %v3878
    %v3880 = vmul.f32 %v3717, 1.442695
    %v3881 = vpow.pop %v3880
    %v3882 = vmul.f32 %v3718, 1.442695
    %v3883 = vpow.pop %v3882
    %v3884 = vmul.f32 %v3719, 1.442695
    %v3885 = vpow.pop %v3884
    %v3886 = vmul.f32 %v3720, 1.442695
    %v3887 = vpow.pop %v3886
    %v3888 = vmul.f32 %v3721, 1.442695
    %v3889 = vpow.pop %v3888
    %v3890 = vmul.f32 %v3722, 1.442695
    %v3891 = vpow.pop %v3890
    %v3892 = vmul.f32 %v3723, 1.442695
    %v3893 = vpow.pop %v3892
    %v3894 = vmul.f32 %v3724, 1.442695
    %v3895 = vpow.pop %v3894
    %v3896 = vmul.f32 %v3725, 1.442695
    %v3897 = vpow.pop %v3896
    %v3898 = vmul.f32 %v3726, 1.442695
    %v3899 = vpow.pop %v3898
    %v3900 = vmul.f32 %v3727, 1.442695
    %v3901 = vpow.pop %v3900
    %v3902 = vmul.f32 %v3728, 1.442695
    %v3903 = vpow.pop %v3902
    %v3904 = vmul.f32 %v3729, 1.442695
    %v3905 = vpow.pop %v3904
    %v3906 = vmul.f32 %v3730, 1.442695
    %v3907 = vpow.pop %v3906
    %v3908 = vmul.f32 %v3731, 1.442695
    %v3909 = vpow.pop %v3908
    %v3910 = vmul.f32 %v3732, 1.442695
    %v3911 = vpow.pop %v3910
    %v3912 = vmul.f32 %v3733, 1.442695
    %v3913 = vpow.pop %v3912
    %v3914 = vmul.f32 %v3734, 1.442695
    %v3915 = vpow.pop %v3914
    %v3916 = vmul.f32 %v3735, 1.442695
    %v3917 = vpow.pop %v3916
    %v3918 = vmul.f32 %v3736, 1.442695
    %v3919 = vpow.pop %v3918
    %v3920 = vmul.f32 %v3737, 1.442695
    %v3921 = vpow.pop %v3920
    %v3922 = vmul.f32 %v3738, 1.442695
    %v3923 = vpow.pop %v3922
    %v3924 = vmul.f32 %v3739, 1.442695
    %v3925 = vpow.pop %v3924
    %v3926 = vmul.f32 %v3740, 1.442695
    %v3927 = vpow.pop %v3926
    %v3928 = vmul.f32 %v3741, 1.442695
    %v3929 = vpow.pop %v3928
    %v3930 = vmul.f32 %v3742, 1.442695
    %v3931 = vpow.pop %v3930
    %v3932 = vmul.f32 %v3743, 1.442695
    %v3933 = vpow.pop %v3932
    %v3934 = vmul.f32 %v3744, 1.442695
    %v3935 = vpow.pop %v3934
    %v3936 = vmul.f32 %v3745, 1.442695
    %v3937 = vpow.pop %v3936
    %v3938 = vmul.f32 %v3746, 1.442695
    %v3939 = vpow.pop %v3938
    %v3940 = vmul.f32 %v3747, 1.442695
    %v3941 = vpow.pop %v3940
    %v3942 = vmul.f32 %v3748, 1.442695
    %v3943 = vpow.pop %v3942
    %v3944 = vmul.f32 %v3749, 1.442695
    %v3945 = vpow.pop %v3944
    %v3946 = vmul.f32 %v3750, 1.442695
    %v3947 = vpow.pop %v3946
    %v3948 = vmul.f32 %v3751, 1.442695
    %v3949 = vpow.pop %v3948
    %v3950 = vmul.f32 %v3752, 1.442695
    %v3951 = vpow.pop %v3950
    %v3952 = vmul.f32 %v3753, 1.442695
    %v3953 = vpow.pop %v3952
    %v3954 = vmul.f32 %v3754, 1.442695
    %v3955 = vpow.pop %v3954
    %v3956 = vmul.f32 %v3755, 1.442695
    %v3957 = vpow.pop %v3956
    %v3958 = vmul.f32 %v3756, 1.442695
    %v3959 = vpow.pop %v3958
    %v3960 = vmul.f32 %v3757, 1.442695
    %v3961 = vpow.pop %v3960
    %v3962 = vmul.f32 %v3758, 1.442695
    %v3963 = vpow.pop %v3962
    %v3964 = vmul.f32 %v3759, 1.442695
    %v3965 = vpow.pop %v3964
    %v3966 = vmul.f32 %v3760, 1.442695
    %v3967 = vpow.pop %v3966
    %v3968 = vmul.f32 %v3761, 1.442695
    %v3969 = vpow.pop %v3968
    %v3970 = vmul.f32 %v3762, 1.442695
    %v3971 = vpow.pop %v3970
    %v3972 = vmul.f32 %v3763, 1.442695
    %v3973 = vpow.pop %v3972
    %v3974 = vmul.f32 %v3764, 1.442695
    %v3975 = vpow.pop %v3974
    %v3976 = vmul.f32 %v3765, 1.442695
    %v3977 = vpow.pop %v3976
    %v3978 = vmul.f32 %v3766, 1.442695
    %v3979 = vpow.pop %v3978
    %v3980 = vmul.f32 %v3767, 1.442695
    %v3981 = vpow.pop %v3980
    %v3982 = vmul.f32 %v3768, 1.442695
    %v3983 = vpow.pop %v3982
    %v3984 = vmul.f32 %v3769, 1.442695
    %v3985 = vpow.pop %v3984
    %v3986 = vmul.f32 %v3770, 1.442695
    %v3987 = vpow.pop %v3986
    %v3988 = vmul.f32 %v3771, 1.442695
    %v3989 = vpow.pop %v3988
    %v3990 = vmul.f32 %v3772, 1.442695
    %v3991 = vpow.pop %v3990
    %v3992 = vmul.f32 %v3773, 1.442695
    %v3993 = vpow.pop %v3992
    %v3994 = vmul.f32 %v3774, 1.442695
    %v3995 = vpow.pop %v3994
    %v3996 = vmul.f32 %v3775, 1.442695
    %v3997 = vpow.pop %v3996
    %v3998 = vmul.f32 %v3776, 1.442695
    %v3999 = vpow.pop %v3998
    %v4000 = vmul.f32 %v3777, 1.442695
    %v4001 = vpow.pop %v4000
    %v4002 = vmul.f32 %v3778, 1.442695
    %v4003 = vpow.pop %v4002
    %v4004 = vmul.f32 %v3779, 1.442695
    %v4005 = vpow.pop %v4004
    %v4006 = vmul.f32 %v3780, 1.442695
    %v4007 = vpow.pop %v4006
    %v4008 = vmul.f32 %v3781, 1.442695
    %v4009 = vpow.pop %v4008
    %v4010 = vmul.f32 %v3782, 1.442695
    %v4011 = vpow.pop %v4010
    %v4012 = vmul.f32 %v3783, 1.442695
    %v4013 = vpow.pop %v4012
    %v4014 = vmul.f32 %v3784, 1.442695
    %v4015 = vpow.pop %v4014
    %v4016 = vmul.f32 %v3785, 1.442695
    %v4017 = vpow.pop %v4016
    %v4018 = vmul.f32 %v3786, 1.442695
    %v4019 = vpow.pop %v4018
    %v4020 = vmul.f32 %v3787, 1.442695
    %v4021 = vpow.pop %v4020
    %v4022 = vmul.f32 %v3788, 1.442695
    %v4023 = vpow.pop %v4022
    %v4024 = vmul.f32 %v3789, 1.442695
    %v4025 = vpow.pop %v4024
    %v4026 = vmul.f32 %v3790, 1.442695
    %v4027 = vpow.pop %v4026
    %v4028 = vmul.f32 %v3791, 1.442695
    %v4029 = vpow.pop %v4028
    %v4030 = vmul.f32 %v3792, 1.442695
    %v4031 = vpow.pop %v4030
    %v4032 = vmul.f32 %v3793, 1.442695
    %v4033 = vpow.pop %v4032
    %v4034 = vmul.f32 %v3794, 1.442695
    %v4035 = vpow.pop %v4034
    %v4036 = vmul.f32 %v3795, 1.442695
    %v4037 = vpow.pop %v4036
    %v4038 = vmul.f32 %v3796, 1.442695
    %v4039 = vpow.pop %v4038
    %v4040 = vmul.f32 %v3797, 1.442695
    %v4041 = vpow.pop %v4040
    %v4042 = vmul.f32 %v3798, 1.442695
    %v4043 = vpow.pop %v4042
    %v4044 = vmul.f32 %v3799, 1.442695
    %v4045 = vpow.pop %v4044
    %v4046 = vmul.f32 %v3800, 1.442695
    %v4047 = vpow.pop %v4046
    %v4048 = vmul.f32 %v3801, 1.442695
    %v4049 = vpow.pop %v4048
    %v4050 = vmul.f32 %v3802, 1.442695
    %v4051 = vpow.pop %v4050
    %v4052 = vmul.f32 %v3803, 1.442695
    %v4053 = vpow.pop %v4052
    %v4054 = vmul.f32 %v3804, 1.442695
    %v4055 = vpow.pop %v4054
    %v4056 = vmul.f32 %v3805, 1.442695
    %v4057 = vpow.pop %v4056
    %v4058 = vmul.f32 %v3806, 1.442695
    %v4059 = vpow.pop %v4058
    %v4060 = vmul.f32 %v3807, 1.442695
    %v4061 = vpow.pop %v4060
    %v4062 = vmul.f32 %v3808, 1.442695
    %v4063 = vpow.pop %v4062
    %v4064 = vmul.f32 %v3809, 1.442695
    %v4065 = vpow.pop %v4064
    %4194 = vset.pattern.permute.xlu0 0
    %4195 = vperm.xlu0 %4194, %v3811
    %v4196 = vpop.permute.xlu0 %4195
    %4197 = vset.pattern.permute.xlu0 0
    %4198 = vperm.xlu0 %4197, %v3813
    %v4199 = vpop.permute.xlu0 %4198
    %4200 = vset.pattern.permute.xlu0 0
    %4201 = vperm.xlu0 %4200, %v3815
    %v4202 = vpop.permute.xlu0 %4201
    %4203 = vset.pattern.permute.xlu0 0
    %4204 = vperm.xlu0 %4203, %v3817
    %v4205 = vpop.permute.xlu0 %4204
    %4206 = vset.pattern.permute.xlu0 0
    %4207 = vperm.xlu0 %4206, %v3819
    %v4208 = vpop.permute.xlu0 %4207
    %4209 = vset.pattern.permute.xlu0 0
    %4210 = vperm.xlu0 %4209, %v3821
    %v4211 = vpop.permute.xlu0 %4210
    %4212 = vset.pattern.permute.xlu0 0
    %4213 = vperm.xlu0 %4212, %v3823
    %v4214 = vpop.permute.xlu0 %4213
    %4215 = vset.pattern.permute.xlu0 0
    %4216 = vperm.xlu0 %4215, %v3825
    %v4217 = vpop.permute.xlu0 %4216
    %4218 = vset.pattern.permute.xlu0 0
    %4219 = vperm.xlu0 %4218, %v3827
    %v4220 = vpop.permute.xlu0 %4219
    %4221 = vset.pattern.permute.xlu0 0
    %4222 = vperm.xlu0 %4221, %v3829
    %v4223 = vpop.permute.xlu0 %4222
    %4224 = vset.pattern.permute.xlu0 0
    %4225 = vperm.xlu0 %4224, %v3831
    %v4226 = vpop.permute.xlu0 %4225
    %4227 = vset.pattern.permute.xlu0 0
    %4228 = vperm.xlu0 %4227, %v3833
    %v4229 = vpop.permute.xlu0 %4228
    %4230 = vset.pattern.permute.xlu0 0
    %4231 = vperm.xlu0 %4230, %v3835
    %v4232 = vpop.permute.xlu0 %4231
    %4233 = vset.pattern.permute.xlu0 0
    %4234 = vperm.xlu0 %4233, %v3837
    %v4235 = vpop.permute.xlu0 %4234
    %4236 = vset.pattern.permute.xlu0 0
    %4237 = vperm.xlu0 %4236, %v3839
    %v4238 = vpop.permute.xlu0 %4237
    %4239 = vset.pattern.permute.xlu0 0
    %4240 = vperm.xlu0 %4239, %v3841
    %v4241 = vpop.permute.xlu0 %4240
    %4242 = vset.pattern.permute.xlu0 0
    %4243 = vperm.xlu0 %4242, %v3843
    %v4244 = vpop.permute.xlu0 %4243
    %4245 = vset.pattern.permute.xlu0 0
    %4246 = vperm.xlu0 %4245, %v3845
    %v4247 = vpop.permute.xlu0 %4246
    %4248 = vset.pattern.permute.xlu0 0
    %4249 = vperm.xlu0 %4248, %v3847
    %v4250 = vpop.permute.xlu0 %4249
    %4251 = vset.pattern.permute.xlu0 0
    %4252 = vperm.xlu0 %4251, %v3849
    %v4253 = vpop.permute.xlu0 %4252
    %4254 = vset.pattern.permute.xlu0 0
    %4255 = vperm.xlu0 %4254, %v3851
    %v4256 = vpop.permute.xlu0 %4255
    %4257 = vset.pattern.permute.xlu0 0
    %4258 = vperm.xlu0 %4257, %v3853
    %v4259 = vpop.permute.xlu0 %4258
    %4260 = vset.pattern.permute.xlu0 0
    %4261 = vperm.xlu0 %4260, %v3855
    %v4262 = vpop.permute.xlu0 %4261
    %4263 = vset.pattern.permute.xlu0 0
    %4264 = vperm.xlu0 %4263, %v3857
    %v4265 = vpop.permute.xlu0 %4264
    %4266 = vset.pattern.permute.xlu0 0
    %4267 = vperm.xlu0 %4266, %v3859
    %v4268 = vpop.permute.xlu0 %4267
    %4269 = vset.pattern.permute.xlu0 0
    %4270 = vperm.xlu0 %4269, %v3861
    %v4271 = vpop.permute.xlu0 %4270
    %4272 = vset.pattern.permute.xlu0 0
    %4273 = vperm.xlu0 %4272, %v3863
    %v4274 = vpop.permute.xlu0 %4273
    %4275 = vset.pattern.permute.xlu0 0
    %4276 = vperm.xlu0 %4275, %v3865
    %v4277 = vpop.permute.xlu0 %4276
    %4278 = vset.pattern.permute.xlu0 0
    %4279 = vperm.xlu0 %4278, %v3867
    %v4280 = vpop.permute.xlu0 %4279
    %4281 = vset.pattern.permute.xlu0 0
    %4282 = vperm.xlu0 %4281, %v3869
    %v4283 = vpop.permute.xlu0 %4282
    %4284 = vset.pattern.permute.xlu0 0
    %4285 = vperm.xlu0 %4284, %v3871
    %v4286 = vpop.permute.xlu0 %4285
    %4287 = vset.pattern.permute.xlu0 0
    %4288 = vperm.xlu0 %4287, %v3873
    %v4289 = vpop.permute.xlu0 %4288
    %4290 = vset.pattern.permute.xlu0 0
    %4291 = vperm.xlu0 %4290, %v3875
    %v4292 = vpop.permute.xlu0 %4291
    %4293 = vset.pattern.permute.xlu0 0
    %4294 = vperm.xlu0 %4293, %v3877
    %v4295 = vpop.permute.xlu0 %4294
    %4296 = vset.pattern.permute.xlu0 0
    %4297 = vperm.xlu0 %4296, %v3879
    %v4298 = vpop.permute.xlu0 %4297
    %4299 = vset.pattern.permute.xlu0 0
    %4300 = vperm.xlu0 %4299, %v3881
    %v4301 = vpop.permute.xlu0 %4300
    %4302 = vset.pattern.permute.xlu0 0
    %4303 = vperm.xlu0 %4302, %v3883
    %v4304 = vpop.permute.xlu0 %4303
    %4305 = vset.pattern.permute.xlu0 0
    %4306 = vperm.xlu0 %4305, %v3885
    %v4307 = vpop.permute.xlu0 %4306
    %4308 = vset.pattern.permute.xlu0 0
    %4309 = vperm.xlu0 %4308, %v3887
    %v4310 = vpop.permute.xlu0 %4309
    %4311 = vset.pattern.permute.xlu0 0
    %4312 = vperm.xlu0 %4311, %v3889
    %v4313 = vpop.permute.xlu0 %4312
    %4314 = vset.pattern.permute.xlu0 0
    %4315 = vperm.xlu0 %4314, %v3891
    %v4316 = vpop.permute.xlu0 %4315
    %4317 = vset.pattern.permute.xlu0 0
    %4318 = vperm.xlu0 %4317, %v3893
    %v4319 = vpop.permute.xlu0 %4318
    %4320 = vset.pattern.permute.xlu0 0
    %4321 = vperm.xlu0 %4320, %v3895
    %v4322 = vpop.permute.xlu0 %4321
    %4323 = vset.pattern.permute.xlu0 0
    %4324 = vperm.xlu0 %4323, %v3897
    %v4325 = vpop.permute.xlu0 %4324
    %4326 = vset.pattern.permute.xlu0 0
    %4327 = vperm.xlu0 %4326, %v3899
    %v4328 = vpop.permute.xlu0 %4327
    %4329 = vset.pattern.permute.xlu0 0
    %4330 = vperm.xlu0 %4329, %v3901
    %v4331 = vpop.permute.xlu0 %4330
    %4332 = vset.pattern.permute.xlu0 0
    %4333 = vperm.xlu0 %4332, %v3903
    %v4334 = vpop.permute.xlu0 %4333
    %4335 = vset.pattern.permute.xlu0 0
    %4336 = vperm.xlu0 %4335, %v3905
    %v4337 = vpop.permute.xlu0 %4336
    %4338 = vset.pattern.permute.xlu0 0
    %4339 = vperm.xlu0 %4338, %v3907
    %v4340 = vpop.permute.xlu0 %4339
    %4341 = vset.pattern.permute.xlu0 0
    %4342 = vperm.xlu0 %4341, %v3909
    %v4343 = vpop.permute.xlu0 %4342
    %4344 = vset.pattern.permute.xlu0 0
    %4345 = vperm.xlu0 %4344, %v3911
    %v4346 = vpop.permute.xlu0 %4345
    %4347 = vset.pattern.permute.xlu0 0
    %4348 = vperm.xlu0 %4347, %v3913
    %v4349 = vpop.permute.xlu0 %4348
    %4350 = vset.pattern.permute.xlu0 0
    %4351 = vperm.xlu0 %4350, %v3915
    %v4352 = vpop.permute.xlu0 %4351
    %4353 = vset.pattern.permute.xlu0 0
    %4354 = vperm.xlu0 %4353, %v3917
    %v4355 = vpop.permute.xlu0 %4354
    %4356 = vset.pattern.permute.xlu0 0
    %4357 = vperm.xlu0 %4356, %v3919
    %v4358 = vpop.permute.xlu0 %4357
    %4359 = vset.pattern.permute.xlu0 0
    %4360 = vperm.xlu0 %4359, %v3921
    %v4361 = vpop.permute.xlu0 %4360
    %4362 = vset.pattern.permute.xlu0 0
    %4363 = vperm.xlu0 %4362, %v3923
    %v4364 = vpop.permute.xlu0 %4363
    %4365 = vset.pattern.permute.xlu0 0
    %4366 = vperm.xlu0 %4365, %v3925
    %v4367 = vpop.permute.xlu0 %4366
    %4368 = vset.pattern.permute.xlu0 0
    %4369 = vperm.xlu0 %4368, %v3927
    %v4370 = vpop.permute.xlu0 %4369
    %4371 = vset.pattern.permute.xlu0 0
    %4372 = vperm.xlu0 %4371, %v3929
    %v4373 = vpop.permute.xlu0 %4372
    %4374 = vset.pattern.permute.xlu0 0
    %4375 = vperm.xlu0 %4374, %v3931
    %v4376 = vpop.permute.xlu0 %4375
    %4377 = vset.pattern.permute.xlu0 0
    %4378 = vperm.xlu0 %4377, %v3933
    %v4379 = vpop.permute.xlu0 %4378
    %4380 = vset.pattern.permute.xlu0 0
    %4381 = vperm.xlu0 %4380, %v3935
    %v4382 = vpop.permute.xlu0 %4381
    %4383 = vset.pattern.permute.xlu0 0
    %4384 = vperm.xlu0 %4383, %v3937
    %v4385 = vpop.permute.xlu0 %4384
    %4386 = vset.pattern.permute.xlu0 0
    %4387 = vperm.xlu0 %4386, %v3939
    %v4388 = vpop.permute.xlu0 %4387
    %4389 = vset.pattern.permute.xlu0 0
    %4390 = vperm.xlu0 %4389, %v3941
    %v4391 = vpop.permute.xlu0 %4390
    %4392 = vset.pattern.permute.xlu0 0
    %4393 = vperm.xlu0 %4392, %v3943
    %v4394 = vpop.permute.xlu0 %4393
    %4395 = vset.pattern.permute.xlu0 0
    %4396 = vperm.xlu0 %4395, %v3945
    %v4397 = vpop.permute.xlu0 %4396
    %4398 = vset.pattern.permute.xlu0 0
    %4399 = vperm.xlu0 %4398, %v3947
    %v4400 = vpop.permute.xlu0 %4399
    %4401 = vset.pattern.permute.xlu0 0
    %4402 = vperm.xlu0 %4401, %v3949
    %v4403 = vpop.permute.xlu0 %4402
    %4404 = vset.pattern.permute.xlu0 0
    %4405 = vperm.xlu0 %4404, %v3951
    %v4406 = vpop.permute.xlu0 %4405
    %4407 = vset.pattern.permute.xlu0 0
    %4408 = vperm.xlu0 %4407, %v3953
    %v4409 = vpop.permute.xlu0 %4408
    %4410 = vset.pattern.permute.xlu0 0
    %4411 = vperm.xlu0 %4410, %v3955
    %v4412 = vpop.permute.xlu0 %4411
    %4413 = vset.pattern.permute.xlu0 0
    %4414 = vperm.xlu0 %4413, %v3957
    %v4415 = vpop.permute.xlu0 %4414
    %4416 = vset.pattern.permute.xlu0 0
    %4417 = vperm.xlu0 %4416, %v3959
    %v4418 = vpop.permute.xlu0 %4417
    %4419 = vset.pattern.permute.xlu0 0
    %4420 = vperm.xlu0 %4419, %v3961
    %v4421 = vpop.permute.xlu0 %4420
    %4422 = vset.pattern.permute.xlu0 0
    %4423 = vperm.xlu0 %4422, %v3963
    %v4424 = vpop.permute.xlu0 %4423
    %4425 = vset.pattern.permute.xlu0 0
    %4426 = vperm.xlu0 %4425, %v3965
    %v4427 = vpop.permute.xlu0 %4426
    %4428 = vset.pattern.permute.xlu0 0
    %4429 = vperm.xlu0 %4428, %v3967
    %v4430 = vpop.permute.xlu0 %4429
    %4431 = vset.pattern.permute.xlu0 0
    %4432 = vperm.xlu0 %4431, %v3969
    %v4433 = vpop.permute.xlu0 %4432
    %4434 = vset.pattern.permute.xlu0 0
    %4435 = vperm.xlu0 %4434, %v3971
    %v4436 = vpop.permute.xlu0 %4435
    %4437 = vset.pattern.permute.xlu0 0
    %4438 = vperm.xlu0 %4437, %v3973
    %v4439 = vpop.permute.xlu0 %4438
    %4440 = vset.pattern.permute.xlu0 0
    %4441 = vperm.xlu0 %4440, %v3975
    %v4442 = vpop.permute.xlu0 %4441
    %4443 = vset.pattern.permute.xlu0 0
    %4444 = vperm.xlu0 %4443, %v3977
    %v4445 = vpop.permute.xlu0 %4444
    %4446 = vset.pattern.permute.xlu0 0
    %4447 = vperm.xlu0 %4446, %v3979
    %v4448 = vpop.permute.xlu0 %4447
    %4449 = vset.pattern.permute.xlu0 0
    %4450 = vperm.xlu0 %4449, %v3981
    %v4451 = vpop.permute.xlu0 %4450
    %4452 = vset.pattern.permute.xlu0 0
    %4453 = vperm.xlu0 %4452, %v3983
    %v4454 = vpop.permute.xlu0 %4453
    %4455 = vset.pattern.permute.xlu0 0
    %4456 = vperm.xlu0 %4455, %v3985
    %v4457 = vpop.permute.xlu0 %4456
    %4458 = vset.pattern.permute.xlu0 0
    %4459 = vperm.xlu0 %4458, %v3987
    %v4460 = vpop.permute.xlu0 %4459
    %4461 = vset.pattern.permute.xlu0 0
    %4462 = vperm.xlu0 %4461, %v3989
    %v4463 = vpop.permute.xlu0 %4462
    %4464 = vset.pattern.permute.xlu0 0
    %4465 = vperm.xlu0 %4464, %v3991
    %v4466 = vpop.permute.xlu0 %4465
    %4467 = vset.pattern.permute.xlu0 0
    %4468 = vperm.xlu0 %4467, %v3993
    %v4469 = vpop.permute.xlu0 %4468
    %4470 = vset.pattern.permute.xlu0 0
    %4471 = vperm.xlu0 %4470, %v3995
    %v4472 = vpop.permute.xlu0 %4471
    %4473 = vset.pattern.permute.xlu0 0
    %4474 = vperm.xlu0 %4473, %v3997
    %v4475 = vpop.permute.xlu0 %4474
    %4476 = vset.pattern.permute.xlu0 0
    %4477 = vperm.xlu0 %4476, %v3999
    %v4478 = vpop.permute.xlu0 %4477
    %4479 = vset.pattern.permute.xlu0 0
    %4480 = vperm.xlu0 %4479, %v4001
    %v4481 = vpop.permute.xlu0 %4480
    %4482 = vset.pattern.permute.xlu0 0
    %4483 = vperm.xlu0 %4482, %v4003
    %v4484 = vpop.permute.xlu0 %4483
    %4485 = vset.pattern.permute.xlu0 0
    %4486 = vperm.xlu0 %4485, %v4005
    %v4487 = vpop.permute.xlu0 %4486
    %4488 = vset.pattern.permute.xlu0 0
    %4489 = vperm.xlu0 %4488, %v4007
    %v4490 = vpop.permute.xlu0 %4489
    %4491 = vset.pattern.permute.xlu0 0
    %4492 = vperm.xlu0 %4491, %v4009
    %v4493 = vpop.permute.xlu0 %4492
    %4494 = vset.pattern.permute.xlu0 0
    %4495 = vperm.xlu0 %4494, %v4011
    %v4496 = vpop.permute.xlu0 %4495
    %4497 = vset.pattern.permute.xlu0 0
    %4498 = vperm.xlu0 %4497, %v4013
    %v4499 = vpop.permute.xlu0 %4498
    %4500 = vset.pattern.permute.xlu0 0
    %4501 = vperm.xlu0 %4500, %v4015
    %v4502 = vpop.permute.xlu0 %4501
    %4503 = vset.pattern.permute.xlu0 0
    %4504 = vperm.xlu0 %4503, %v4017
    %v4505 = vpop.permute.xlu0 %4504
    %4506 = vset.pattern.permute.xlu0 0
    %4507 = vperm.xlu0 %4506, %v4019
    %v4508 = vpop.permute.xlu0 %4507
    %4509 = vset.pattern.permute.xlu0 0
    %4510 = vperm.xlu0 %4509, %v4021
    %v4511 = vpop.permute.xlu0 %4510
    %4512 = vset.pattern.permute.xlu0 0
    %4513 = vperm.xlu0 %4512, %v4023
    %v4514 = vpop.permute.xlu0 %4513
    %4515 = vset.pattern.permute.xlu0 0
    %4516 = vperm.xlu0 %4515, %v4025
    %v4517 = vpop.permute.xlu0 %4516
    %4518 = vset.pattern.permute.xlu0 0
    %4519 = vperm.xlu0 %4518, %v4027
    %v4520 = vpop.permute.xlu0 %4519
    %4521 = vset.pattern.permute.xlu0 0
    %4522 = vperm.xlu0 %4521, %v4029
    %v4523 = vpop.permute.xlu0 %4522
    %4524 = vset.pattern.permute.xlu0 0
    %4525 = vperm.xlu0 %4524, %v4031
    %v4526 = vpop.permute.xlu0 %4525
    %4527 = vset.pattern.permute.xlu0 0
    %4528 = vperm.xlu0 %4527, %v4033
    %v4529 = vpop.permute.xlu0 %4528
    %4530 = vset.pattern.permute.xlu0 0
    %4531 = vperm.xlu0 %4530, %v4035
    %v4532 = vpop.permute.xlu0 %4531
    %4533 = vset.pattern.permute.xlu0 0
    %4534 = vperm.xlu0 %4533, %v4037
    %v4535 = vpop.permute.xlu0 %4534
    %4536 = vset.pattern.permute.xlu0 0
    %4537 = vperm.xlu0 %4536, %v4039
    %v4538 = vpop.permute.xlu0 %4537
    %4539 = vset.pattern.permute.xlu0 0
    %4540 = vperm.xlu0 %4539, %v4041
    %v4541 = vpop.permute.xlu0 %4540
    %4542 = vset.pattern.permute.xlu0 0
    %4543 = vperm.xlu0 %4542, %v4043
    %v4544 = vpop.permute.xlu0 %4543
    %4545 = vset.pattern.permute.xlu0 0
    %4546 = vperm.xlu0 %4545, %v4045
    %v4547 = vpop.permute.xlu0 %4546
    %4548 = vset.pattern.permute.xlu0 0
    %4549 = vperm.xlu0 %4548, %v4047
    %v4550 = vpop.permute.xlu0 %4549
    %4551 = vset.pattern.permute.xlu0 0
    %4552 = vperm.xlu0 %4551, %v4049
    %v4553 = vpop.permute.xlu0 %4552
    %4554 = vset.pattern.permute.xlu0 0
    %4555 = vperm.xlu0 %4554, %v4051
    %v4556 = vpop.permute.xlu0 %4555
    %4557 = vset.pattern.permute.xlu0 0
    %4558 = vperm.xlu0 %4557, %v4053
    %v4559 = vpop.permute.xlu0 %4558
    %4560 = vset.pattern.permute.xlu0 0
    %4561 = vperm.xlu0 %4560, %v4055
    %v4562 = vpop.permute.xlu0 %4561
    %4563 = vset.pattern.permute.xlu0 0
    %4564 = vperm.xlu0 %4563, %v4057
    %v4565 = vpop.permute.xlu0 %4564
    %4566 = vset.pattern.permute.xlu0 0
    %4567 = vperm.xlu0 %4566, %v4059
    %v4568 = vpop.permute.xlu0 %4567
    %4569 = vset.pattern.permute.xlu0 0
    %4570 = vperm.xlu0 %4569, %v4061
    %v4571 = vpop.permute.xlu0 %4570
    %4572 = vset.pattern.permute.xlu0 0
    %4573 = vperm.xlu0 %4572, %v4063
    %v4574 = vpop.permute.xlu0 %4573
    %4575 = vset.pattern.permute.xlu0 0
    %4576 = vperm.xlu0 %4575, %v4065
    %v4577 = vpop.permute.xlu0 %4576
    %v4578 = vlaneseq
    %v4579 = vshrl.u32 %v4578, 7
    %v4580 = vsub.s32 %v2960, %v4579
    %v4581 = vrot.slane %v4196, %v4580
    %v4582 = vlaneseq
    %v4583 = vshrl.u32 %v4582, 7
    %v4584 = vsub.s32 %v2965, %v4583
    %v4585 = vrot.slane %v4199, %v4584
    %v4586 = vsel %vm2970, %v4585, %v4581
    %v4587 = vlaneseq
    %v4588 = vshrl.u32 %v4587, 7
    %v4589 = vsub.s32 %v2972, %v4588
    %v4590 = vrot.slane %v4202, %v4589
    %v4591 = vsel %vm2977, %v4590, %v4586
    %v4592 = vlaneseq
    %v4593 = vshrl.u32 %v4592, 7
    %v4594 = vsub.s32 %v2979, %v4593
    %v4595 = vrot.slane %v4205, %v4594
    %v4596 = vsel %vm2984, %v4595, %v4591
    %v4597 = vlaneseq
    %v4598 = vshrl.u32 %v4597, 7
    %v4599 = vsub.s32 %v2986, %v4598
    %v4600 = vrot.slane %v4208, %v4599
    %v4601 = vsel %vm2991, %v4600, %v4596
    %v4602 = vlaneseq
    %v4603 = vshrl.u32 %v4602, 7
    %v4604 = vsub.s32 %v2993, %v4603
    %v4605 = vrot.slane %v4211, %v4604
    %v4606 = vsel %vm2998, %v4605, %v4601
    %v4607 = vlaneseq
    %v4608 = vshrl.u32 %v4607, 7
    %v4609 = vsub.s32 %v3000, %v4608
    %v4610 = vrot.slane %v4214, %v4609
    %v4611 = vsel %vm3005, %v4610, %v4606
    %v4612 = vlaneseq
    %v4613 = vshrl.u32 %v4612, 7
    %v4614 = vsub.s32 %v3007, %v4613
    %v4615 = vrot.slane %v4217, %v4614
    %v4616 = vsel %vm3012, %v4615, %v4611
    %v4617 = vlaneseq
    %v4618 = vshrl.u32 %v4617, 7
    %v4619 = vsub.s32 %v3014, %v4618
    %v4620 = vrot.slane %v4220, %v4619
    %v4621 = vsel %vm3019, %v4620, %v4616
    %v4622 = vlaneseq
    %v4623 = vshrl.u32 %v4622, 7
    %v4624 = vsub.s32 %v3021, %v4623
    %v4625 = vrot.slane %v4223, %v4624
    %v4626 = vsel %vm3026, %v4625, %v4621
    %v4627 = vlaneseq
    %v4628 = vshrl.u32 %v4627, 7
    %v4629 = vsub.s32 %v3028, %v4628
    %v4630 = vrot.slane %v4226, %v4629
    %v4631 = vsel %vm3033, %v4630, %v4626
    %v4632 = vlaneseq
    %v4633 = vshrl.u32 %v4632, 7
    %v4634 = vsub.s32 %v3035, %v4633
    %v4635 = vrot.slane %v4229, %v4634
    %v4636 = vsel %vm3040, %v4635, %v4631
    %v4637 = vlaneseq
    %v4638 = vshrl.u32 %v4637, 7
    %v4639 = vsub.s32 %v3042, %v4638
    %v4640 = vrot.slane %v4232, %v4639
    %v4641 = vsel %vm3047, %v4640, %v4636
    %v4642 = vlaneseq
    %v4643 = vshrl.u32 %v4642, 7
    %v4644 = vsub.s32 %v3049, %v4643
    %v4645 = vrot.slane %v4235, %v4644
    %v4646 = vsel %vm3054, %v4645, %v4641
    %v4647 = vlaneseq
    %v4648 = vshrl.u32 %v4647, 7
    %v4649 = vsub.s32 %v3056, %v4648
    %v4650 = vrot.slane %v4238, %v4649
    %v4651 = vsel %vm3061, %v4650, %v4646
    %v4652 = vlaneseq
    %v4653 = vshrl.u32 %v4652, 7
    %v4654 = vsub.s32 %v3063, %v4653
    %v4655 = vrot.slane %v4241, %v4654
    %v4656 = vsel %vm3068, %v4655, %v4651
    %v4657 = vlaneseq
    %v4658 = vshrl.u32 %v4657, 7
    %v4659 = vsub.s32 %v2960, %v4658
    %v4660 = vrot.slane %v4244, %v4659
    %v4661 = vlaneseq
    %v4662 = vshrl.u32 %v4661, 7
    %v4663 = vsub.s32 %v2965, %v4662
    %v4664 = vrot.slane %v4247, %v4663
    %v4665 = vsel %vm2970, %v4664, %v4660
    %v4666 = vlaneseq
    %v4667 = vshrl.u32 %v4666, 7
    %v4668 = vsub.s32 %v2972, %v4667
    %v4669 = vrot.slane %v4250, %v4668
    %v4670 = vsel %vm2977, %v4669, %v4665
    %v4671 = vlaneseq
    %v4672 = vshrl.u32 %v4671, 7
    %v4673 = vsub.s32 %v2979, %v4672
    %v4674 = vrot.slane %v4253, %v4673
    %v4675 = vsel %vm2984, %v4674, %v4670
    %v4676 = vlaneseq
    %v4677 = vshrl.u32 %v4676, 7
    %v4678 = vsub.s32 %v2986, %v4677
    %v4679 = vrot.slane %v4256, %v4678
    %v4680 = vsel %vm2991, %v4679, %v4675
    %v4681 = vlaneseq
    %v4682 = vshrl.u32 %v4681, 7
    %v4683 = vsub.s32 %v2993, %v4682
    %v4684 = vrot.slane %v4259, %v4683
    %v4685 = vsel %vm2998, %v4684, %v4680
    %v4686 = vlaneseq
    %v4687 = vshrl.u32 %v4686, 7
    %v4688 = vsub.s32 %v3000, %v4687
    %v4689 = vrot.slane %v4262, %v4688
    %v4690 = vsel %vm3005, %v4689, %v4685
    %v4691 = vlaneseq
    %v4692 = vshrl.u32 %v4691, 7
    %v4693 = vsub.s32 %v3007, %v4692
    %v4694 = vrot.slane %v4265, %v4693
    %v4695 = vsel %vm3012, %v4694, %v4690
    %v4696 = vlaneseq
    %v4697 = vshrl.u32 %v4696, 7
    %v4698 = vsub.s32 %v3014, %v4697
    %v4699 = vrot.slane %v4268, %v4698
    %v4700 = vsel %vm3019, %v4699, %v4695
    %v4701 = vlaneseq
    %v4702 = vshrl.u32 %v4701, 7
    %v4703 = vsub.s32 %v3021, %v4702
    %v4704 = vrot.slane %v4271, %v4703
    %v4705 = vsel %vm3026, %v4704, %v4700
    %v4706 = vlaneseq
    %v4707 = vshrl.u32 %v4706, 7
    %v4708 = vsub.s32 %v3028, %v4707
    %v4709 = vrot.slane %v4274, %v4708
    %v4710 = vsel %vm3033, %v4709, %v4705
    %v4711 = vlaneseq
    %v4712 = vshrl.u32 %v4711, 7
    %v4713 = vsub.s32 %v3035, %v4712
    %v4714 = vrot.slane %v4277, %v4713
    %v4715 = vsel %vm3040, %v4714, %v4710
    %v4716 = vlaneseq
    %v4717 = vshrl.u32 %v4716, 7
    %v4718 = vsub.s32 %v3042, %v4717
    %v4719 = vrot.slane %v4280, %v4718
    %v4720 = vsel %vm3047, %v4719, %v4715
    %v4721 = vlaneseq
    %v4722 = vshrl.u32 %v4721, 7
    %v4723 = vsub.s32 %v3049, %v4722
    %v4724 = vrot.slane %v4283, %v4723
    %v4725 = vsel %vm3054, %v4724, %v4720
    %v4726 = vlaneseq
    %v4727 = vshrl.u32 %v4726, 7
    %v4728 = vsub.s32 %v3056, %v4727
    %v4729 = vrot.slane %v4286, %v4728
    %v4730 = vsel %vm3061, %v4729, %v4725
    %v4731 = vlaneseq
    %v4732 = vshrl.u32 %v4731, 7
    %v4733 = vsub.s32 %v3063, %v4732
    %v4734 = vrot.slane %v4289, %v4733
    %v4735 = vsel %vm3068, %v4734, %v4730
    %v4736 = vlaneseq
    %v4737 = vshrl.u32 %v4736, 7
    %v4738 = vsub.s32 %v2960, %v4737
    %v4739 = vrot.slane %v4292, %v4738
    %v4740 = vlaneseq
    %v4741 = vshrl.u32 %v4740, 7
    %v4742 = vsub.s32 %v2965, %v4741
    %v4743 = vrot.slane %v4295, %v4742
    %v4744 = vsel %vm2970, %v4743, %v4739
    %v4745 = vlaneseq
    %v4746 = vshrl.u32 %v4745, 7
    %v4747 = vsub.s32 %v2972, %v4746
    %v4748 = vrot.slane %v4298, %v4747
    %v4749 = vsel %vm2977, %v4748, %v4744
    %v4750 = vlaneseq
    %v4751 = vshrl.u32 %v4750, 7
    %v4752 = vsub.s32 %v2979, %v4751
    %v4753 = vrot.slane %v4301, %v4752
    %v4754 = vsel %vm2984, %v4753, %v4749
    %v4755 = vlaneseq
    %v4756 = vshrl.u32 %v4755, 7
    %v4757 = vsub.s32 %v2986, %v4756
    %v4758 = vrot.slane %v4304, %v4757
    %v4759 = vsel %vm2991, %v4758, %v4754
    %v4760 = vlaneseq
    %v4761 = vshrl.u32 %v4760, 7
    %v4762 = vsub.s32 %v2993, %v4761
    %v4763 = vrot.slane %v4307, %v4762
    %v4764 = vsel %vm2998, %v4763, %v4759
    %v4765 = vlaneseq
    %v4766 = vshrl.u32 %v4765, 7
    %v4767 = vsub.s32 %v3000, %v4766
    %v4768 = vrot.slane %v4310, %v4767
    %v4769 = vsel %vm3005, %v4768, %v4764
    %v4770 = vlaneseq
    %v4771 = vshrl.u32 %v4770, 7
    %v4772 = vsub.s32 %v3007, %v4771
    %v4773 = vrot.slane %v4313, %v4772
    %v4774 = vsel %vm3012, %v4773, %v4769
    %v4775 = vlaneseq
    %v4776 = vshrl.u32 %v4775, 7
    %v4777 = vsub.s32 %v3014, %v4776
    %v4778 = vrot.slane %v4316, %v4777
    %v4779 = vsel %vm3019, %v4778, %v4774
    %v4780 = vlaneseq
    %v4781 = vshrl.u32 %v4780, 7
    %v4782 = vsub.s32 %v3021, %v4781
    %v4783 = vrot.slane %v4319, %v4782
    %v4784 = vsel %vm3026, %v4783, %v4779
    %v4785 = vlaneseq
    %v4786 = vshrl.u32 %v4785, 7
    %v4787 = vsub.s32 %v3028, %v4786
    %v4788 = vrot.slane %v4322, %v4787
    %v4789 = vsel %vm3033, %v4788, %v4784
    %v4790 = vlaneseq
    %v4791 = vshrl.u32 %v4790, 7
    %v4792 = vsub.s32 %v3035, %v4791
    %v4793 = vrot.slane %v4325, %v4792
    %v4794 = vsel %vm3040, %v4793, %v4789
    %v4795 = vlaneseq
    %v4796 = vshrl.u32 %v4795, 7
    %v4797 = vsub.s32 %v3042, %v4796
    %v4798 = vrot.slane %v4328, %v4797
    %v4799 = vsel %vm3047, %v4798, %v4794
    %v4800 = vlaneseq
    %v4801 = vshrl.u32 %v4800, 7
    %v4802 = vsub.s32 %v3049, %v4801
    %v4803 = vrot.slane %v4331, %v4802
    %v4804 = vsel %vm3054, %v4803, %v4799
    %v4805 = vlaneseq
    %v4806 = vshrl.u32 %v4805, 7
    %v4807 = vsub.s32 %v3056, %v4806
    %v4808 = vrot.slane %v4334, %v4807
    %v4809 = vsel %vm3061, %v4808, %v4804
    %v4810 = vlaneseq
    %v4811 = vshrl.u32 %v4810, 7
    %v4812 = vsub.s32 %v3063, %v4811
    %v4813 = vrot.slane %v4337, %v4812
    %v4814 = vsel %vm3068, %v4813, %v4809
    %v4815 = vlaneseq
    %v4816 = vshrl.u32 %v4815, 7
    %v4817 = vsub.s32 %v2960, %v4816
    %v4818 = vrot.slane %v4340, %v4817
    %v4819 = vlaneseq
    %v4820 = vshrl.u32 %v4819, 7
    %v4821 = vsub.s32 %v2965, %v4820
    %v4822 = vrot.slane %v4343, %v4821
    %v4823 = vsel %vm2970, %v4822, %v4818
    %v4824 = vlaneseq
    %v4825 = vshrl.u32 %v4824, 7
    %v4826 = vsub.s32 %v2972, %v4825
    %v4827 = vrot.slane %v4346, %v4826
    %v4828 = vsel %vm2977, %v4827, %v4823
    %v4829 = vlaneseq
    %v4830 = vshrl.u32 %v4829, 7
    %v4831 = vsub.s32 %v2979, %v4830
    %v4832 = vrot.slane %v4349, %v4831
    %v4833 = vsel %vm2984, %v4832, %v4828
    %v4834 = vlaneseq
    %v4835 = vshrl.u32 %v4834, 7
    %v4836 = vsub.s32 %v2986, %v4835
    %v4837 = vrot.slane %v4352, %v4836
    %v4838 = vsel %vm2991, %v4837, %v4833
    %v4839 = vlaneseq
    %v4840 = vshrl.u32 %v4839, 7
    %v4841 = vsub.s32 %v2993, %v4840
    %v4842 = vrot.slane %v4355, %v4841
    %v4843 = vsel %vm2998, %v4842, %v4838
    %v4844 = vlaneseq
    %v4845 = vshrl.u32 %v4844, 7
    %v4846 = vsub.s32 %v3000, %v4845
    %v4847 = vrot.slane %v4358, %v4846
    %v4848 = vsel %vm3005, %v4847, %v4843
    %v4849 = vlaneseq
    %v4850 = vshrl.u32 %v4849, 7
    %v4851 = vsub.s32 %v3007, %v4850
    %v4852 = vrot.slane %v4361, %v4851
    %v4853 = vsel %vm3012, %v4852, %v4848
    %v4854 = vlaneseq
    %v4855 = vshrl.u32 %v4854, 7
    %v4856 = vsub.s32 %v3014, %v4855
    %v4857 = vrot.slane %v4364, %v4856
    %v4858 = vsel %vm3019, %v4857, %v4853
    %v4859 = vlaneseq
    %v4860 = vshrl.u32 %v4859, 7
    %v4861 = vsub.s32 %v3021, %v4860
    %v4862 = vrot.slane %v4367, %v4861
    %v4863 = vsel %vm3026, %v4862, %v4858
    %v4864 = vlaneseq
    %v4865 = vshrl.u32 %v4864, 7
    %v4866 = vsub.s32 %v3028, %v4865
    %v4867 = vrot.slane %v4370, %v4866
    %v4868 = vsel %vm3033, %v4867, %v4863
    %v4869 = vlaneseq
    %v4870 = vshrl.u32 %v4869, 7
    %v4871 = vsub.s32 %v3035, %v4870
    %v4872 = vrot.slane %v4373, %v4871
    %v4873 = vsel %vm3040, %v4872, %v4868
    %v4874 = vlaneseq
    %v4875 = vshrl.u32 %v4874, 7
    %v4876 = vsub.s32 %v3042, %v4875
    %v4877 = vrot.slane %v4376, %v4876
    %v4878 = vsel %vm3047, %v4877, %v4873
    %v4879 = vlaneseq
    %v4880 = vshrl.u32 %v4879, 7
    %v4881 = vsub.s32 %v3049, %v4880
    %v4882 = vrot.slane %v4379, %v4881
    %v4883 = vsel %vm3054, %v4882, %v4878
    %v4884 = vlaneseq
    %v4885 = vshrl.u32 %v4884, 7
    %v4886 = vsub.s32 %v3056, %v4885
    %v4887 = vrot.slane %v4382, %v4886
    %v4888 = vsel %vm3061, %v4887, %v4883
    %v4889 = vlaneseq
    %v4890 = vshrl.u32 %v4889, 7
    %v4891 = vsub.s32 %v3063, %v4890
    %v4892 = vrot.slane %v4385, %v4891
    %v4893 = vsel %vm3068, %v4892, %v4888
    %v4894 = vlaneseq
    %v4895 = vshrl.u32 %v4894, 7
    %v4896 = vsub.s32 %v2960, %v4895
    %v4897 = vrot.slane %v4388, %v4896
    %v4898 = vlaneseq
    %v4899 = vshrl.u32 %v4898, 7
    %v4900 = vsub.s32 %v2965, %v4899
    %v4901 = vrot.slane %v4391, %v4900
    %v4902 = vsel %vm2970, %v4901, %v4897
    %v4903 = vlaneseq
    %v4904 = vshrl.u32 %v4903, 7
    %v4905 = vsub.s32 %v2972, %v4904
    %v4906 = vrot.slane %v4394, %v4905
    %v4907 = vsel %vm2977, %v4906, %v4902
    %v4908 = vlaneseq
    %v4909 = vshrl.u32 %v4908, 7
    %v4910 = vsub.s32 %v2979, %v4909
    %v4911 = vrot.slane %v4397, %v4910
    %v4912 = vsel %vm2984, %v4911, %v4907
    %v4913 = vlaneseq
    %v4914 = vshrl.u32 %v4913, 7
    %v4915 = vsub.s32 %v2986, %v4914
    %v4916 = vrot.slane %v4400, %v4915
    %v4917 = vsel %vm2991, %v4916, %v4912
    %v4918 = vlaneseq
    %v4919 = vshrl.u32 %v4918, 7
    %v4920 = vsub.s32 %v2993, %v4919
    %v4921 = vrot.slane %v4403, %v4920
    %v4922 = vsel %vm2998, %v4921, %v4917
    %v4923 = vlaneseq
    %v4924 = vshrl.u32 %v4923, 7
    %v4925 = vsub.s32 %v3000, %v4924
    %v4926 = vrot.slane %v4406, %v4925
    %v4927 = vsel %vm3005, %v4926, %v4922
    %v4928 = vlaneseq
    %v4929 = vshrl.u32 %v4928, 7
    %v4930 = vsub.s32 %v3007, %v4929
    %v4931 = vrot.slane %v4409, %v4930
    %v4932 = vsel %vm3012, %v4931, %v4927
    %v4933 = vlaneseq
    %v4934 = vshrl.u32 %v4933, 7
    %v4935 = vsub.s32 %v3014, %v4934
    %v4936 = vrot.slane %v4412, %v4935
    %v4937 = vsel %vm3019, %v4936, %v4932
    %v4938 = vlaneseq
    %v4939 = vshrl.u32 %v4938, 7
    %v4940 = vsub.s32 %v3021, %v4939
    %v4941 = vrot.slane %v4415, %v4940
    %v4942 = vsel %vm3026, %v4941, %v4937
    %v4943 = vlaneseq
    %v4944 = vshrl.u32 %v4943, 7
    %v4945 = vsub.s32 %v3028, %v4944
    %v4946 = vrot.slane %v4418, %v4945
    %v4947 = vsel %vm3033, %v4946, %v4942
    %v4948 = vlaneseq
    %v4949 = vshrl.u32 %v4948, 7
    %v4950 = vsub.s32 %v3035, %v4949
    %v4951 = vrot.slane %v4421, %v4950
    %v4952 = vsel %vm3040, %v4951, %v4947
    %v4953 = vlaneseq
    %v4954 = vshrl.u32 %v4953, 7
    %v4955 = vsub.s32 %v3042, %v4954
    %v4956 = vrot.slane %v4424, %v4955
    %v4957 = vsel %vm3047, %v4956, %v4952
    %v4958 = vlaneseq
    %v4959 = vshrl.u32 %v4958, 7
    %v4960 = vsub.s32 %v3049, %v4959
    %v4961 = vrot.slane %v4427, %v4960
    %v4962 = vsel %vm3054, %v4961, %v4957
    %v4963 = vlaneseq
    %v4964 = vshrl.u32 %v4963, 7
    %v4965 = vsub.s32 %v3056, %v4964
    %v4966 = vrot.slane %v4430, %v4965
    %v4967 = vsel %vm3061, %v4966, %v4962
    %v4968 = vlaneseq
    %v4969 = vshrl.u32 %v4968, 7
    %v4970 = vsub.s32 %v3063, %v4969
    %v4971 = vrot.slane %v4433, %v4970
    %v4972 = vsel %vm3068, %v4971, %v4967
    %v4973 = vlaneseq
    %v4974 = vshrl.u32 %v4973, 7
    %v4975 = vsub.s32 %v2960, %v4974
    %v4976 = vrot.slane %v4436, %v4975
    %v4977 = vlaneseq
    %v4978 = vshrl.u32 %v4977, 7
    %v4979 = vsub.s32 %v2965, %v4978
    %v4980 = vrot.slane %v4439, %v4979
    %v4981 = vsel %vm2970, %v4980, %v4976
    %v4982 = vlaneseq
    %v4983 = vshrl.u32 %v4982, 7
    %v4984 = vsub.s32 %v2972, %v4983
    %v4985 = vrot.slane %v4442, %v4984
    %v4986 = vsel %vm2977, %v4985, %v4981
    %v4987 = vlaneseq
    %v4988 = vshrl.u32 %v4987, 7
    %v4989 = vsub.s32 %v2979, %v4988
    %v4990 = vrot.slane %v4445, %v4989
    %v4991 = vsel %vm2984, %v4990, %v4986
    %v4992 = vlaneseq
    %v4993 = vshrl.u32 %v4992, 7
    %v4994 = vsub.s32 %v2986, %v4993
    %v4995 = vrot.slane %v4448, %v4994
    %v4996 = vsel %vm2991, %v4995, %v4991
    %v4997 = vlaneseq
    %v4998 = vshrl.u32 %v4997, 7
    %v4999 = vsub.s32 %v2993, %v4998
    %v5000 = vrot.slane %v4451, %v4999
    %v5001 = vsel %vm2998, %v5000, %v4996
    %v5002 = vlaneseq
    %v5003 = vshrl.u32 %v5002, 7
    %v5004 = vsub.s32 %v3000, %v5003
    %v5005 = vrot.slane %v4454, %v5004
    %v5006 = vsel %vm3005, %v5005, %v5001
    %v5007 = vlaneseq
    %v5008 = vshrl.u32 %v5007, 7
    %v5009 = vsub.s32 %v3007, %v5008
    %v5010 = vrot.slane %v4457, %v5009
    %v5011 = vsel %vm3012, %v5010, %v5006
    %v5012 = vlaneseq
    %v5013 = vshrl.u32 %v5012, 7
    %v5014 = vsub.s32 %v3014, %v5013
    %v5015 = vrot.slane %v4460, %v5014
    %v5016 = vsel %vm3019, %v5015, %v5011
    %v5017 = vlaneseq
    %v5018 = vshrl.u32 %v5017, 7
    %v5019 = vsub.s32 %v3021, %v5018
    %v5020 = vrot.slane %v4463, %v5019
    %v5021 = vsel %vm3026, %v5020, %v5016
    %v5022 = vlaneseq
    %v5023 = vshrl.u32 %v5022, 7
    %v5024 = vsub.s32 %v3028, %v5023
    %v5025 = vrot.slane %v4466, %v5024
    %v5026 = vsel %vm3033, %v5025, %v5021
    %v5027 = vlaneseq
    %v5028 = vshrl.u32 %v5027, 7
    %v5029 = vsub.s32 %v3035, %v5028
    %v5030 = vrot.slane %v4469, %v5029
    %v5031 = vsel %vm3040, %v5030, %v5026
    %v5032 = vlaneseq
    %v5033 = vshrl.u32 %v5032, 7
    %v5034 = vsub.s32 %v3042, %v5033
    %v5035 = vrot.slane %v4472, %v5034
    %v5036 = vsel %vm3047, %v5035, %v5031
    %v5037 = vlaneseq
    %v5038 = vshrl.u32 %v5037, 7
    %v5039 = vsub.s32 %v3049, %v5038
    %v5040 = vrot.slane %v4475, %v5039
    %v5041 = vsel %vm3054, %v5040, %v5036
    %v5042 = vlaneseq
    %v5043 = vshrl.u32 %v5042, 7
    %v5044 = vsub.s32 %v3056, %v5043
    %v5045 = vrot.slane %v4478, %v5044
    %v5046 = vsel %vm3061, %v5045, %v5041
    %v5047 = vlaneseq
    %v5048 = vshrl.u32 %v5047, 7
    %v5049 = vsub.s32 %v3063, %v5048
    %v5050 = vrot.slane %v4481, %v5049
    %v5051 = vsel %vm3068, %v5050, %v5046
    %v5052 = vlaneseq
    %v5053 = vshrl.u32 %v5052, 7
    %v5054 = vsub.s32 %v2960, %v5053
    %v5055 = vrot.slane %v4484, %v5054
    %v5056 = vlaneseq
    %v5057 = vshrl.u32 %v5056, 7
    %v5058 = vsub.s32 %v2965, %v5057
    %v5059 = vrot.slane %v4487, %v5058
    %v5060 = vsel %vm2970, %v5059, %v5055
    %v5061 = vlaneseq
    %v5062 = vshrl.u32 %v5061, 7
    %v5063 = vsub.s32 %v2972, %v5062
    %v5064 = vrot.slane %v4490, %v5063
    %v5065 = vsel %vm2977, %v5064, %v5060
    %v5066 = vlaneseq
    %v5067 = vshrl.u32 %v5066, 7
    %v5068 = vsub.s32 %v2979, %v5067
    %v5069 = vrot.slane %v4493, %v5068
    %v5070 = vsel %vm2984, %v5069, %v5065
    %v5071 = vlaneseq
    %v5072 = vshrl.u32 %v5071, 7
    %v5073 = vsub.s32 %v2986, %v5072
    %v5074 = vrot.slane %v4496, %v5073
    %v5075 = vsel %vm2991, %v5074, %v5070
    %v5076 = vlaneseq
    %v5077 = vshrl.u32 %v5076, 7
    %v5078 = vsub.s32 %v2993, %v5077
    %v5079 = vrot.slane %v4499, %v5078
    %v5080 = vsel %vm2998, %v5079, %v5075
    %v5081 = vlaneseq
    %v5082 = vshrl.u32 %v5081, 7
    %v5083 = vsub.s32 %v3000, %v5082
    %v5084 = vrot.slane %v4502, %v5083
    %v5085 = vsel %vm3005, %v5084, %v5080
    %v5086 = vlaneseq
    %v5087 = vshrl.u32 %v5086, 7
    %v5088 = vsub.s32 %v3007, %v5087
    %v5089 = vrot.slane %v4505, %v5088
    %v5090 = vsel %vm3012, %v5089, %v5085
    %v5091 = vlaneseq
    %v5092 = vshrl.u32 %v5091, 7
    %v5093 = vsub.s32 %v3014, %v5092
    %v5094 = vrot.slane %v4508, %v5093
    %v5095 = vsel %vm3019, %v5094, %v5090
    %v5096 = vlaneseq
    %v5097 = vshrl.u32 %v5096, 7
    %v5098 = vsub.s32 %v3021, %v5097
    %v5099 = vrot.slane %v4511, %v5098
    %v5100 = vsel %vm3026, %v5099, %v5095
    %v5101 = vlaneseq
    %v5102 = vshrl.u32 %v5101, 7
    %v5103 = vsub.s32 %v3028, %v5102
    %v5104 = vrot.slane %v4514, %v5103
    %v5105 = vsel %vm3033, %v5104, %v5100
    %v5106 = vlaneseq
    %v5107 = vshrl.u32 %v5106, 7
    %v5108 = vsub.s32 %v3035, %v5107
    %v5109 = vrot.slane %v4517, %v5108
    %v5110 = vsel %vm3040, %v5109, %v5105
    %v5111 = vlaneseq
    %v5112 = vshrl.u32 %v5111, 7
    %v5113 = vsub.s32 %v3042, %v5112
    %v5114 = vrot.slane %v4520, %v5113
    %v5115 = vsel %vm3047, %v5114, %v5110
    %v5116 = vlaneseq
    %v5117 = vshrl.u32 %v5116, 7
    %v5118 = vsub.s32 %v3049, %v5117
    %v5119 = vrot.slane %v4523, %v5118
    %v5120 = vsel %vm3054, %v5119, %v5115
    %v5121 = vlaneseq
    %v5122 = vshrl.u32 %v5121, 7
    %v5123 = vsub.s32 %v3056, %v5122
    %v5124 = vrot.slane %v4526, %v5123
    %v5125 = vsel %vm3061, %v5124, %v5120
    %v5126 = vlaneseq
    %v5127 = vshrl.u32 %v5126, 7
    %v5128 = vsub.s32 %v3063, %v5127
    %v5129 = vrot.slane %v4529, %v5128
    %v5130 = vsel %vm3068, %v5129, %v5125
    %v5131 = vlaneseq
    %v5132 = vshrl.u32 %v5131, 7
    %v5133 = vsub.s32 %v2960, %v5132
    %v5134 = vrot.slane %v4532, %v5133
    %v5135 = vlaneseq
    %v5136 = vshrl.u32 %v5135, 7
    %v5137 = vsub.s32 %v2965, %v5136
    %v5138 = vrot.slane %v4535, %v5137
    %v5139 = vsel %vm2970, %v5138, %v5134
    %v5140 = vlaneseq
    %v5141 = vshrl.u32 %v5140, 7
    %v5142 = vsub.s32 %v2972, %v5141
    %v5143 = vrot.slane %v4538, %v5142
    %v5144 = vsel %vm2977, %v5143, %v5139
    %v5145 = vlaneseq
    %v5146 = vshrl.u32 %v5145, 7
    %v5147 = vsub.s32 %v2979, %v5146
    %v5148 = vrot.slane %v4541, %v5147
    %v5149 = vsel %vm2984, %v5148, %v5144
    %v5150 = vlaneseq
    %v5151 = vshrl.u32 %v5150, 7
    %v5152 = vsub.s32 %v2986, %v5151
    %v5153 = vrot.slane %v4544, %v5152
    %v5154 = vsel %vm2991, %v5153, %v5149
    %v5155 = vlaneseq
    %v5156 = vshrl.u32 %v5155, 7
    %v5157 = vsub.s32 %v2993, %v5156
    %v5158 = vrot.slane %v4547, %v5157
    %v5159 = vsel %vm2998, %v5158, %v5154
    %v5160 = vlaneseq
    %v5161 = vshrl.u32 %v5160, 7
    %v5162 = vsub.s32 %v3000, %v5161
    %v5163 = vrot.slane %v4550, %v5162
    %v5164 = vsel %vm3005, %v5163, %v5159
    %v5165 = vlaneseq
    %v5166 = vshrl.u32 %v5165, 7
    %v5167 = vsub.s32 %v3007, %v5166
    %v5168 = vrot.slane %v4553, %v5167
    %v5169 = vsel %vm3012, %v5168, %v5164
    %v5170 = vlaneseq
    %v5171 = vshrl.u32 %v5170, 7
    %v5172 = vsub.s32 %v3014, %v5171
    %v5173 = vrot.slane %v4556, %v5172
    %v5174 = vsel %vm3019, %v5173, %v5169
    %v5175 = vlaneseq
    %v5176 = vshrl.u32 %v5175, 7
    %v5177 = vsub.s32 %v3021, %v5176
    %v5178 = vrot.slane %v4559, %v5177
    %v5179 = vsel %vm3026, %v5178, %v5174
    %v5180 = vlaneseq
    %v5181 = vshrl.u32 %v5180, 7
    %v5182 = vsub.s32 %v3028, %v5181
    %v5183 = vrot.slane %v4562, %v5182
    %v5184 = vsel %vm3033, %v5183, %v5179
    %v5185 = vlaneseq
    %v5186 = vshrl.u32 %v5185, 7
    %v5187 = vsub.s32 %v3035, %v5186
    %v5188 = vrot.slane %v4565, %v5187
    %v5189 = vsel %vm3040, %v5188, %v5184
    %v5190 = vlaneseq
    %v5191 = vshrl.u32 %v5190, 7
    %v5192 = vsub.s32 %v3042, %v5191
    %v5193 = vrot.slane %v4568, %v5192
    %v5194 = vsel %vm3047, %v5193, %v5189
    %v5195 = vlaneseq
    %v5196 = vshrl.u32 %v5195, 7
    %v5197 = vsub.s32 %v3049, %v5196
    %v5198 = vrot.slane %v4571, %v5197
    %v5199 = vsel %vm3054, %v5198, %v5194
    %v5200 = vlaneseq
    %v5201 = vshrl.u32 %v5200, 7
    %v5202 = vsub.s32 %v3056, %v5201
    %v5203 = vrot.slane %v4574, %v5202
    %v5204 = vsel %vm3061, %v5203, %v5199
    %v5205 = vlaneseq
    %v5206 = vshrl.u32 %v5205, 7
    %v5207 = vsub.s32 %v3063, %v5206
    %v5208 = vrot.slane %v4577, %v5207
    %v5209 = vsel %vm3068, %v5208, %v5204
    %v5210 = vsel %vm3623, %v4735, %v4656
    %v5211 = vsel %vm3625, %v4814, %v5210
    %v5212 = vsel %vm3627, %v4893, %v5211
    %v5213 = vsel %vm3629, %v4972, %v5212
    %v5214 = vsel %vm3631, %v5051, %v5213
    %v5215 = vsel %vm3633, %v5130, %v5214
    %v5216 = vsel %vm3635, %v5209, %v5215
    %5218 = vadd.xlane.f32.xlu0 %v5216
    %v5219 = vpop.xlane.xlu0 %5218
    %v5220 = vrcp.pop %v5219
    %v5222 = vlaneseq
    %v5223 = vshrl.u32 %v5222, 7
    %v5224 = vsub.s32 0, %v5223
    %v5225 = vrot.slane %v5220, %v5224
    %v5226 = vlaneseq
    %v5227 = vshrl.u32 %v5226, 7
    %v5228 = vsub.s32 1, %v5227
    %v5229 = vrot.slane %v5220, %v5228
    %v5230 = vlaneseq
    %v5231 = vshrl.u32 %v5230, 7
    %v5232 = vsub.s32 2, %v5231
    %v5233 = vrot.slane %v5220, %v5232
    %v5234 = vlaneseq
    %v5235 = vshrl.u32 %v5234, 7
    %v5236 = vsub.s32 3, %v5235
    %v5237 = vrot.slane %v5220, %v5236
    %v5238 = vlaneseq
    %v5239 = vshrl.u32 %v5238, 7
    %v5240 = vsub.s32 4, %v5239
    %v5241 = vrot.slane %v5220, %v5240
    %v5242 = vlaneseq
    %v5243 = vshrl.u32 %v5242, 7
    %v5244 = vsub.s32 5, %v5243
    %v5245 = vrot.slane %v5220, %v5244
    %v5246 = vlaneseq
    %v5247 = vshrl.u32 %v5246, 7
    %v5248 = vsub.s32 6, %v5247
    %v5249 = vrot.slane %v5220, %v5248
    %v5250 = vlaneseq
    %v5251 = vshrl.u32 %v5250, 7
    %v5252 = vsub.s32 7, %v5251
    %v5253 = vrot.slane %v5220, %v5252
    %v5262 = vmul.f32 %v3811, %v5225
    %v5263 = vmul.f32 %v3813, %v5225
    %v5264 = vmul.f32 %v3815, %v5225
    %v5265 = vmul.f32 %v3817, %v5225
    %v5266 = vmul.f32 %v3819, %v5225
    %v5267 = vmul.f32 %v3821, %v5225
    %v5268 = vmul.f32 %v3823, %v5225
    %v5269 = vmul.f32 %v3825, %v5225
    %v5270 = vmul.f32 %v3827, %v5225
    %v5271 = vmul.f32 %v3829, %v5225
    %v5272 = vmul.f32 %v3831, %v5225
    %v5273 = vmul.f32 %v3833, %v5225
    %v5274 = vmul.f32 %v3835, %v5225
    %v5275 = vmul.f32 %v3837, %v5225
    %v5276 = vmul.f32 %v3839, %v5225
    %v5277 = vmul.f32 %v3841, %v5225
    %v5278 = vmul.f32 %v3843, %v5229
    %v5279 = vmul.f32 %v3845, %v5229
    %v5280 = vmul.f32 %v3847, %v5229
    %v5281 = vmul.f32 %v3849, %v5229
    %v5282 = vmul.f32 %v3851, %v5229
    %v5283 = vmul.f32 %v3853, %v5229
    %v5284 = vmul.f32 %v3855, %v5229
    %v5285 = vmul.f32 %v3857, %v5229
    %v5286 = vmul.f32 %v3859, %v5229
    %v5287 = vmul.f32 %v3861, %v5229
    %v5288 = vmul.f32 %v3863, %v5229
    %v5289 = vmul.f32 %v3865, %v5229
    %v5290 = vmul.f32 %v3867, %v5229
    %v5291 = vmul.f32 %v3869, %v5229
    %v5292 = vmul.f32 %v3871, %v5229
    %v5293 = vmul.f32 %v3873, %v5229
    %v5294 = vmul.f32 %v3875, %v5233
    %v5295 = vmul.f32 %v3877, %v5233
    %v5296 = vmul.f32 %v3879, %v5233
    %v5297 = vmul.f32 %v3881, %v5233
    %v5298 = vmul.f32 %v3883, %v5233
    %v5299 = vmul.f32 %v3885, %v5233
    %v5300 = vmul.f32 %v3887, %v5233
    %v5301 = vmul.f32 %v3889, %v5233
    %v5302 = vmul.f32 %v3891, %v5233
    %v5303 = vmul.f32 %v3893, %v5233
    %v5304 = vmul.f32 %v3895, %v5233
    %v5305 = vmul.f32 %v3897, %v5233
    %v5306 = vmul.f32 %v3899, %v5233
    %v5307 = vmul.f32 %v3901, %v5233
    %v5308 = vmul.f32 %v3903, %v5233
    %v5309 = vmul.f32 %v3905, %v5233
    %v5310 = vmul.f32 %v3907, %v5237
    %v5311 = vmul.f32 %v3909, %v5237
    %v5312 = vmul.f32 %v3911, %v5237
    %v5313 = vmul.f32 %v3913, %v5237
    %v5314 = vmul.f32 %v3915, %v5237
    %v5315 = vmul.f32 %v3917, %v5237
    %v5316 = vmul.f32 %v3919, %v5237
    %v5317 = vmul.f32 %v3921, %v5237
    %v5318 = vmul.f32 %v3923, %v5237
    %v5319 = vmul.f32 %v3925, %v5237
    %v5320 = vmul.f32 %v3927, %v5237
    %v5321 = vmul.f32 %v3929, %v5237
    %v5322 = vmul.f32 %v3931, %v5237
    %v5323 = vmul.f32 %v3933, %v5237
    %v5324 = vmul.f32 %v3935, %v5237
    %v5325 = vmul.f32 %v3937, %v5237
    %v5326 = vmul.f32 %v3939, %v5241
    %v5327 = vmul.f32 %v3941, %v5241
    %v5328 = vmul.f32 %v3943, %v5241
    %v5329 = vmul.f32 %v3945, %v5241
    %v5330 = vmul.f32 %v3947, %v5241
    %v5331 = vmul.f32 %v3949, %v5241
    %v5332 = vmul.f32 %v3951, %v5241
    %v5333 = vmul.f32 %v3953, %v5241
    %v5334 = vmul.f32 %v3955, %v5241
    %v5335 = vmul.f32 %v3957, %v5241
    %v5336 = vmul.f32 %v3959, %v5241
    %v5337 = vmul.f32 %v3961, %v5241
    %v5338 = vmul.f32 %v3963, %v5241
    %v5339 = vmul.f32 %v3965, %v5241
    %v5340 = vmul.f32 %v3967, %v5241
    %v5341 = vmul.f32 %v3969, %v5241
    %v5342 = vmul.f32 %v3971, %v5245
    %v5343 = vmul.f32 %v3973, %v5245
    %v5344 = vmul.f32 %v3975, %v5245
    %v5345 = vmul.f32 %v3977, %v5245
    %v5346 = vmul.f32 %v3979, %v5245
    %v5347 = vmul.f32 %v3981, %v5245
    %v5348 = vmul.f32 %v3983, %v5245
    %v5349 = vmul.f32 %v3985, %v5245
    %v5350 = vmul.f32 %v3987, %v5245
    %v5351 = vmul.f32 %v3989, %v5245
    %v5352 = vmul.f32 %v3991, %v5245
    %v5353 = vmul.f32 %v3993, %v5245
    %v5354 = vmul.f32 %v3995, %v5245
    %v5355 = vmul.f32 %v3997, %v5245
    %v5356 = vmul.f32 %v3999, %v5245
    %v5357 = vmul.f32 %v4001, %v5245
    %v5358 = vmul.f32 %v4003, %v5249
    %v5359 = vmul.f32 %v4005, %v5249
    %v5360 = vmul.f32 %v4007, %v5249
    %v5361 = vmul.f32 %v4009, %v5249
    %v5362 = vmul.f32 %v4011, %v5249
    %v5363 = vmul.f32 %v4013, %v5249
    %v5364 = vmul.f32 %v4015, %v5249
    %v5365 = vmul.f32 %v4017, %v5249
    %v5366 = vmul.f32 %v4019, %v5249
    %v5367 = vmul.f32 %v4021, %v5249
    %v5368 = vmul.f32 %v4023, %v5249
    %v5369 = vmul.f32 %v4025, %v5249
    %v5370 = vmul.f32 %v4027, %v5249
    %v5371 = vmul.f32 %v4029, %v5249
    %v5372 = vmul.f32 %v4031, %v5249
    %v5373 = vmul.f32 %v4033, %v5249
    %v5374 = vmul.f32 %v4035, %v5253
    %v5375 = vmul.f32 %v4037, %v5253
    %v5376 = vmul.f32 %v4039, %v5253
    %v5377 = vmul.f32 %v4041, %v5253
    %v5378 = vmul.f32 %v4043, %v5253
    %v5379 = vmul.f32 %v4045, %v5253
    %v5380 = vmul.f32 %v4047, %v5253
    %v5381 = vmul.f32 %v4049, %v5253
    %v5382 = vmul.f32 %v4051, %v5253
    %v5383 = vmul.f32 %v4053, %v5253
    %v5384 = vmul.f32 %v4055, %v5253
    %v5385 = vmul.f32 %v4057, %v5253
    %v5386 = vmul.f32 %v4059, %v5253
    %v5387 = vmul.f32 %v4061, %v5253
    %v5388 = vmul.f32 %v4063, %v5253
    %v5389 = vmul.f32 %v4065, %v5253
    %5391 = vset.pattern.permute.xlu0 0
    %5392 = vperm.xlu0 %5391, %v5262
    %v5393 = vpop.permute.xlu0 %5392
    %5396 = vset.pattern.permute.xlu0 0
    %5397 = vperm.xlu0 %5396, %v5263
    %v5398 = vpop.permute.xlu0 %5397
    %5401 = vset.pattern.permute.xlu0 0
    %5402 = vperm.xlu0 %5401, %v5264
    %v5403 = vpop.permute.xlu0 %5402
    %5406 = vset.pattern.permute.xlu0 0
    %5407 = vperm.xlu0 %5406, %v5265
    %v5408 = vpop.permute.xlu0 %5407
    %5411 = vset.pattern.permute.xlu0 0
    %5412 = vperm.xlu0 %5411, %v5266
    %v5413 = vpop.permute.xlu0 %5412
    %5416 = vset.pattern.permute.xlu0 0
    %5417 = vperm.xlu0 %5416, %v5267
    %v5418 = vpop.permute.xlu0 %5417
    %5421 = vset.pattern.permute.xlu0 0
    %5422 = vperm.xlu0 %5421, %v5268
    %v5423 = vpop.permute.xlu0 %5422
    %5426 = vset.pattern.permute.xlu0 0
    %5427 = vperm.xlu0 %5426, %v5269
    %v5428 = vpop.permute.xlu0 %5427
    %5431 = vset.pattern.permute.xlu0 0
    %5432 = vperm.xlu0 %5431, %v5270
    %v5433 = vpop.permute.xlu0 %5432
    %5436 = vset.pattern.permute.xlu0 0
    %5437 = vperm.xlu0 %5436, %v5271
    %v5438 = vpop.permute.xlu0 %5437
    %5441 = vset.pattern.permute.xlu0 0
    %5442 = vperm.xlu0 %5441, %v5272
    %v5443 = vpop.permute.xlu0 %5442
    %5446 = vset.pattern.permute.xlu0 0
    %5447 = vperm.xlu0 %5446, %v5273
    %v5448 = vpop.permute.xlu0 %5447
    %5451 = vset.pattern.permute.xlu0 0
    %5452 = vperm.xlu0 %5451, %v5274
    %v5453 = vpop.permute.xlu0 %5452
    %5456 = vset.pattern.permute.xlu0 0
    %5457 = vperm.xlu0 %5456, %v5275
    %v5458 = vpop.permute.xlu0 %5457
    %5461 = vset.pattern.permute.xlu0 0
    %5462 = vperm.xlu0 %5461, %v5276
    %v5463 = vpop.permute.xlu0 %5462
    %5466 = vset.pattern.permute.xlu0 0
    %5467 = vperm.xlu0 %5466, %v5277
    %v5468 = vpop.permute.xlu0 %5467
    %5471 = vset.pattern.permute.xlu0 0
    %5472 = vperm.xlu0 %5471, %v5278
    %v5473 = vpop.permute.xlu0 %5472
    %5476 = vset.pattern.permute.xlu0 0
    %5477 = vperm.xlu0 %5476, %v5279
    %v5478 = vpop.permute.xlu0 %5477
    %5481 = vset.pattern.permute.xlu0 0
    %5482 = vperm.xlu0 %5481, %v5280
    %v5483 = vpop.permute.xlu0 %5482
    %5486 = vset.pattern.permute.xlu0 0
    %5487 = vperm.xlu0 %5486, %v5281
    %v5488 = vpop.permute.xlu0 %5487
    %5491 = vset.pattern.permute.xlu0 0
    %5492 = vperm.xlu0 %5491, %v5282
    %v5493 = vpop.permute.xlu0 %5492
    %5496 = vset.pattern.permute.xlu0 0
    %5497 = vperm.xlu0 %5496, %v5283
    %v5498 = vpop.permute.xlu0 %5497
    %5501 = vset.pattern.permute.xlu0 0
    %5502 = vperm.xlu0 %5501, %v5284
    %v5503 = vpop.permute.xlu0 %5502
    %5506 = vset.pattern.permute.xlu0 0
    %5507 = vperm.xlu0 %5506, %v5285
    %v5508 = vpop.permute.xlu0 %5507
    %5511 = vset.pattern.permute.xlu0 0
    %5512 = vperm.xlu0 %5511, %v5286
    %v5513 = vpop.permute.xlu0 %5512
    %5516 = vset.pattern.permute.xlu0 0
    %5517 = vperm.xlu0 %5516, %v5287
    %v5518 = vpop.permute.xlu0 %5517
    %5521 = vset.pattern.permute.xlu0 0
    %5522 = vperm.xlu0 %5521, %v5288
    %v5523 = vpop.permute.xlu0 %5522
    %5526 = vset.pattern.permute.xlu0 0
    %5527 = vperm.xlu0 %5526, %v5289
    %v5528 = vpop.permute.xlu0 %5527
    %5531 = vset.pattern.permute.xlu0 0
    %5532 = vperm.xlu0 %5531, %v5290
    %v5533 = vpop.permute.xlu0 %5532
    %5536 = vset.pattern.permute.xlu0 0
    %5537 = vperm.xlu0 %5536, %v5291
    %v5538 = vpop.permute.xlu0 %5537
    %5541 = vset.pattern.permute.xlu0 0
    %5542 = vperm.xlu0 %5541, %v5292
    %v5543 = vpop.permute.xlu0 %5542
    %5546 = vset.pattern.permute.xlu0 0
    %5547 = vperm.xlu0 %5546, %v5293
    %v5548 = vpop.permute.xlu0 %5547
    %5551 = vset.pattern.permute.xlu0 0
    %5552 = vperm.xlu0 %5551, %v5294
    %v5553 = vpop.permute.xlu0 %5552
    %5556 = vset.pattern.permute.xlu0 0
    %5557 = vperm.xlu0 %5556, %v5295
    %v5558 = vpop.permute.xlu0 %5557
    %5561 = vset.pattern.permute.xlu0 0
    %5562 = vperm.xlu0 %5561, %v5296
    %v5563 = vpop.permute.xlu0 %5562
    %5566 = vset.pattern.permute.xlu0 0
    %5567 = vperm.xlu0 %5566, %v5297
    %v5568 = vpop.permute.xlu0 %5567
    %5571 = vset.pattern.permute.xlu0 0
    %5572 = vperm.xlu0 %5571, %v5298
    %v5573 = vpop.permute.xlu0 %5572
    %5576 = vset.pattern.permute.xlu0 0
    %5577 = vperm.xlu0 %5576, %v5299
    %v5578 = vpop.permute.xlu0 %5577
    %5581 = vset.pattern.permute.xlu0 0
    %5582 = vperm.xlu0 %5581, %v5300
    %v5583 = vpop.permute.xlu0 %5582
    %5586 = vset.pattern.permute.xlu0 0
    %5587 = vperm.xlu0 %5586, %v5301
    %v5588 = vpop.permute.xlu0 %5587
    %5591 = vset.pattern.permute.xlu0 0
    %5592 = vperm.xlu0 %5591, %v5302
    %v5593 = vpop.permute.xlu0 %5592
    %5596 = vset.pattern.permute.xlu0 0
    %5597 = vperm.xlu0 %5596, %v5303
    %v5598 = vpop.permute.xlu0 %5597
    %5601 = vset.pattern.permute.xlu0 0
    %5602 = vperm.xlu0 %5601, %v5304
    %v5603 = vpop.permute.xlu0 %5602
    %5606 = vset.pattern.permute.xlu0 0
    %5607 = vperm.xlu0 %5606, %v5305
    %v5608 = vpop.permute.xlu0 %5607
    %5611 = vset.pattern.permute.xlu0 0
    %5612 = vperm.xlu0 %5611, %v5306
    %v5613 = vpop.permute.xlu0 %5612
    %5616 = vset.pattern.permute.xlu0 0
    %5617 = vperm.xlu0 %5616, %v5307
    %v5618 = vpop.permute.xlu0 %5617
    %5621 = vset.pattern.permute.xlu0 0
    %5622 = vperm.xlu0 %5621, %v5308
    %v5623 = vpop.permute.xlu0 %5622
    %5626 = vset.pattern.permute.xlu0 0
    %5627 = vperm.xlu0 %5626, %v5309
    %v5628 = vpop.permute.xlu0 %5627
    %5631 = vset.pattern.permute.xlu0 0
    %5632 = vperm.xlu0 %5631, %v5310
    %v5633 = vpop.permute.xlu0 %5632
    %5636 = vset.pattern.permute.xlu0 0
    %5637 = vperm.xlu0 %5636, %v5311
    %v5638 = vpop.permute.xlu0 %5637
    %5641 = vset.pattern.permute.xlu0 0
    %5642 = vperm.xlu0 %5641, %v5312
    %v5643 = vpop.permute.xlu0 %5642
    %5646 = vset.pattern.permute.xlu0 0
    %5647 = vperm.xlu0 %5646, %v5313
    %v5648 = vpop.permute.xlu0 %5647
    %5651 = vset.pattern.permute.xlu0 0
    %5652 = vperm.xlu0 %5651, %v5314
    %v5653 = vpop.permute.xlu0 %5652
    %5656 = vset.pattern.permute.xlu0 0
    %5657 = vperm.xlu0 %5656, %v5315
    %v5658 = vpop.permute.xlu0 %5657
    %5661 = vset.pattern.permute.xlu0 0
    %5662 = vperm.xlu0 %5661, %v5316
    %v5663 = vpop.permute.xlu0 %5662
    %5666 = vset.pattern.permute.xlu0 0
    %5667 = vperm.xlu0 %5666, %v5317
    %v5668 = vpop.permute.xlu0 %5667
    %5671 = vset.pattern.permute.xlu0 0
    %5672 = vperm.xlu0 %5671, %v5318
    %v5673 = vpop.permute.xlu0 %5672
    %5676 = vset.pattern.permute.xlu0 0
    %5677 = vperm.xlu0 %5676, %v5319
    %v5678 = vpop.permute.xlu0 %5677
    %5681 = vset.pattern.permute.xlu0 0
    %5682 = vperm.xlu0 %5681, %v5320
    %v5683 = vpop.permute.xlu0 %5682
    %5686 = vset.pattern.permute.xlu0 0
    %5687 = vperm.xlu0 %5686, %v5321
    %v5688 = vpop.permute.xlu0 %5687
    %5691 = vset.pattern.permute.xlu0 0
    %5692 = vperm.xlu0 %5691, %v5322
    %v5693 = vpop.permute.xlu0 %5692
    %5696 = vset.pattern.permute.xlu0 0
    %5697 = vperm.xlu0 %5696, %v5323
    %v5698 = vpop.permute.xlu0 %5697
    %5701 = vset.pattern.permute.xlu0 0
    %5702 = vperm.xlu0 %5701, %v5324
    %v5703 = vpop.permute.xlu0 %5702
    %5706 = vset.pattern.permute.xlu0 0
    %5707 = vperm.xlu0 %5706, %v5325
    %v5708 = vpop.permute.xlu0 %5707
    %5711 = vset.pattern.permute.xlu0 0
    %5712 = vperm.xlu0 %5711, %v5326
    %v5713 = vpop.permute.xlu0 %5712
    %5716 = vset.pattern.permute.xlu0 0
    %5717 = vperm.xlu0 %5716, %v5327
    %v5718 = vpop.permute.xlu0 %5717
    %5721 = vset.pattern.permute.xlu0 0
    %5722 = vperm.xlu0 %5721, %v5328
    %v5723 = vpop.permute.xlu0 %5722
    %5726 = vset.pattern.permute.xlu0 0
    %5727 = vperm.xlu0 %5726, %v5329
    %v5728 = vpop.permute.xlu0 %5727
    %5731 = vset.pattern.permute.xlu0 0
    %5732 = vperm.xlu0 %5731, %v5330
    %v5733 = vpop.permute.xlu0 %5732
    %5736 = vset.pattern.permute.xlu0 0
    %5737 = vperm.xlu0 %5736, %v5331
    %v5738 = vpop.permute.xlu0 %5737
    %5741 = vset.pattern.permute.xlu0 0
    %5742 = vperm.xlu0 %5741, %v5332
    %v5743 = vpop.permute.xlu0 %5742
    %5746 = vset.pattern.permute.xlu0 0
    %5747 = vperm.xlu0 %5746, %v5333
    %v5748 = vpop.permute.xlu0 %5747
    %5751 = vset.pattern.permute.xlu0 0
    %5752 = vperm.xlu0 %5751, %v5334
    %v5753 = vpop.permute.xlu0 %5752
    %5756 = vset.pattern.permute.xlu0 0
    %5757 = vperm.xlu0 %5756, %v5335
    %v5758 = vpop.permute.xlu0 %5757
    %5761 = vset.pattern.permute.xlu0 0
    %5762 = vperm.xlu0 %5761, %v5336
    %v5763 = vpop.permute.xlu0 %5762
    %5766 = vset.pattern.permute.xlu0 0
    %5767 = vperm.xlu0 %5766, %v5337
    %v5768 = vpop.permute.xlu0 %5767
    %5771 = vset.pattern.permute.xlu0 0
    %5772 = vperm.xlu0 %5771, %v5338
    %v5773 = vpop.permute.xlu0 %5772
    %5776 = vset.pattern.permute.xlu0 0
    %5777 = vperm.xlu0 %5776, %v5339
    %v5778 = vpop.permute.xlu0 %5777
    %5781 = vset.pattern.permute.xlu0 0
    %5782 = vperm.xlu0 %5781, %v5340
    %v5783 = vpop.permute.xlu0 %5782
    %5786 = vset.pattern.permute.xlu0 0
    %5787 = vperm.xlu0 %5786, %v5341
    %v5788 = vpop.permute.xlu0 %5787
    %5791 = vset.pattern.permute.xlu0 0
    %5792 = vperm.xlu0 %5791, %v5342
    %v5793 = vpop.permute.xlu0 %5792
    %5796 = vset.pattern.permute.xlu0 0
    %5797 = vperm.xlu0 %5796, %v5343
    %v5798 = vpop.permute.xlu0 %5797
    %5801 = vset.pattern.permute.xlu0 0
    %5802 = vperm.xlu0 %5801, %v5344
    %v5803 = vpop.permute.xlu0 %5802
    %5806 = vset.pattern.permute.xlu0 0
    %5807 = vperm.xlu0 %5806, %v5345
    %v5808 = vpop.permute.xlu0 %5807
    %5811 = vset.pattern.permute.xlu0 0
    %5812 = vperm.xlu0 %5811, %v5346
    %v5813 = vpop.permute.xlu0 %5812
    %5816 = vset.pattern.permute.xlu0 0
    %5817 = vperm.xlu0 %5816, %v5347
    %v5818 = vpop.permute.xlu0 %5817
    %5821 = vset.pattern.permute.xlu0 0
    %5822 = vperm.xlu0 %5821, %v5348
    %v5823 = vpop.permute.xlu0 %5822
    %5826 = vset.pattern.permute.xlu0 0
    %5827 = vperm.xlu0 %5826, %v5349
    %v5828 = vpop.permute.xlu0 %5827
    %5831 = vset.pattern.permute.xlu0 0
    %5832 = vperm.xlu0 %5831, %v5350
    %v5833 = vpop.permute.xlu0 %5832
    %5836 = vset.pattern.permute.xlu0 0
    %5837 = vperm.xlu0 %5836, %v5351
    %v5838 = vpop.permute.xlu0 %5837
    %5841 = vset.pattern.permute.xlu0 0
    %5842 = vperm.xlu0 %5841, %v5352
    %v5843 = vpop.permute.xlu0 %5842
    %5846 = vset.pattern.permute.xlu0 0
    %5847 = vperm.xlu0 %5846, %v5353
    %v5848 = vpop.permute.xlu0 %5847
    %5851 = vset.pattern.permute.xlu0 0
    %5852 = vperm.xlu0 %5851, %v5354
    %v5853 = vpop.permute.xlu0 %5852
    %5856 = vset.pattern.permute.xlu0 0
    %5857 = vperm.xlu0 %5856, %v5355
    %v5858 = vpop.permute.xlu0 %5857
    %5861 = vset.pattern.permute.xlu0 0
    %5862 = vperm.xlu0 %5861, %v5356
    %v5863 = vpop.permute.xlu0 %5862
    %5866 = vset.pattern.permute.xlu0 0
    %5867 = vperm.xlu0 %5866, %v5357
    %v5868 = vpop.permute.xlu0 %5867
    %5871 = vset.pattern.permute.xlu0 0
    %5872 = vperm.xlu0 %5871, %v5358
    %v5873 = vpop.permute.xlu0 %5872
    %5876 = vset.pattern.permute.xlu0 0
    %5877 = vperm.xlu0 %5876, %v5359
    %v5878 = vpop.permute.xlu0 %5877
    %5881 = vset.pattern.permute.xlu0 0
    %5882 = vperm.xlu0 %5881, %v5360
    %v5883 = vpop.permute.xlu0 %5882
    %5886 = vset.pattern.permute.xlu0 0
    %5887 = vperm.xlu0 %5886, %v5361
    %v5888 = vpop.permute.xlu0 %5887
    %5891 = vset.pattern.permute.xlu0 0
    %5892 = vperm.xlu0 %5891, %v5362
    %v5893 = vpop.permute.xlu0 %5892
    %5896 = vset.pattern.permute.xlu0 0
    %5897 = vperm.xlu0 %5896, %v5363
    %v5898 = vpop.permute.xlu0 %5897
    %5901 = vset.pattern.permute.xlu0 0
    %5902 = vperm.xlu0 %5901, %v5364
    %v5903 = vpop.permute.xlu0 %5902
    %5906 = vset.pattern.permute.xlu0 0
    %5907 = vperm.xlu0 %5906, %v5365
    %v5908 = vpop.permute.xlu0 %5907
    %5911 = vset.pattern.permute.xlu0 0
    %5912 = vperm.xlu0 %5911, %v5366
    %v5913 = vpop.permute.xlu0 %5912
    %5916 = vset.pattern.permute.xlu0 0
    %5917 = vperm.xlu0 %5916, %v5367
    %v5918 = vpop.permute.xlu0 %5917
    %5921 = vset.pattern.permute.xlu0 0
    %5922 = vperm.xlu0 %5921, %v5368
    %v5923 = vpop.permute.xlu0 %5922
    %5926 = vset.pattern.permute.xlu0 0
    %5927 = vperm.xlu0 %5926, %v5369
    %v5928 = vpop.permute.xlu0 %5927
    %5931 = vset.pattern.permute.xlu0 0
    %5932 = vperm.xlu0 %5931, %v5370
    %v5933 = vpop.permute.xlu0 %5932
    %5936 = vset.pattern.permute.xlu0 0
    %5937 = vperm.xlu0 %5936, %v5371
    %v5938 = vpop.permute.xlu0 %5937
    %5941 = vset.pattern.permute.xlu0 0
    %5942 = vperm.xlu0 %5941, %v5372
    %v5943 = vpop.permute.xlu0 %5942
    %5946 = vset.pattern.permute.xlu0 0
    %5947 = vperm.xlu0 %5946, %v5373
    %v5948 = vpop.permute.xlu0 %5947
    %5951 = vset.pattern.permute.xlu0 0
    %5952 = vperm.xlu0 %5951, %v5374
    %v5953 = vpop.permute.xlu0 %5952
    %5956 = vset.pattern.permute.xlu0 0
    %5957 = vperm.xlu0 %5956, %v5375
    %v5958 = vpop.permute.xlu0 %5957
    %5961 = vset.pattern.permute.xlu0 0
    %5962 = vperm.xlu0 %5961, %v5376
    %v5963 = vpop.permute.xlu0 %5962
    %5966 = vset.pattern.permute.xlu0 0
    %5967 = vperm.xlu0 %5966, %v5377
    %v5968 = vpop.permute.xlu0 %5967
    %5971 = vset.pattern.permute.xlu0 0
    %5972 = vperm.xlu0 %5971, %v5378
    %v5973 = vpop.permute.xlu0 %5972
    %5976 = vset.pattern.permute.xlu0 0
    %5977 = vperm.xlu0 %5976, %v5379
    %v5978 = vpop.permute.xlu0 %5977
    %5981 = vset.pattern.permute.xlu0 0
    %5982 = vperm.xlu0 %5981, %v5380
    %v5983 = vpop.permute.xlu0 %5982
    %5986 = vset.pattern.permute.xlu0 0
    %5987 = vperm.xlu0 %5986, %v5381
    %v5988 = vpop.permute.xlu0 %5987
    %5991 = vset.pattern.permute.xlu0 0
    %5992 = vperm.xlu0 %5991, %v5382
    %v5993 = vpop.permute.xlu0 %5992
    %5996 = vset.pattern.permute.xlu0 0
    %5997 = vperm.xlu0 %5996, %v5383
    %v5998 = vpop.permute.xlu0 %5997
    %6001 = vset.pattern.permute.xlu0 0
    %6002 = vperm.xlu0 %6001, %v5384
    %v6003 = vpop.permute.xlu0 %6002
    %6006 = vset.pattern.permute.xlu0 0
    %6007 = vperm.xlu0 %6006, %v5385
    %v6008 = vpop.permute.xlu0 %6007
    %6011 = vset.pattern.permute.xlu0 0
    %6012 = vperm.xlu0 %6011, %v5386
    %v6013 = vpop.permute.xlu0 %6012
    %6016 = vset.pattern.permute.xlu0 0
    %6017 = vperm.xlu0 %6016, %v5387
    %v6018 = vpop.permute.xlu0 %6017
    %6021 = vset.pattern.permute.xlu0 0
    %6022 = vperm.xlu0 %6021, %v5388
    %v6023 = vpop.permute.xlu0 %6022
    %6026 = vset.pattern.permute.xlu0 0
    %6027 = vperm.xlu0 %6026, %v5389
    %v6028 = vpop.permute.xlu0 %6027
    %v6030 = vmul.f32 %v5393, %v51
    %v6031 = vmul.f32 %v5398, %v52
    %v6032 = vmul.f32 %v5403, %v53
    %v6033 = vmul.f32 %v5408, %v54
    %v6034 = vmul.f32 %v5413, %v55
    %v6035 = vmul.f32 %v5418, %v56
    %v6036 = vmul.f32 %v5423, %v57
    %v6037 = vmul.f32 %v5428, %v58
    %v6038 = vmul.f32 %v5433, %v59
    %v6039 = vmul.f32 %v5438, %v60
    %v6040 = vmul.f32 %v5443, %v61
    %v6041 = vmul.f32 %v5448, %v62
    %v6042 = vmul.f32 %v5453, %v63
    %v6043 = vmul.f32 %v5458, %v64
    %v6044 = vmul.f32 %v5463, %v65
    %v6045 = vmul.f32 %v5468, %v66
    %v6046 = vmul.f32 %v5473, %v67
    %v6047 = vmul.f32 %v5478, %v68
    %v6048 = vmul.f32 %v5483, %v69
    %v6049 = vmul.f32 %v5488, %v70
    %v6050 = vmul.f32 %v5493, %v71
    %v6051 = vmul.f32 %v5498, %v72
    %v6052 = vmul.f32 %v5503, %v73
    %v6053 = vmul.f32 %v5508, %v74
    %v6054 = vmul.f32 %v5513, %v75
    %v6055 = vmul.f32 %v5518, %v76
    %v6056 = vmul.f32 %v5523, %v77
    %v6057 = vmul.f32 %v5528, %v78
    %v6058 = vmul.f32 %v5533, %v79
    %v6059 = vmul.f32 %v5538, %v80
    %v6060 = vmul.f32 %v5543, %v81
    %v6061 = vmul.f32 %v5548, %v82
    %v6062 = vmul.f32 %v5553, %v83
    %v6063 = vmul.f32 %v5558, %v84
    %v6064 = vmul.f32 %v5563, %v85
    %v6065 = vmul.f32 %v5568, %v86
    %v6066 = vmul.f32 %v5573, %v87
    %v6067 = vmul.f32 %v5578, %v88
    %v6068 = vmul.f32 %v5583, %v89
    %v6069 = vmul.f32 %v5588, %v90
    %v6070 = vmul.f32 %v5593, %v91
    %v6071 = vmul.f32 %v5598, %v92
    %v6072 = vmul.f32 %v5603, %v93
    %v6073 = vmul.f32 %v5608, %v94
    %v6074 = vmul.f32 %v5613, %v95
    %v6075 = vmul.f32 %v5618, %v96
    %v6076 = vmul.f32 %v5623, %v97
    %v6077 = vmul.f32 %v5628, %v98
    %v6078 = vmul.f32 %v5633, %v99
    %v6079 = vmul.f32 %v5638, %v100
    %v6080 = vmul.f32 %v5643, %v101
    %v6081 = vmul.f32 %v5648, %v102
    %v6082 = vmul.f32 %v5653, %v103
    %v6083 = vmul.f32 %v5658, %v104
    %v6084 = vmul.f32 %v5663, %v105
    %v6085 = vmul.f32 %v5668, %v106
    %v6086 = vmul.f32 %v5673, %v107
    %v6087 = vmul.f32 %v5678, %v108
    %v6088 = vmul.f32 %v5683, %v109
    %v6089 = vmul.f32 %v5688, %v110
    %v6090 = vmul.f32 %v5693, %v111
    %v6091 = vmul.f32 %v5698, %v112
    %v6092 = vmul.f32 %v5703, %v113
    %v6093 = vmul.f32 %v5708, %v114
    %v6094 = vmul.f32 %v5713, %v115
    %v6095 = vmul.f32 %v5718, %v116
    %v6096 = vmul.f32 %v5723, %v117
    %v6097 = vmul.f32 %v5728, %v118
    %v6098 = vmul.f32 %v5733, %v119
    %v6099 = vmul.f32 %v5738, %v120
    %v6100 = vmul.f32 %v5743, %v121
    %v6101 = vmul.f32 %v5748, %v122
    %v6102 = vmul.f32 %v5753, %v123
    %v6103 = vmul.f32 %v5758, %v124
    %v6104 = vmul.f32 %v5763, %v125
    %v6105 = vmul.f32 %v5768, %v126
    %v6106 = vmul.f32 %v5773, %v127
    %v6107 = vmul.f32 %v5778, %v128
    %v6108 = vmul.f32 %v5783, %v129
    %v6109 = vmul.f32 %v5788, %v130
    %v6110 = vmul.f32 %v5793, %v131
    %v6111 = vmul.f32 %v5798, %v132
    %v6112 = vmul.f32 %v5803, %v133
    %v6113 = vmul.f32 %v5808, %v134
    %v6114 = vmul.f32 %v5813, %v135
    %v6115 = vmul.f32 %v5818, %v136
    %v6116 = vmul.f32 %v5823, %v137
    %v6117 = vmul.f32 %v5828, %v138
    %v6118 = vmul.f32 %v5833, %v139
    %v6119 = vmul.f32 %v5838, %v140
    %v6120 = vmul.f32 %v5843, %v141
    %v6121 = vmul.f32 %v5848, %v142
    %v6122 = vmul.f32 %v5853, %v143
    %v6123 = vmul.f32 %v5858, %v144
    %v6124 = vmul.f32 %v5863, %v145
    %v6125 = vmul.f32 %v5868, %v146
    %v6126 = vmul.f32 %v5873, %v147
    %v6127 = vmul.f32 %v5878, %v148
    %v6128 = vmul.f32 %v5883, %v149
    %v6129 = vmul.f32 %v5888, %v150
    %v6130 = vmul.f32 %v5893, %v151
    %v6131 = vmul.f32 %v5898, %v152
    %v6132 = vmul.f32 %v5903, %v153
    %v6133 = vmul.f32 %v5908, %v154
    %v6134 = vmul.f32 %v5913, %v155
    %v6135 = vmul.f32 %v5918, %v156
    %v6136 = vmul.f32 %v5923, %v157
    %v6137 = vmul.f32 %v5928, %v158
    %v6138 = vmul.f32 %v5933, %v159
    %v6139 = vmul.f32 %v5938, %v160
    %v6140 = vmul.f32 %v5943, %v161
    %v6141 = vmul.f32 %v5948, %v162
    %v6142 = vmul.f32 %v5953, %v163
    %v6143 = vmul.f32 %v5958, %v164
    %v6144 = vmul.f32 %v5963, %v165
    %v6145 = vmul.f32 %v5968, %v166
    %v6146 = vmul.f32 %v5973, %v167
    %v6147 = vmul.f32 %v5978, %v168
    %v6148 = vmul.f32 %v5983, %v169
    %v6149 = vmul.f32 %v5988, %v170
    %v6150 = vmul.f32 %v5993, %v171
    %v6151 = vmul.f32 %v5998, %v172
    %v6152 = vmul.f32 %v6003, %v173
    %v6153 = vmul.f32 %v6008, %v174
    %v6154 = vmul.f32 %v6013, %v175
    %v6155 = vmul.f32 %v6018, %v176
    %v6156 = vmul.f32 %v6023, %v177
    %v6157 = vmul.f32 %v6028, %v178
    %v6158 = vadd.f32 %v6030, %v6031
    %v6159 = vadd.f32 %v6158, %v6032
    %v6160 = vadd.f32 %v6159, %v6033
    %v6161 = vadd.f32 %v6160, %v6034
    %v6162 = vadd.f32 %v6161, %v6035
    %v6163 = vadd.f32 %v6162, %v6036
    %v6164 = vadd.f32 %v6163, %v6037
    %v6165 = vadd.f32 %v6164, %v6038
    %v6166 = vadd.f32 %v6165, %v6039
    %v6167 = vadd.f32 %v6166, %v6040
    %v6168 = vadd.f32 %v6167, %v6041
    %v6169 = vadd.f32 %v6168, %v6042
    %v6170 = vadd.f32 %v6169, %v6043
    %v6171 = vadd.f32 %v6170, %v6044
    %v6172 = vadd.f32 %v6171, %v6045
    %v6173 = vrot.slane %v6172, 4
    %v6174 = vadd.f32 %v6172, %v6173
    %v6175 = vrot.slane %v6174, 2
    %v6176 = vadd.f32 %v6174, %v6175
    %v6177 = vrot.slane %v6176, 1
    %v6178 = vadd.f32 %v6176, %v6177
    %v6179 = vadd.f32 %v6046, %v6047
    %v6180 = vadd.f32 %v6179, %v6048
    %v6181 = vadd.f32 %v6180, %v6049
    %v6182 = vadd.f32 %v6181, %v6050
    %v6183 = vadd.f32 %v6182, %v6051
    %v6184 = vadd.f32 %v6183, %v6052
    %v6185 = vadd.f32 %v6184, %v6053
    %v6186 = vadd.f32 %v6185, %v6054
    %v6187 = vadd.f32 %v6186, %v6055
    %v6188 = vadd.f32 %v6187, %v6056
    %v6189 = vadd.f32 %v6188, %v6057
    %v6190 = vadd.f32 %v6189, %v6058
    %v6191 = vadd.f32 %v6190, %v6059
    %v6192 = vadd.f32 %v6191, %v6060
    %v6193 = vadd.f32 %v6192, %v6061
    %v6194 = vrot.slane %v6193, 4
    %v6195 = vadd.f32 %v6193, %v6194
    %v6196 = vrot.slane %v6195, 2
    %v6197 = vadd.f32 %v6195, %v6196
    %v6198 = vrot.slane %v6197, 1
    %v6199 = vadd.f32 %v6197, %v6198
    %v6200 = vadd.f32 %v6062, %v6063
    %v6201 = vadd.f32 %v6200, %v6064
    %v6202 = vadd.f32 %v6201, %v6065
    %v6203 = vadd.f32 %v6202, %v6066
    %v6204 = vadd.f32 %v6203, %v6067
    %v6205 = vadd.f32 %v6204, %v6068
    %v6206 = vadd.f32 %v6205, %v6069
    %v6207 = vadd.f32 %v6206, %v6070
    %v6208 = vadd.f32 %v6207, %v6071
    %v6209 = vadd.f32 %v6208, %v6072
    %v6210 = vadd.f32 %v6209, %v6073
    %v6211 = vadd.f32 %v6210, %v6074
    %v6212 = vadd.f32 %v6211, %v6075
    %v6213 = vadd.f32 %v6212, %v6076
    %v6214 = vadd.f32 %v6213, %v6077
    %v6215 = vrot.slane %v6214, 4
    %v6216 = vadd.f32 %v6214, %v6215
    %v6217 = vrot.slane %v6216, 2
    %v6218 = vadd.f32 %v6216, %v6217
    %v6219 = vrot.slane %v6218, 1
    %v6220 = vadd.f32 %v6218, %v6219
    %v6221 = vadd.f32 %v6078, %v6079
    %v6222 = vadd.f32 %v6221, %v6080
    %v6223 = vadd.f32 %v6222, %v6081
    %v6224 = vadd.f32 %v6223, %v6082
    %v6225 = vadd.f32 %v6224, %v6083
    %v6226 = vadd.f32 %v6225, %v6084
    %v6227 = vadd.f32 %v6226, %v6085
    %v6228 = vadd.f32 %v6227, %v6086
    %v6229 = vadd.f32 %v6228, %v6087
    %v6230 = vadd.f32 %v6229, %v6088
    %v6231 = vadd.f32 %v6230, %v6089
    %v6232 = vadd.f32 %v6231, %v6090
    %v6233 = vadd.f32 %v6232, %v6091
    %v6234 = vadd.f32 %v6233, %v6092
    %v6235 = vadd.f32 %v6234, %v6093
    %v6236 = vrot.slane %v6235, 4
    %v6237 = vadd.f32 %v6235, %v6236
    %v6238 = vrot.slane %v6237, 2
    %v6239 = vadd.f32 %v6237, %v6238
    %v6240 = vrot.slane %v6239, 1
    %v6241 = vadd.f32 %v6239, %v6240
    %v6242 = vadd.f32 %v6094, %v6095
    %v6243 = vadd.f32 %v6242, %v6096
    %v6244 = vadd.f32 %v6243, %v6097
    %v6245 = vadd.f32 %v6244, %v6098
    %v6246 = vadd.f32 %v6245, %v6099
    %v6247 = vadd.f32 %v6246, %v6100
    %v6248 = vadd.f32 %v6247, %v6101
    %v6249 = vadd.f32 %v6248, %v6102
    %v6250 = vadd.f32 %v6249, %v6103
    %v6251 = vadd.f32 %v6250, %v6104
    %v6252 = vadd.f32 %v6251, %v6105
    %v6253 = vadd.f32 %v6252, %v6106
    %v6254 = vadd.f32 %v6253, %v6107
    %v6255 = vadd.f32 %v6254, %v6108
    %v6256 = vadd.f32 %v6255, %v6109
    %v6257 = vrot.slane %v6256, 4
    %v6258 = vadd.f32 %v6256, %v6257
    %v6259 = vrot.slane %v6258, 2
    %v6260 = vadd.f32 %v6258, %v6259
    %v6261 = vrot.slane %v6260, 1
    %v6262 = vadd.f32 %v6260, %v6261
    %v6263 = vadd.f32 %v6110, %v6111
    %v6264 = vadd.f32 %v6263, %v6112
    %v6265 = vadd.f32 %v6264, %v6113
    %v6266 = vadd.f32 %v6265, %v6114
    %v6267 = vadd.f32 %v6266, %v6115
    %v6268 = vadd.f32 %v6267, %v6116
    %v6269 = vadd.f32 %v6268, %v6117
    %v6270 = vadd.f32 %v6269, %v6118
    %v6271 = vadd.f32 %v6270, %v6119
    %v6272 = vadd.f32 %v6271, %v6120
    %v6273 = vadd.f32 %v6272, %v6121
    %v6274 = vadd.f32 %v6273, %v6122
    %v6275 = vadd.f32 %v6274, %v6123
    %v6276 = vadd.f32 %v6275, %v6124
    %v6277 = vadd.f32 %v6276, %v6125
    %v6278 = vrot.slane %v6277, 4
    %v6279 = vadd.f32 %v6277, %v6278
    %v6280 = vrot.slane %v6279, 2
    %v6281 = vadd.f32 %v6279, %v6280
    %v6282 = vrot.slane %v6281, 1
    %v6283 = vadd.f32 %v6281, %v6282
    %v6284 = vadd.f32 %v6126, %v6127
    %v6285 = vadd.f32 %v6284, %v6128
    %v6286 = vadd.f32 %v6285, %v6129
    %v6287 = vadd.f32 %v6286, %v6130
    %v6288 = vadd.f32 %v6287, %v6131
    %v6289 = vadd.f32 %v6288, %v6132
    %v6290 = vadd.f32 %v6289, %v6133
    %v6291 = vadd.f32 %v6290, %v6134
    %v6292 = vadd.f32 %v6291, %v6135
    %v6293 = vadd.f32 %v6292, %v6136
    %v6294 = vadd.f32 %v6293, %v6137
    %v6295 = vadd.f32 %v6294, %v6138
    %v6296 = vadd.f32 %v6295, %v6139
    %v6297 = vadd.f32 %v6296, %v6140
    %v6298 = vadd.f32 %v6297, %v6141
    %v6299 = vrot.slane %v6298, 4
    %v6300 = vadd.f32 %v6298, %v6299
    %v6301 = vrot.slane %v6300, 2
    %v6302 = vadd.f32 %v6300, %v6301
    %v6303 = vrot.slane %v6302, 1
    %v6304 = vadd.f32 %v6302, %v6303
    %v6305 = vadd.f32 %v6142, %v6143
    %v6306 = vadd.f32 %v6305, %v6144
    %v6307 = vadd.f32 %v6306, %v6145
    %v6308 = vadd.f32 %v6307, %v6146
    %v6309 = vadd.f32 %v6308, %v6147
    %v6310 = vadd.f32 %v6309, %v6148
    %v6311 = vadd.f32 %v6310, %v6149
    %v6312 = vadd.f32 %v6311, %v6150
    %v6313 = vadd.f32 %v6312, %v6151
    %v6314 = vadd.f32 %v6313, %v6152
    %v6315 = vadd.f32 %v6314, %v6153
    %v6316 = vadd.f32 %v6315, %v6154
    %v6317 = vadd.f32 %v6316, %v6155
    %v6318 = vadd.f32 %v6317, %v6156
    %v6319 = vadd.f32 %v6318, %v6157
    %v6320 = vrot.slane %v6319, 4
    %v6321 = vadd.f32 %v6319, %v6320
    %v6322 = vrot.slane %v6321, 2
    %v6323 = vadd.f32 %v6321, %v6322
    %v6324 = vrot.slane %v6323, 1
    %v6325 = vadd.f32 %v6323, %v6324
    %v6326 = vpack.c.bf16 %v6178, %v6178
    %v6327 = vpack.c.bf16 %v6199, %v6199
    %v6328 = vpack.c.bf16 %v6220, %v6220
    %v6329 = vpack.c.bf16 %v6241, %v6241
    %v6330 = vpack.c.bf16 %v6262, %v6262
    %v6331 = vpack.c.bf16 %v6283, %v6283
    %v6332 = vpack.c.bf16 %v6304, %v6304
    %v6333 = vpack.c.bf16 %v6325, %v6325
    %v6334 = vld [vmem:[%s6] sm:$0xf]
    %v6335 = vld [vmem:[%s6 + $0x4] sm:$0xf]
    %v6336 = vld [vmem:[%s6 + $0x8] sm:$0xf]
    %v6337 = vld [vmem:[%s6 + $0xc] sm:$0xf]
    %v6338 = vld [vmem:[%s6 + $0x10] sm:$0xf]
    %v6339 = vld [vmem:[%s6 + $0x14] sm:$0xf]
    %v6340 = vld [vmem:[%s6 + $0x18] sm:$0xf]
    %v6341 = vld [vmem:[%s6 + $0x1c] sm:$0xf]
    %v6342 = vld [vmem:[%s6 + $0x20] sm:$0xf]
    %v6343 = vld [vmem:[%s6 + $0x24] sm:$0xf]
    %v6344 = vld [vmem:[%s6 + $0x28] sm:$0xf]
    %v6345 = vld [vmem:[%s6 + $0x2c] sm:$0xf]
    %v6346 = vld [vmem:[%s6 + $0x30] sm:$0xf]
    %v6347 = vld [vmem:[%s6 + $0x34] sm:$0xf]
    %v6348 = vld [vmem:[%s6 + $0x38] sm:$0xf]
    %v6349 = vld [vmem:[%s6 + $0x3c] sm:$0xf]
    %v6350 = vld [vmem:[%s8] sm:$0x1]
    %v6352 = vlaneseq
    %v6353 = vshrl.u32 %v6352, 7
    %v6354 = vsub.s32 0, %v6353
    %v6355 = vrot.slane %v6350, %v6354
    %v6365 = vunpack.c.l.b16 %v6326
    %v6366 = vunpack.c.l.b16 %v6327
    %v6367 = vunpack.c.l.b16 %v6328
    %v6368 = vunpack.c.l.b16 %v6329
    %v6369 = vunpack.c.l.b16 %v6330
    %v6370 = vunpack.c.l.b16 %v6331
    %v6371 = vunpack.c.l.b16 %v6332
    %v6372 = vunpack.c.l.b16 %v6333
    %v6373 = vsel %vm3623, %v6366, %v6365
    %v6374 = vsel %vm3625, %v6367, %v6373
    %v6375 = vsel %vm3627, %v6368, %v6374
    %v6376 = vsel %vm3629, %v6369, %v6375
    %v6377 = vsel %vm3631, %v6370, %v6376
    %v6378 = vsel %vm3633, %v6371, %v6377
    %v6379 = vsel %vm3635, %v6372, %v6378
    %v6380 = vpack.c.b16 %v6379, %v6379
    %v6398 = vunpack.c.l.b16 %v6334
    %v6399 = vunpack.c.l.b16 %v6335
    %v6400 = vunpack.c.l.b16 %v6336
    %v6401 = vunpack.c.l.b16 %v6337
    %v6402 = vunpack.c.l.b16 %v6338
    %v6403 = vunpack.c.l.b16 %v6339
    %v6404 = vunpack.c.l.b16 %v6340
    %v6405 = vunpack.c.l.b16 %v6341
    %v6406 = vunpack.c.l.b16 %v6342
    %v6407 = vunpack.c.l.b16 %v6343
    %v6408 = vunpack.c.l.b16 %v6344
    %v6409 = vunpack.c.l.b16 %v6345
    %v6410 = vunpack.c.l.b16 %v6346
    %v6411 = vunpack.c.l.b16 %v6347
    %v6412 = vunpack.c.l.b16 %v6348
    %v6413 = vunpack.c.l.b16 %v6349
    %v6414 = vpack.c.b16 %v6399, %v6398
    %v6415 = vpack.c.b16 %v6401, %v6400
    %v6416 = vpack.c.b16 %v6403, %v6402
    %v6417 = vpack.c.b16 %v6405, %v6404
    %v6418 = vpack.c.b16 %v6407, %v6406
    %v6419 = vpack.c.b16 %v6409, %v6408
    %v6420 = vpack.c.b16 %v6411, %v6410
    %v6421 = vpack.c.b16 %v6413, %v6412
    %6430 = vmatprep.subr.bf16.mxu0 0
    %6431 = vmatpush1.bf16.msra.mxu0 %v6421
    %6432 = vmatprep.subr.bf16.mxu0 0
    %6433 = vmatpush1.bf16.msra.mxu0 %v6420
    %6434 = vmatprep.subr.bf16.mxu0 0
    %6435 = vmatpush1.bf16.msra.mxu0 %v6419
    %6436 = vmatprep.subr.bf16.mxu0 0
    %6437 = vmatpush1.bf16.msra.mxu0 %v6418
    %6438 = vmatprep.subr.bf16.mxu0 0
    %6439 = vmatpush1.bf16.msra.mxu0 %v6417
    %6440 = vmatprep.subr.bf16.mxu0 0
    %6441 = vmatpush1.bf16.msra.mxu0 %v6416
    %6442 = vmatprep.subr.bf16.mxu0 0
    %6443 = vmatpush1.bf16.msra.mxu0 %v6415
    %6444 = vmatprep.subr.bf16.mxu0 0
    %6445 = vmatpush1.bf16.msra.mxu0 %v6414
    %6446 = vmatprep.subr.bf16.mxu0 0
    %6447 = vmatpush2.bf16.msra.mxu0 0
    %6448 = vmatprep.subr.bf16.mxu0 0
    %6449 = vmatpush2.bf16.msra.mxu0 0
    %6450 = vmatprep.subr.bf16.mxu0 0
    %6451 = vmatpush2.bf16.msra.mxu0 0
    %6452 = vmatprep.subr.bf16.mxu0 0
    %6453 = vmatpush2.bf16.msra.mxu0 0
    %6454 = vmatprep.subr.bf16.mxu0 0
    %6455 = vmatpush2.bf16.msra.mxu0 0
    %6456 = vmatprep.subr.bf16.mxu0 0
    %6457 = vmatpush2.bf16.msra.mxu0 0
    %6458 = vmatprep.subr.bf16.mxu0 0
    %6459 = vmatpush2.bf16.msra.mxu0 0
    %6460 = vmatprep.subr.bf16.mxu0 0
    %6461 = vmatpush2.bf16.msra.mxu0 0
    %6462 = vmatprep.mubr.bf16.mxu0 0
    %6463 = vmatmul.mubr.bf16.gmra.mxu0 %v6380
    %v6464 = vpop.f32.mrf.mxu0
    %v6465 = vadd.f32 %v6355, %v6464
    %v6466 = vpop.f32.mrf.mxu0
    %v6467 = vpop.f32.mrf.mxu0
    %v6468 = vpop.f32.mrf.mxu0
    %6469 = vdwg.mxu0
    %v6470 = vld [vmem:[%s7] sm:$0xf]
    %v6471 = vld [vmem:[%s7 + $0x4] sm:$0xf]
    %v6472 = vld [vmem:[%s7 + $0x8] sm:$0xf]
    %v6473 = vld [vmem:[%s7 + $0xc] sm:$0xf]
    %v6474 = vld [vmem:[%s9] sm:$0x1]
    %v6476 = vlaneseq
    %v6477 = vshrl.u32 %v6476, 7
    %v6478 = vsub.s32 0, %v6477
    %v6479 = vrot.slane %v6474, %v6478
    %v6485 = vunpack.c.l.b16 %v6470
    %v6486 = vunpack.c.l.b16 %v6471
    %v6487 = vunpack.c.l.b16 %v6472
    %v6488 = vunpack.c.l.b16 %v6473
    %v6489 = vpack.c.b16 %v6486, %v6485
    %v6490 = vpack.c.b16 %v6488, %v6487
    %6493 = vmatprep.subr.bf16.mxu0 0
    %6494 = vmatpush1.bf16.msra.mxu0 0
    %6495 = vmatprep.subr.bf16.mxu0 0
    %6496 = vmatpush1.bf16.msra.mxu0 0
    %6497 = vmatprep.subr.bf16.mxu0 0
    %6498 = vmatpush1.bf16.msra.mxu0 0
    %6499 = vmatprep.subr.bf16.mxu0 0
    %6500 = vmatpush1.bf16.msra.mxu0 0
    %6501 = vmatprep.subr.bf16.mxu0 0
    %6502 = vmatpush1.bf16.msra.mxu0 0
    %6503 = vmatprep.subr.bf16.mxu0 0
    %6504 = vmatpush1.bf16.msra.mxu0 0
    %6505 = vmatprep.subr.bf16.mxu0 0
    %6506 = vmatpush1.bf16.msra.mxu0 %v6490
    %6507 = vmatprep.subr.bf16.mxu0 0
    %6508 = vmatpush1.bf16.msra.mxu0 %v6489
    %6509 = vmatprep.subr.bf16.mxu0 0
    %6510 = vmatpush2.bf16.msra.mxu0 0
    %6511 = vmatprep.subr.bf16.mxu0 0
    %6512 = vmatpush2.bf16.msra.mxu0 0
    %6513 = vmatprep.subr.bf16.mxu0 0
    %6514 = vmatpush2.bf16.msra.mxu0 0
    %6515 = vmatprep.subr.bf16.mxu0 0
    %6516 = vmatpush2.bf16.msra.mxu0 0
    %6517 = vmatprep.subr.bf16.mxu0 0
    %6518 = vmatpush2.bf16.msra.mxu0 0
    %6519 = vmatprep.subr.bf16.mxu0 0
    %6520 = vmatpush2.bf16.msra.mxu0 0
    %6521 = vmatprep.subr.bf16.mxu0 0
    %6522 = vmatpush2.bf16.msra.mxu0 0
    %6523 = vmatprep.subr.bf16.mxu0 0
    %6524 = vmatpush2.bf16.msra.mxu0 0
    %6525 = vmatprep.mubr.bf16.mxu0 0
    %6526 = vmatmul.mubr.bf16.gmra.mxu0 %v876
    %v6527 = vpop.f32.mrf.mxu0
    %v6528 = vadd.f32 %v6479, %v6527
    %v6529 = vpop.f32.mrf.mxu0
    %v6530 = vpop.f32.mrf.mxu0
    %v6531 = vpop.f32.mrf.mxu0
    %6532 = vdwg.mxu0
    %v6533 = vadd.f32 %v6465, %v6528
    %v6534 = vxor.u32 %v6533, 2147483648
    %v6535 = vmul.f32 %v6534, 1.442695
    %v6536 = vpow.pop %v6535
    %v6537 = vadd.f32 %v6536, 1.0
    %v6538 = vrcp.pop %v6537
    %v6539 = vmul.f32 1.0, %v6538
    %6541 = vrot.lane.b32.xlu0 %v6528, 64
    %v6542 = vpop.permute.xlu0 %6541
    %v6544 = vmul.f32 %v6539, %v6542
    %6546 = vrot.lane.b32.xlu0 %v6544, 64
    %v6547 = vpop.permute.xlu0 %6546
    %v6549 = vadd.f32 %v6465, %v6547
    %v6550 = vtanh.pop %v6549
    %v6551 = vsub.f32 1.0, %v6539
    %6553 = vrot.lane.b32.xlu0 %v6550, 96
    %v6554 = vpop.permute.xlu0 %6553
    %v6556 = vmul.f32 %v6551, %v6554
    %6558 = vrot.lane.b32.xlu0 %v243, 32
    %v6559 = vpop.permute.xlu0 %6558
    %v6561 = vmul.f32 %v6539, %v6559
    %v6562 = vadd.f32 %v6556, %v6561
    %v6563 = vpack.c.bf16 %v6562, %v6562
    %6565 = vrot.lane.b32.xlu0 %v6563, 96
    %v6566 = vpop.permute.xlu0 %6565
    %v6568 = vsel %vm874, %v6566, 0
    %6570 = vmatprep.subr.bf16.mxu0 0
    %6571 = vmatpush1.bf16.msra.mxu0 0
    %6572 = vmatprep.subr.bf16.mxu0 0
    %6573 = vmatpush1.bf16.msra.mxu0 0
    %6574 = vmatprep.subr.bf16.mxu0 0
    %6575 = vmatpush1.bf16.msra.mxu0 0
    %6576 = vmatprep.subr.bf16.mxu0 0
    %6577 = vmatpush1.bf16.msra.mxu0 0
    %6578 = vmatprep.subr.bf16.mxu0 0
    %6579 = vmatpush1.bf16.msra.mxu0 0
    %6580 = vmatprep.subr.bf16.mxu0 0
    %6581 = vmatpush1.bf16.msra.mxu0 0
    %6582 = vmatprep.subr.bf16.mxu0 0
    %6583 = vmatpush1.bf16.msra.mxu0 %v871
    %6584 = vmatprep.subr.bf16.mxu0 0
    %6585 = vmatpush1.bf16.msra.mxu0 %v870
    %6586 = vmatprep.subr.bf16.mxu0 0
    %6587 = vmatpush2.bf16.msra.mxu0 0
    %6588 = vmatprep.subr.bf16.mxu0 0
    %6589 = vmatpush2.bf16.msra.mxu0 0
    %6590 = vmatprep.subr.bf16.mxu0 0
    %6591 = vmatpush2.bf16.msra.mxu0 0
    %6592 = vmatprep.subr.bf16.mxu0 0
    %6593 = vmatpush2.bf16.msra.mxu0 0
    %6594 = vmatprep.subr.bf16.mxu0 0
    %6595 = vmatpush2.bf16.msra.mxu0 0
    %6596 = vmatprep.subr.bf16.mxu0 0
    %6597 = vmatpush2.bf16.msra.mxu0 0
    %6598 = vmatprep.subr.bf16.mxu0 0
    %6599 = vmatpush2.bf16.msra.mxu0 0
    %6600 = vmatprep.subr.bf16.mxu0 0
    %6601 = vmatpush2.bf16.msra.mxu0 0
    %6602 = vmatprep.mubr.bf16.mxu0 0
    %6603 = vmatmul.mubr.bf16.gmra.mxu0 %v6568
    %v6604 = vpop.f32.mrf.mxu0
    %v6605 = vadd.f32 0.0, %v6604
    %v6606 = vpop.f32.mrf.mxu0
    %v6607 = vpop.f32.mrf.mxu0
    %v6608 = vpop.f32.mrf.mxu0
    %6609 = vdwg.mxu0
    %v6611 = vcombine.high %v6605, %v6605
    %v6613 = vunpack.c.l.s4 1966171168
    %v6614 = vunpack.c.0.s8 %v6613
    %v6615 = vlaneseq
    %v6616 = vshrl.u32 %v6615, 7
    %v6617 = vsub.s32 %v6614, %v6616
    %v6618 = vrot.slane %v6605, %v6617
    %v6620 = vunpack.c.l.s4 1966171168
    %v6621 = vunpack.c.0.s8 %v6620
    %v6622 = vlaneseq
    %v6623 = vshrl.u32 %v6622, 7
    %v6624 = vsub.s32 %v6621, %v6623
    %v6625 = vrot.slane %v6611, %v6624
    %v6626 = vcombine.high %v6618, %v6618
    %v6627 = vcombine.high %v6625, %v6625
    %v6629 = vunpack.c.l.s4 1966171168
    %v6630 = vunpack.c.0.s8 %v6629
    %v6631 = vlaneseq
    %v6632 = vshrl.u32 %v6631, 7
    %v6633 = vsub.s32 %v6630, %v6632
    %v6634 = vrot.slane %v6618, %v6633
    %v6636 = vunpack.c.l.s4 1966171168
    %v6637 = vunpack.c.0.s8 %v6636
    %v6638 = vlaneseq
    %v6639 = vshrl.u32 %v6638, 7
    %v6640 = vsub.s32 %v6637, %v6639
    %v6641 = vrot.slane %v6625, %v6640
    %v6643 = vunpack.c.l.s4 1966171168
    %v6644 = vunpack.c.0.s8 %v6643
    %v6645 = vlaneseq
    %v6646 = vshrl.u32 %v6645, 7
    %v6647 = vsub.s32 %v6644, %v6646
    %v6648 = vrot.slane %v6626, %v6647
    %v6650 = vunpack.c.l.s4 1966171168
    %v6651 = vunpack.c.0.s8 %v6650
    %v6652 = vlaneseq
    %v6653 = vshrl.u32 %v6652, 7
    %v6654 = vsub.s32 %v6651, %v6653
    %v6655 = vrot.slane %v6627, %v6654
    %v6656 = vcombine.high %v6634, %v6634
    %v6657 = vcombine.high %v6641, %v6641
    %v6658 = vcombine.high %v6648, %v6648
    %v6659 = vcombine.high %v6655, %v6655
    %v6660 = vlaneseq
    %v6661 = vshrl.u32 %v6660, 7
    %v6662 = vsub.s32 0, %v6661
    %v6663 = vrot.slane %v6634, %v6662
    %v6664 = vlaneseq
    %v6665 = vshrl.u32 %v6664, 7
    %v6666 = vsub.s32 0, %v6665
    %v6667 = vrot.slane %v6648, %v6666
    %v6668 = vlaneseq
    %v6669 = vshrl.u32 %v6668, 7
    %v6670 = vsub.s32 0, %v6669
    %v6671 = vrot.slane %v6656, %v6670
    %v6672 = vlaneseq
    %v6673 = vshrl.u32 %v6672, 7
    %v6674 = vsub.s32 0, %v6673
    %v6675 = vrot.slane %v6658, %v6674
    %v6676 = vlaneseq
    %v6677 = vshrl.u32 %v6676, 7
    %v6678 = vsub.s32 0, %v6677
    %v6679 = vrot.slane %v6641, %v6678
    %v6680 = vlaneseq
    %v6681 = vshrl.u32 %v6680, 7
    %v6682 = vsub.s32 0, %v6681
    %v6683 = vrot.slane %v6655, %v6682
    %v6684 = vlaneseq
    %v6685 = vshrl.u32 %v6684, 7
    %v6686 = vsub.s32 0, %v6685
    %v6687 = vrot.slane %v6657, %v6686
    %v6688 = vlaneseq
    %v6689 = vshrl.u32 %v6688, 7
    %v6690 = vsub.s32 0, %v6689
    %v6691 = vrot.slane %v6659, %v6690
    %v6700 = vadd.f32 %v351, %v6663
    %v6701 = vadd.f32 %v354, %v6663
    %v6702 = vadd.f32 %v359, %v6663
    %v6703 = vadd.f32 %v362, %v6663
    %v6704 = vadd.f32 %v367, %v6663
    %v6705 = vadd.f32 %v370, %v6663
    %v6706 = vadd.f32 %v375, %v6663
    %v6707 = vadd.f32 %v378, %v6663
    %v6708 = vadd.f32 %v383, %v6663
    %v6709 = vadd.f32 %v386, %v6663
    %v6710 = vadd.f32 %v391, %v6663
    %v6711 = vadd.f32 %v394, %v6663
    %v6712 = vadd.f32 %v399, %v6663
    %v6713 = vadd.f32 %v402, %v6663
    %v6714 = vadd.f32 %v407, %v6663
    %v6715 = vadd.f32 %v410, %v6663
    %v6716 = vadd.f32 %v415, %v6667
    %v6717 = vadd.f32 %v418, %v6667
    %v6718 = vadd.f32 %v423, %v6667
    %v6719 = vadd.f32 %v426, %v6667
    %v6720 = vadd.f32 %v431, %v6667
    %v6721 = vadd.f32 %v434, %v6667
    %v6722 = vadd.f32 %v439, %v6667
    %v6723 = vadd.f32 %v442, %v6667
    %v6724 = vadd.f32 %v447, %v6667
    %v6725 = vadd.f32 %v450, %v6667
    %v6726 = vadd.f32 %v455, %v6667
    %v6727 = vadd.f32 %v458, %v6667
    %v6728 = vadd.f32 %v463, %v6667
    %v6729 = vadd.f32 %v466, %v6667
    %v6730 = vadd.f32 %v471, %v6667
    %v6731 = vadd.f32 %v474, %v6667
    %v6732 = vadd.f32 %v479, %v6671
    %v6733 = vadd.f32 %v482, %v6671
    %v6734 = vadd.f32 %v487, %v6671
    %v6735 = vadd.f32 %v490, %v6671
    %v6736 = vadd.f32 %v495, %v6671
    %v6737 = vadd.f32 %v498, %v6671
    %v6738 = vadd.f32 %v503, %v6671
    %v6739 = vadd.f32 %v506, %v6671
    %v6740 = vadd.f32 %v511, %v6671
    %v6741 = vadd.f32 %v514, %v6671
    %v6742 = vadd.f32 %v519, %v6671
    %v6743 = vadd.f32 %v522, %v6671
    %v6744 = vadd.f32 %v527, %v6671
    %v6745 = vadd.f32 %v530, %v6671
    %v6746 = vadd.f32 %v535, %v6671
    %v6747 = vadd.f32 %v538, %v6671
    %v6748 = vadd.f32 %v543, %v6675
    %v6749 = vadd.f32 %v546, %v6675
    %v6750 = vadd.f32 %v551, %v6675
    %v6751 = vadd.f32 %v554, %v6675
    %v6752 = vadd.f32 %v559, %v6675
    %v6753 = vadd.f32 %v562, %v6675
    %v6754 = vadd.f32 %v567, %v6675
    %v6755 = vadd.f32 %v570, %v6675
    %v6756 = vadd.f32 %v575, %v6675
    %v6757 = vadd.f32 %v578, %v6675
    %v6758 = vadd.f32 %v583, %v6675
    %v6759 = vadd.f32 %v586, %v6675
    %v6760 = vadd.f32 %v591, %v6675
    %v6761 = vadd.f32 %v594, %v6675
    %v6762 = vadd.f32 %v599, %v6675
    %v6763 = vadd.f32 %v602, %v6675
    %v6764 = vadd.f32 %v607, %v6679
    %v6765 = vadd.f32 %v610, %v6679
    %v6766 = vadd.f32 %v615, %v6679
    %v6767 = vadd.f32 %v618, %v6679
    %v6768 = vadd.f32 %v623, %v6679
    %v6769 = vadd.f32 %v626, %v6679
    %v6770 = vadd.f32 %v631, %v6679
    %v6771 = vadd.f32 %v634, %v6679
    %v6772 = vadd.f32 %v639, %v6679
    %v6773 = vadd.f32 %v642, %v6679
    %v6774 = vadd.f32 %v647, %v6679
    %v6775 = vadd.f32 %v650, %v6679
    %v6776 = vadd.f32 %v655, %v6679
    %v6777 = vadd.f32 %v658, %v6679
    %v6778 = vadd.f32 %v663, %v6679
    %v6779 = vadd.f32 %v666, %v6679
    %v6780 = vadd.f32 %v671, %v6683
    %v6781 = vadd.f32 %v674, %v6683
    %v6782 = vadd.f32 %v679, %v6683
    %v6783 = vadd.f32 %v682, %v6683
    %v6784 = vadd.f32 %v687, %v6683
    %v6785 = vadd.f32 %v690, %v6683
    %v6786 = vadd.f32 %v695, %v6683
    %v6787 = vadd.f32 %v698, %v6683
    %v6788 = vadd.f32 %v703, %v6683
    %v6789 = vadd.f32 %v706, %v6683
    %v6790 = vadd.f32 %v711, %v6683
    %v6791 = vadd.f32 %v714, %v6683
    %v6792 = vadd.f32 %v719, %v6683
    %v6793 = vadd.f32 %v722, %v6683
    %v6794 = vadd.f32 %v727, %v6683
    %v6795 = vadd.f32 %v730, %v6683
    %v6796 = vadd.f32 %v735, %v6687
    %v6797 = vadd.f32 %v738, %v6687
    %v6798 = vadd.f32 %v743, %v6687
    %v6799 = vadd.f32 %v746, %v6687
    %v6800 = vadd.f32 %v751, %v6687
    %v6801 = vadd.f32 %v754, %v6687
    %v6802 = vadd.f32 %v759, %v6687
    %v6803 = vadd.f32 %v762, %v6687
    %v6804 = vadd.f32 %v767, %v6687
    %v6805 = vadd.f32 %v770, %v6687
    %v6806 = vadd.f32 %v775, %v6687
    %v6807 = vadd.f32 %v778, %v6687
    %v6808 = vadd.f32 %v783, %v6687
    %v6809 = vadd.f32 %v786, %v6687
    %v6810 = vadd.f32 %v791, %v6687
    %v6811 = vadd.f32 %v794, %v6687
    %v6812 = vadd.f32 %v799, %v6691
    %v6813 = vadd.f32 %v802, %v6691
    %v6814 = vadd.f32 %v807, %v6691
    %v6815 = vadd.f32 %v810, %v6691
    %v6816 = vadd.f32 %v815, %v6691
    %v6817 = vadd.f32 %v818, %v6691
    %v6818 = vadd.f32 %v823, %v6691
    %v6819 = vadd.f32 %v826, %v6691
    %v6820 = vadd.f32 %v831, %v6691
    %v6821 = vadd.f32 %v834, %v6691
    %v6822 = vadd.f32 %v839, %v6691
    %v6823 = vadd.f32 %v842, %v6691
    %v6824 = vadd.f32 %v847, %v6691
    %v6825 = vadd.f32 %v850, %v6691
    %v6826 = vadd.f32 %v855, %v6691
    %v6827 = vadd.f32 %v858, %v6691
    %v6828 = vtanh.pop %v6700
    %v6829 = vtanh.pop %v6701
    %v6830 = vtanh.pop %v6702
    %v6831 = vtanh.pop %v6703
    %v6832 = vtanh.pop %v6704
    %v6833 = vtanh.pop %v6705
    %v6834 = vtanh.pop %v6706
    %v6835 = vtanh.pop %v6707
    %v6836 = vtanh.pop %v6708
    %v6837 = vtanh.pop %v6709
    %v6838 = vtanh.pop %v6710
    %v6839 = vtanh.pop %v6711
    %v6840 = vtanh.pop %v6712
    %v6841 = vtanh.pop %v6713
    %v6842 = vtanh.pop %v6714
    %v6843 = vtanh.pop %v6715
    %v6844 = vtanh.pop %v6716
    %v6845 = vtanh.pop %v6717
    %v6846 = vtanh.pop %v6718
    %v6847 = vtanh.pop %v6719
    %v6848 = vtanh.pop %v6720
    %v6849 = vtanh.pop %v6721
    %v6850 = vtanh.pop %v6722
    %v6851 = vtanh.pop %v6723
    %v6852 = vtanh.pop %v6724
    %v6853 = vtanh.pop %v6725
    %v6854 = vtanh.pop %v6726
    %v6855 = vtanh.pop %v6727
    %v6856 = vtanh.pop %v6728
    %v6857 = vtanh.pop %v6729
    %v6858 = vtanh.pop %v6730
    %v6859 = vtanh.pop %v6731
    %v6860 = vtanh.pop %v6732
    %v6861 = vtanh.pop %v6733
    %v6862 = vtanh.pop %v6734
    %v6863 = vtanh.pop %v6735
    %v6864 = vtanh.pop %v6736
    %v6865 = vtanh.pop %v6737
    %v6866 = vtanh.pop %v6738
    %v6867 = vtanh.pop %v6739
    %v6868 = vtanh.pop %v6740
    %v6869 = vtanh.pop %v6741
    %v6870 = vtanh.pop %v6742
    %v6871 = vtanh.pop %v6743
    %v6872 = vtanh.pop %v6744
    %v6873 = vtanh.pop %v6745
    %v6874 = vtanh.pop %v6746
    %v6875 = vtanh.pop %v6747
    %v6876 = vtanh.pop %v6748
    %v6877 = vtanh.pop %v6749
    %v6878 = vtanh.pop %v6750
    %v6879 = vtanh.pop %v6751
    %v6880 = vtanh.pop %v6752
    %v6881 = vtanh.pop %v6753
    %v6882 = vtanh.pop %v6754
    %v6883 = vtanh.pop %v6755
    %v6884 = vtanh.pop %v6756
    %v6885 = vtanh.pop %v6757
    %v6886 = vtanh.pop %v6758
    %v6887 = vtanh.pop %v6759
    %v6888 = vtanh.pop %v6760
    %v6889 = vtanh.pop %v6761
    %v6890 = vtanh.pop %v6762
    %v6891 = vtanh.pop %v6763
    %v6892 = vtanh.pop %v6764
    %v6893 = vtanh.pop %v6765
    %v6894 = vtanh.pop %v6766
    %v6895 = vtanh.pop %v6767
    %v6896 = vtanh.pop %v6768
    %v6897 = vtanh.pop %v6769
    %v6898 = vtanh.pop %v6770
    %v6899 = vtanh.pop %v6771
    %v6900 = vtanh.pop %v6772
    %v6901 = vtanh.pop %v6773
    %v6902 = vtanh.pop %v6774
    %v6903 = vtanh.pop %v6775
    %v6904 = vtanh.pop %v6776
    %v6905 = vtanh.pop %v6777
    %v6906 = vtanh.pop %v6778
    %v6907 = vtanh.pop %v6779
    %v6908 = vtanh.pop %v6780
    %v6909 = vtanh.pop %v6781
    %v6910 = vtanh.pop %v6782
    %v6911 = vtanh.pop %v6783
    %v6912 = vtanh.pop %v6784
    %v6913 = vtanh.pop %v6785
    %v6914 = vtanh.pop %v6786
    %v6915 = vtanh.pop %v6787
    %v6916 = vtanh.pop %v6788
    %v6917 = vtanh.pop %v6789
    %v6918 = vtanh.pop %v6790
    %v6919 = vtanh.pop %v6791
    %v6920 = vtanh.pop %v6792
    %v6921 = vtanh.pop %v6793
    %v6922 = vtanh.pop %v6794
    %v6923 = vtanh.pop %v6795
    %v6924 = vtanh.pop %v6796
    %v6925 = vtanh.pop %v6797
    %v6926 = vtanh.pop %v6798
    %v6927 = vtanh.pop %v6799
    %v6928 = vtanh.pop %v6800
    %v6929 = vtanh.pop %v6801
    %v6930 = vtanh.pop %v6802
    %v6931 = vtanh.pop %v6803
    %v6932 = vtanh.pop %v6804
    %v6933 = vtanh.pop %v6805
    %v6934 = vtanh.pop %v6806
    %v6935 = vtanh.pop %v6807
    %v6936 = vtanh.pop %v6808
    %v6937 = vtanh.pop %v6809
    %v6938 = vtanh.pop %v6810
    %v6939 = vtanh.pop %v6811
    %v6940 = vtanh.pop %v6812
    %v6941 = vtanh.pop %v6813
    %v6942 = vtanh.pop %v6814
    %v6943 = vtanh.pop %v6815
    %v6944 = vtanh.pop %v6816
    %v6945 = vtanh.pop %v6817
    %v6946 = vtanh.pop %v6818
    %v6947 = vtanh.pop %v6819
    %v6948 = vtanh.pop %v6820
    %v6949 = vtanh.pop %v6821
    %v6950 = vtanh.pop %v6822
    %v6951 = vtanh.pop %v6823
    %v6952 = vtanh.pop %v6824
    %v6953 = vtanh.pop %v6825
    %v6954 = vtanh.pop %v6826
    %v6955 = vtanh.pop %v6827
    %v6956 = vmul.f32 %v6828, %v1268
    %v6957 = vmul.f32 %v6829, %v1268
    %v6958 = vmul.f32 %v6830, %v1268
    %v6959 = vmul.f32 %v6831, %v1268
    %v6960 = vmul.f32 %v6832, %v1268
    %v6961 = vmul.f32 %v6833, %v1268
    %v6962 = vmul.f32 %v6834, %v1268
    %v6963 = vmul.f32 %v6835, %v1268
    %v6964 = vmul.f32 %v6836, %v1268
    %v6965 = vmul.f32 %v6837, %v1268
    %v6966 = vmul.f32 %v6838, %v1268
    %v6967 = vmul.f32 %v6839, %v1268
    %v6968 = vmul.f32 %v6840, %v1268
    %v6969 = vmul.f32 %v6841, %v1268
    %v6970 = vmul.f32 %v6842, %v1268
    %v6971 = vmul.f32 %v6843, %v1268
    %v6972 = vmul.f32 %v6844, %v1268
    %v6973 = vmul.f32 %v6845, %v1268
    %v6974 = vmul.f32 %v6846, %v1268
    %v6975 = vmul.f32 %v6847, %v1268
    %v6976 = vmul.f32 %v6848, %v1268
    %v6977 = vmul.f32 %v6849, %v1268
    %v6978 = vmul.f32 %v6850, %v1268
    %v6979 = vmul.f32 %v6851, %v1268
    %v6980 = vmul.f32 %v6852, %v1268
    %v6981 = vmul.f32 %v6853, %v1268
    %v6982 = vmul.f32 %v6854, %v1268
    %v6983 = vmul.f32 %v6855, %v1268
    %v6984 = vmul.f32 %v6856, %v1268
    %v6985 = vmul.f32 %v6857, %v1268
    %v6986 = vmul.f32 %v6858, %v1268
    %v6987 = vmul.f32 %v6859, %v1268
    %v6988 = vmul.f32 %v6860, %v1268
    %v6989 = vmul.f32 %v6861, %v1268
    %v6990 = vmul.f32 %v6862, %v1268
    %v6991 = vmul.f32 %v6863, %v1268
    %v6992 = vmul.f32 %v6864, %v1268
    %v6993 = vmul.f32 %v6865, %v1268
    %v6994 = vmul.f32 %v6866, %v1268
    %v6995 = vmul.f32 %v6867, %v1268
    %v6996 = vmul.f32 %v6868, %v1268
    %v6997 = vmul.f32 %v6869, %v1268
    %v6998 = vmul.f32 %v6870, %v1268
    %v6999 = vmul.f32 %v6871, %v1268
    %v7000 = vmul.f32 %v6872, %v1268
    %v7001 = vmul.f32 %v6873, %v1268
    %v7002 = vmul.f32 %v6874, %v1268
    %v7003 = vmul.f32 %v6875, %v1268
    %v7004 = vmul.f32 %v6876, %v1268
    %v7005 = vmul.f32 %v6877, %v1268
    %v7006 = vmul.f32 %v6878, %v1268
    %v7007 = vmul.f32 %v6879, %v1268
    %v7008 = vmul.f32 %v6880, %v1268
    %v7009 = vmul.f32 %v6881, %v1268
    %v7010 = vmul.f32 %v6882, %v1268
    %v7011 = vmul.f32 %v6883, %v1268
    %v7012 = vmul.f32 %v6884, %v1268
    %v7013 = vmul.f32 %v6885, %v1268
    %v7014 = vmul.f32 %v6886, %v1268
    %v7015 = vmul.f32 %v6887, %v1268
    %v7016 = vmul.f32 %v6888, %v1268
    %v7017 = vmul.f32 %v6889, %v1268
    %v7018 = vmul.f32 %v6890, %v1268
    %v7019 = vmul.f32 %v6891, %v1268
    %v7020 = vmul.f32 %v6892, %v1268
    %v7021 = vmul.f32 %v6893, %v1268
    %v7022 = vmul.f32 %v6894, %v1268
    %v7023 = vmul.f32 %v6895, %v1268
    %v7024 = vmul.f32 %v6896, %v1268
    %v7025 = vmul.f32 %v6897, %v1268
    %v7026 = vmul.f32 %v6898, %v1268
    %v7027 = vmul.f32 %v6899, %v1268
    %v7028 = vmul.f32 %v6900, %v1268
    %v7029 = vmul.f32 %v6901, %v1268
    %v7030 = vmul.f32 %v6902, %v1268
    %v7031 = vmul.f32 %v6903, %v1268
    %v7032 = vmul.f32 %v6904, %v1268
    %v7033 = vmul.f32 %v6905, %v1268
    %v7034 = vmul.f32 %v6906, %v1268
    %v7035 = vmul.f32 %v6907, %v1268
    %v7036 = vmul.f32 %v6908, %v1268
    %v7037 = vmul.f32 %v6909, %v1268
    %v7038 = vmul.f32 %v6910, %v1268
    %v7039 = vmul.f32 %v6911, %v1268
    %v7040 = vmul.f32 %v6912, %v1268
    %v7041 = vmul.f32 %v6913, %v1268
    %v7042 = vmul.f32 %v6914, %v1268
    %v7043 = vmul.f32 %v6915, %v1268
    %v7044 = vmul.f32 %v6916, %v1268
    %v7045 = vmul.f32 %v6917, %v1268
    %v7046 = vmul.f32 %v6918, %v1268
    %v7047 = vmul.f32 %v6919, %v1268
    %v7048 = vmul.f32 %v6920, %v1268
    %v7049 = vmul.f32 %v6921, %v1268
    %v7050 = vmul.f32 %v6922, %v1268
    %v7051 = vmul.f32 %v6923, %v1268
    %v7052 = vmul.f32 %v6924, %v1268
    %v7053 = vmul.f32 %v6925, %v1268
    %v7054 = vmul.f32 %v6926, %v1268
    %v7055 = vmul.f32 %v6927, %v1268
    %v7056 = vmul.f32 %v6928, %v1268
    %v7057 = vmul.f32 %v6929, %v1268
    %v7058 = vmul.f32 %v6930, %v1268
    %v7059 = vmul.f32 %v6931, %v1268
    %v7060 = vmul.f32 %v6932, %v1268
    %v7061 = vmul.f32 %v6933, %v1268
    %v7062 = vmul.f32 %v6934, %v1268
    %v7063 = vmul.f32 %v6935, %v1268
    %v7064 = vmul.f32 %v6936, %v1268
    %v7065 = vmul.f32 %v6937, %v1268
    %v7066 = vmul.f32 %v6938, %v1268
    %v7067 = vmul.f32 %v6939, %v1268
    %v7068 = vmul.f32 %v6940, %v1268
    %v7069 = vmul.f32 %v6941, %v1268
    %v7070 = vmul.f32 %v6942, %v1268
    %v7071 = vmul.f32 %v6943, %v1268
    %v7072 = vmul.f32 %v6944, %v1268
    %v7073 = vmul.f32 %v6945, %v1268
    %v7074 = vmul.f32 %v6946, %v1268
    %v7075 = vmul.f32 %v6947, %v1268
    %v7076 = vmul.f32 %v6948, %v1268
    %v7077 = vmul.f32 %v6949, %v1268
    %v7078 = vmul.f32 %v6950, %v1268
    %v7079 = vmul.f32 %v6951, %v1268
    %v7080 = vmul.f32 %v6952, %v1268
    %v7081 = vmul.f32 %v6953, %v1268
    %v7082 = vmul.f32 %v6954, %v1268
    %v7083 = vmul.f32 %v6955, %v1268
    %7084 = vadd.xlane.f32.xlu0 %v6956
    %v7085 = vpop.xlane.xlu0 %7084
    %7086 = vadd.xlane.f32.xlu0 %v6957
    %v7087 = vpop.xlane.xlu0 %7086
    %7088 = vadd.xlane.f32.xlu0 %v6958
    %v7089 = vpop.xlane.xlu0 %7088
    %7090 = vadd.xlane.f32.xlu0 %v6959
    %v7091 = vpop.xlane.xlu0 %7090
    %7092 = vadd.xlane.f32.xlu0 %v6960
    %v7093 = vpop.xlane.xlu0 %7092
    %7094 = vadd.xlane.f32.xlu0 %v6961
    %v7095 = vpop.xlane.xlu0 %7094
    %7096 = vadd.xlane.f32.xlu0 %v6962
    %v7097 = vpop.xlane.xlu0 %7096
    %7098 = vadd.xlane.f32.xlu0 %v6963
    %v7099 = vpop.xlane.xlu0 %7098
    %7100 = vadd.xlane.f32.xlu0 %v6964
    %v7101 = vpop.xlane.xlu0 %7100
    %7102 = vadd.xlane.f32.xlu0 %v6965
    %v7103 = vpop.xlane.xlu0 %7102
    %7104 = vadd.xlane.f32.xlu0 %v6966
    %v7105 = vpop.xlane.xlu0 %7104
    %7106 = vadd.xlane.f32.xlu0 %v6967
    %v7107 = vpop.xlane.xlu0 %7106
    %7108 = vadd.xlane.f32.xlu0 %v6968
    %v7109 = vpop.xlane.xlu0 %7108
    %7110 = vadd.xlane.f32.xlu0 %v6969
    %v7111 = vpop.xlane.xlu0 %7110
    %7112 = vadd.xlane.f32.xlu0 %v6970
    %v7113 = vpop.xlane.xlu0 %7112
    %7114 = vadd.xlane.f32.xlu0 %v6971
    %v7115 = vpop.xlane.xlu0 %7114
    %7116 = vadd.xlane.f32.xlu0 %v6972
    %v7117 = vpop.xlane.xlu0 %7116
    %7118 = vadd.xlane.f32.xlu0 %v6973
    %v7119 = vpop.xlane.xlu0 %7118
    %7120 = vadd.xlane.f32.xlu0 %v6974
    %v7121 = vpop.xlane.xlu0 %7120
    %7122 = vadd.xlane.f32.xlu0 %v6975
    %v7123 = vpop.xlane.xlu0 %7122
    %7124 = vadd.xlane.f32.xlu0 %v6976
    %v7125 = vpop.xlane.xlu0 %7124
    %7126 = vadd.xlane.f32.xlu0 %v6977
    %v7127 = vpop.xlane.xlu0 %7126
    %7128 = vadd.xlane.f32.xlu0 %v6978
    %v7129 = vpop.xlane.xlu0 %7128
    %7130 = vadd.xlane.f32.xlu0 %v6979
    %v7131 = vpop.xlane.xlu0 %7130
    %7132 = vadd.xlane.f32.xlu0 %v6980
    %v7133 = vpop.xlane.xlu0 %7132
    %7134 = vadd.xlane.f32.xlu0 %v6981
    %v7135 = vpop.xlane.xlu0 %7134
    %7136 = vadd.xlane.f32.xlu0 %v6982
    %v7137 = vpop.xlane.xlu0 %7136
    %7138 = vadd.xlane.f32.xlu0 %v6983
    %v7139 = vpop.xlane.xlu0 %7138
    %7140 = vadd.xlane.f32.xlu0 %v6984
    %v7141 = vpop.xlane.xlu0 %7140
    %7142 = vadd.xlane.f32.xlu0 %v6985
    %v7143 = vpop.xlane.xlu0 %7142
    %7144 = vadd.xlane.f32.xlu0 %v6986
    %v7145 = vpop.xlane.xlu0 %7144
    %7146 = vadd.xlane.f32.xlu0 %v6987
    %v7147 = vpop.xlane.xlu0 %7146
    %7148 = vadd.xlane.f32.xlu0 %v6988
    %v7149 = vpop.xlane.xlu0 %7148
    %7150 = vadd.xlane.f32.xlu0 %v6989
    %v7151 = vpop.xlane.xlu0 %7150
    %7152 = vadd.xlane.f32.xlu0 %v6990
    %v7153 = vpop.xlane.xlu0 %7152
    %7154 = vadd.xlane.f32.xlu0 %v6991
    %v7155 = vpop.xlane.xlu0 %7154
    %7156 = vadd.xlane.f32.xlu0 %v6992
    %v7157 = vpop.xlane.xlu0 %7156
    %7158 = vadd.xlane.f32.xlu0 %v6993
    %v7159 = vpop.xlane.xlu0 %7158
    %7160 = vadd.xlane.f32.xlu0 %v6994
    %v7161 = vpop.xlane.xlu0 %7160
    %7162 = vadd.xlane.f32.xlu0 %v6995
    %v7163 = vpop.xlane.xlu0 %7162
    %7164 = vadd.xlane.f32.xlu0 %v6996
    %v7165 = vpop.xlane.xlu0 %7164
    %7166 = vadd.xlane.f32.xlu0 %v6997
    %v7167 = vpop.xlane.xlu0 %7166
    %7168 = vadd.xlane.f32.xlu0 %v6998
    %v7169 = vpop.xlane.xlu0 %7168
    %7170 = vadd.xlane.f32.xlu0 %v6999
    %v7171 = vpop.xlane.xlu0 %7170
    %7172 = vadd.xlane.f32.xlu0 %v7000
    %v7173 = vpop.xlane.xlu0 %7172
    %7174 = vadd.xlane.f32.xlu0 %v7001
    %v7175 = vpop.xlane.xlu0 %7174
    %7176 = vadd.xlane.f32.xlu0 %v7002
    %v7177 = vpop.xlane.xlu0 %7176
    %7178 = vadd.xlane.f32.xlu0 %v7003
    %v7179 = vpop.xlane.xlu0 %7178
    %7180 = vadd.xlane.f32.xlu0 %v7004
    %v7181 = vpop.xlane.xlu0 %7180
    %7182 = vadd.xlane.f32.xlu0 %v7005
    %v7183 = vpop.xlane.xlu0 %7182
    %7184 = vadd.xlane.f32.xlu0 %v7006
    %v7185 = vpop.xlane.xlu0 %7184
    %7186 = vadd.xlane.f32.xlu0 %v7007
    %v7187 = vpop.xlane.xlu0 %7186
    %7188 = vadd.xlane.f32.xlu0 %v7008
    %v7189 = vpop.xlane.xlu0 %7188
    %7190 = vadd.xlane.f32.xlu0 %v7009
    %v7191 = vpop.xlane.xlu0 %7190
    %7192 = vadd.xlane.f32.xlu0 %v7010
    %v7193 = vpop.xlane.xlu0 %7192
    %7194 = vadd.xlane.f32.xlu0 %v7011
    %v7195 = vpop.xlane.xlu0 %7194
    %7196 = vadd.xlane.f32.xlu0 %v7012
    %v7197 = vpop.xlane.xlu0 %7196
    %7198 = vadd.xlane.f32.xlu0 %v7013
    %v7199 = vpop.xlane.xlu0 %7198
    %7200 = vadd.xlane.f32.xlu0 %v7014
    %v7201 = vpop.xlane.xlu0 %7200
    %7202 = vadd.xlane.f32.xlu0 %v7015
    %v7203 = vpop.xlane.xlu0 %7202
    %7204 = vadd.xlane.f32.xlu0 %v7016
    %v7205 = vpop.xlane.xlu0 %7204
    %7206 = vadd.xlane.f32.xlu0 %v7017
    %v7207 = vpop.xlane.xlu0 %7206
    %7208 = vadd.xlane.f32.xlu0 %v7018
    %v7209 = vpop.xlane.xlu0 %7208
    %7210 = vadd.xlane.f32.xlu0 %v7019
    %v7211 = vpop.xlane.xlu0 %7210
    %7212 = vadd.xlane.f32.xlu0 %v7020
    %v7213 = vpop.xlane.xlu0 %7212
    %7214 = vadd.xlane.f32.xlu0 %v7021
    %v7215 = vpop.xlane.xlu0 %7214
    %7216 = vadd.xlane.f32.xlu0 %v7022
    %v7217 = vpop.xlane.xlu0 %7216
    %7218 = vadd.xlane.f32.xlu0 %v7023
    %v7219 = vpop.xlane.xlu0 %7218
    %7220 = vadd.xlane.f32.xlu0 %v7024
    %v7221 = vpop.xlane.xlu0 %7220
    %7222 = vadd.xlane.f32.xlu0 %v7025
    %v7223 = vpop.xlane.xlu0 %7222
    %7224 = vadd.xlane.f32.xlu0 %v7026
    %v7225 = vpop.xlane.xlu0 %7224
    %7226 = vadd.xlane.f32.xlu0 %v7027
    %v7227 = vpop.xlane.xlu0 %7226
    %7228 = vadd.xlane.f32.xlu0 %v7028
    %v7229 = vpop.xlane.xlu0 %7228
    %7230 = vadd.xlane.f32.xlu0 %v7029
    %v7231 = vpop.xlane.xlu0 %7230
    %7232 = vadd.xlane.f32.xlu0 %v7030
    %v7233 = vpop.xlane.xlu0 %7232
    %7234 = vadd.xlane.f32.xlu0 %v7031
    %v7235 = vpop.xlane.xlu0 %7234
    %7236 = vadd.xlane.f32.xlu0 %v7032
    %v7237 = vpop.xlane.xlu0 %7236
    %7238 = vadd.xlane.f32.xlu0 %v7033
    %v7239 = vpop.xlane.xlu0 %7238
    %7240 = vadd.xlane.f32.xlu0 %v7034
    %v7241 = vpop.xlane.xlu0 %7240
    %7242 = vadd.xlane.f32.xlu0 %v7035
    %v7243 = vpop.xlane.xlu0 %7242
    %7244 = vadd.xlane.f32.xlu0 %v7036
    %v7245 = vpop.xlane.xlu0 %7244
    %7246 = vadd.xlane.f32.xlu0 %v7037
    %v7247 = vpop.xlane.xlu0 %7246
    %7248 = vadd.xlane.f32.xlu0 %v7038
    %v7249 = vpop.xlane.xlu0 %7248
    %7250 = vadd.xlane.f32.xlu0 %v7039
    %v7251 = vpop.xlane.xlu0 %7250
    %7252 = vadd.xlane.f32.xlu0 %v7040
    %v7253 = vpop.xlane.xlu0 %7252
    %7254 = vadd.xlane.f32.xlu0 %v7041
    %v7255 = vpop.xlane.xlu0 %7254
    %7256 = vadd.xlane.f32.xlu0 %v7042
    %v7257 = vpop.xlane.xlu0 %7256
    %7258 = vadd.xlane.f32.xlu0 %v7043
    %v7259 = vpop.xlane.xlu0 %7258
    %7260 = vadd.xlane.f32.xlu0 %v7044
    %v7261 = vpop.xlane.xlu0 %7260
    %7262 = vadd.xlane.f32.xlu0 %v7045
    %v7263 = vpop.xlane.xlu0 %7262
    %7264 = vadd.xlane.f32.xlu0 %v7046
    %v7265 = vpop.xlane.xlu0 %7264
    %7266 = vadd.xlane.f32.xlu0 %v7047
    %v7267 = vpop.xlane.xlu0 %7266
    %7268 = vadd.xlane.f32.xlu0 %v7048
    %v7269 = vpop.xlane.xlu0 %7268
    %7270 = vadd.xlane.f32.xlu0 %v7049
    %v7271 = vpop.xlane.xlu0 %7270
    %7272 = vadd.xlane.f32.xlu0 %v7050
    %v7273 = vpop.xlane.xlu0 %7272
    %7274 = vadd.xlane.f32.xlu0 %v7051
    %v7275 = vpop.xlane.xlu0 %7274
    %7276 = vadd.xlane.f32.xlu0 %v7052
    %v7277 = vpop.xlane.xlu0 %7276
    %7278 = vadd.xlane.f32.xlu0 %v7053
    %v7279 = vpop.xlane.xlu0 %7278
    %7280 = vadd.xlane.f32.xlu0 %v7054
    %v7281 = vpop.xlane.xlu0 %7280
    %7282 = vadd.xlane.f32.xlu0 %v7055
    %v7283 = vpop.xlane.xlu0 %7282
    %7284 = vadd.xlane.f32.xlu0 %v7056
    %v7285 = vpop.xlane.xlu0 %7284
    %7286 = vadd.xlane.f32.xlu0 %v7057
    %v7287 = vpop.xlane.xlu0 %7286
    %7288 = vadd.xlane.f32.xlu0 %v7058
    %v7289 = vpop.xlane.xlu0 %7288
    %7290 = vadd.xlane.f32.xlu0 %v7059
    %v7291 = vpop.xlane.xlu0 %7290
    %7292 = vadd.xlane.f32.xlu0 %v7060
    %v7293 = vpop.xlane.xlu0 %7292
    %7294 = vadd.xlane.f32.xlu0 %v7061
    %v7295 = vpop.xlane.xlu0 %7294
    %7296 = vadd.xlane.f32.xlu0 %v7062
    %v7297 = vpop.xlane.xlu0 %7296
    %7298 = vadd.xlane.f32.xlu0 %v7063
    %v7299 = vpop.xlane.xlu0 %7298
    %7300 = vadd.xlane.f32.xlu0 %v7064
    %v7301 = vpop.xlane.xlu0 %7300
    %7302 = vadd.xlane.f32.xlu0 %v7065
    %v7303 = vpop.xlane.xlu0 %7302
    %7304 = vadd.xlane.f32.xlu0 %v7066
    %v7305 = vpop.xlane.xlu0 %7304
    %7306 = vadd.xlane.f32.xlu0 %v7067
    %v7307 = vpop.xlane.xlu0 %7306
    %7308 = vadd.xlane.f32.xlu0 %v7068
    %v7309 = vpop.xlane.xlu0 %7308
    %7310 = vadd.xlane.f32.xlu0 %v7069
    %v7311 = vpop.xlane.xlu0 %7310
    %7312 = vadd.xlane.f32.xlu0 %v7070
    %v7313 = vpop.xlane.xlu0 %7312
    %7314 = vadd.xlane.f32.xlu0 %v7071
    %v7315 = vpop.xlane.xlu0 %7314
    %7316 = vadd.xlane.f32.xlu0 %v7072
    %v7317 = vpop.xlane.xlu0 %7316
    %7318 = vadd.xlane.f32.xlu0 %v7073
    %v7319 = vpop.xlane.xlu0 %7318
    %7320 = vadd.xlane.f32.xlu0 %v7074
    %v7321 = vpop.xlane.xlu0 %7320
    %7322 = vadd.xlane.f32.xlu0 %v7075
    %v7323 = vpop.xlane.xlu0 %7322
    %7324 = vadd.xlane.f32.xlu0 %v7076
    %v7325 = vpop.xlane.xlu0 %7324
    %7326 = vadd.xlane.f32.xlu0 %v7077
    %v7327 = vpop.xlane.xlu0 %7326
    %7328 = vadd.xlane.f32.xlu0 %v7078
    %v7329 = vpop.xlane.xlu0 %7328
    %7330 = vadd.xlane.f32.xlu0 %v7079
    %v7331 = vpop.xlane.xlu0 %7330
    %7332 = vadd.xlane.f32.xlu0 %v7080
    %v7333 = vpop.xlane.xlu0 %7332
    %7334 = vadd.xlane.f32.xlu0 %v7081
    %v7335 = vpop.xlane.xlu0 %7334
    %7336 = vadd.xlane.f32.xlu0 %v7082
    %v7337 = vpop.xlane.xlu0 %7336
    %7338 = vadd.xlane.f32.xlu0 %v7083
    %v7339 = vpop.xlane.xlu0 %7338
    %v7340 = vadd.f32 %v7085, %v1661
    %v7341 = vadd.f32 %v7087, %v1665
    %v7342 = vadd.f32 %v7089, %v1669
    %v7343 = vadd.f32 %v7091, %v1673
    %v7344 = vadd.f32 %v7093, %v1677
    %v7345 = vadd.f32 %v7095, %v1681
    %v7346 = vadd.f32 %v7097, %v1685
    %v7347 = vadd.f32 %v7099, %v1689
    %v7348 = vadd.f32 %v7101, %v1693
    %v7349 = vadd.f32 %v7103, %v1697
    %v7350 = vadd.f32 %v7105, %v1701
    %v7351 = vadd.f32 %v7107, %v1705
    %v7352 = vadd.f32 %v7109, %v1709
    %v7353 = vadd.f32 %v7111, %v1713
    %v7354 = vadd.f32 %v7113, %v1717
    %v7355 = vadd.f32 %v7115, %v1721
    %v7356 = vadd.f32 %v7117, %v1728
    %v7357 = vadd.f32 %v7119, %v1732
    %v7358 = vadd.f32 %v7121, %v1736
    %v7359 = vadd.f32 %v7123, %v1740
    %v7360 = vadd.f32 %v7125, %v1744
    %v7361 = vadd.f32 %v7127, %v1748
    %v7362 = vadd.f32 %v7129, %v1752
    %v7363 = vadd.f32 %v7131, %v1756
    %v7364 = vadd.f32 %v7133, %v1760
    %v7365 = vadd.f32 %v7135, %v1764
    %v7366 = vadd.f32 %v7137, %v1768
    %v7367 = vadd.f32 %v7139, %v1772
    %v7368 = vadd.f32 %v7141, %v1776
    %v7369 = vadd.f32 %v7143, %v1780
    %v7370 = vadd.f32 %v7145, %v1784
    %v7371 = vadd.f32 %v7147, %v1788
    %v7372 = vadd.f32 %v7149, %v1795
    %v7373 = vadd.f32 %v7151, %v1799
    %v7374 = vadd.f32 %v7153, %v1803
    %v7375 = vadd.f32 %v7155, %v1807
    %v7376 = vadd.f32 %v7157, %v1811
    %v7377 = vadd.f32 %v7159, %v1815
    %v7378 = vadd.f32 %v7161, %v1819
    %v7379 = vadd.f32 %v7163, %v1823
    %v7380 = vadd.f32 %v7165, %v1827
    %v7381 = vadd.f32 %v7167, %v1831
    %v7382 = vadd.f32 %v7169, %v1835
    %v7383 = vadd.f32 %v7171, %v1839
    %v7384 = vadd.f32 %v7173, %v1843
    %v7385 = vadd.f32 %v7175, %v1847
    %v7386 = vadd.f32 %v7177, %v1851
    %v7387 = vadd.f32 %v7179, %v1855
    %v7388 = vadd.f32 %v7181, %v1862
    %v7389 = vadd.f32 %v7183, %v1866
    %v7390 = vadd.f32 %v7185, %v1870
    %v7391 = vadd.f32 %v7187, %v1874
    %v7392 = vadd.f32 %v7189, %v1878
    %v7393 = vadd.f32 %v7191, %v1882
    %v7394 = vadd.f32 %v7193, %v1886
    %v7395 = vadd.f32 %v7195, %v1890
    %v7396 = vadd.f32 %v7197, %v1894
    %v7397 = vadd.f32 %v7199, %v1898
    %v7398 = vadd.f32 %v7201, %v1902
    %v7399 = vadd.f32 %v7203, %v1906
    %v7400 = vadd.f32 %v7205, %v1910
    %v7401 = vadd.f32 %v7207, %v1914
    %v7402 = vadd.f32 %v7209, %v1918
    %v7403 = vadd.f32 %v7211, %v1922
    %v7404 = vadd.f32 %v7213, %v1929
    %v7405 = vadd.f32 %v7215, %v1933
    %v7406 = vadd.f32 %v7217, %v1937
    %v7407 = vadd.f32 %v7219, %v1941
    %v7408 = vadd.f32 %v7221, %v1945
    %v7409 = vadd.f32 %v7223, %v1949
    %v7410 = vadd.f32 %v7225, %v1953
    %v7411 = vadd.f32 %v7227, %v1957
    %v7412 = vadd.f32 %v7229, %v1961
    %v7413 = vadd.f32 %v7231, %v1965
    %v7414 = vadd.f32 %v7233, %v1969
    %v7415 = vadd.f32 %v7235, %v1973
    %v7416 = vadd.f32 %v7237, %v1977
    %v7417 = vadd.f32 %v7239, %v1981
    %v7418 = vadd.f32 %v7241, %v1985
    %v7419 = vadd.f32 %v7243, %v1989
    %v7420 = vadd.f32 %v7245, %v1996
    %v7421 = vadd.f32 %v7247, %v2000
    %v7422 = vadd.f32 %v7249, %v2004
    %v7423 = vadd.f32 %v7251, %v2008
    %v7424 = vadd.f32 %v7253, %v2012
    %v7425 = vadd.f32 %v7255, %v2016
    %v7426 = vadd.f32 %v7257, %v2020
    %v7427 = vadd.f32 %v7259, %v2024
    %v7428 = vadd.f32 %v7261, %v2028
    %v7429 = vadd.f32 %v7263, %v2032
    %v7430 = vadd.f32 %v7265, %v2036
    %v7431 = vadd.f32 %v7267, %v2040
    %v7432 = vadd.f32 %v7269, %v2044
    %v7433 = vadd.f32 %v7271, %v2048
    %v7434 = vadd.f32 %v7273, %v2052
    %v7435 = vadd.f32 %v7275, %v2056
    %v7436 = vadd.f32 %v7277, %v2063
    %v7437 = vadd.f32 %v7279, %v2067
    %v7438 = vadd.f32 %v7281, %v2071
    %v7439 = vadd.f32 %v7283, %v2075
    %v7440 = vadd.f32 %v7285, %v2079
    %v7441 = vadd.f32 %v7287, %v2083
    %v7442 = vadd.f32 %v7289, %v2087
    %v7443 = vadd.f32 %v7291, %v2091
    %v7444 = vadd.f32 %v7293, %v2095
    %v7445 = vadd.f32 %v7295, %v2099
    %v7446 = vadd.f32 %v7297, %v2103
    %v7447 = vadd.f32 %v7299, %v2107
    %v7448 = vadd.f32 %v7301, %v2111
    %v7449 = vadd.f32 %v7303, %v2115
    %v7450 = vadd.f32 %v7305, %v2119
    %v7451 = vadd.f32 %v7307, %v2123
    %v7452 = vadd.f32 %v7309, %v2130
    %v7453 = vadd.f32 %v7311, %v2134
    %v7454 = vadd.f32 %v7313, %v2138
    %v7455 = vadd.f32 %v7315, %v2142
    %v7456 = vadd.f32 %v7317, %v2146
    %v7457 = vadd.f32 %v7319, %v2150
    %v7458 = vadd.f32 %v7321, %v2154
    %v7459 = vadd.f32 %v7323, %v2158
    %v7460 = vadd.f32 %v7325, %v2162
    %v7461 = vadd.f32 %v7327, %v2166
    %v7462 = vadd.f32 %v7329, %v2170
    %v7463 = vadd.f32 %v7331, %v2174
    %v7464 = vadd.f32 %v7333, %v2178
    %v7465 = vadd.f32 %v7335, %v2182
    %v7466 = vadd.f32 %v7337, %v2186
    %v7467 = vadd.f32 %v7339, %v2190
    %7596 = vset.pattern.permute.xlu0 0
    %7597 = vperm.xlu0 %7596, %v7340
    %v7598 = vpop.permute.xlu0 %7597
    %7599 = vset.pattern.permute.xlu0 0
    %7600 = vperm.xlu0 %7599, %v7341
    %v7601 = vpop.permute.xlu0 %7600
    %7602 = vset.pattern.permute.xlu0 0
    %7603 = vperm.xlu0 %7602, %v7342
    %v7604 = vpop.permute.xlu0 %7603
    %7605 = vset.pattern.permute.xlu0 0
    %7606 = vperm.xlu0 %7605, %v7343
    %v7607 = vpop.permute.xlu0 %7606
    %7608 = vset.pattern.permute.xlu0 0
    %7609 = vperm.xlu0 %7608, %v7344
    %v7610 = vpop.permute.xlu0 %7609
    %7611 = vset.pattern.permute.xlu0 0
    %7612 = vperm.xlu0 %7611, %v7345
    %v7613 = vpop.permute.xlu0 %7612
    %7614 = vset.pattern.permute.xlu0 0
    %7615 = vperm.xlu0 %7614, %v7346
    %v7616 = vpop.permute.xlu0 %7615
    %7617 = vset.pattern.permute.xlu0 0
    %7618 = vperm.xlu0 %7617, %v7347
    %v7619 = vpop.permute.xlu0 %7618
    %7620 = vset.pattern.permute.xlu0 0
    %7621 = vperm.xlu0 %7620, %v7348
    %v7622 = vpop.permute.xlu0 %7621
    %7623 = vset.pattern.permute.xlu0 0
    %7624 = vperm.xlu0 %7623, %v7349
    %v7625 = vpop.permute.xlu0 %7624
    %7626 = vset.pattern.permute.xlu0 0
    %7627 = vperm.xlu0 %7626, %v7350
    %v7628 = vpop.permute.xlu0 %7627
    %7629 = vset.pattern.permute.xlu0 0
    %7630 = vperm.xlu0 %7629, %v7351
    %v7631 = vpop.permute.xlu0 %7630
    %7632 = vset.pattern.permute.xlu0 0
    %7633 = vperm.xlu0 %7632, %v7352
    %v7634 = vpop.permute.xlu0 %7633
    %7635 = vset.pattern.permute.xlu0 0
    %7636 = vperm.xlu0 %7635, %v7353
    %v7637 = vpop.permute.xlu0 %7636
    %7638 = vset.pattern.permute.xlu0 0
    %7639 = vperm.xlu0 %7638, %v7354
    %v7640 = vpop.permute.xlu0 %7639
    %7641 = vset.pattern.permute.xlu0 0
    %7642 = vperm.xlu0 %7641, %v7355
    %v7643 = vpop.permute.xlu0 %7642
    %7644 = vset.pattern.permute.xlu0 0
    %7645 = vperm.xlu0 %7644, %v7356
    %v7646 = vpop.permute.xlu0 %7645
    %7647 = vset.pattern.permute.xlu0 0
    %7648 = vperm.xlu0 %7647, %v7357
    %v7649 = vpop.permute.xlu0 %7648
    %7650 = vset.pattern.permute.xlu0 0
    %7651 = vperm.xlu0 %7650, %v7358
    %v7652 = vpop.permute.xlu0 %7651
    %7653 = vset.pattern.permute.xlu0 0
    %7654 = vperm.xlu0 %7653, %v7359
    %v7655 = vpop.permute.xlu0 %7654
    %7656 = vset.pattern.permute.xlu0 0
    %7657 = vperm.xlu0 %7656, %v7360
    %v7658 = vpop.permute.xlu0 %7657
    %7659 = vset.pattern.permute.xlu0 0
    %7660 = vperm.xlu0 %7659, %v7361
    %v7661 = vpop.permute.xlu0 %7660
    %7662 = vset.pattern.permute.xlu0 0
    %7663 = vperm.xlu0 %7662, %v7362
    %v7664 = vpop.permute.xlu0 %7663
    %7665 = vset.pattern.permute.xlu0 0
    %7666 = vperm.xlu0 %7665, %v7363
    %v7667 = vpop.permute.xlu0 %7666
    %7668 = vset.pattern.permute.xlu0 0
    %7669 = vperm.xlu0 %7668, %v7364
    %v7670 = vpop.permute.xlu0 %7669
    %7671 = vset.pattern.permute.xlu0 0
    %7672 = vperm.xlu0 %7671, %v7365
    %v7673 = vpop.permute.xlu0 %7672
    %7674 = vset.pattern.permute.xlu0 0
    %7675 = vperm.xlu0 %7674, %v7366
    %v7676 = vpop.permute.xlu0 %7675
    %7677 = vset.pattern.permute.xlu0 0
    %7678 = vperm.xlu0 %7677, %v7367
    %v7679 = vpop.permute.xlu0 %7678
    %7680 = vset.pattern.permute.xlu0 0
    %7681 = vperm.xlu0 %7680, %v7368
    %v7682 = vpop.permute.xlu0 %7681
    %7683 = vset.pattern.permute.xlu0 0
    %7684 = vperm.xlu0 %7683, %v7369
    %v7685 = vpop.permute.xlu0 %7684
    %7686 = vset.pattern.permute.xlu0 0
    %7687 = vperm.xlu0 %7686, %v7370
    %v7688 = vpop.permute.xlu0 %7687
    %7689 = vset.pattern.permute.xlu0 0
    %7690 = vperm.xlu0 %7689, %v7371
    %v7691 = vpop.permute.xlu0 %7690
    %7692 = vset.pattern.permute.xlu0 0
    %7693 = vperm.xlu0 %7692, %v7372
    %v7694 = vpop.permute.xlu0 %7693
    %7695 = vset.pattern.permute.xlu0 0
    %7696 = vperm.xlu0 %7695, %v7373
    %v7697 = vpop.permute.xlu0 %7696
    %7698 = vset.pattern.permute.xlu0 0
    %7699 = vperm.xlu0 %7698, %v7374
    %v7700 = vpop.permute.xlu0 %7699
    %7701 = vset.pattern.permute.xlu0 0
    %7702 = vperm.xlu0 %7701, %v7375
    %v7703 = vpop.permute.xlu0 %7702
    %7704 = vset.pattern.permute.xlu0 0
    %7705 = vperm.xlu0 %7704, %v7376
    %v7706 = vpop.permute.xlu0 %7705
    %7707 = vset.pattern.permute.xlu0 0
    %7708 = vperm.xlu0 %7707, %v7377
    %v7709 = vpop.permute.xlu0 %7708
    %7710 = vset.pattern.permute.xlu0 0
    %7711 = vperm.xlu0 %7710, %v7378
    %v7712 = vpop.permute.xlu0 %7711
    %7713 = vset.pattern.permute.xlu0 0
    %7714 = vperm.xlu0 %7713, %v7379
    %v7715 = vpop.permute.xlu0 %7714
    %7716 = vset.pattern.permute.xlu0 0
    %7717 = vperm.xlu0 %7716, %v7380
    %v7718 = vpop.permute.xlu0 %7717
    %7719 = vset.pattern.permute.xlu0 0
    %7720 = vperm.xlu0 %7719, %v7381
    %v7721 = vpop.permute.xlu0 %7720
    %7722 = vset.pattern.permute.xlu0 0
    %7723 = vperm.xlu0 %7722, %v7382
    %v7724 = vpop.permute.xlu0 %7723
    %7725 = vset.pattern.permute.xlu0 0
    %7726 = vperm.xlu0 %7725, %v7383
    %v7727 = vpop.permute.xlu0 %7726
    %7728 = vset.pattern.permute.xlu0 0
    %7729 = vperm.xlu0 %7728, %v7384
    %v7730 = vpop.permute.xlu0 %7729
    %7731 = vset.pattern.permute.xlu0 0
    %7732 = vperm.xlu0 %7731, %v7385
    %v7733 = vpop.permute.xlu0 %7732
    %7734 = vset.pattern.permute.xlu0 0
    %7735 = vperm.xlu0 %7734, %v7386
    %v7736 = vpop.permute.xlu0 %7735
    %7737 = vset.pattern.permute.xlu0 0
    %7738 = vperm.xlu0 %7737, %v7387
    %v7739 = vpop.permute.xlu0 %7738
    %7740 = vset.pattern.permute.xlu0 0
    %7741 = vperm.xlu0 %7740, %v7388
    %v7742 = vpop.permute.xlu0 %7741
    %7743 = vset.pattern.permute.xlu0 0
    %7744 = vperm.xlu0 %7743, %v7389
    %v7745 = vpop.permute.xlu0 %7744
    %7746 = vset.pattern.permute.xlu0 0
    %7747 = vperm.xlu0 %7746, %v7390
    %v7748 = vpop.permute.xlu0 %7747
    %7749 = vset.pattern.permute.xlu0 0
    %7750 = vperm.xlu0 %7749, %v7391
    %v7751 = vpop.permute.xlu0 %7750
    %7752 = vset.pattern.permute.xlu0 0
    %7753 = vperm.xlu0 %7752, %v7392
    %v7754 = vpop.permute.xlu0 %7753
    %7755 = vset.pattern.permute.xlu0 0
    %7756 = vperm.xlu0 %7755, %v7393
    %v7757 = vpop.permute.xlu0 %7756
    %7758 = vset.pattern.permute.xlu0 0
    %7759 = vperm.xlu0 %7758, %v7394
    %v7760 = vpop.permute.xlu0 %7759
    %7761 = vset.pattern.permute.xlu0 0
    %7762 = vperm.xlu0 %7761, %v7395
    %v7763 = vpop.permute.xlu0 %7762
    %7764 = vset.pattern.permute.xlu0 0
    %7765 = vperm.xlu0 %7764, %v7396
    %v7766 = vpop.permute.xlu0 %7765
    %7767 = vset.pattern.permute.xlu0 0
    %7768 = vperm.xlu0 %7767, %v7397
    %v7769 = vpop.permute.xlu0 %7768
    %7770 = vset.pattern.permute.xlu0 0
    %7771 = vperm.xlu0 %7770, %v7398
    %v7772 = vpop.permute.xlu0 %7771
    %7773 = vset.pattern.permute.xlu0 0
    %7774 = vperm.xlu0 %7773, %v7399
    %v7775 = vpop.permute.xlu0 %7774
    %7776 = vset.pattern.permute.xlu0 0
    %7777 = vperm.xlu0 %7776, %v7400
    %v7778 = vpop.permute.xlu0 %7777
    %7779 = vset.pattern.permute.xlu0 0
    %7780 = vperm.xlu0 %7779, %v7401
    %v7781 = vpop.permute.xlu0 %7780
    %7782 = vset.pattern.permute.xlu0 0
    %7783 = vperm.xlu0 %7782, %v7402
    %v7784 = vpop.permute.xlu0 %7783
    %7785 = vset.pattern.permute.xlu0 0
    %7786 = vperm.xlu0 %7785, %v7403
    %v7787 = vpop.permute.xlu0 %7786
    %7788 = vset.pattern.permute.xlu0 0
    %7789 = vperm.xlu0 %7788, %v7404
    %v7790 = vpop.permute.xlu0 %7789
    %7791 = vset.pattern.permute.xlu0 0
    %7792 = vperm.xlu0 %7791, %v7405
    %v7793 = vpop.permute.xlu0 %7792
    %7794 = vset.pattern.permute.xlu0 0
    %7795 = vperm.xlu0 %7794, %v7406
    %v7796 = vpop.permute.xlu0 %7795
    %7797 = vset.pattern.permute.xlu0 0
    %7798 = vperm.xlu0 %7797, %v7407
    %v7799 = vpop.permute.xlu0 %7798
    %7800 = vset.pattern.permute.xlu0 0
    %7801 = vperm.xlu0 %7800, %v7408
    %v7802 = vpop.permute.xlu0 %7801
    %7803 = vset.pattern.permute.xlu0 0
    %7804 = vperm.xlu0 %7803, %v7409
    %v7805 = vpop.permute.xlu0 %7804
    %7806 = vset.pattern.permute.xlu0 0
    %7807 = vperm.xlu0 %7806, %v7410
    %v7808 = vpop.permute.xlu0 %7807
    %7809 = vset.pattern.permute.xlu0 0
    %7810 = vperm.xlu0 %7809, %v7411
    %v7811 = vpop.permute.xlu0 %7810
    %7812 = vset.pattern.permute.xlu0 0
    %7813 = vperm.xlu0 %7812, %v7412
    %v7814 = vpop.permute.xlu0 %7813
    %7815 = vset.pattern.permute.xlu0 0
    %7816 = vperm.xlu0 %7815, %v7413
    %v7817 = vpop.permute.xlu0 %7816
    %7818 = vset.pattern.permute.xlu0 0
    %7819 = vperm.xlu0 %7818, %v7414
    %v7820 = vpop.permute.xlu0 %7819
    %7821 = vset.pattern.permute.xlu0 0
    %7822 = vperm.xlu0 %7821, %v7415
    %v7823 = vpop.permute.xlu0 %7822
    %7824 = vset.pattern.permute.xlu0 0
    %7825 = vperm.xlu0 %7824, %v7416
    %v7826 = vpop.permute.xlu0 %7825
    %7827 = vset.pattern.permute.xlu0 0
    %7828 = vperm.xlu0 %7827, %v7417
    %v7829 = vpop.permute.xlu0 %7828
    %7830 = vset.pattern.permute.xlu0 0
    %7831 = vperm.xlu0 %7830, %v7418
    %v7832 = vpop.permute.xlu0 %7831
    %7833 = vset.pattern.permute.xlu0 0
    %7834 = vperm.xlu0 %7833, %v7419
    %v7835 = vpop.permute.xlu0 %7834
    %7836 = vset.pattern.permute.xlu0 0
    %7837 = vperm.xlu0 %7836, %v7420
    %v7838 = vpop.permute.xlu0 %7837
    %7839 = vset.pattern.permute.xlu0 0
    %7840 = vperm.xlu0 %7839, %v7421
    %v7841 = vpop.permute.xlu0 %7840
    %7842 = vset.pattern.permute.xlu0 0
    %7843 = vperm.xlu0 %7842, %v7422
    %v7844 = vpop.permute.xlu0 %7843
    %7845 = vset.pattern.permute.xlu0 0
    %7846 = vperm.xlu0 %7845, %v7423
    %v7847 = vpop.permute.xlu0 %7846
    %7848 = vset.pattern.permute.xlu0 0
    %7849 = vperm.xlu0 %7848, %v7424
    %v7850 = vpop.permute.xlu0 %7849
    %7851 = vset.pattern.permute.xlu0 0
    %7852 = vperm.xlu0 %7851, %v7425
    %v7853 = vpop.permute.xlu0 %7852
    %7854 = vset.pattern.permute.xlu0 0
    %7855 = vperm.xlu0 %7854, %v7426
    %v7856 = vpop.permute.xlu0 %7855
    %7857 = vset.pattern.permute.xlu0 0
    %7858 = vperm.xlu0 %7857, %v7427
    %v7859 = vpop.permute.xlu0 %7858
    %7860 = vset.pattern.permute.xlu0 0
    %7861 = vperm.xlu0 %7860, %v7428
    %v7862 = vpop.permute.xlu0 %7861
    %7863 = vset.pattern.permute.xlu0 0
    %7864 = vperm.xlu0 %7863, %v7429
    %v7865 = vpop.permute.xlu0 %7864
    %7866 = vset.pattern.permute.xlu0 0
    %7867 = vperm.xlu0 %7866, %v7430
    %v7868 = vpop.permute.xlu0 %7867
    %7869 = vset.pattern.permute.xlu0 0
    %7870 = vperm.xlu0 %7869, %v7431
    %v7871 = vpop.permute.xlu0 %7870
    %7872 = vset.pattern.permute.xlu0 0
    %7873 = vperm.xlu0 %7872, %v7432
    %v7874 = vpop.permute.xlu0 %7873
    %7875 = vset.pattern.permute.xlu0 0
    %7876 = vperm.xlu0 %7875, %v7433
    %v7877 = vpop.permute.xlu0 %7876
    %7878 = vset.pattern.permute.xlu0 0
    %7879 = vperm.xlu0 %7878, %v7434
    %v7880 = vpop.permute.xlu0 %7879
    %7881 = vset.pattern.permute.xlu0 0
    %7882 = vperm.xlu0 %7881, %v7435
    %v7883 = vpop.permute.xlu0 %7882
    %7884 = vset.pattern.permute.xlu0 0
    %7885 = vperm.xlu0 %7884, %v7436
    %v7886 = vpop.permute.xlu0 %7885
    %7887 = vset.pattern.permute.xlu0 0
    %7888 = vperm.xlu0 %7887, %v7437
    %v7889 = vpop.permute.xlu0 %7888
    %7890 = vset.pattern.permute.xlu0 0
    %7891 = vperm.xlu0 %7890, %v7438
    %v7892 = vpop.permute.xlu0 %7891
    %7893 = vset.pattern.permute.xlu0 0
    %7894 = vperm.xlu0 %7893, %v7439
    %v7895 = vpop.permute.xlu0 %7894
    %7896 = vset.pattern.permute.xlu0 0
    %7897 = vperm.xlu0 %7896, %v7440
    %v7898 = vpop.permute.xlu0 %7897
    %7899 = vset.pattern.permute.xlu0 0
    %7900 = vperm.xlu0 %7899, %v7441
    %v7901 = vpop.permute.xlu0 %7900
    %7902 = vset.pattern.permute.xlu0 0
    %7903 = vperm.xlu0 %7902, %v7442
    %v7904 = vpop.permute.xlu0 %7903
    %7905 = vset.pattern.permute.xlu0 0
    %7906 = vperm.xlu0 %7905, %v7443
    %v7907 = vpop.permute.xlu0 %7906
    %7908 = vset.pattern.permute.xlu0 0
    %7909 = vperm.xlu0 %7908, %v7444
    %v7910 = vpop.permute.xlu0 %7909
    %7911 = vset.pattern.permute.xlu0 0
    %7912 = vperm.xlu0 %7911, %v7445
    %v7913 = vpop.permute.xlu0 %7912
    %7914 = vset.pattern.permute.xlu0 0
    %7915 = vperm.xlu0 %7914, %v7446
    %v7916 = vpop.permute.xlu0 %7915
    %7917 = vset.pattern.permute.xlu0 0
    %7918 = vperm.xlu0 %7917, %v7447
    %v7919 = vpop.permute.xlu0 %7918
    %7920 = vset.pattern.permute.xlu0 0
    %7921 = vperm.xlu0 %7920, %v7448
    %v7922 = vpop.permute.xlu0 %7921
    %7923 = vset.pattern.permute.xlu0 0
    %7924 = vperm.xlu0 %7923, %v7449
    %v7925 = vpop.permute.xlu0 %7924
    %7926 = vset.pattern.permute.xlu0 0
    %7927 = vperm.xlu0 %7926, %v7450
    %v7928 = vpop.permute.xlu0 %7927
    %7929 = vset.pattern.permute.xlu0 0
    %7930 = vperm.xlu0 %7929, %v7451
    %v7931 = vpop.permute.xlu0 %7930
    %7932 = vset.pattern.permute.xlu0 0
    %7933 = vperm.xlu0 %7932, %v7452
    %v7934 = vpop.permute.xlu0 %7933
    %7935 = vset.pattern.permute.xlu0 0
    %7936 = vperm.xlu0 %7935, %v7453
    %v7937 = vpop.permute.xlu0 %7936
    %7938 = vset.pattern.permute.xlu0 0
    %7939 = vperm.xlu0 %7938, %v7454
    %v7940 = vpop.permute.xlu0 %7939
    %7941 = vset.pattern.permute.xlu0 0
    %7942 = vperm.xlu0 %7941, %v7455
    %v7943 = vpop.permute.xlu0 %7942
    %7944 = vset.pattern.permute.xlu0 0
    %7945 = vperm.xlu0 %7944, %v7456
    %v7946 = vpop.permute.xlu0 %7945
    %7947 = vset.pattern.permute.xlu0 0
    %7948 = vperm.xlu0 %7947, %v7457
    %v7949 = vpop.permute.xlu0 %7948
    %7950 = vset.pattern.permute.xlu0 0
    %7951 = vperm.xlu0 %7950, %v7458
    %v7952 = vpop.permute.xlu0 %7951
    %7953 = vset.pattern.permute.xlu0 0
    %7954 = vperm.xlu0 %7953, %v7459
    %v7955 = vpop.permute.xlu0 %7954
    %7956 = vset.pattern.permute.xlu0 0
    %7957 = vperm.xlu0 %7956, %v7460
    %v7958 = vpop.permute.xlu0 %7957
    %7959 = vset.pattern.permute.xlu0 0
    %7960 = vperm.xlu0 %7959, %v7461
    %v7961 = vpop.permute.xlu0 %7960
    %7962 = vset.pattern.permute.xlu0 0
    %7963 = vperm.xlu0 %7962, %v7462
    %v7964 = vpop.permute.xlu0 %7963
    %7965 = vset.pattern.permute.xlu0 0
    %7966 = vperm.xlu0 %7965, %v7463
    %v7967 = vpop.permute.xlu0 %7966
    %7968 = vset.pattern.permute.xlu0 0
    %7969 = vperm.xlu0 %7968, %v7464
    %v7970 = vpop.permute.xlu0 %7969
    %7971 = vset.pattern.permute.xlu0 0
    %7972 = vperm.xlu0 %7971, %v7465
    %v7973 = vpop.permute.xlu0 %7972
    %7974 = vset.pattern.permute.xlu0 0
    %7975 = vperm.xlu0 %7974, %v7466
    %v7976 = vpop.permute.xlu0 %7975
    %7977 = vset.pattern.permute.xlu0 0
    %7978 = vperm.xlu0 %7977, %v7467
    %v7979 = vpop.permute.xlu0 %7978
    %v7980 = vlaneseq
    %v7981 = vshrl.u32 %v7980, 7
    %v7982 = vsub.s32 %v2960, %v7981
    %v7983 = vrot.slane %v7598, %v7982
    %v7984 = vlaneseq
    %v7985 = vshrl.u32 %v7984, 7
    %v7986 = vsub.s32 %v2965, %v7985
    %v7987 = vrot.slane %v7601, %v7986
    %v7988 = vsel %vm2970, %v7987, %v7983
    %v7989 = vlaneseq
    %v7990 = vshrl.u32 %v7989, 7
    %v7991 = vsub.s32 %v2972, %v7990
    %v7992 = vrot.slane %v7604, %v7991
    %v7993 = vsel %vm2977, %v7992, %v7988
    %v7994 = vlaneseq
    %v7995 = vshrl.u32 %v7994, 7
    %v7996 = vsub.s32 %v2979, %v7995
    %v7997 = vrot.slane %v7607, %v7996
    %v7998 = vsel %vm2984, %v7997, %v7993
    %v7999 = vlaneseq
    %v8000 = vshrl.u32 %v7999, 7
    %v8001 = vsub.s32 %v2986, %v8000
    %v8002 = vrot.slane %v7610, %v8001
    %v8003 = vsel %vm2991, %v8002, %v7998
    %v8004 = vlaneseq
    %v8005 = vshrl.u32 %v8004, 7
    %v8006 = vsub.s32 %v2993, %v8005
    %v8007 = vrot.slane %v7613, %v8006
    %v8008 = vsel %vm2998, %v8007, %v8003
    %v8009 = vlaneseq
    %v8010 = vshrl.u32 %v8009, 7
    %v8011 = vsub.s32 %v3000, %v8010
    %v8012 = vrot.slane %v7616, %v8011
    %v8013 = vsel %vm3005, %v8012, %v8008
    %v8014 = vlaneseq
    %v8015 = vshrl.u32 %v8014, 7
    %v8016 = vsub.s32 %v3007, %v8015
    %v8017 = vrot.slane %v7619, %v8016
    %v8018 = vsel %vm3012, %v8017, %v8013
    %v8019 = vlaneseq
    %v8020 = vshrl.u32 %v8019, 7
    %v8021 = vsub.s32 %v3014, %v8020
    %v8022 = vrot.slane %v7622, %v8021
    %v8023 = vsel %vm3019, %v8022, %v8018
    %v8024 = vlaneseq
    %v8025 = vshrl.u32 %v8024, 7
    %v8026 = vsub.s32 %v3021, %v8025
    %v8027 = vrot.slane %v7625, %v8026
    %v8028 = vsel %vm3026, %v8027, %v8023
    %v8029 = vlaneseq
    %v8030 = vshrl.u32 %v8029, 7
    %v8031 = vsub.s32 %v3028, %v8030
    %v8032 = vrot.slane %v7628, %v8031
    %v8033 = vsel %vm3033, %v8032, %v8028
    %v8034 = vlaneseq
    %v8035 = vshrl.u32 %v8034, 7
    %v8036 = vsub.s32 %v3035, %v8035
    %v8037 = vrot.slane %v7631, %v8036
    %v8038 = vsel %vm3040, %v8037, %v8033
    %v8039 = vlaneseq
    %v8040 = vshrl.u32 %v8039, 7
    %v8041 = vsub.s32 %v3042, %v8040
    %v8042 = vrot.slane %v7634, %v8041
    %v8043 = vsel %vm3047, %v8042, %v8038
    %v8044 = vlaneseq
    %v8045 = vshrl.u32 %v8044, 7
    %v8046 = vsub.s32 %v3049, %v8045
    %v8047 = vrot.slane %v7637, %v8046
    %v8048 = vsel %vm3054, %v8047, %v8043
    %v8049 = vlaneseq
    %v8050 = vshrl.u32 %v8049, 7
    %v8051 = vsub.s32 %v3056, %v8050
    %v8052 = vrot.slane %v7640, %v8051
    %v8053 = vsel %vm3061, %v8052, %v8048
    %v8054 = vlaneseq
    %v8055 = vshrl.u32 %v8054, 7
    %v8056 = vsub.s32 %v3063, %v8055
    %v8057 = vrot.slane %v7643, %v8056
    %v8058 = vsel %vm3068, %v8057, %v8053
    %v8059 = vlaneseq
    %v8060 = vshrl.u32 %v8059, 7
    %v8061 = vsub.s32 %v2960, %v8060
    %v8062 = vrot.slane %v7646, %v8061
    %v8063 = vlaneseq
    %v8064 = vshrl.u32 %v8063, 7
    %v8065 = vsub.s32 %v2965, %v8064
    %v8066 = vrot.slane %v7649, %v8065
    %v8067 = vsel %vm2970, %v8066, %v8062
    %v8068 = vlaneseq
    %v8069 = vshrl.u32 %v8068, 7
    %v8070 = vsub.s32 %v2972, %v8069
    %v8071 = vrot.slane %v7652, %v8070
    %v8072 = vsel %vm2977, %v8071, %v8067
    %v8073 = vlaneseq
    %v8074 = vshrl.u32 %v8073, 7
    %v8075 = vsub.s32 %v2979, %v8074
    %v8076 = vrot.slane %v7655, %v8075
    %v8077 = vsel %vm2984, %v8076, %v8072
    %v8078 = vlaneseq
    %v8079 = vshrl.u32 %v8078, 7
    %v8080 = vsub.s32 %v2986, %v8079
    %v8081 = vrot.slane %v7658, %v8080
    %v8082 = vsel %vm2991, %v8081, %v8077
    %v8083 = vlaneseq
    %v8084 = vshrl.u32 %v8083, 7
    %v8085 = vsub.s32 %v2993, %v8084
    %v8086 = vrot.slane %v7661, %v8085
    %v8087 = vsel %vm2998, %v8086, %v8082
    %v8088 = vlaneseq
    %v8089 = vshrl.u32 %v8088, 7
    %v8090 = vsub.s32 %v3000, %v8089
    %v8091 = vrot.slane %v7664, %v8090
    %v8092 = vsel %vm3005, %v8091, %v8087
    %v8093 = vlaneseq
    %v8094 = vshrl.u32 %v8093, 7
    %v8095 = vsub.s32 %v3007, %v8094
    %v8096 = vrot.slane %v7667, %v8095
    %v8097 = vsel %vm3012, %v8096, %v8092
    %v8098 = vlaneseq
    %v8099 = vshrl.u32 %v8098, 7
    %v8100 = vsub.s32 %v3014, %v8099
    %v8101 = vrot.slane %v7670, %v8100
    %v8102 = vsel %vm3019, %v8101, %v8097
    %v8103 = vlaneseq
    %v8104 = vshrl.u32 %v8103, 7
    %v8105 = vsub.s32 %v3021, %v8104
    %v8106 = vrot.slane %v7673, %v8105
    %v8107 = vsel %vm3026, %v8106, %v8102
    %v8108 = vlaneseq
    %v8109 = vshrl.u32 %v8108, 7
    %v8110 = vsub.s32 %v3028, %v8109
    %v8111 = vrot.slane %v7676, %v8110
    %v8112 = vsel %vm3033, %v8111, %v8107
    %v8113 = vlaneseq
    %v8114 = vshrl.u32 %v8113, 7
    %v8115 = vsub.s32 %v3035, %v8114
    %v8116 = vrot.slane %v7679, %v8115
    %v8117 = vsel %vm3040, %v8116, %v8112
    %v8118 = vlaneseq
    %v8119 = vshrl.u32 %v8118, 7
    %v8120 = vsub.s32 %v3042, %v8119
    %v8121 = vrot.slane %v7682, %v8120
    %v8122 = vsel %vm3047, %v8121, %v8117
    %v8123 = vlaneseq
    %v8124 = vshrl.u32 %v8123, 7
    %v8125 = vsub.s32 %v3049, %v8124
    %v8126 = vrot.slane %v7685, %v8125
    %v8127 = vsel %vm3054, %v8126, %v8122
    %v8128 = vlaneseq
    %v8129 = vshrl.u32 %v8128, 7
    %v8130 = vsub.s32 %v3056, %v8129
    %v8131 = vrot.slane %v7688, %v8130
    %v8132 = vsel %vm3061, %v8131, %v8127
    %v8133 = vlaneseq
    %v8134 = vshrl.u32 %v8133, 7
    %v8135 = vsub.s32 %v3063, %v8134
    %v8136 = vrot.slane %v7691, %v8135
    %v8137 = vsel %vm3068, %v8136, %v8132
    %v8138 = vlaneseq
    %v8139 = vshrl.u32 %v8138, 7
    %v8140 = vsub.s32 %v2960, %v8139
    %v8141 = vrot.slane %v7694, %v8140
    %v8142 = vlaneseq
    %v8143 = vshrl.u32 %v8142, 7
    %v8144 = vsub.s32 %v2965, %v8143
    %v8145 = vrot.slane %v7697, %v8144
    %v8146 = vsel %vm2970, %v8145, %v8141
    %v8147 = vlaneseq
    %v8148 = vshrl.u32 %v8147, 7
    %v8149 = vsub.s32 %v2972, %v8148
    %v8150 = vrot.slane %v7700, %v8149
    %v8151 = vsel %vm2977, %v8150, %v8146
    %v8152 = vlaneseq
    %v8153 = vshrl.u32 %v8152, 7
    %v8154 = vsub.s32 %v2979, %v8153
    %v8155 = vrot.slane %v7703, %v8154
    %v8156 = vsel %vm2984, %v8155, %v8151
    %v8157 = vlaneseq
    %v8158 = vshrl.u32 %v8157, 7
    %v8159 = vsub.s32 %v2986, %v8158
    %v8160 = vrot.slane %v7706, %v8159
    %v8161 = vsel %vm2991, %v8160, %v8156
    %v8162 = vlaneseq
    %v8163 = vshrl.u32 %v8162, 7
    %v8164 = vsub.s32 %v2993, %v8163
    %v8165 = vrot.slane %v7709, %v8164
    %v8166 = vsel %vm2998, %v8165, %v8161
    %v8167 = vlaneseq
    %v8168 = vshrl.u32 %v8167, 7
    %v8169 = vsub.s32 %v3000, %v8168
    %v8170 = vrot.slane %v7712, %v8169
    %v8171 = vsel %vm3005, %v8170, %v8166
    %v8172 = vlaneseq
    %v8173 = vshrl.u32 %v8172, 7
    %v8174 = vsub.s32 %v3007, %v8173
    %v8175 = vrot.slane %v7715, %v8174
    %v8176 = vsel %vm3012, %v8175, %v8171
    %v8177 = vlaneseq
    %v8178 = vshrl.u32 %v8177, 7
    %v8179 = vsub.s32 %v3014, %v8178
    %v8180 = vrot.slane %v7718, %v8179
    %v8181 = vsel %vm3019, %v8180, %v8176
    %v8182 = vlaneseq
    %v8183 = vshrl.u32 %v8182, 7
    %v8184 = vsub.s32 %v3021, %v8183
    %v8185 = vrot.slane %v7721, %v8184
    %v8186 = vsel %vm3026, %v8185, %v8181
    %v8187 = vlaneseq
    %v8188 = vshrl.u32 %v8187, 7
    %v8189 = vsub.s32 %v3028, %v8188
    %v8190 = vrot.slane %v7724, %v8189
    %v8191 = vsel %vm3033, %v8190, %v8186
    %v8192 = vlaneseq
    %v8193 = vshrl.u32 %v8192, 7
    %v8194 = vsub.s32 %v3035, %v8193
    %v8195 = vrot.slane %v7727, %v8194
    %v8196 = vsel %vm3040, %v8195, %v8191
    %v8197 = vlaneseq
    %v8198 = vshrl.u32 %v8197, 7
    %v8199 = vsub.s32 %v3042, %v8198
    %v8200 = vrot.slane %v7730, %v8199
    %v8201 = vsel %vm3047, %v8200, %v8196
    %v8202 = vlaneseq
    %v8203 = vshrl.u32 %v8202, 7
    %v8204 = vsub.s32 %v3049, %v8203
    %v8205 = vrot.slane %v7733, %v8204
    %v8206 = vsel %vm3054, %v8205, %v8201
    %v8207 = vlaneseq
    %v8208 = vshrl.u32 %v8207, 7
    %v8209 = vsub.s32 %v3056, %v8208
    %v8210 = vrot.slane %v7736, %v8209
    %v8211 = vsel %vm3061, %v8210, %v8206
    %v8212 = vlaneseq
    %v8213 = vshrl.u32 %v8212, 7
    %v8214 = vsub.s32 %v3063, %v8213
    %v8215 = vrot.slane %v7739, %v8214
    %v8216 = vsel %vm3068, %v8215, %v8211
    %v8217 = vlaneseq
    %v8218 = vshrl.u32 %v8217, 7
    %v8219 = vsub.s32 %v2960, %v8218
    %v8220 = vrot.slane %v7742, %v8219
    %v8221 = vlaneseq
    %v8222 = vshrl.u32 %v8221, 7
    %v8223 = vsub.s32 %v2965, %v8222
    %v8224 = vrot.slane %v7745, %v8223
    %v8225 = vsel %vm2970, %v8224, %v8220
    %v8226 = vlaneseq
    %v8227 = vshrl.u32 %v8226, 7
    %v8228 = vsub.s32 %v2972, %v8227
    %v8229 = vrot.slane %v7748, %v8228
    %v8230 = vsel %vm2977, %v8229, %v8225
    %v8231 = vlaneseq
    %v8232 = vshrl.u32 %v8231, 7
    %v8233 = vsub.s32 %v2979, %v8232
    %v8234 = vrot.slane %v7751, %v8233
    %v8235 = vsel %vm2984, %v8234, %v8230
    %v8236 = vlaneseq
    %v8237 = vshrl.u32 %v8236, 7
    %v8238 = vsub.s32 %v2986, %v8237
    %v8239 = vrot.slane %v7754, %v8238
    %v8240 = vsel %vm2991, %v8239, %v8235
    %v8241 = vlaneseq
    %v8242 = vshrl.u32 %v8241, 7
    %v8243 = vsub.s32 %v2993, %v8242
    %v8244 = vrot.slane %v7757, %v8243
    %v8245 = vsel %vm2998, %v8244, %v8240
    %v8246 = vlaneseq
    %v8247 = vshrl.u32 %v8246, 7
    %v8248 = vsub.s32 %v3000, %v8247
    %v8249 = vrot.slane %v7760, %v8248
    %v8250 = vsel %vm3005, %v8249, %v8245
    %v8251 = vlaneseq
    %v8252 = vshrl.u32 %v8251, 7
    %v8253 = vsub.s32 %v3007, %v8252
    %v8254 = vrot.slane %v7763, %v8253
    %v8255 = vsel %vm3012, %v8254, %v8250
    %v8256 = vlaneseq
    %v8257 = vshrl.u32 %v8256, 7
    %v8258 = vsub.s32 %v3014, %v8257
    %v8259 = vrot.slane %v7766, %v8258
    %v8260 = vsel %vm3019, %v8259, %v8255
    %v8261 = vlaneseq
    %v8262 = vshrl.u32 %v8261, 7
    %v8263 = vsub.s32 %v3021, %v8262
    %v8264 = vrot.slane %v7769, %v8263
    %v8265 = vsel %vm3026, %v8264, %v8260
    %v8266 = vlaneseq
    %v8267 = vshrl.u32 %v8266, 7
    %v8268 = vsub.s32 %v3028, %v8267
    %v8269 = vrot.slane %v7772, %v8268
    %v8270 = vsel %vm3033, %v8269, %v8265
    %v8271 = vlaneseq
    %v8272 = vshrl.u32 %v8271, 7
    %v8273 = vsub.s32 %v3035, %v8272
    %v8274 = vrot.slane %v7775, %v8273
    %v8275 = vsel %vm3040, %v8274, %v8270
    %v8276 = vlaneseq
    %v8277 = vshrl.u32 %v8276, 7
    %v8278 = vsub.s32 %v3042, %v8277
    %v8279 = vrot.slane %v7778, %v8278
    %v8280 = vsel %vm3047, %v8279, %v8275
    %v8281 = vlaneseq
    %v8282 = vshrl.u32 %v8281, 7
    %v8283 = vsub.s32 %v3049, %v8282
    %v8284 = vrot.slane %v7781, %v8283
    %v8285 = vsel %vm3054, %v8284, %v8280
    %v8286 = vlaneseq
    %v8287 = vshrl.u32 %v8286, 7
    %v8288 = vsub.s32 %v3056, %v8287
    %v8289 = vrot.slane %v7784, %v8288
    %v8290 = vsel %vm3061, %v8289, %v8285
    %v8291 = vlaneseq
    %v8292 = vshrl.u32 %v8291, 7
    %v8293 = vsub.s32 %v3063, %v8292
    %v8294 = vrot.slane %v7787, %v8293
    %v8295 = vsel %vm3068, %v8294, %v8290
    %v8296 = vlaneseq
    %v8297 = vshrl.u32 %v8296, 7
    %v8298 = vsub.s32 %v2960, %v8297
    %v8299 = vrot.slane %v7790, %v8298
    %v8300 = vlaneseq
    %v8301 = vshrl.u32 %v8300, 7
    %v8302 = vsub.s32 %v2965, %v8301
    %v8303 = vrot.slane %v7793, %v8302
    %v8304 = vsel %vm2970, %v8303, %v8299
    %v8305 = vlaneseq
    %v8306 = vshrl.u32 %v8305, 7
    %v8307 = vsub.s32 %v2972, %v8306
    %v8308 = vrot.slane %v7796, %v8307
    %v8309 = vsel %vm2977, %v8308, %v8304
    %v8310 = vlaneseq
    %v8311 = vshrl.u32 %v8310, 7
    %v8312 = vsub.s32 %v2979, %v8311
    %v8313 = vrot.slane %v7799, %v8312
    %v8314 = vsel %vm2984, %v8313, %v8309
    %v8315 = vlaneseq
    %v8316 = vshrl.u32 %v8315, 7
    %v8317 = vsub.s32 %v2986, %v8316
    %v8318 = vrot.slane %v7802, %v8317
    %v8319 = vsel %vm2991, %v8318, %v8314
    %v8320 = vlaneseq
    %v8321 = vshrl.u32 %v8320, 7
    %v8322 = vsub.s32 %v2993, %v8321
    %v8323 = vrot.slane %v7805, %v8322
    %v8324 = vsel %vm2998, %v8323, %v8319
    %v8325 = vlaneseq
    %v8326 = vshrl.u32 %v8325, 7
    %v8327 = vsub.s32 %v3000, %v8326
    %v8328 = vrot.slane %v7808, %v8327
    %v8329 = vsel %vm3005, %v8328, %v8324
    %v8330 = vlaneseq
    %v8331 = vshrl.u32 %v8330, 7
    %v8332 = vsub.s32 %v3007, %v8331
    %v8333 = vrot.slane %v7811, %v8332
    %v8334 = vsel %vm3012, %v8333, %v8329
    %v8335 = vlaneseq
    %v8336 = vshrl.u32 %v8335, 7
    %v8337 = vsub.s32 %v3014, %v8336
    %v8338 = vrot.slane %v7814, %v8337
    %v8339 = vsel %vm3019, %v8338, %v8334
    %v8340 = vlaneseq
    %v8341 = vshrl.u32 %v8340, 7
    %v8342 = vsub.s32 %v3021, %v8341
    %v8343 = vrot.slane %v7817, %v8342
    %v8344 = vsel %vm3026, %v8343, %v8339
    %v8345 = vlaneseq
    %v8346 = vshrl.u32 %v8345, 7
    %v8347 = vsub.s32 %v3028, %v8346
    %v8348 = vrot.slane %v7820, %v8347
    %v8349 = vsel %vm3033, %v8348, %v8344
    %v8350 = vlaneseq
    %v8351 = vshrl.u32 %v8350, 7
    %v8352 = vsub.s32 %v3035, %v8351
    %v8353 = vrot.slane %v7823, %v8352
    %v8354 = vsel %vm3040, %v8353, %v8349
    %v8355 = vlaneseq
    %v8356 = vshrl.u32 %v8355, 7
    %v8357 = vsub.s32 %v3042, %v8356
    %v8358 = vrot.slane %v7826, %v8357
    %v8359 = vsel %vm3047, %v8358, %v8354
    %v8360 = vlaneseq
    %v8361 = vshrl.u32 %v8360, 7
    %v8362 = vsub.s32 %v3049, %v8361
    %v8363 = vrot.slane %v7829, %v8362
    %v8364 = vsel %vm3054, %v8363, %v8359
    %v8365 = vlaneseq
    %v8366 = vshrl.u32 %v8365, 7
    %v8367 = vsub.s32 %v3056, %v8366
    %v8368 = vrot.slane %v7832, %v8367
    %v8369 = vsel %vm3061, %v8368, %v8364
    %v8370 = vlaneseq
    %v8371 = vshrl.u32 %v8370, 7
    %v8372 = vsub.s32 %v3063, %v8371
    %v8373 = vrot.slane %v7835, %v8372
    %v8374 = vsel %vm3068, %v8373, %v8369
    %v8375 = vlaneseq
    %v8376 = vshrl.u32 %v8375, 7
    %v8377 = vsub.s32 %v2960, %v8376
    %v8378 = vrot.slane %v7838, %v8377
    %v8379 = vlaneseq
    %v8380 = vshrl.u32 %v8379, 7
    %v8381 = vsub.s32 %v2965, %v8380
    %v8382 = vrot.slane %v7841, %v8381
    %v8383 = vsel %vm2970, %v8382, %v8378
    %v8384 = vlaneseq
    %v8385 = vshrl.u32 %v8384, 7
    %v8386 = vsub.s32 %v2972, %v8385
    %v8387 = vrot.slane %v7844, %v8386
    %v8388 = vsel %vm2977, %v8387, %v8383
    %v8389 = vlaneseq
    %v8390 = vshrl.u32 %v8389, 7
    %v8391 = vsub.s32 %v2979, %v8390
    %v8392 = vrot.slane %v7847, %v8391
    %v8393 = vsel %vm2984, %v8392, %v8388
    %v8394 = vlaneseq
    %v8395 = vshrl.u32 %v8394, 7
    %v8396 = vsub.s32 %v2986, %v8395
    %v8397 = vrot.slane %v7850, %v8396
    %v8398 = vsel %vm2991, %v8397, %v8393
    %v8399 = vlaneseq
    %v8400 = vshrl.u32 %v8399, 7
    %v8401 = vsub.s32 %v2993, %v8400
    %v8402 = vrot.slane %v7853, %v8401
    %v8403 = vsel %vm2998, %v8402, %v8398
    %v8404 = vlaneseq
    %v8405 = vshrl.u32 %v8404, 7
    %v8406 = vsub.s32 %v3000, %v8405
    %v8407 = vrot.slane %v7856, %v8406
    %v8408 = vsel %vm3005, %v8407, %v8403
    %v8409 = vlaneseq
    %v8410 = vshrl.u32 %v8409, 7
    %v8411 = vsub.s32 %v3007, %v8410
    %v8412 = vrot.slane %v7859, %v8411
    %v8413 = vsel %vm3012, %v8412, %v8408
    %v8414 = vlaneseq
    %v8415 = vshrl.u32 %v8414, 7
    %v8416 = vsub.s32 %v3014, %v8415
    %v8417 = vrot.slane %v7862, %v8416
    %v8418 = vsel %vm3019, %v8417, %v8413
    %v8419 = vlaneseq
    %v8420 = vshrl.u32 %v8419, 7
    %v8421 = vsub.s32 %v3021, %v8420
    %v8422 = vrot.slane %v7865, %v8421
    %v8423 = vsel %vm3026, %v8422, %v8418
    %v8424 = vlaneseq
    %v8425 = vshrl.u32 %v8424, 7
    %v8426 = vsub.s32 %v3028, %v8425
    %v8427 = vrot.slane %v7868, %v8426
    %v8428 = vsel %vm3033, %v8427, %v8423
    %v8429 = vlaneseq
    %v8430 = vshrl.u32 %v8429, 7
    %v8431 = vsub.s32 %v3035, %v8430
    %v8432 = vrot.slane %v7871, %v8431
    %v8433 = vsel %vm3040, %v8432, %v8428
    %v8434 = vlaneseq
    %v8435 = vshrl.u32 %v8434, 7
    %v8436 = vsub.s32 %v3042, %v8435
    %v8437 = vrot.slane %v7874, %v8436
    %v8438 = vsel %vm3047, %v8437, %v8433
    %v8439 = vlaneseq
    %v8440 = vshrl.u32 %v8439, 7
    %v8441 = vsub.s32 %v3049, %v8440
    %v8442 = vrot.slane %v7877, %v8441
    %v8443 = vsel %vm3054, %v8442, %v8438
    %v8444 = vlaneseq
    %v8445 = vshrl.u32 %v8444, 7
    %v8446 = vsub.s32 %v3056, %v8445
    %v8447 = vrot.slane %v7880, %v8446
    %v8448 = vsel %vm3061, %v8447, %v8443
    %v8449 = vlaneseq
    %v8450 = vshrl.u32 %v8449, 7
    %v8451 = vsub.s32 %v3063, %v8450
    %v8452 = vrot.slane %v7883, %v8451
    %v8453 = vsel %vm3068, %v8452, %v8448
    %v8454 = vlaneseq
    %v8455 = vshrl.u32 %v8454, 7
    %v8456 = vsub.s32 %v2960, %v8455
    %v8457 = vrot.slane %v7886, %v8456
    %v8458 = vlaneseq
    %v8459 = vshrl.u32 %v8458, 7
    %v8460 = vsub.s32 %v2965, %v8459
    %v8461 = vrot.slane %v7889, %v8460
    %v8462 = vsel %vm2970, %v8461, %v8457
    %v8463 = vlaneseq
    %v8464 = vshrl.u32 %v8463, 7
    %v8465 = vsub.s32 %v2972, %v8464
    %v8466 = vrot.slane %v7892, %v8465
    %v8467 = vsel %vm2977, %v8466, %v8462
    %v8468 = vlaneseq
    %v8469 = vshrl.u32 %v8468, 7
    %v8470 = vsub.s32 %v2979, %v8469
    %v8471 = vrot.slane %v7895, %v8470
    %v8472 = vsel %vm2984, %v8471, %v8467
    %v8473 = vlaneseq
    %v8474 = vshrl.u32 %v8473, 7
    %v8475 = vsub.s32 %v2986, %v8474
    %v8476 = vrot.slane %v7898, %v8475
    %v8477 = vsel %vm2991, %v8476, %v8472
    %v8478 = vlaneseq
    %v8479 = vshrl.u32 %v8478, 7
    %v8480 = vsub.s32 %v2993, %v8479
    %v8481 = vrot.slane %v7901, %v8480
    %v8482 = vsel %vm2998, %v8481, %v8477
    %v8483 = vlaneseq
    %v8484 = vshrl.u32 %v8483, 7
    %v8485 = vsub.s32 %v3000, %v8484
    %v8486 = vrot.slane %v7904, %v8485
    %v8487 = vsel %vm3005, %v8486, %v8482
    %v8488 = vlaneseq
    %v8489 = vshrl.u32 %v8488, 7
    %v8490 = vsub.s32 %v3007, %v8489
    %v8491 = vrot.slane %v7907, %v8490
    %v8492 = vsel %vm3012, %v8491, %v8487
    %v8493 = vlaneseq
    %v8494 = vshrl.u32 %v8493, 7
    %v8495 = vsub.s32 %v3014, %v8494
    %v8496 = vrot.slane %v7910, %v8495
    %v8497 = vsel %vm3019, %v8496, %v8492
    %v8498 = vlaneseq
    %v8499 = vshrl.u32 %v8498, 7
    %v8500 = vsub.s32 %v3021, %v8499
    %v8501 = vrot.slane %v7913, %v8500
    %v8502 = vsel %vm3026, %v8501, %v8497
    %v8503 = vlaneseq
    %v8504 = vshrl.u32 %v8503, 7
    %v8505 = vsub.s32 %v3028, %v8504
    %v8506 = vrot.slane %v7916, %v8505
    %v8507 = vsel %vm3033, %v8506, %v8502
    %v8508 = vlaneseq
    %v8509 = vshrl.u32 %v8508, 7
    %v8510 = vsub.s32 %v3035, %v8509
    %v8511 = vrot.slane %v7919, %v8510
    %v8512 = vsel %vm3040, %v8511, %v8507
    %v8513 = vlaneseq
    %v8514 = vshrl.u32 %v8513, 7
    %v8515 = vsub.s32 %v3042, %v8514
    %v8516 = vrot.slane %v7922, %v8515
    %v8517 = vsel %vm3047, %v8516, %v8512
    %v8518 = vlaneseq
    %v8519 = vshrl.u32 %v8518, 7
    %v8520 = vsub.s32 %v3049, %v8519
    %v8521 = vrot.slane %v7925, %v8520
    %v8522 = vsel %vm3054, %v8521, %v8517
    %v8523 = vlaneseq
    %v8524 = vshrl.u32 %v8523, 7
    %v8525 = vsub.s32 %v3056, %v8524
    %v8526 = vrot.slane %v7928, %v8525
    %v8527 = vsel %vm3061, %v8526, %v8522
    %v8528 = vlaneseq
    %v8529 = vshrl.u32 %v8528, 7
    %v8530 = vsub.s32 %v3063, %v8529
    %v8531 = vrot.slane %v7931, %v8530
    %v8532 = vsel %vm3068, %v8531, %v8527
    %v8533 = vlaneseq
    %v8534 = vshrl.u32 %v8533, 7
    %v8535 = vsub.s32 %v2960, %v8534
    %v8536 = vrot.slane %v7934, %v8535
    %v8537 = vlaneseq
    %v8538 = vshrl.u32 %v8537, 7
    %v8539 = vsub.s32 %v2965, %v8538
    %v8540 = vrot.slane %v7937, %v8539
    %v8541 = vsel %vm2970, %v8540, %v8536
    %v8542 = vlaneseq
    %v8543 = vshrl.u32 %v8542, 7
    %v8544 = vsub.s32 %v2972, %v8543
    %v8545 = vrot.slane %v7940, %v8544
    %v8546 = vsel %vm2977, %v8545, %v8541
    %v8547 = vlaneseq
    %v8548 = vshrl.u32 %v8547, 7
    %v8549 = vsub.s32 %v2979, %v8548
    %v8550 = vrot.slane %v7943, %v8549
    %v8551 = vsel %vm2984, %v8550, %v8546
    %v8552 = vlaneseq
    %v8553 = vshrl.u32 %v8552, 7
    %v8554 = vsub.s32 %v2986, %v8553
    %v8555 = vrot.slane %v7946, %v8554
    %v8556 = vsel %vm2991, %v8555, %v8551
    %v8557 = vlaneseq
    %v8558 = vshrl.u32 %v8557, 7
    %v8559 = vsub.s32 %v2993, %v8558
    %v8560 = vrot.slane %v7949, %v8559
    %v8561 = vsel %vm2998, %v8560, %v8556
    %v8562 = vlaneseq
    %v8563 = vshrl.u32 %v8562, 7
    %v8564 = vsub.s32 %v3000, %v8563
    %v8565 = vrot.slane %v7952, %v8564
    %v8566 = vsel %vm3005, %v8565, %v8561
    %v8567 = vlaneseq
    %v8568 = vshrl.u32 %v8567, 7
    %v8569 = vsub.s32 %v3007, %v8568
    %v8570 = vrot.slane %v7955, %v8569
    %v8571 = vsel %vm3012, %v8570, %v8566
    %v8572 = vlaneseq
    %v8573 = vshrl.u32 %v8572, 7
    %v8574 = vsub.s32 %v3014, %v8573
    %v8575 = vrot.slane %v7958, %v8574
    %v8576 = vsel %vm3019, %v8575, %v8571
    %v8577 = vlaneseq
    %v8578 = vshrl.u32 %v8577, 7
    %v8579 = vsub.s32 %v3021, %v8578
    %v8580 = vrot.slane %v7961, %v8579
    %v8581 = vsel %vm3026, %v8580, %v8576
    %v8582 = vlaneseq
    %v8583 = vshrl.u32 %v8582, 7
    %v8584 = vsub.s32 %v3028, %v8583
    %v8585 = vrot.slane %v7964, %v8584
    %v8586 = vsel %vm3033, %v8585, %v8581
    %v8587 = vlaneseq
    %v8588 = vshrl.u32 %v8587, 7
    %v8589 = vsub.s32 %v3035, %v8588
    %v8590 = vrot.slane %v7967, %v8589
    %v8591 = vsel %vm3040, %v8590, %v8586
    %v8592 = vlaneseq
    %v8593 = vshrl.u32 %v8592, 7
    %v8594 = vsub.s32 %v3042, %v8593
    %v8595 = vrot.slane %v7970, %v8594
    %v8596 = vsel %vm3047, %v8595, %v8591
    %v8597 = vlaneseq
    %v8598 = vshrl.u32 %v8597, 7
    %v8599 = vsub.s32 %v3049, %v8598
    %v8600 = vrot.slane %v7973, %v8599
    %v8601 = vsel %vm3054, %v8600, %v8596
    %v8602 = vlaneseq
    %v8603 = vshrl.u32 %v8602, 7
    %v8604 = vsub.s32 %v3056, %v8603
    %v8605 = vrot.slane %v7976, %v8604
    %v8606 = vsel %vm3061, %v8605, %v8601
    %v8607 = vlaneseq
    %v8608 = vshrl.u32 %v8607, 7
    %v8609 = vsub.s32 %v3063, %v8608
    %v8610 = vrot.slane %v7979, %v8609
    %v8611 = vsel %vm3068, %v8610, %v8606
    %v8612 = vsel %vm3623, %v8137, %v8058
    %v8613 = vsel %vm3625, %v8216, %v8612
    %v8614 = vsel %vm3627, %v8295, %v8613
    %v8615 = vsel %vm3629, %v8374, %v8614
    %v8616 = vsel %vm3631, %v8453, %v8615
    %v8617 = vsel %vm3633, %v8532, %v8616
    %v8618 = vsel %vm3635, %v8611, %v8617
    %s8620 = scalar_lea.vmem [#allocation5], 8
    %8621 = vst [vmem:[%s8620] sm:$0xff] %v8618
    // Predicated region
    $region46: #{tpu_custom_call.1} parent=1 // pred_check
      _
    $region47: #{tpu_custom_call.1} parent=1 // pred_check_branch
      %8623 = sbr.rel (0) target = $region49
    $region48: #{tpu_custom_call.1} parent=1 // pred_region
      %s8625 = ssub.s32 256, 256
      %8626 = vsyncadd [#allocation4], %s8625
      %s8627 = sshll.u32 [#allocation5], 4
      %s8628 = int_to_ptr.vmem [resolvable:$true] %s8627
      %8633 = dma.vmem_to_hbm [thread:$0]  %s8628, 256, %s10, [#allocation4], 128, 128, 8
    $region49: #{tpu_custom_call.1} parent=1 // pred_fallthru
      _
    // Predicated region
    $region50: #{tpu_custom_call.1} parent=1 // pred_check
      _
    $region51: #{tpu_custom_call.1} parent=1 // pred_check_branch
      %8635 = sbr.rel (0) target = $region53
    $region52: #{tpu_custom_call.1} parent=1 // pred_region
      %8636 = dma.done [#allocation4], 256
    $region53: #{tpu_custom_call.1} parent=1 // pred_fallthru
      _
    %8637 = vsyncpa [#allocation3], 1
    %8638 = vsyncpa [#allocation4], 1

</llo_original>
